<compile_context>
chip_gen: v5e
topology: v5e:2x2
jax: 0.10.0
libtpu: 0.0.40
codegen_flags: <defaults>
</compile_context>

<pallas_src>
import functools
import math

import jax
import jax.numpy as jnp
from jax.experimental import pallas as pl
from jax.experimental.pallas import tpu as pltpu


# ----------------------------------------------------------------------------
# Fused kernel: attention + LSTM stack + fc, one batch TILE per grid step.
# ----------------------------------------------------------------------------
def _fused_kernel(x_ref, wqkv_ref, bqkv_ref, wa_ref, ba_ref,
                  w_ih_ref, w_hh_ref, b_ref, fc_w_ref, fc_b_ref,
                  o_ref, xp_ref, seq_ref, attn_ref, *, scale):
    f32, bf16 = jnp.float32, jnp.bfloat16
    bt, T, D = x_ref.shape
    qkv = wqkv_ref.shape[2]
    num_layers, hp, _ = w_hh_ref.shape

    x = x_ref[...]                                        # (bt, T, D) f32
    x_flat = x.reshape(bt * T, D).astype(bf16)

    # ---- attention (batched over the bt rows of this tile) ----
    def proj(idx):
        return (jnp.dot(x_flat, wqkv_ref[idx], preferred_element_type=f32)
                + bqkv_ref[idx]).reshape(bt, T, qkv)

    q, k, v = proj(0), proj(1), proj(2)

    s = jnp.einsum("btd,bsd->bts", q.astype(bf16), k.astype(bf16),
                   preferred_element_type=f32) * (1.0 / scale)          # (bt, T, T)
    s = s - jnp.max(s, axis=-1, keepdims=True)
    e = jnp.exp(s)
    p = e * pl.reciprocal(jnp.sum(e, axis=-1, keepdims=True), approx=True)

    scaled = jnp.einsum("bts,bsd->btd", p.astype(bf16), v.astype(bf16),
                        preferred_element_type=f32) + x                  # (bt, T, qkv)
    attn = (jnp.dot(scaled.reshape(bt * T, qkv).astype(bf16), wa_ref[...],
                    preferred_element_type=f32)
            + ba_ref[...]).reshape(bt, T, D) + x                         # (bt, T, D)

    # ---- one-time relayout: batch-major attention output -> time-major rows
    #      in the seq scratch, lane-padded to hp so every layer uses the same
    #      stacked (hp, 4*hp) input-projection weight.  (Padded weight rows are
    #      zero, so the zero lane padding is exact.)
    attn_ref[...] = attn
    lane_pad = jnp.zeros((bt, hp - D), f32) if hp > D else None          # hoisted
    for t in range(T):
        row = attn_ref[:, t, :]                                          # (bt, D)
        seq_ref[t] = row if lane_pad is None else jnp.concatenate(
            [row, lane_pad], axis=1)                                     # (bt, hp)

    # ---- LSTM stack: hoisted input projection + batched unrolled recurrence ----
    h = None
    for l in range(num_layers):
        seq_flat = seq_ref[...].reshape(T * bt, hp)                      # time-major
        xp = (jnp.dot(seq_flat.astype(bf16), w_ih_ref[l],
                      preferred_element_type=f32) + b_ref[l])            # (T*bt, 4hp)
        xp_ref[...] = xp.reshape(T, bt, 4 * hp)

        h = jnp.zeros((bt, hp), f32)
        c = jnp.zeros((bt, hp), f32)
        for t in range(T):                        # fully unrolled (T small & static)
            gates = xp_ref[t] + jnp.dot(h.astype(bf16), w_hh_ref[l],
                                        preferred_element_type=f32)      # (bt, 4hp)
            # hp is a multiple of 128 -> every gate slice is lane-aligned.
            i = jax.nn.sigmoid(gates[:, 0 * hp:1 * hp])
            f = jax.nn.sigmoid(gates[:, 1 * hp:2 * hp])
            g = jnp.tanh(gates[:, 2 * hp:3 * hp])
            o = jax.nn.sigmoid(gates[:, 3 * hp:4 * hp])
            c = f * c + i * g
            h = o * jnp.tanh(c)
            if l < num_layers - 1:
                seq_ref[t] = h                    # contiguous (bt, hp) slab store

    # ---- final fc on the last hidden state ----
    o_ref[...] = (jnp.dot(h.astype(bf16), fc_w_ref[...],
                          preferred_element_type=f32) + fc_b_ref[...])   # (bt, O)


# ----------------------------------------------------------------------------
# Host-side wrapper: pads/stacks weights, tiles the batch, calls the kernel.
# ----------------------------------------------------------------------------
def _round_up(a, m):
    return ((a + m - 1) // m) * m


def _pad_gate_cols(w, H, hp):
    """(rows, 4H) -> (rows, 4*hp); gate g lives in cols [g*hp, g*hp+H), rest zero."""
    parts = [jnp.pad(w[:, g * H:(g + 1) * H], ((0, 0), (0, hp - H))) for g in range(4)]
    return jnp.concatenate(parts, axis=1)


def attentional_lstm_forward(x, params, *, hidden_size, scale):
    B, T, D = x.shape
    qkv = params["wq"].shape[1]
    assert qkv == D, "residual adds in AttentionalLSTM.forward require qkv == input_size"
    O = params["fc_w"].shape[1]
    num_layers = len(params["lstm"])
    hp = _round_up(hidden_size, 128)       # lane-aligned hidden dim
    assert D <= hp

    # Batch tiling: bt a multiple of 8 sublanes; keep >= 2 grid steps so both
    # v7x TensorCores are used.  Padded rows are zeros and discarded at the end.
    num_tiles = max(2, pl.cdiv(B, 128))
    bt = _round_up(pl.cdiv(B, num_tiles), 8)
    b_pad = num_tiles * bt
    x_p = jnp.pad(x.astype(jnp.float32), ((0, b_pad - B), (0, 0), (0, 0)))

    bf16 = jnp.bfloat16
    wqkv = jnp.stack([params["wq"], params["wk"], params["wv"]]).astype(bf16)  # (3,D,qkv)
    bqkv = jnp.stack([params["bq"], params["bk"], params["bv"]])               # (3,1,qkv)
    wa = params["wa"].astype(bf16)
    ba = params["ba"]

    w_ih_l, w_hh_l, b_l = [], [], []
    for l, lp in enumerate(params["lstm"]):
        din = D if l == 0 else hidden_size
        w_ih = _pad_gate_cols(lp["w_ih"], hidden_size, hp)
        w_ih_l.append(jnp.pad(w_ih, ((0, hp - din), (0, 0))))
        w_hh = _pad_gate_cols(lp["w_hh"], hidden_size, hp)
        w_hh_l.append(jnp.pad(w_hh, ((0, hp - hidden_size), (0, 0))))
        b_l.append(_pad_gate_cols(lp["b"], hidden_size, hp))
    w_ih_all = jnp.stack(w_ih_l).astype(bf16)      # (L, hp, 4*hp)
    w_hh_all = jnp.stack(w_hh_l).astype(bf16)      # (L, hp, 4*hp)
    b_all = jnp.stack(b_l)                         # (L, 1, 4*hp) f32
    fc_w = jnp.pad(params["fc_w"], ((0, hp - hidden_size), (0, 0))).astype(bf16)
    fc_b = params["fc_b"]

    grid_spec = pltpu.PrefetchScalarGridSpec(
        num_scalar_prefetch=0,
        grid=(num_tiles,),
        in_specs=[
            pl.BlockSpec((bt, T, D), lambda b: (b, 0, 0)),
            pl.BlockSpec((3, D, qkv), lambda b: (0, 0, 0)),
            pl.BlockSpec((3, 1, qkv), lambda b: (0, 0, 0)),
            pl.BlockSpec((qkv, D), lambda b: (0, 0)),
            pl.BlockSpec((1, D), lambda b: (0, 0)),
            pl.BlockSpec((num_layers, hp, 4 * hp), lambda b: (0, 0, 0)),
            pl.BlockSpec((num_layers, hp, 4 * hp), lambda b: (0, 0, 0)),
            pl.BlockSpec((num_layers, 1, 4 * hp), lambda b: (0, 0, 0)),
            pl.BlockSpec((hp, O), lambda b: (0, 0)),
            pl.BlockSpec((1, O), lambda b: (0, 0)),
        ],
        out_specs=pl.BlockSpec((bt, O), lambda b: (b, 0)),
        scratch_shapes=[
            pltpu.VMEM((T, bt, 4 * hp), jnp.float32),   # xp: hoisted gate preacts
            pltpu.VMEM((T, bt, hp), jnp.float32),       # seq: inter-layer hiddens
            pltpu.VMEM((bt, T, D), jnp.float32),        # attn: relayout staging
        ],
    )
    out = pl.pallas_call(
        functools.partial(_fused_kernel, scale=scale),
        out_shape=jax.ShapeDtypeStruct((b_pad, O), jnp.float32),
        grid_spec=grid_spec,
        compiler_params=pltpu.CompilerParams(dimension_semantics=("parallel",)),
    )(x_p, wqkv, bqkv, wa, ba, w_ih_all, w_hh_all, b_all, fc_w, fc_b)
    return out[:B]


# ----------------------------------------------------------------------------
# Pure-JAX reference (f32, sanity check only)
# ----------------------------------------------------------------------------
def reference_forward(x, params, *, hidden_size, scale, num_layers):
    q = x @ params["wq"] + params["bq"]
    k = x @ params["wk"] + params["bk"]
    v = x @ params["wv"] + params["bv"]
    s = jnp.einsum("btd,bsd->bts", q, k) / scale
    p = jax.nn.softmax(s, axis=-1)
    scaled = jnp.einsum("bts,bsd->btd", p, v) + x
    out = scaled @ params["wa"] + params["ba"] + x

    B, T, _ = x.shape
    seq = out
    for li in range(num_layers):
        lp = params["lstm"][li]
        h = jnp.zeros((B, hidden_size), jnp.float32)
        c = jnp.zeros((B, hidden_size), jnp.float32)
        hs = []
        for t in range(T):
            gates = seq[:, t, :] @ lp["w_ih"] + h @ lp["w_hh"] + lp["b"]
            i = jax.nn.sigmoid(gates[:, 0 * hidden_size:1 * hidden_size])
            f = jax.nn.sigmoid(gates[:, 1 * hidden_size:2 * hidden_size])
            g = jnp.tanh(gates[:, 2 * hidden_size:3 * hidden_size])
            o = jax.nn.sigmoid(gates[:, 3 * hidden_size:4 * hidden_size])
            c = f * c + i * g
            h = o * jnp.tanh(c)
            hs.append(h)
        seq = jnp.stack(hs, axis=1)
    return seq[:, -1, :] @ params["fc_w"] + params["fc_b"]


# ----------------------------------------------------------------------------
# Deterministic parameter init (PyTorch-style uniform bounds, synthetic values)
# ----------------------------------------------------------------------------
def init_params(key, input_size, qkv, hidden_size, num_layers, output_size):
    keys = jax.random.split(key, 10 + 4 * num_layers)
    u = lambda k, shape, bound: jax.random.uniform(k, shape, jnp.float32, -bound, bound)

    bi = 1.0 / math.sqrt(input_size)
    bq = 1.0 / math.sqrt(qkv)
    bh = 1.0 / math.sqrt(hidden_size)

    params = {
        "wq": u(keys[0], (input_size, qkv), bi), "bq": u(keys[1], (1, qkv), bi),
        "wk": u(keys[2], (input_size, qkv), bi), "bk": u(keys[3], (1, qkv), bi),
        "wv": u(keys[4], (input_size, qkv), bi), "bv": u(keys[5], (1, qkv), bi),
        "wa": u(keys[6], (qkv, input_size), bq), "ba": u(keys[7], (1, input_size), bq),
        "fc_w": u(keys[8], (hidden_size, output_size), bh),
        "fc_b": u(keys[9], (1, output_size), bh),
        "lstm": [],
    }
    for l in range(num_layers):
        din = input_size if l == 0 else hidden_size
        k0, k1, k2, k3 = keys[10 + 4 * l:10 + 4 * (l + 1)]
        params["lstm"].append({
            "w_ih": u(k0, (din, 4 * hidden_size), bh),
            "w_hh": u(k1, (hidden_size, 4 * hidden_size), bh),
            "b": u(k2, (1, 4 * hidden_size), bh) + u(k3, (1, 4 * hidden_size), bh),
        })
    return params


if __name__ == "__main__":
    B, T = 2, 8
    input_size = 16
    qkv = 16            # must equal input_size (residual adds in the PyTorch forward)
    hidden_size = 32
    num_layers = 2
    output_size = 4
    scale = math.sqrt(qkv)

    key = jax.random.PRNGKey(0)
    kx, kp = jax.random.split(key)
    x = jax.random.normal(kx, (B, T, input_size), jnp.float32)
    params = init_params(kp, input_size, qkv, hidden_size, num_layers, output_size)

    out = attentional_lstm_forward(x, params, hidden_size=hidden_size, scale=scale)
    out = jax.block_until_ready(out)
    assert out.shape == (B, output_size), out.shape

    ref = reference_forward(x, params, hidden_size=hidden_size, scale=scale,
                            num_layers=num_layers)
    # Tolerance covers bf16 MXU operands (f32 accumulation) across the 16-step
    # recurrence plus the EUP approximate reciprocal in the softmax.
    assert jnp.allclose(out, ref, rtol=4e-2, atol=4e-2), (
        float(jnp.max(jnp.abs(out - ref))))

    print("KERNEL_OK")
</pallas_src>

<mosaic_0001>
module attributes {stable_mosaic.version = 11 : i64} {
  func.func @_fused_kernel(%arg0: i32, %arg1: memref<8x8x16xf32, #tpu.memory_space<vmem>>, %arg2: memref<3x16x16xbf16, #tpu.memory_space<vmem>>, %arg3: memref<3x1x16xf32, #tpu.memory_space<vmem>>, %arg4: memref<16x16xbf16, #tpu.memory_space<vmem>>, %arg5: memref<1x16xf32, #tpu.memory_space<vmem>>, %arg6: memref<2x128x512xbf16, #tpu.memory_space<vmem>>, %arg7: memref<2x128x512xbf16, #tpu.memory_space<vmem>>, %arg8: memref<2x1x512xf32, #tpu.memory_space<vmem>>, %arg9: memref<128x4xbf16, #tpu.memory_space<vmem>>, %arg10: memref<1x4xf32, #tpu.memory_space<vmem>>, %arg11: memref<8x4xf32, #tpu.memory_space<vmem>>, %arg12: memref<8x8x512xf32, #tpu.memory_space<vmem>>, %arg13: memref<8x8x128xf32, #tpu.memory_space<vmem>>, %arg14: memref<8x8x16xf32, #tpu.memory_space<vmem>>) attributes {dimension_semantics = [#tpu.dimension_semantics<parallel>], iteration_bounds = array<i64: 2>, scalar_prefetch = 0 : i64, scratch_operands = 3 : i64, tpu.core_type = #tpu.core_type<tc>, window_params = [{transform_indices = @transform_0, window_bounds = array<i64: 8, 8, 16>}, {pipeline_mode = #tpu.pipeline_mode<synchronous>, transform_indices = @transform_1, window_bounds = array<i64: 3, 16, 16>}, {pipeline_mode = #tpu.pipeline_mode<synchronous>, transform_indices = @transform_2, window_bounds = array<i64: 3, 1, 16>}, {pipeline_mode = #tpu.pipeline_mode<synchronous>, transform_indices = @transform_3, window_bounds = array<i64: 16, 16>}, {pipeline_mode = #tpu.pipeline_mode<synchronous>, transform_indices = @transform_4, window_bounds = array<i64: 1, 16>}, {pipeline_mode = #tpu.pipeline_mode<synchronous>, transform_indices = @transform_5, window_bounds = array<i64: 2, 128, 512>}, {pipeline_mode = #tpu.pipeline_mode<synchronous>, transform_indices = @transform_6, window_bounds = array<i64: 2, 128, 512>}, {pipeline_mode = #tpu.pipeline_mode<synchronous>, transform_indices = @transform_7, window_bounds = array<i64: 2, 1, 512>}, {pipeline_mode = #tpu.pipeline_mode<synchronous>, transform_indices = @transform_8, window_bounds = array<i64: 128, 4>}, {pipeline_mode = #tpu.pipeline_mode<synchronous>, transform_indices = @transform_9, window_bounds = array<i64: 1, 4>}, {transform_indices = @transform_10, window_bounds = array<i64: 8, 4>}]} {
    %c0 = arith.constant 0 : index
    %c0_0 = arith.constant 0 : index
    %c0_1 = arith.constant 0 : index
    %0 = vector.load %arg1[%c0, %c0_0, %c0_1] : memref<8x8x16xf32, #tpu.memory_space<vmem>>, vector<8x8x16xf32>
    %1 = vector.shape_cast %0 : vector<8x8x16xf32> to vector<64x16xf32>
    %2 = arith.truncf %1 : vector<64x16xf32> to vector<64x16xbf16>
    %c0_2 = arith.constant 0 : index
    %c0_3 = arith.constant 0 : index
    %c0_4 = arith.constant 0 : index
    %3 = vector.load %arg2[%c0_2, %c0_3, %c0_4] : memref<3x16x16xbf16, #tpu.memory_space<vmem>>, vector<1x16x16xbf16>
    %4 = vector.shape_cast %3 : vector<1x16x16xbf16> to vector<16x16xbf16>
    %cst = arith.constant dense<0.000000e+00> : vector<64x16xf32>
    %5 = tpu.matmul %2, %4, %cst {dimension_numbers = #tpu.dot_dimension_numbers<[1], [0], [0], [1], [0, 0, 1, 1], [], []>} : vector<64x16xbf16>, vector<16x16xbf16>, vector<64x16xf32> -> vector<64x16xf32>
    %c0_5 = arith.constant 0 : index
    %c0_6 = arith.constant 0 : index
    %c0_7 = arith.constant 0 : index
    %6 = vector.load %arg3[%c0_5, %c0_6, %c0_7] : memref<3x1x16xf32, #tpu.memory_space<vmem>>, vector<1x1x16xf32>
    %7 = vector.shape_cast %6 : vector<1x1x16xf32> to vector<1x16xf32>
    %8 = vector.broadcast %7 : vector<1x16xf32> to vector<64x16xf32>
    %9 = arith.addf %5, %8 : vector<64x16xf32>
    %10 = vector.shape_cast %9 : vector<64x16xf32> to vector<8x8x16xf32>
    %c1 = arith.constant 1 : index
    %c0_8 = arith.constant 0 : index
    %c0_9 = arith.constant 0 : index
    %11 = vector.load %arg2[%c1, %c0_8, %c0_9] : memref<3x16x16xbf16, #tpu.memory_space<vmem>>, vector<1x16x16xbf16>
    %12 = vector.shape_cast %11 : vector<1x16x16xbf16> to vector<16x16xbf16>
    %cst_10 = arith.constant dense<0.000000e+00> : vector<64x16xf32>
    %13 = tpu.matmul %2, %12, %cst_10 {dimension_numbers = #tpu.dot_dimension_numbers<[1], [0], [0], [1], [0, 0, 1, 1], [], []>} : vector<64x16xbf16>, vector<16x16xbf16>, vector<64x16xf32> -> vector<64x16xf32>
    %c1_11 = arith.constant 1 : index
    %c0_12 = arith.constant 0 : index
    %c0_13 = arith.constant 0 : index
    %14 = vector.load %arg3[%c1_11, %c0_12, %c0_13] : memref<3x1x16xf32, #tpu.memory_space<vmem>>, vector<1x1x16xf32>
    %15 = vector.shape_cast %14 : vector<1x1x16xf32> to vector<1x16xf32>
    %16 = vector.broadcast %15 : vector<1x16xf32> to vector<64x16xf32>
    %17 = arith.addf %13, %16 : vector<64x16xf32>
    %18 = vector.shape_cast %17 : vector<64x16xf32> to vector<8x8x16xf32>
    %c2 = arith.constant 2 : index
    %c0_14 = arith.constant 0 : index
    %c0_15 = arith.constant 0 : index
    %19 = vector.load %arg2[%c2, %c0_14, %c0_15] : memref<3x16x16xbf16, #tpu.memory_space<vmem>>, vector<1x16x16xbf16>
    %20 = vector.shape_cast %19 : vector<1x16x16xbf16> to vector<16x16xbf16>
    %cst_16 = arith.constant dense<0.000000e+00> : vector<64x16xf32>
    %21 = tpu.matmul %2, %20, %cst_16 {dimension_numbers = #tpu.dot_dimension_numbers<[1], [0], [0], [1], [0, 0, 1, 1], [], []>} : vector<64x16xbf16>, vector<16x16xbf16>, vector<64x16xf32> -> vector<64x16xf32>
    %c2_17 = arith.constant 2 : index
    %c0_18 = arith.constant 0 : index
    %c0_19 = arith.constant 0 : index
    %22 = vector.load %arg3[%c2_17, %c0_18, %c0_19] : memref<3x1x16xf32, #tpu.memory_space<vmem>>, vector<1x1x16xf32>
    %23 = vector.shape_cast %22 : vector<1x1x16xf32> to vector<1x16xf32>
    %24 = vector.broadcast %23 : vector<1x16xf32> to vector<64x16xf32>
    %25 = arith.addf %21, %24 : vector<64x16xf32>
    %26 = vector.shape_cast %25 : vector<64x16xf32> to vector<8x8x16xf32>
    %27 = arith.truncf %10 : vector<8x8x16xf32> to vector<8x8x16xbf16>
    %28 = arith.truncf %18 : vector<8x8x16xf32> to vector<8x8x16xbf16>
    "tpu.trace_start"() <{level = 10 : i32, message = "btd,bsd->bts"}> : () -> ()
    %cst_20 = arith.constant dense<0.000000e+00> : vector<8x8x8xf32>
    %29 = tpu.matmul %27, %28, %cst_20 {dimension_numbers = #tpu.dot_dimension_numbers<[2], [2], [1], [1], [0, 0, 0, 1, 1, 1], [0], [0]>} : vector<8x8x16xbf16>, vector<8x8x16xbf16>, vector<8x8x8xf32> -> vector<8x8x8xf32>
    "tpu.trace_stop"() : () -> ()
    %cst_21 = arith.constant 2.500000e-01 : f32
    %30 = vector.broadcast %cst_21 : f32 to vector<8x8x8xf32>
    %31 = arith.mulf %29, %30 : vector<8x8x8xf32>
    %cst_22 = arith.constant dense<0xFF800000> : vector<8x8xf32>
    %32 = vector.multi_reduction <maximumf>, %31, %cst_22 [2] : vector<8x8x8xf32> to vector<8x8xf32>
    %33 = vector.shape_cast %32 : vector<8x8xf32> to vector<8x8x1xf32>
    %34 = vector.broadcast %33 : vector<8x8x1xf32> to vector<8x8x8xf32>
    %35 = arith.subf %31, %34 : vector<8x8x8xf32>
    %36 = math.exp %35 : vector<8x8x8xf32>
    %cst_23 = arith.constant dense<0.000000e+00> : vector<8x8xf32>
    %37 = vector.multi_reduction <add>, %36, %cst_23 [2] : vector<8x8x8xf32> to vector<8x8xf32>
    %38 = vector.shape_cast %37 : vector<8x8xf32> to vector<8x8x1xf32>
    %39 = tpu.reciprocal %38 {approx = true} : vector<8x8x1xf32> -> vector<8x8x1xf32>
    %40 = vector.broadcast %39 : vector<8x8x1xf32> to vector<8x8x8xf32>
    %41 = arith.mulf %36, %40 : vector<8x8x8xf32>
    %42 = arith.truncf %41 : vector<8x8x8xf32> to vector<8x8x8xbf16>
    %43 = arith.truncf %26 : vector<8x8x16xf32> to vector<8x8x16xbf16>
    "tpu.trace_start"() <{level = 10 : i32, message = "bts,bsd->btd"}> : () -> ()
    %cst_24 = arith.constant dense<0.000000e+00> : vector<8x8x16xf32>
    %44 = tpu.matmul %42, %43, %cst_24 {dimension_numbers = #tpu.dot_dimension_numbers<[2], [1], [1], [2], [0, 0, 0, 1, 1, 2], [0], [0]>} : vector<8x8x8xbf16>, vector<8x8x16xbf16>, vector<8x8x16xf32> -> vector<8x8x16xf32>
    "tpu.trace_stop"() : () -> ()
    %45 = arith.addf %44, %0 : vector<8x8x16xf32>
    %46 = vector.shape_cast %45 : vector<8x8x16xf32> to vector<64x16xf32>
    %47 = arith.truncf %46 : vector<64x16xf32> to vector<64x16xbf16>
    %c0_25 = arith.constant 0 : index
    %c0_26 = arith.constant 0 : index
    %48 = vector.load %arg4[%c0_25, %c0_26] : memref<16x16xbf16, #tpu.memory_space<vmem>>, vector<16x16xbf16>
    %cst_27 = arith.constant dense<0.000000e+00> : vector<64x16xf32>
    %49 = tpu.matmul %47, %48, %cst_27 {dimension_numbers = #tpu.dot_dimension_numbers<[1], [0], [0], [1], [0, 0, 1, 1], [], []>} : vector<64x16xbf16>, vector<16x16xbf16>, vector<64x16xf32> -> vector<64x16xf32>
    %c0_28 = arith.constant 0 : index
    %c0_29 = arith.constant 0 : index
    %50 = vector.load %arg5[%c0_28, %c0_29] : memref<1x16xf32, #tpu.memory_space<vmem>>, vector<1x16xf32>
    %51 = vector.broadcast %50 : vector<1x16xf32> to vector<64x16xf32>
    %52 = arith.addf %49, %51 : vector<64x16xf32>
    %53 = vector.shape_cast %52 : vector<64x16xf32> to vector<8x8x16xf32>
    %54 = arith.addf %53, %0 : vector<8x8x16xf32>
    %c0_30 = arith.constant 0 : index
    %c0_31 = arith.constant 0 : index
    %c0_32 = arith.constant 0 : index
    %55 = vector.load %arg14[%c0_30, %c0_31, %c0_32] : memref<8x8x16xf32, #tpu.memory_space<vmem>>, vector<8x8x16xf32>
    tpu.vector_store %arg14[%c0_30, %c0_31, %c0_32], %54 {strides = array<i32>} : memref<8x8x16xf32, #tpu.memory_space<vmem>>, vector<8x8x16xf32>,
    %cst_33 = arith.constant 0.000000e+00 : f32
    %56 = vector.broadcast %cst_33 : f32 to vector<8x112xf32>
    %c0_34 = arith.constant 0 : index
    %c0_35 = arith.constant 0 : index
    %c0_36 = arith.constant 0 : index
    %57 = vector.load %arg14[%c0_34, %c0_35, %c0_36] : memref<8x8x16xf32, #tpu.memory_space<vmem>>, vector<8x1x16xf32>
    %58 = vector.shape_cast %57 : vector<8x1x16xf32> to vector<8x16xf32>
    %59 = tpu.concatenate %58, %56 in 1 : vector<8x16xf32>, vector<8x112xf32> -> vector<8x128xf32>
    %c0_37 = arith.constant 0 : index
    %c0_38 = arith.constant 0 : index
    %c0_39 = arith.constant 0 : index
    %60 = vector.load %arg13[%c0_37, %c0_38, %c0_39] : memref<8x8x128xf32, #tpu.memory_space<vmem>>, vector<1x8x128xf32>
    %61 = vector.shape_cast %60 : vector<1x8x128xf32> to vector<8x128xf32>
    %62 = vector.shape_cast %59 : vector<8x128xf32> to vector<1x8x128xf32>
    tpu.vector_store %arg13[%c0_37, %c0_38, %c0_39], %62 {strides = array<i32>} : memref<8x8x128xf32, #tpu.memory_space<vmem>>, vector<1x8x128xf32>,
    %c0_40 = arith.constant 0 : index
    %c1_41 = arith.constant 1 : index
    %c0_42 = arith.constant 0 : index
    %63 = vector.load %arg14[%c0_40, %c1_41, %c0_42] : memref<8x8x16xf32, #tpu.memory_space<vmem>>, vector<8x1x16xf32>
    %64 = vector.shape_cast %63 : vector<8x1x16xf32> to vector<8x16xf32>
    %65 = tpu.concatenate %64, %56 in 1 : vector<8x16xf32>, vector<8x112xf32> -> vector<8x128xf32>
    %c1_43 = arith.constant 1 : index
    %c0_44 = arith.constant 0 : index
    %c0_45 = arith.constant 0 : index
    %66 = vector.load %arg13[%c1_43, %c0_44, %c0_45] : memref<8x8x128xf32, #tpu.memory_space<vmem>>, vector<1x8x128xf32>
    %67 = vector.shape_cast %66 : vector<1x8x128xf32> to vector<8x128xf32>
    %68 = vector.shape_cast %65 : vector<8x128xf32> to vector<1x8x128xf32>
    tpu.vector_store %arg13[%c1_43, %c0_44, %c0_45], %68 {strides = array<i32>} : memref<8x8x128xf32, #tpu.memory_space<vmem>>, vector<1x8x128xf32>,
    %c0_46 = arith.constant 0 : index
    %c2_47 = arith.constant 2 : index
    %c0_48 = arith.constant 0 : index
    %69 = vector.load %arg14[%c0_46, %c2_47, %c0_48] : memref<8x8x16xf32, #tpu.memory_space<vmem>>, vector<8x1x16xf32>
    %70 = vector.shape_cast %69 : vector<8x1x16xf32> to vector<8x16xf32>
    %71 = tpu.concatenate %70, %56 in 1 : vector<8x16xf32>, vector<8x112xf32> -> vector<8x128xf32>
    %c2_49 = arith.constant 2 : index
    %c0_50 = arith.constant 0 : index
    %c0_51 = arith.constant 0 : index
    %72 = vector.load %arg13[%c2_49, %c0_50, %c0_51] : memref<8x8x128xf32, #tpu.memory_space<vmem>>, vector<1x8x128xf32>
    %73 = vector.shape_cast %72 : vector<1x8x128xf32> to vector<8x128xf32>
    %74 = vector.shape_cast %71 : vector<8x128xf32> to vector<1x8x128xf32>
    tpu.vector_store %arg13[%c2_49, %c0_50, %c0_51], %74 {strides = array<i32>} : memref<8x8x128xf32, #tpu.memory_space<vmem>>, vector<1x8x128xf32>,
    %c0_52 = arith.constant 0 : index
    %c3 = arith.constant 3 : index
    %c0_53 = arith.constant 0 : index
    %75 = vector.load %arg14[%c0_52, %c3, %c0_53] : memref<8x8x16xf32, #tpu.memory_space<vmem>>, vector<8x1x16xf32>
    %76 = vector.shape_cast %75 : vector<8x1x16xf32> to vector<8x16xf32>
    %77 = tpu.concatenate %76, %56 in 1 : vector<8x16xf32>, vector<8x112xf32> -> vector<8x128xf32>
    %c3_54 = arith.constant 3 : index
    %c0_55 = arith.constant 0 : index
    %c0_56 = arith.constant 0 : index
    %78 = vector.load %arg13[%c3_54, %c0_55, %c0_56] : memref<8x8x128xf32, #tpu.memory_space<vmem>>, vector<1x8x128xf32>
    %79 = vector.shape_cast %78 : vector<1x8x128xf32> to vector<8x128xf32>
    %80 = vector.shape_cast %77 : vector<8x128xf32> to vector<1x8x128xf32>
    tpu.vector_store %arg13[%c3_54, %c0_55, %c0_56], %80 {strides = array<i32>} : memref<8x8x128xf32, #tpu.memory_space<vmem>>, vector<1x8x128xf32>,
    %c0_57 = arith.constant 0 : index
    %c4 = arith.constant 4 : index
    %c0_58 = arith.constant 0 : index
    %81 = vector.load %arg14[%c0_57, %c4, %c0_58] : memref<8x8x16xf32, #tpu.memory_space<vmem>>, vector<8x1x16xf32>
    %82 = vector.shape_cast %81 : vector<8x1x16xf32> to vector<8x16xf32>
    %83 = tpu.concatenate %82, %56 in 1 : vector<8x16xf32>, vector<8x112xf32> -> vector<8x128xf32>
    %c4_59 = arith.constant 4 : index
    %c0_60 = arith.constant 0 : index
    %c0_61 = arith.constant 0 : index
    %84 = vector.load %arg13[%c4_59, %c0_60, %c0_61] : memref<8x8x128xf32, #tpu.memory_space<vmem>>, vector<1x8x128xf32>
    %85 = vector.shape_cast %84 : vector<1x8x128xf32> to vector<8x128xf32>
    %86 = vector.shape_cast %83 : vector<8x128xf32> to vector<1x8x128xf32>
    tpu.vector_store %arg13[%c4_59, %c0_60, %c0_61], %86 {strides = array<i32>} : memref<8x8x128xf32, #tpu.memory_space<vmem>>, vector<1x8x128xf32>,
    %c0_62 = arith.constant 0 : index
    %c5 = arith.constant 5 : index
    %c0_63 = arith.constant 0 : index
    %87 = vector.load %arg14[%c0_62, %c5, %c0_63] : memref<8x8x16xf32, #tpu.memory_space<vmem>>, vector<8x1x16xf32>
    %88 = vector.shape_cast %87 : vector<8x1x16xf32> to vector<8x16xf32>
    %89 = tpu.concatenate %88, %56 in 1 : vector<8x16xf32>, vector<8x112xf32> -> vector<8x128xf32>
    %c5_64 = arith.constant 5 : index
    %c0_65 = arith.constant 0 : index
    %c0_66 = arith.constant 0 : index
    %90 = vector.load %arg13[%c5_64, %c0_65, %c0_66] : memref<8x8x128xf32, #tpu.memory_space<vmem>>, vector<1x8x128xf32>
    %91 = vector.shape_cast %90 : vector<1x8x128xf32> to vector<8x128xf32>
    %92 = vector.shape_cast %89 : vector<8x128xf32> to vector<1x8x128xf32>
    tpu.vector_store %arg13[%c5_64, %c0_65, %c0_66], %92 {strides = array<i32>} : memref<8x8x128xf32, #tpu.memory_space<vmem>>, vector<1x8x128xf32>,
    %c0_67 = arith.constant 0 : index
    %c6 = arith.constant 6 : index
    %c0_68 = arith.constant 0 : index
    %93 = vector.load %arg14[%c0_67, %c6, %c0_68] : memref<8x8x16xf32, #tpu.memory_space<vmem>>, vector<8x1x16xf32>
    %94 = vector.shape_cast %93 : vector<8x1x16xf32> to vector<8x16xf32>
    %95 = tpu.concatenate %94, %56 in 1 : vector<8x16xf32>, vector<8x112xf32> -> vector<8x128xf32>
    %c6_69 = arith.constant 6 : index
    %c0_70 = arith.constant 0 : index
    %c0_71 = arith.constant 0 : index
    %96 = vector.load %arg13[%c6_69, %c0_70, %c0_71] : memref<8x8x128xf32, #tpu.memory_space<vmem>>, vector<1x8x128xf32>
    %97 = vector.shape_cast %96 : vector<1x8x128xf32> to vector<8x128xf32>
    %98 = vector.shape_cast %95 : vector<8x128xf32> to vector<1x8x128xf32>
    tpu.vector_store %arg13[%c6_69, %c0_70, %c0_71], %98 {strides = array<i32>} : memref<8x8x128xf32, #tpu.memory_space<vmem>>, vector<1x8x128xf32>,
    %c0_72 = arith.constant 0 : index
    %c7 = arith.constant 7 : index
    %c0_73 = arith.constant 0 : index
    %99 = vector.load %arg14[%c0_72, %c7, %c0_73] : memref<8x8x16xf32, #tpu.memory_space<vmem>>, vector<8x1x16xf32>
    %100 = vector.shape_cast %99 : vector<8x1x16xf32> to vector<8x16xf32>
    %101 = tpu.concatenate %100, %56 in 1 : vector<8x16xf32>, vector<8x112xf32> -> vector<8x128xf32>
    %c7_74 = arith.constant 7 : index
    %c0_75 = arith.constant 0 : index
    %c0_76 = arith.constant 0 : index
    %102 = vector.load %arg13[%c7_74, %c0_75, %c0_76] : memref<8x8x128xf32, #tpu.memory_space<vmem>>, vector<1x8x128xf32>
    %103 = vector.shape_cast %102 : vector<1x8x128xf32> to vector<8x128xf32>
    %104 = vector.shape_cast %101 : vector<8x128xf32> to vector<1x8x128xf32>
    tpu.vector_store %arg13[%c7_74, %c0_75, %c0_76], %104 {strides = array<i32>} : memref<8x8x128xf32, #tpu.memory_space<vmem>>, vector<1x8x128xf32>,
    %c0_77 = arith.constant 0 : index
    %c0_78 = arith.constant 0 : index
    %c0_79 = arith.constant 0 : index
    %105 = vector.load %arg13[%c0_77, %c0_78, %c0_79] : memref<8x8x128xf32, #tpu.memory_space<vmem>>, vector<8x8x128xf32>
    %106 = vector.shape_cast %105 : vector<8x8x128xf32> to vector<64x128xf32>
    %107 = arith.truncf %106 : vector<64x128xf32> to vector<64x128xbf16>
    %c0_80 = arith.constant 0 : index
    %c0_81 = arith.constant 0 : index
    %c0_82 = arith.constant 0 : index
    %108 = vector.load %arg6[%c0_80, %c0_81, %c0_82] : memref<2x128x512xbf16, #tpu.memory_space<vmem>>, vector<1x128x512xbf16>
    %109 = vector.shape_cast %108 : vector<1x128x512xbf16> to vector<128x512xbf16>
    %cst_83 = arith.constant dense<0.000000e+00> : vector<64x512xf32>
    %110 = tpu.matmul %107, %109, %cst_83 {dimension_numbers = #tpu.dot_dimension_numbers<[1], [0], [0], [1], [0, 0, 1, 1], [], []>} : vector<64x128xbf16>, vector<128x512xbf16>, vector<64x512xf32> -> vector<64x512xf32>
    %c0_84 = arith.constant 0 : index
    %c0_85 = arith.constant 0 : index
    %c0_86 = arith.constant 0 : index
    %111 = vector.load %arg8[%c0_84, %c0_85, %c0_86] : memref<2x1x512xf32, #tpu.memory_space<vmem>>, vector<1x1x512xf32>
    %112 = vector.shape_cast %111 : vector<1x1x512xf32> to vector<1x512xf32>
    %113 = vector.broadcast %112 : vector<1x512xf32> to vector<64x512xf32>
    %114 = arith.addf %110, %113 : vector<64x512xf32>
    %115 = vector.shape_cast %114 : vector<64x512xf32> to vector<8x8x512xf32>
    %c0_87 = arith.constant 0 : index
    %c0_88 = arith.constant 0 : index
    %c0_89 = arith.constant 0 : index
    %116 = vector.load %arg12[%c0_87, %c0_88, %c0_89] : memref<8x8x512xf32, #tpu.memory_space<vmem>>, vector<8x8x512xf32>
    tpu.vector_store %arg12[%c0_87, %c0_88, %c0_89], %115 {strides = array<i32>} : memref<8x8x512xf32, #tpu.memory_space<vmem>>, vector<8x8x512xf32>,
    %cst_90 = arith.constant 0.000000e+00 : f32
    %117 = vector.broadcast %cst_90 : f32 to vector<8x128xf32>
    %cst_91 = arith.constant 0.000000e+00 : f32
    %118 = vector.broadcast %cst_91 : f32 to vector<8x128xf32>
    %c0_92 = arith.constant 0 : index
    %c0_93 = arith.constant 0 : index
    %c0_94 = arith.constant 0 : index
    %119 = vector.load %arg12[%c0_92, %c0_93, %c0_94] : memref<8x8x512xf32, #tpu.memory_space<vmem>>, vector<1x8x512xf32>
    %120 = vector.shape_cast %119 : vector<1x8x512xf32> to vector<8x512xf32>
    %121 = arith.truncf %117 : vector<8x128xf32> to vector<8x128xbf16>
    %c0_95 = arith.constant 0 : index
    %c0_96 = arith.constant 0 : index
    %c0_97 = arith.constant 0 : index
    %122 = vector.load %arg7[%c0_95, %c0_96, %c0_97] : memref<2x128x512xbf16, #tpu.memory_space<vmem>>, vector<1x128x512xbf16>
    %123 = vector.shape_cast %122 : vector<1x128x512xbf16> to vector<128x512xbf16>
    %cst_98 = arith.constant dense<0.000000e+00> : vector<8x512xf32>
    %124 = tpu.matmul %121, %123, %cst_98 {dimension_numbers = #tpu.dot_dimension_numbers<[1], [0], [0], [1], [0, 0, 1, 1], [], []>} : vector<8x128xbf16>, vector<128x512xbf16>, vector<8x512xf32> -> vector<8x512xf32>
    %125 = arith.addf %120, %124 : vector<8x512xf32>
    %126 = vector.extract_strided_slice %125 {offsets = [0, 0], sizes = [8, 128], strides = [1, 1]} : vector<8x512xf32> to vector<8x128xf32>
    %127 = arith.negf %126 : vector<8x128xf32>
    %128 = math.exp %127 : vector<8x128xf32>
    %cst_99 = arith.constant 1.000000e+00 : f32
    %129 = vector.broadcast %cst_99 : f32 to vector<8x128xf32>
    %130 = arith.addf %129, %128 : vector<8x128xf32>
    %131 = arith.divf %129, %130 : vector<8x128xf32>
    %132 = vector.extract_strided_slice %125 {offsets = [0, 128], sizes = [8, 128], strides = [1, 1]} : vector<8x512xf32> to vector<8x128xf32>
    %133 = arith.negf %132 : vector<8x128xf32>
    %134 = math.exp %133 : vector<8x128xf32>
    %cst_100 = arith.constant 1.000000e+00 : f32
    %135 = vector.broadcast %cst_100 : f32 to vector<8x128xf32>
    %136 = arith.addf %135, %134 : vector<8x128xf32>
    %137 = arith.divf %135, %136 : vector<8x128xf32>
    %138 = vector.extract_strided_slice %125 {offsets = [0, 256], sizes = [8, 128], strides = [1, 1]} : vector<8x512xf32> to vector<8x128xf32>
    %139 = math.tanh %138 : vector<8x128xf32>
    %140 = vector.extract_strided_slice %125 {offsets = [0, 384], sizes = [8, 128], strides = [1, 1]} : vector<8x512xf32> to vector<8x128xf32>
    %141 = arith.negf %140 : vector<8x128xf32>
    %142 = math.exp %141 : vector<8x128xf32>
    %cst_101 = arith.constant 1.000000e+00 : f32
    %143 = vector.broadcast %cst_101 : f32 to vector<8x128xf32>
    %144 = arith.addf %143, %142 : vector<8x128xf32>
    %145 = arith.divf %143, %144 : vector<8x128xf32>
    %146 = arith.mulf %137, %118 : vector<8x128xf32>
    %147 = arith.mulf %131, %139 : vector<8x128xf32>
    %148 = arith.addf %146, %147 : vector<8x128xf32>
    %149 = math.tanh %148 : vector<8x128xf32>
    %150 = arith.mulf %145, %149 : vector<8x128xf32>
    %c0_102 = arith.constant 0 : index
    %c0_103 = arith.constant 0 : index
    %c0_104 = arith.constant 0 : index
    %151 = vector.load %arg13[%c0_102, %c0_103, %c0_104] : memref<8x8x128xf32, #tpu.memory_space<vmem>>, vector<1x8x128xf32>
    %152 = vector.shape_cast %151 : vector<1x8x128xf32> to vector<8x128xf32>
    %153 = vector.shape_cast %150 : vector<8x128xf32> to vector<1x8x128xf32>
    tpu.vector_store %arg13[%c0_102, %c0_103, %c0_104], %153 {strides = array<i32>} : memref<8x8x128xf32, #tpu.memory_space<vmem>>, vector<1x8x128xf32>,
    %c1_105 = arith.constant 1 : index
    %c0_106 = arith.constant 0 : index
    %c0_107 = arith.constant 0 : index
    %154 = vector.load %arg12[%c1_105, %c0_106, %c0_107] : memref<8x8x512xf32, #tpu.memory_space<vmem>>, vector<1x8x512xf32>
    %155 = vector.shape_cast %154 : vector<1x8x512xf32> to vector<8x512xf32>
    %156 = arith.truncf %150 : vector<8x128xf32> to vector<8x128xbf16>
    %c0_108 = arith.constant 0 : index
    %c0_109 = arith.constant 0 : index
    %c0_110 = arith.constant 0 : index
    %157 = vector.load %arg7[%c0_108, %c0_109, %c0_110] : memref<2x128x512xbf16, #tpu.memory_space<vmem>>, vector<1x128x512xbf16>
    %158 = vector.shape_cast %157 : vector<1x128x512xbf16> to vector<128x512xbf16>
    %cst_111 = arith.constant dense<0.000000e+00> : vector<8x512xf32>
    %159 = tpu.matmul %156, %158, %cst_111 {dimension_numbers = #tpu.dot_dimension_numbers<[1], [0], [0], [1], [0, 0, 1, 1], [], []>} : vector<8x128xbf16>, vector<128x512xbf16>, vector<8x512xf32> -> vector<8x512xf32>
    %160 = arith.addf %155, %159 : vector<8x512xf32>
    %161 = vector.extract_strided_slice %160 {offsets = [0, 0], sizes = [8, 128], strides = [1, 1]} : vector<8x512xf32> to vector<8x128xf32>
    %162 = arith.negf %161 : vector<8x128xf32>
    %163 = math.exp %162 : vector<8x128xf32>
    %cst_112 = arith.constant 1.000000e+00 : f32
    %164 = vector.broadcast %cst_112 : f32 to vector<8x128xf32>
    %165 = arith.addf %164, %163 : vector<8x128xf32>
    %166 = arith.divf %164, %165 : vector<8x128xf32>
    %167 = vector.extract_strided_slice %160 {offsets = [0, 128], sizes = [8, 128], strides = [1, 1]} : vector<8x512xf32> to vector<8x128xf32>
    %168 = arith.negf %167 : vector<8x128xf32>
    %169 = math.exp %168 : vector<8x128xf32>
    %cst_113 = arith.constant 1.000000e+00 : f32
    %170 = vector.broadcast %cst_113 : f32 to vector<8x128xf32>
    %171 = arith.addf %170, %169 : vector<8x128xf32>
    %172 = arith.divf %170, %171 : vector<8x128xf32>
    %173 = vector.extract_strided_slice %160 {offsets = [0, 256], sizes = [8, 128], strides = [1, 1]} : vector<8x512xf32> to vector<8x128xf32>
    %174 = math.tanh %173 : vector<8x128xf32>
    %175 = vector.extract_strided_slice %160 {offsets = [0, 384], sizes = [8, 128], strides = [1, 1]} : vector<8x512xf32> to vector<8x128xf32>
    %176 = arith.negf %175 : vector<8x128xf32>
    %177 = math.exp %176 : vector<8x128xf32>
    %cst_114 = arith.constant 1.000000e+00 : f32
    %178 = vector.broadcast %cst_114 : f32 to vector<8x128xf32>
    %179 = arith.addf %178, %177 : vector<8x128xf32>
    %180 = arith.divf %178, %179 : vector<8x128xf32>
    %181 = arith.mulf %172, %148 : vector<8x128xf32>
    %182 = arith.mulf %166, %174 : vector<8x128xf32>
    %183 = arith.addf %181, %182 : vector<8x128xf32>
    %184 = math.tanh %183 : vector<8x128xf32>
    %185 = arith.mulf %180, %184 : vector<8x128xf32>
    %c1_115 = arith.constant 1 : index
    %c0_116 = arith.constant 0 : index
    %c0_117 = arith.constant 0 : index
    %186 = vector.load %arg13[%c1_115, %c0_116, %c0_117] : memref<8x8x128xf32, #tpu.memory_space<vmem>>, vector<1x8x128xf32>
    %187 = vector.shape_cast %186 : vector<1x8x128xf32> to vector<8x128xf32>
    %188 = vector.shape_cast %185 : vector<8x128xf32> to vector<1x8x128xf32>
    tpu.vector_store %arg13[%c1_115, %c0_116, %c0_117], %188 {strides = array<i32>} : memref<8x8x128xf32, #tpu.memory_space<vmem>>, vector<1x8x128xf32>,
    %c2_118 = arith.constant 2 : index
    %c0_119 = arith.constant 0 : index
    %c0_120 = arith.constant 0 : index
    %189 = vector.load %arg12[%c2_118, %c0_119, %c0_120] : memref<8x8x512xf32, #tpu.memory_space<vmem>>, vector<1x8x512xf32>
    %190 = vector.shape_cast %189 : vector<1x8x512xf32> to vector<8x512xf32>
    %191 = arith.truncf %185 : vector<8x128xf32> to vector<8x128xbf16>
    %c0_121 = arith.constant 0 : index
    %c0_122 = arith.constant 0 : index
    %c0_123 = arith.constant 0 : index
    %192 = vector.load %arg7[%c0_121, %c0_122, %c0_123] : memref<2x128x512xbf16, #tpu.memory_space<vmem>>, vector<1x128x512xbf16>
    %193 = vector.shape_cast %192 : vector<1x128x512xbf16> to vector<128x512xbf16>
    %cst_124 = arith.constant dense<0.000000e+00> : vector<8x512xf32>
    %194 = tpu.matmul %191, %193, %cst_124 {dimension_numbers = #tpu.dot_dimension_numbers<[1], [0], [0], [1], [0, 0, 1, 1], [], []>} : vector<8x128xbf16>, vector<128x512xbf16>, vector<8x512xf32> -> vector<8x512xf32>
    %195 = arith.addf %190, %194 : vector<8x512xf32>
    %196 = vector.extract_strided_slice %195 {offsets = [0, 0], sizes = [8, 128], strides = [1, 1]} : vector<8x512xf32> to vector<8x128xf32>
    %197 = arith.negf %196 : vector<8x128xf32>
    %198 = math.exp %197 : vector<8x128xf32>
    %cst_125 = arith.constant 1.000000e+00 : f32
    %199 = vector.broadcast %cst_125 : f32 to vector<8x128xf32>
    %200 = arith.addf %199, %198 : vector<8x128xf32>
    %201 = arith.divf %199, %200 : vector<8x128xf32>
    %202 = vector.extract_strided_slice %195 {offsets = [0, 128], sizes = [8, 128], strides = [1, 1]} : vector<8x512xf32> to vector<8x128xf32>
    %203 = arith.negf %202 : vector<8x128xf32>
    %204 = math.exp %203 : vector<8x128xf32>
    %cst_126 = arith.constant 1.000000e+00 : f32
    %205 = vector.broadcast %cst_126 : f32 to vector<8x128xf32>
    %206 = arith.addf %205, %204 : vector<8x128xf32>
    %207 = arith.divf %205, %206 : vector<8x128xf32>
    %208 = vector.extract_strided_slice %195 {offsets = [0, 256], sizes = [8, 128], strides = [1, 1]} : vector<8x512xf32> to vector<8x128xf32>
    %209 = math.tanh %208 : vector<8x128xf32>
    %210 = vector.extract_strided_slice %195 {offsets = [0, 384], sizes = [8, 128], strides = [1, 1]} : vector<8x512xf32> to vector<8x128xf32>
    %211 = arith.negf %210 : vector<8x128xf32>
    %212 = math.exp %211 : vector<8x128xf32>
    %cst_127 = arith.constant 1.000000e+00 : f32
    %213 = vector.broadcast %cst_127 : f32 to vector<8x128xf32>
    %214 = arith.addf %213, %212 : vector<8x128xf32>
    %215 = arith.divf %213, %214 : vector<8x128xf32>
    %216 = arith.mulf %207, %183 : vector<8x128xf32>
    %217 = arith.mulf %201, %209 : vector<8x128xf32>
    %218 = arith.addf %216, %217 : vector<8x128xf32>
    %219 = math.tanh %218 : vector<8x128xf32>
    %220 = arith.mulf %215, %219 : vector<8x128xf32>
    %c2_128 = arith.constant 2 : index
    %c0_129 = arith.constant 0 : index
    %c0_130 = arith.constant 0 : index
    %221 = vector.load %arg13[%c2_128, %c0_129, %c0_130] : memref<8x8x128xf32, #tpu.memory_space<vmem>>, vector<1x8x128xf32>
    %222 = vector.shape_cast %221 : vector<1x8x128xf32> to vector<8x128xf32>
    %223 = vector.shape_cast %220 : vector<8x128xf32> to vector<1x8x128xf32>
    tpu.vector_store %arg13[%c2_128, %c0_129, %c0_130], %223 {strides = array<i32>} : memref<8x8x128xf32, #tpu.memory_space<vmem>>, vector<1x8x128xf32>,
    %c3_131 = arith.constant 3 : index
    %c0_132 = arith.constant 0 : index
    %c0_133 = arith.constant 0 : index
    %224 = vector.load %arg12[%c3_131, %c0_132, %c0_133] : memref<8x8x512xf32, #tpu.memory_space<vmem>>, vector<1x8x512xf32>
    %225 = vector.shape_cast %224 : vector<1x8x512xf32> to vector<8x512xf32>
    %226 = arith.truncf %220 : vector<8x128xf32> to vector<8x128xbf16>
    %c0_134 = arith.constant 0 : index
    %c0_135 = arith.constant 0 : index
    %c0_136 = arith.constant 0 : index
    %227 = vector.load %arg7[%c0_134, %c0_135, %c0_136] : memref<2x128x512xbf16, #tpu.memory_space<vmem>>, vector<1x128x512xbf16>
    %228 = vector.shape_cast %227 : vector<1x128x512xbf16> to vector<128x512xbf16>
    %cst_137 = arith.constant dense<0.000000e+00> : vector<8x512xf32>
    %229 = tpu.matmul %226, %228, %cst_137 {dimension_numbers = #tpu.dot_dimension_numbers<[1], [0], [0], [1], [0, 0, 1, 1], [], []>} : vector<8x128xbf16>, vector<128x512xbf16>, vector<8x512xf32> -> vector<8x512xf32>
    %230 = arith.addf %225, %229 : vector<8x512xf32>
    %231 = vector.extract_strided_slice %230 {offsets = [0, 0], sizes = [8, 128], strides = [1, 1]} : vector<8x512xf32> to vector<8x128xf32>
    %232 = arith.negf %231 : vector<8x128xf32>
    %233 = math.exp %232 : vector<8x128xf32>
    %cst_138 = arith.constant 1.000000e+00 : f32
    %234 = vector.broadcast %cst_138 : f32 to vector<8x128xf32>
    %235 = arith.addf %234, %233 : vector<8x128xf32>
    %236 = arith.divf %234, %235 : vector<8x128xf32>
    %237 = vector.extract_strided_slice %230 {offsets = [0, 128], sizes = [8, 128], strides = [1, 1]} : vector<8x512xf32> to vector<8x128xf32>
    %238 = arith.negf %237 : vector<8x128xf32>
    %239 = math.exp %238 : vector<8x128xf32>
    %cst_139 = arith.constant 1.000000e+00 : f32
    %240 = vector.broadcast %cst_139 : f32 to vector<8x128xf32>
    %241 = arith.addf %240, %239 : vector<8x128xf32>
    %242 = arith.divf %240, %241 : vector<8x128xf32>
    %243 = vector.extract_strided_slice %230 {offsets = [0, 256], sizes = [8, 128], strides = [1, 1]} : vector<8x512xf32> to vector<8x128xf32>
    %244 = math.tanh %243 : vector<8x128xf32>
    %245 = vector.extract_strided_slice %230 {offsets = [0, 384], sizes = [8, 128], strides = [1, 1]} : vector<8x512xf32> to vector<8x128xf32>
    %246 = arith.negf %245 : vector<8x128xf32>
    %247 = math.exp %246 : vector<8x128xf32>
    %cst_140 = arith.constant 1.000000e+00 : f32
    %248 = vector.broadcast %cst_140 : f32 to vector<8x128xf32>
    %249 = arith.addf %248, %247 : vector<8x128xf32>
    %250 = arith.divf %248, %249 : vector<8x128xf32>
    %251 = arith.mulf %242, %218 : vector<8x128xf32>
    %252 = arith.mulf %236, %244 : vector<8x128xf32>
    %253 = arith.addf %251, %252 : vector<8x128xf32>
    %254 = math.tanh %253 : vector<8x128xf32>
    %255 = arith.mulf %250, %254 : vector<8x128xf32>
    %c3_141 = arith.constant 3 : index
    %c0_142 = arith.constant 0 : index
    %c0_143 = arith.constant 0 : index
    %256 = vector.load %arg13[%c3_141, %c0_142, %c0_143] : memref<8x8x128xf32, #tpu.memory_space<vmem>>, vector<1x8x128xf32>
    %257 = vector.shape_cast %256 : vector<1x8x128xf32> to vector<8x128xf32>
    %258 = vector.shape_cast %255 : vector<8x128xf32> to vector<1x8x128xf32>
    tpu.vector_store %arg13[%c3_141, %c0_142, %c0_143], %258 {strides = array<i32>} : memref<8x8x128xf32, #tpu.memory_space<vmem>>, vector<1x8x128xf32>,
    %c4_144 = arith.constant 4 : index
    %c0_145 = arith.constant 0 : index
    %c0_146 = arith.constant 0 : index
    %259 = vector.load %arg12[%c4_144, %c0_145, %c0_146] : memref<8x8x512xf32, #tpu.memory_space<vmem>>, vector<1x8x512xf32>
    %260 = vector.shape_cast %259 : vector<1x8x512xf32> to vector<8x512xf32>
    %261 = arith.truncf %255 : vector<8x128xf32> to vector<8x128xbf16>
    %c0_147 = arith.constant 0 : index
    %c0_148 = arith.constant 0 : index
    %c0_149 = arith.constant 0 : index
    %262 = vector.load %arg7[%c0_147, %c0_148, %c0_149] : memref<2x128x512xbf16, #tpu.memory_space<vmem>>, vector<1x128x512xbf16>
    %263 = vector.shape_cast %262 : vector<1x128x512xbf16> to vector<128x512xbf16>
    %cst_150 = arith.constant dense<0.000000e+00> : vector<8x512xf32>
    %264 = tpu.matmul %261, %263, %cst_150 {dimension_numbers = #tpu.dot_dimension_numbers<[1], [0], [0], [1], [0, 0, 1, 1], [], []>} : vector<8x128xbf16>, vector<128x512xbf16>, vector<8x512xf32> -> vector<8x512xf32>
    %265 = arith.addf %260, %264 : vector<8x512xf32>
    %266 = vector.extract_strided_slice %265 {offsets = [0, 0], sizes = [8, 128], strides = [1, 1]} : vector<8x512xf32> to vector<8x128xf32>
    %267 = arith.negf %266 : vector<8x128xf32>
    %268 = math.exp %267 : vector<8x128xf32>
    %cst_151 = arith.constant 1.000000e+00 : f32
    %269 = vector.broadcast %cst_151 : f32 to vector<8x128xf32>
    %270 = arith.addf %269, %268 : vector<8x128xf32>
    %271 = arith.divf %269, %270 : vector<8x128xf32>
    %272 = vector.extract_strided_slice %265 {offsets = [0, 128], sizes = [8, 128], strides = [1, 1]} : vector<8x512xf32> to vector<8x128xf32>
    %273 = arith.negf %272 : vector<8x128xf32>
    %274 = math.exp %273 : vector<8x128xf32>
    %cst_152 = arith.constant 1.000000e+00 : f32
    %275 = vector.broadcast %cst_152 : f32 to vector<8x128xf32>
    %276 = arith.addf %275, %274 : vector<8x128xf32>
    %277 = arith.divf %275, %276 : vector<8x128xf32>
    %278 = vector.extract_strided_slice %265 {offsets = [0, 256], sizes = [8, 128], strides = [1, 1]} : vector<8x512xf32> to vector<8x128xf32>
    %279 = math.tanh %278 : vector<8x128xf32>
    %280 = vector.extract_strided_slice %265 {offsets = [0, 384], sizes = [8, 128], strides = [1, 1]} : vector<8x512xf32> to vector<8x128xf32>
    %281 = arith.negf %280 : vector<8x128xf32>
    %282 = math.exp %281 : vector<8x128xf32>
    %cst_153 = arith.constant 1.000000e+00 : f32
    %283 = vector.broadcast %cst_153 : f32 to vector<8x128xf32>
    %284 = arith.addf %283, %282 : vector<8x128xf32>
    %285 = arith.divf %283, %284 : vector<8x128xf32>
    %286 = arith.mulf %277, %253 : vector<8x128xf32>
    %287 = arith.mulf %271, %279 : vector<8x128xf32>
    %288 = arith.addf %286, %287 : vector<8x128xf32>
    %289 = math.tanh %288 : vector<8x128xf32>
    %290 = arith.mulf %285, %289 : vector<8x128xf32>
    %c4_154 = arith.constant 4 : index
    %c0_155 = arith.constant 0 : index
    %c0_156 = arith.constant 0 : index
    %291 = vector.load %arg13[%c4_154, %c0_155, %c0_156] : memref<8x8x128xf32, #tpu.memory_space<vmem>>, vector<1x8x128xf32>
    %292 = vector.shape_cast %291 : vector<1x8x128xf32> to vector<8x128xf32>
    %293 = vector.shape_cast %290 : vector<8x128xf32> to vector<1x8x128xf32>
    tpu.vector_store %arg13[%c4_154, %c0_155, %c0_156], %293 {strides = array<i32>} : memref<8x8x128xf32, #tpu.memory_space<vmem>>, vector<1x8x128xf32>,
    %c5_157 = arith.constant 5 : index
    %c0_158 = arith.constant 0 : index
    %c0_159 = arith.constant 0 : index
    %294 = vector.load %arg12[%c5_157, %c0_158, %c0_159] : memref<8x8x512xf32, #tpu.memory_space<vmem>>, vector<1x8x512xf32>
    %295 = vector.shape_cast %294 : vector<1x8x512xf32> to vector<8x512xf32>
    %296 = arith.truncf %290 : vector<8x128xf32> to vector<8x128xbf16>
    %c0_160 = arith.constant 0 : index
    %c0_161 = arith.constant 0 : index
    %c0_162 = arith.constant 0 : index
    %297 = vector.load %arg7[%c0_160, %c0_161, %c0_162] : memref<2x128x512xbf16, #tpu.memory_space<vmem>>, vector<1x128x512xbf16>
    %298 = vector.shape_cast %297 : vector<1x128x512xbf16> to vector<128x512xbf16>
    %cst_163 = arith.constant dense<0.000000e+00> : vector<8x512xf32>
    %299 = tpu.matmul %296, %298, %cst_163 {dimension_numbers = #tpu.dot_dimension_numbers<[1], [0], [0], [1], [0, 0, 1, 1], [], []>} : vector<8x128xbf16>, vector<128x512xbf16>, vector<8x512xf32> -> vector<8x512xf32>
    %300 = arith.addf %295, %299 : vector<8x512xf32>
    %301 = vector.extract_strided_slice %300 {offsets = [0, 0], sizes = [8, 128], strides = [1, 1]} : vector<8x512xf32> to vector<8x128xf32>
    %302 = arith.negf %301 : vector<8x128xf32>
    %303 = math.exp %302 : vector<8x128xf32>
    %cst_164 = arith.constant 1.000000e+00 : f32
    %304 = vector.broadcast %cst_164 : f32 to vector<8x128xf32>
    %305 = arith.addf %304, %303 : vector<8x128xf32>
    %306 = arith.divf %304, %305 : vector<8x128xf32>
    %307 = vector.extract_strided_slice %300 {offsets = [0, 128], sizes = [8, 128], strides = [1, 1]} : vector<8x512xf32> to vector<8x128xf32>
    %308 = arith.negf %307 : vector<8x128xf32>
    %309 = math.exp %308 : vector<8x128xf32>
    %cst_165 = arith.constant 1.000000e+00 : f32
    %310 = vector.broadcast %cst_165 : f32 to vector<8x128xf32>
    %311 = arith.addf %310, %309 : vector<8x128xf32>
    %312 = arith.divf %310, %311 : vector<8x128xf32>
    %313 = vector.extract_strided_slice %300 {offsets = [0, 256], sizes = [8, 128], strides = [1, 1]} : vector<8x512xf32> to vector<8x128xf32>
    %314 = math.tanh %313 : vector<8x128xf32>
    %315 = vector.extract_strided_slice %300 {offsets = [0, 384], sizes = [8, 128], strides = [1, 1]} : vector<8x512xf32> to vector<8x128xf32>
    %316 = arith.negf %315 : vector<8x128xf32>
    %317 = math.exp %316 : vector<8x128xf32>
    %cst_166 = arith.constant 1.000000e+00 : f32
    %318 = vector.broadcast %cst_166 : f32 to vector<8x128xf32>
    %319 = arith.addf %318, %317 : vector<8x128xf32>
    %320 = arith.divf %318, %319 : vector<8x128xf32>
    %321 = arith.mulf %312, %288 : vector<8x128xf32>
    %322 = arith.mulf %306, %314 : vector<8x128xf32>
    %323 = arith.addf %321, %322 : vector<8x128xf32>
    %324 = math.tanh %323 : vector<8x128xf32>
    %325 = arith.mulf %320, %324 : vector<8x128xf32>
    %c5_167 = arith.constant 5 : index
    %c0_168 = arith.constant 0 : index
    %c0_169 = arith.constant 0 : index
    %326 = vector.load %arg13[%c5_167, %c0_168, %c0_169] : memref<8x8x128xf32, #tpu.memory_space<vmem>>, vector<1x8x128xf32>
    %327 = vector.shape_cast %326 : vector<1x8x128xf32> to vector<8x128xf32>
    %328 = vector.shape_cast %325 : vector<8x128xf32> to vector<1x8x128xf32>
    tpu.vector_store %arg13[%c5_167, %c0_168, %c0_169], %328 {strides = array<i32>} : memref<8x8x128xf32, #tpu.memory_space<vmem>>, vector<1x8x128xf32>,
    %c6_170 = arith.constant 6 : index
    %c0_171 = arith.constant 0 : index
    %c0_172 = arith.constant 0 : index
    %329 = vector.load %arg12[%c6_170, %c0_171, %c0_172] : memref<8x8x512xf32, #tpu.memory_space<vmem>>, vector<1x8x512xf32>
    %330 = vector.shape_cast %329 : vector<1x8x512xf32> to vector<8x512xf32>
    %331 = arith.truncf %325 : vector<8x128xf32> to vector<8x128xbf16>
    %c0_173 = arith.constant 0 : index
    %c0_174 = arith.constant 0 : index
    %c0_175 = arith.constant 0 : index
    %332 = vector.load %arg7[%c0_173, %c0_174, %c0_175] : memref<2x128x512xbf16, #tpu.memory_space<vmem>>, vector<1x128x512xbf16>
    %333 = vector.shape_cast %332 : vector<1x128x512xbf16> to vector<128x512xbf16>
    %cst_176 = arith.constant dense<0.000000e+00> : vector<8x512xf32>
    %334 = tpu.matmul %331, %333, %cst_176 {dimension_numbers = #tpu.dot_dimension_numbers<[1], [0], [0], [1], [0, 0, 1, 1], [], []>} : vector<8x128xbf16>, vector<128x512xbf16>, vector<8x512xf32> -> vector<8x512xf32>
    %335 = arith.addf %330, %334 : vector<8x512xf32>
    %336 = vector.extract_strided_slice %335 {offsets = [0, 0], sizes = [8, 128], strides = [1, 1]} : vector<8x512xf32> to vector<8x128xf32>
    %337 = arith.negf %336 : vector<8x128xf32>
    %338 = math.exp %337 : vector<8x128xf32>
    %cst_177 = arith.constant 1.000000e+00 : f32
    %339 = vector.broadcast %cst_177 : f32 to vector<8x128xf32>
    %340 = arith.addf %339, %338 : vector<8x128xf32>
    %341 = arith.divf %339, %340 : vector<8x128xf32>
    %342 = vector.extract_strided_slice %335 {offsets = [0, 128], sizes = [8, 128], strides = [1, 1]} : vector<8x512xf32> to vector<8x128xf32>
    %343 = arith.negf %342 : vector<8x128xf32>
    %344 = math.exp %343 : vector<8x128xf32>
    %cst_178 = arith.constant 1.000000e+00 : f32
    %345 = vector.broadcast %cst_178 : f32 to vector<8x128xf32>
    %346 = arith.addf %345, %344 : vector<8x128xf32>
    %347 = arith.divf %345, %346 : vector<8x128xf32>
    %348 = vector.extract_strided_slice %335 {offsets = [0, 256], sizes = [8, 128], strides = [1, 1]} : vector<8x512xf32> to vector<8x128xf32>
    %349 = math.tanh %348 : vector<8x128xf32>
    %350 = vector.extract_strided_slice %335 {offsets = [0, 384], sizes = [8, 128], strides = [1, 1]} : vector<8x512xf32> to vector<8x128xf32>
    %351 = arith.negf %350 : vector<8x128xf32>
    %352 = math.exp %351 : vector<8x128xf32>
    %cst_179 = arith.constant 1.000000e+00 : f32
    %353 = vector.broadcast %cst_179 : f32 to vector<8x128xf32>
    %354 = arith.addf %353, %352 : vector<8x128xf32>
    %355 = arith.divf %353, %354 : vector<8x128xf32>
    %356 = arith.mulf %347, %323 : vector<8x128xf32>
    %357 = arith.mulf %341, %349 : vector<8x128xf32>
    %358 = arith.addf %356, %357 : vector<8x128xf32>
    %359 = math.tanh %358 : vector<8x128xf32>
    %360 = arith.mulf %355, %359 : vector<8x128xf32>
    %c6_180 = arith.constant 6 : index
    %c0_181 = arith.constant 0 : index
    %c0_182 = arith.constant 0 : index
    %361 = vector.load %arg13[%c6_180, %c0_181, %c0_182] : memref<8x8x128xf32, #tpu.memory_space<vmem>>, vector<1x8x128xf32>
    %362 = vector.shape_cast %361 : vector<1x8x128xf32> to vector<8x128xf32>
    %363 = vector.shape_cast %360 : vector<8x128xf32> to vector<1x8x128xf32>
    tpu.vector_store %arg13[%c6_180, %c0_181, %c0_182], %363 {strides = array<i32>} : memref<8x8x128xf32, #tpu.memory_space<vmem>>, vector<1x8x128xf32>,
    %c7_183 = arith.constant 7 : index
    %c0_184 = arith.constant 0 : index
    %c0_185 = arith.constant 0 : index
    %364 = vector.load %arg12[%c7_183, %c0_184, %c0_185] : memref<8x8x512xf32, #tpu.memory_space<vmem>>, vector<1x8x512xf32>
    %365 = vector.shape_cast %364 : vector<1x8x512xf32> to vector<8x512xf32>
    %366 = arith.truncf %360 : vector<8x128xf32> to vector<8x128xbf16>
    %c0_186 = arith.constant 0 : index
    %c0_187 = arith.constant 0 : index
    %c0_188 = arith.constant 0 : index
    %367 = vector.load %arg7[%c0_186, %c0_187, %c0_188] : memref<2x128x512xbf16, #tpu.memory_space<vmem>>, vector<1x128x512xbf16>
    %368 = vector.shape_cast %367 : vector<1x128x512xbf16> to vector<128x512xbf16>
    %cst_189 = arith.constant dense<0.000000e+00> : vector<8x512xf32>
    %369 = tpu.matmul %366, %368, %cst_189 {dimension_numbers = #tpu.dot_dimension_numbers<[1], [0], [0], [1], [0, 0, 1, 1], [], []>} : vector<8x128xbf16>, vector<128x512xbf16>, vector<8x512xf32> -> vector<8x512xf32>
    %370 = arith.addf %365, %369 : vector<8x512xf32>
    %371 = vector.extract_strided_slice %370 {offsets = [0, 0], sizes = [8, 128], strides = [1, 1]} : vector<8x512xf32> to vector<8x128xf32>
    %372 = arith.negf %371 : vector<8x128xf32>
    %373 = math.exp %372 : vector<8x128xf32>
    %cst_190 = arith.constant 1.000000e+00 : f32
    %374 = vector.broadcast %cst_190 : f32 to vector<8x128xf32>
    %375 = arith.addf %374, %373 : vector<8x128xf32>
    %376 = arith.divf %374, %375 : vector<8x128xf32>
    %377 = vector.extract_strided_slice %370 {offsets = [0, 128], sizes = [8, 128], strides = [1, 1]} : vector<8x512xf32> to vector<8x128xf32>
    %378 = arith.negf %377 : vector<8x128xf32>
    %379 = math.exp %378 : vector<8x128xf32>
    %cst_191 = arith.constant 1.000000e+00 : f32
    %380 = vector.broadcast %cst_191 : f32 to vector<8x128xf32>
    %381 = arith.addf %380, %379 : vector<8x128xf32>
    %382 = arith.divf %380, %381 : vector<8x128xf32>
    %383 = vector.extract_strided_slice %370 {offsets = [0, 256], sizes = [8, 128], strides = [1, 1]} : vector<8x512xf32> to vector<8x128xf32>
    %384 = math.tanh %383 : vector<8x128xf32>
    %385 = vector.extract_strided_slice %370 {offsets = [0, 384], sizes = [8, 128], strides = [1, 1]} : vector<8x512xf32> to vector<8x128xf32>
    %386 = arith.negf %385 : vector<8x128xf32>
    %387 = math.exp %386 : vector<8x128xf32>
    %cst_192 = arith.constant 1.000000e+00 : f32
    %388 = vector.broadcast %cst_192 : f32 to vector<8x128xf32>
    %389 = arith.addf %388, %387 : vector<8x128xf32>
    %390 = arith.divf %388, %389 : vector<8x128xf32>
    %391 = arith.mulf %382, %358 : vector<8x128xf32>
    %392 = arith.mulf %376, %384 : vector<8x128xf32>
    %393 = arith.addf %391, %392 : vector<8x128xf32>
    %394 = math.tanh %393 : vector<8x128xf32>
    %395 = arith.mulf %390, %394 : vector<8x128xf32>
    %c7_193 = arith.constant 7 : index
    %c0_194 = arith.constant 0 : index
    %c0_195 = arith.constant 0 : index
    %396 = vector.load %arg13[%c7_193, %c0_194, %c0_195] : memref<8x8x128xf32, #tpu.memory_space<vmem>>, vector<1x8x128xf32>
    %397 = vector.shape_cast %396 : vector<1x8x128xf32> to vector<8x128xf32>
    %398 = vector.shape_cast %395 : vector<8x128xf32> to vector<1x8x128xf32>
    tpu.vector_store %arg13[%c7_193, %c0_194, %c0_195], %398 {strides = array<i32>} : memref<8x8x128xf32, #tpu.memory_space<vmem>>, vector<1x8x128xf32>,
    %c0_196 = arith.constant 0 : index
    %c0_197 = arith.constant 0 : index
    %c0_198 = arith.constant 0 : index
    %399 = vector.load %arg13[%c0_196, %c0_197, %c0_198] : memref<8x8x128xf32, #tpu.memory_space<vmem>>, vector<8x8x128xf32>
    %400 = vector.shape_cast %399 : vector<8x8x128xf32> to vector<64x128xf32>
    %401 = arith.truncf %400 : vector<64x128xf32> to vector<64x128xbf16>
    %c1_199 = arith.constant 1 : index
    %c0_200 = arith.constant 0 : index
    %c0_201 = arith.constant 0 : index
    %402 = vector.load %arg6[%c1_199, %c0_200, %c0_201] : memref<2x128x512xbf16, #tpu.memory_space<vmem>>, vector<1x128x512xbf16>
    %403 = vector.shape_cast %402 : vector<1x128x512xbf16> to vector<128x512xbf16>
    %cst_202 = arith.constant dense<0.000000e+00> : vector<64x512xf32>
    %404 = tpu.matmul %401, %403, %cst_202 {dimension_numbers = #tpu.dot_dimension_numbers<[1], [0], [0], [1], [0, 0, 1, 1], [], []>} : vector<64x128xbf16>, vector<128x512xbf16>, vector<64x512xf32> -> vector<64x512xf32>
    %c1_203 = arith.constant 1 : index
    %c0_204 = arith.constant 0 : index
    %c0_205 = arith.constant 0 : index
    %405 = vector.load %arg8[%c1_203, %c0_204, %c0_205] : memref<2x1x512xf32, #tpu.memory_space<vmem>>, vector<1x1x512xf32>
    %406 = vector.shape_cast %405 : vector<1x1x512xf32> to vector<1x512xf32>
    %407 = vector.broadcast %406 : vector<1x512xf32> to vector<64x512xf32>
    %408 = arith.addf %404, %407 : vector<64x512xf32>
    %409 = vector.shape_cast %408 : vector<64x512xf32> to vector<8x8x512xf32>
    %c0_206 = arith.constant 0 : index
    %c0_207 = arith.constant 0 : index
    %c0_208 = arith.constant 0 : index
    %410 = vector.load %arg12[%c0_206, %c0_207, %c0_208] : memref<8x8x512xf32, #tpu.memory_space<vmem>>, vector<8x8x512xf32>
    tpu.vector_store %arg12[%c0_206, %c0_207, %c0_208], %409 {strides = array<i32>} : memref<8x8x512xf32, #tpu.memory_space<vmem>>, vector<8x8x512xf32>,
    %cst_209 = arith.constant 0.000000e+00 : f32
    %411 = vector.broadcast %cst_209 : f32 to vector<8x128xf32>
    %cst_210 = arith.constant 0.000000e+00 : f32
    %412 = vector.broadcast %cst_210 : f32 to vector<8x128xf32>
    %c0_211 = arith.constant 0 : index
    %c0_212 = arith.constant 0 : index
    %c0_213 = arith.constant 0 : index
    %413 = vector.load %arg12[%c0_211, %c0_212, %c0_213] : memref<8x8x512xf32, #tpu.memory_space<vmem>>, vector<1x8x512xf32>
    %414 = vector.shape_cast %413 : vector<1x8x512xf32> to vector<8x512xf32>
    %415 = arith.truncf %411 : vector<8x128xf32> to vector<8x128xbf16>
    %c1_214 = arith.constant 1 : index
    %c0_215 = arith.constant 0 : index
    %c0_216 = arith.constant 0 : index
    %416 = vector.load %arg7[%c1_214, %c0_215, %c0_216] : memref<2x128x512xbf16, #tpu.memory_space<vmem>>, vector<1x128x512xbf16>
    %417 = vector.shape_cast %416 : vector<1x128x512xbf16> to vector<128x512xbf16>
    %cst_217 = arith.constant dense<0.000000e+00> : vector<8x512xf32>
    %418 = tpu.matmul %415, %417, %cst_217 {dimension_numbers = #tpu.dot_dimension_numbers<[1], [0], [0], [1], [0, 0, 1, 1], [], []>} : vector<8x128xbf16>, vector<128x512xbf16>, vector<8x512xf32> -> vector<8x512xf32>
    %419 = arith.addf %414, %418 : vector<8x512xf32>
    %420 = vector.extract_strided_slice %419 {offsets = [0, 0], sizes = [8, 128], strides = [1, 1]} : vector<8x512xf32> to vector<8x128xf32>
    %421 = arith.negf %420 : vector<8x128xf32>
    %422 = math.exp %421 : vector<8x128xf32>
    %cst_218 = arith.constant 1.000000e+00 : f32
    %423 = vector.broadcast %cst_218 : f32 to vector<8x128xf32>
    %424 = arith.addf %423, %422 : vector<8x128xf32>
    %425 = arith.divf %423, %424 : vector<8x128xf32>
    %426 = vector.extract_strided_slice %419 {offsets = [0, 128], sizes = [8, 128], strides = [1, 1]} : vector<8x512xf32> to vector<8x128xf32>
    %427 = arith.negf %426 : vector<8x128xf32>
    %428 = math.exp %427 : vector<8x128xf32>
    %cst_219 = arith.constant 1.000000e+00 : f32
    %429 = vector.broadcast %cst_219 : f32 to vector<8x128xf32>
    %430 = arith.addf %429, %428 : vector<8x128xf32>
    %431 = arith.divf %429, %430 : vector<8x128xf32>
    %432 = vector.extract_strided_slice %419 {offsets = [0, 256], sizes = [8, 128], strides = [1, 1]} : vector<8x512xf32> to vector<8x128xf32>
    %433 = math.tanh %432 : vector<8x128xf32>
    %434 = vector.extract_strided_slice %419 {offsets = [0, 384], sizes = [8, 128], strides = [1, 1]} : vector<8x512xf32> to vector<8x128xf32>
    %435 = arith.negf %434 : vector<8x128xf32>
    %436 = math.exp %435 : vector<8x128xf32>
    %cst_220 = arith.constant 1.000000e+00 : f32
    %437 = vector.broadcast %cst_220 : f32 to vector<8x128xf32>
    %438 = arith.addf %437, %436 : vector<8x128xf32>
    %439 = arith.divf %437, %438 : vector<8x128xf32>
    %440 = arith.mulf %431, %412 : vector<8x128xf32>
    %441 = arith.mulf %425, %433 : vector<8x128xf32>
    %442 = arith.addf %440, %441 : vector<8x128xf32>
    %443 = math.tanh %442 : vector<8x128xf32>
    %444 = arith.mulf %439, %443 : vector<8x128xf32>
    %c1_221 = arith.constant 1 : index
    %c0_222 = arith.constant 0 : index
    %c0_223 = arith.constant 0 : index
    %445 = vector.load %arg12[%c1_221, %c0_222, %c0_223] : memref<8x8x512xf32, #tpu.memory_space<vmem>>, vector<1x8x512xf32>
    %446 = vector.shape_cast %445 : vector<1x8x512xf32> to vector<8x512xf32>
    %447 = arith.truncf %444 : vector<8x128xf32> to vector<8x128xbf16>
    %c1_224 = arith.constant 1 : index
    %c0_225 = arith.constant 0 : index
    %c0_226 = arith.constant 0 : index
    %448 = vector.load %arg7[%c1_224, %c0_225, %c0_226] : memref<2x128x512xbf16, #tpu.memory_space<vmem>>, vector<1x128x512xbf16>
    %449 = vector.shape_cast %448 : vector<1x128x512xbf16> to vector<128x512xbf16>
    %cst_227 = arith.constant dense<0.000000e+00> : vector<8x512xf32>
    %450 = tpu.matmul %447, %449, %cst_227 {dimension_numbers = #tpu.dot_dimension_numbers<[1], [0], [0], [1], [0, 0, 1, 1], [], []>} : vector<8x128xbf16>, vector<128x512xbf16>, vector<8x512xf32> -> vector<8x512xf32>
    %451 = arith.addf %446, %450 : vector<8x512xf32>
    %452 = vector.extract_strided_slice %451 {offsets = [0, 0], sizes = [8, 128], strides = [1, 1]} : vector<8x512xf32> to vector<8x128xf32>
    %453 = arith.negf %452 : vector<8x128xf32>
    %454 = math.exp %453 : vector<8x128xf32>
    %cst_228 = arith.constant 1.000000e+00 : f32
    %455 = vector.broadcast %cst_228 : f32 to vector<8x128xf32>
    %456 = arith.addf %455, %454 : vector<8x128xf32>
    %457 = arith.divf %455, %456 : vector<8x128xf32>
    %458 = vector.extract_strided_slice %451 {offsets = [0, 128], sizes = [8, 128], strides = [1, 1]} : vector<8x512xf32> to vector<8x128xf32>
    %459 = arith.negf %458 : vector<8x128xf32>
    %460 = math.exp %459 : vector<8x128xf32>
    %cst_229 = arith.constant 1.000000e+00 : f32
    %461 = vector.broadcast %cst_229 : f32 to vector<8x128xf32>
    %462 = arith.addf %461, %460 : vector<8x128xf32>
    %463 = arith.divf %461, %462 : vector<8x128xf32>
    %464 = vector.extract_strided_slice %451 {offsets = [0, 256], sizes = [8, 128], strides = [1, 1]} : vector<8x512xf32> to vector<8x128xf32>
    %465 = math.tanh %464 : vector<8x128xf32>
    %466 = vector.extract_strided_slice %451 {offsets = [0, 384], sizes = [8, 128], strides = [1, 1]} : vector<8x512xf32> to vector<8x128xf32>
    %467 = arith.negf %466 : vector<8x128xf32>
    %468 = math.exp %467 : vector<8x128xf32>
    %cst_230 = arith.constant 1.000000e+00 : f32
    %469 = vector.broadcast %cst_230 : f32 to vector<8x128xf32>
    %470 = arith.addf %469, %468 : vector<8x128xf32>
    %471 = arith.divf %469, %470 : vector<8x128xf32>
    %472 = arith.mulf %463, %442 : vector<8x128xf32>
    %473 = arith.mulf %457, %465 : vector<8x128xf32>
    %474 = arith.addf %472, %473 : vector<8x128xf32>
    %475 = math.tanh %474 : vector<8x128xf32>
    %476 = arith.mulf %471, %475 : vector<8x128xf32>
    %c2_231 = arith.constant 2 : index
    %c0_232 = arith.constant 0 : index
    %c0_233 = arith.constant 0 : index
    %477 = vector.load %arg12[%c2_231, %c0_232, %c0_233] : memref<8x8x512xf32, #tpu.memory_space<vmem>>, vector<1x8x512xf32>
    %478 = vector.shape_cast %477 : vector<1x8x512xf32> to vector<8x512xf32>
    %479 = arith.truncf %476 : vector<8x128xf32> to vector<8x128xbf16>
    %c1_234 = arith.constant 1 : index
    %c0_235 = arith.constant 0 : index
    %c0_236 = arith.constant 0 : index
    %480 = vector.load %arg7[%c1_234, %c0_235, %c0_236] : memref<2x128x512xbf16, #tpu.memory_space<vmem>>, vector<1x128x512xbf16>
    %481 = vector.shape_cast %480 : vector<1x128x512xbf16> to vector<128x512xbf16>
    %cst_237 = arith.constant dense<0.000000e+00> : vector<8x512xf32>
    %482 = tpu.matmul %479, %481, %cst_237 {dimension_numbers = #tpu.dot_dimension_numbers<[1], [0], [0], [1], [0, 0, 1, 1], [], []>} : vector<8x128xbf16>, vector<128x512xbf16>, vector<8x512xf32> -> vector<8x512xf32>
    %483 = arith.addf %478, %482 : vector<8x512xf32>
    %484 = vector.extract_strided_slice %483 {offsets = [0, 0], sizes = [8, 128], strides = [1, 1]} : vector<8x512xf32> to vector<8x128xf32>
    %485 = arith.negf %484 : vector<8x128xf32>
    %486 = math.exp %485 : vector<8x128xf32>
    %cst_238 = arith.constant 1.000000e+00 : f32
    %487 = vector.broadcast %cst_238 : f32 to vector<8x128xf32>
    %488 = arith.addf %487, %486 : vector<8x128xf32>
    %489 = arith.divf %487, %488 : vector<8x128xf32>
    %490 = vector.extract_strided_slice %483 {offsets = [0, 128], sizes = [8, 128], strides = [1, 1]} : vector<8x512xf32> to vector<8x128xf32>
    %491 = arith.negf %490 : vector<8x128xf32>
    %492 = math.exp %491 : vector<8x128xf32>
    %cst_239 = arith.constant 1.000000e+00 : f32
    %493 = vector.broadcast %cst_239 : f32 to vector<8x128xf32>
    %494 = arith.addf %493, %492 : vector<8x128xf32>
    %495 = arith.divf %493, %494 : vector<8x128xf32>
    %496 = vector.extract_strided_slice %483 {offsets = [0, 256], sizes = [8, 128], strides = [1, 1]} : vector<8x512xf32> to vector<8x128xf32>
    %497 = math.tanh %496 : vector<8x128xf32>
    %498 = vector.extract_strided_slice %483 {offsets = [0, 384], sizes = [8, 128], strides = [1, 1]} : vector<8x512xf32> to vector<8x128xf32>
    %499 = arith.negf %498 : vector<8x128xf32>
    %500 = math.exp %499 : vector<8x128xf32>
    %cst_240 = arith.constant 1.000000e+00 : f32
    %501 = vector.broadcast %cst_240 : f32 to vector<8x128xf32>
    %502 = arith.addf %501, %500 : vector<8x128xf32>
    %503 = arith.divf %501, %502 : vector<8x128xf32>
    %504 = arith.mulf %495, %474 : vector<8x128xf32>
    %505 = arith.mulf %489, %497 : vector<8x128xf32>
    %506 = arith.addf %504, %505 : vector<8x128xf32>
    %507 = math.tanh %506 : vector<8x128xf32>
    %508 = arith.mulf %503, %507 : vector<8x128xf32>
    %c3_241 = arith.constant 3 : index
    %c0_242 = arith.constant 0 : index
    %c0_243 = arith.constant 0 : index
    %509 = vector.load %arg12[%c3_241, %c0_242, %c0_243] : memref<8x8x512xf32, #tpu.memory_space<vmem>>, vector<1x8x512xf32>
    %510 = vector.shape_cast %509 : vector<1x8x512xf32> to vector<8x512xf32>
    %511 = arith.truncf %508 : vector<8x128xf32> to vector<8x128xbf16>
    %c1_244 = arith.constant 1 : index
    %c0_245 = arith.constant 0 : index
    %c0_246 = arith.constant 0 : index
    %512 = vector.load %arg7[%c1_244, %c0_245, %c0_246] : memref<2x128x512xbf16, #tpu.memory_space<vmem>>, vector<1x128x512xbf16>
    %513 = vector.shape_cast %512 : vector<1x128x512xbf16> to vector<128x512xbf16>
    %cst_247 = arith.constant dense<0.000000e+00> : vector<8x512xf32>
    %514 = tpu.matmul %511, %513, %cst_247 {dimension_numbers = #tpu.dot_dimension_numbers<[1], [0], [0], [1], [0, 0, 1, 1], [], []>} : vector<8x128xbf16>, vector<128x512xbf16>, vector<8x512xf32> -> vector<8x512xf32>
    %515 = arith.addf %510, %514 : vector<8x512xf32>
    %516 = vector.extract_strided_slice %515 {offsets = [0, 0], sizes = [8, 128], strides = [1, 1]} : vector<8x512xf32> to vector<8x128xf32>
    %517 = arith.negf %516 : vector<8x128xf32>
    %518 = math.exp %517 : vector<8x128xf32>
    %cst_248 = arith.constant 1.000000e+00 : f32
    %519 = vector.broadcast %cst_248 : f32 to vector<8x128xf32>
    %520 = arith.addf %519, %518 : vector<8x128xf32>
    %521 = arith.divf %519, %520 : vector<8x128xf32>
    %522 = vector.extract_strided_slice %515 {offsets = [0, 128], sizes = [8, 128], strides = [1, 1]} : vector<8x512xf32> to vector<8x128xf32>
    %523 = arith.negf %522 : vector<8x128xf32>
    %524 = math.exp %523 : vector<8x128xf32>
    %cst_249 = arith.constant 1.000000e+00 : f32
    %525 = vector.broadcast %cst_249 : f32 to vector<8x128xf32>
    %526 = arith.addf %525, %524 : vector<8x128xf32>
    %527 = arith.divf %525, %526 : vector<8x128xf32>
    %528 = vector.extract_strided_slice %515 {offsets = [0, 256], sizes = [8, 128], strides = [1, 1]} : vector<8x512xf32> to vector<8x128xf32>
    %529 = math.tanh %528 : vector<8x128xf32>
    %530 = vector.extract_strided_slice %515 {offsets = [0, 384], sizes = [8, 128], strides = [1, 1]} : vector<8x512xf32> to vector<8x128xf32>
    %531 = arith.negf %530 : vector<8x128xf32>
    %532 = math.exp %531 : vector<8x128xf32>
    %cst_250 = arith.constant 1.000000e+00 : f32
    %533 = vector.broadcast %cst_250 : f32 to vector<8x128xf32>
    %534 = arith.addf %533, %532 : vector<8x128xf32>
    %535 = arith.divf %533, %534 : vector<8x128xf32>
    %536 = arith.mulf %527, %506 : vector<8x128xf32>
    %537 = arith.mulf %521, %529 : vector<8x128xf32>
    %538 = arith.addf %536, %537 : vector<8x128xf32>
    %539 = math.tanh %538 : vector<8x128xf32>
    %540 = arith.mulf %535, %539 : vector<8x128xf32>
    %c4_251 = arith.constant 4 : index
    %c0_252 = arith.constant 0 : index
    %c0_253 = arith.constant 0 : index
    %541 = vector.load %arg12[%c4_251, %c0_252, %c0_253] : memref<8x8x512xf32, #tpu.memory_space<vmem>>, vector<1x8x512xf32>
    %542 = vector.shape_cast %541 : vector<1x8x512xf32> to vector<8x512xf32>
    %543 = arith.truncf %540 : vector<8x128xf32> to vector<8x128xbf16>
    %c1_254 = arith.constant 1 : index
    %c0_255 = arith.constant 0 : index
    %c0_256 = arith.constant 0 : index
    %544 = vector.load %arg7[%c1_254, %c0_255, %c0_256] : memref<2x128x512xbf16, #tpu.memory_space<vmem>>, vector<1x128x512xbf16>
    %545 = vector.shape_cast %544 : vector<1x128x512xbf16> to vector<128x512xbf16>
    %cst_257 = arith.constant dense<0.000000e+00> : vector<8x512xf32>
    %546 = tpu.matmul %543, %545, %cst_257 {dimension_numbers = #tpu.dot_dimension_numbers<[1], [0], [0], [1], [0, 0, 1, 1], [], []>} : vector<8x128xbf16>, vector<128x512xbf16>, vector<8x512xf32> -> vector<8x512xf32>
    %547 = arith.addf %542, %546 : vector<8x512xf32>
    %548 = vector.extract_strided_slice %547 {offsets = [0, 0], sizes = [8, 128], strides = [1, 1]} : vector<8x512xf32> to vector<8x128xf32>
    %549 = arith.negf %548 : vector<8x128xf32>
    %550 = math.exp %549 : vector<8x128xf32>
    %cst_258 = arith.constant 1.000000e+00 : f32
    %551 = vector.broadcast %cst_258 : f32 to vector<8x128xf32>
    %552 = arith.addf %551, %550 : vector<8x128xf32>
    %553 = arith.divf %551, %552 : vector<8x128xf32>
    %554 = vector.extract_strided_slice %547 {offsets = [0, 128], sizes = [8, 128], strides = [1, 1]} : vector<8x512xf32> to vector<8x128xf32>
    %555 = arith.negf %554 : vector<8x128xf32>
    %556 = math.exp %555 : vector<8x128xf32>
    %cst_259 = arith.constant 1.000000e+00 : f32
    %557 = vector.broadcast %cst_259 : f32 to vector<8x128xf32>
    %558 = arith.addf %557, %556 : vector<8x128xf32>
    %559 = arith.divf %557, %558 : vector<8x128xf32>
    %560 = vector.extract_strided_slice %547 {offsets = [0, 256], sizes = [8, 128], strides = [1, 1]} : vector<8x512xf32> to vector<8x128xf32>
    %561 = math.tanh %560 : vector<8x128xf32>
    %562 = vector.extract_strided_slice %547 {offsets = [0, 384], sizes = [8, 128], strides = [1, 1]} : vector<8x512xf32> to vector<8x128xf32>
    %563 = arith.negf %562 : vector<8x128xf32>
    %564 = math.exp %563 : vector<8x128xf32>
    %cst_260 = arith.constant 1.000000e+00 : f32
    %565 = vector.broadcast %cst_260 : f32 to vector<8x128xf32>
    %566 = arith.addf %565, %564 : vector<8x128xf32>
    %567 = arith.divf %565, %566 : vector<8x128xf32>
    %568 = arith.mulf %559, %538 : vector<8x128xf32>
    %569 = arith.mulf %553, %561 : vector<8x128xf32>
    %570 = arith.addf %568, %569 : vector<8x128xf32>
    %571 = math.tanh %570 : vector<8x128xf32>
    %572 = arith.mulf %567, %571 : vector<8x128xf32>
    %c5_261 = arith.constant 5 : index
    %c0_262 = arith.constant 0 : index
    %c0_263 = arith.constant 0 : index
    %573 = vector.load %arg12[%c5_261, %c0_262, %c0_263] : memref<8x8x512xf32, #tpu.memory_space<vmem>>, vector<1x8x512xf32>
    %574 = vector.shape_cast %573 : vector<1x8x512xf32> to vector<8x512xf32>
    %575 = arith.truncf %572 : vector<8x128xf32> to vector<8x128xbf16>
    %c1_264 = arith.constant 1 : index
    %c0_265 = arith.constant 0 : index
    %c0_266 = arith.constant 0 : index
    %576 = vector.load %arg7[%c1_264, %c0_265, %c0_266] : memref<2x128x512xbf16, #tpu.memory_space<vmem>>, vector<1x128x512xbf16>
    %577 = vector.shape_cast %576 : vector<1x128x512xbf16> to vector<128x512xbf16>
    %cst_267 = arith.constant dense<0.000000e+00> : vector<8x512xf32>
    %578 = tpu.matmul %575, %577, %cst_267 {dimension_numbers = #tpu.dot_dimension_numbers<[1], [0], [0], [1], [0, 0, 1, 1], [], []>} : vector<8x128xbf16>, vector<128x512xbf16>, vector<8x512xf32> -> vector<8x512xf32>
    %579 = arith.addf %574, %578 : vector<8x512xf32>
    %580 = vector.extract_strided_slice %579 {offsets = [0, 0], sizes = [8, 128], strides = [1, 1]} : vector<8x512xf32> to vector<8x128xf32>
    %581 = arith.negf %580 : vector<8x128xf32>
    %582 = math.exp %581 : vector<8x128xf32>
    %cst_268 = arith.constant 1.000000e+00 : f32
    %583 = vector.broadcast %cst_268 : f32 to vector<8x128xf32>
    %584 = arith.addf %583, %582 : vector<8x128xf32>
    %585 = arith.divf %583, %584 : vector<8x128xf32>
    %586 = vector.extract_strided_slice %579 {offsets = [0, 128], sizes = [8, 128], strides = [1, 1]} : vector<8x512xf32> to vector<8x128xf32>
    %587 = arith.negf %586 : vector<8x128xf32>
    %588 = math.exp %587 : vector<8x128xf32>
    %cst_269 = arith.constant 1.000000e+00 : f32
    %589 = vector.broadcast %cst_269 : f32 to vector<8x128xf32>
    %590 = arith.addf %589, %588 : vector<8x128xf32>
    %591 = arith.divf %589, %590 : vector<8x128xf32>
    %592 = vector.extract_strided_slice %579 {offsets = [0, 256], sizes = [8, 128], strides = [1, 1]} : vector<8x512xf32> to vector<8x128xf32>
    %593 = math.tanh %592 : vector<8x128xf32>
    %594 = vector.extract_strided_slice %579 {offsets = [0, 384], sizes = [8, 128], strides = [1, 1]} : vector<8x512xf32> to vector<8x128xf32>
    %595 = arith.negf %594 : vector<8x128xf32>
    %596 = math.exp %595 : vector<8x128xf32>
    %cst_270 = arith.constant 1.000000e+00 : f32
    %597 = vector.broadcast %cst_270 : f32 to vector<8x128xf32>
    %598 = arith.addf %597, %596 : vector<8x128xf32>
    %599 = arith.divf %597, %598 : vector<8x128xf32>
    %600 = arith.mulf %591, %570 : vector<8x128xf32>
    %601 = arith.mulf %585, %593 : vector<8x128xf32>
    %602 = arith.addf %600, %601 : vector<8x128xf32>
    %603 = math.tanh %602 : vector<8x128xf32>
    %604 = arith.mulf %599, %603 : vector<8x128xf32>
    %c6_271 = arith.constant 6 : index
    %c0_272 = arith.constant 0 : index
    %c0_273 = arith.constant 0 : index
    %605 = vector.load %arg12[%c6_271, %c0_272, %c0_273] : memref<8x8x512xf32, #tpu.memory_space<vmem>>, vector<1x8x512xf32>
    %606 = vector.shape_cast %605 : vector<1x8x512xf32> to vector<8x512xf32>
    %607 = arith.truncf %604 : vector<8x128xf32> to vector<8x128xbf16>
    %c1_274 = arith.constant 1 : index
    %c0_275 = arith.constant 0 : index
    %c0_276 = arith.constant 0 : index
    %608 = vector.load %arg7[%c1_274, %c0_275, %c0_276] : memref<2x128x512xbf16, #tpu.memory_space<vmem>>, vector<1x128x512xbf16>
    %609 = vector.shape_cast %608 : vector<1x128x512xbf16> to vector<128x512xbf16>
    %cst_277 = arith.constant dense<0.000000e+00> : vector<8x512xf32>
    %610 = tpu.matmul %607, %609, %cst_277 {dimension_numbers = #tpu.dot_dimension_numbers<[1], [0], [0], [1], [0, 0, 1, 1], [], []>} : vector<8x128xbf16>, vector<128x512xbf16>, vector<8x512xf32> -> vector<8x512xf32>
    %611 = arith.addf %606, %610 : vector<8x512xf32>
    %612 = vector.extract_strided_slice %611 {offsets = [0, 0], sizes = [8, 128], strides = [1, 1]} : vector<8x512xf32> to vector<8x128xf32>
    %613 = arith.negf %612 : vector<8x128xf32>
    %614 = math.exp %613 : vector<8x128xf32>
    %cst_278 = arith.constant 1.000000e+00 : f32
    %615 = vector.broadcast %cst_278 : f32 to vector<8x128xf32>
    %616 = arith.addf %615, %614 : vector<8x128xf32>
    %617 = arith.divf %615, %616 : vector<8x128xf32>
    %618 = vector.extract_strided_slice %611 {offsets = [0, 128], sizes = [8, 128], strides = [1, 1]} : vector<8x512xf32> to vector<8x128xf32>
    %619 = arith.negf %618 : vector<8x128xf32>
    %620 = math.exp %619 : vector<8x128xf32>
    %cst_279 = arith.constant 1.000000e+00 : f32
    %621 = vector.broadcast %cst_279 : f32 to vector<8x128xf32>
    %622 = arith.addf %621, %620 : vector<8x128xf32>
    %623 = arith.divf %621, %622 : vector<8x128xf32>
    %624 = vector.extract_strided_slice %611 {offsets = [0, 256], sizes = [8, 128], strides = [1, 1]} : vector<8x512xf32> to vector<8x128xf32>
    %625 = math.tanh %624 : vector<8x128xf32>
    %626 = vector.extract_strided_slice %611 {offsets = [0, 384], sizes = [8, 128], strides = [1, 1]} : vector<8x512xf32> to vector<8x128xf32>
    %627 = arith.negf %626 : vector<8x128xf32>
    %628 = math.exp %627 : vector<8x128xf32>
    %cst_280 = arith.constant 1.000000e+00 : f32
    %629 = vector.broadcast %cst_280 : f32 to vector<8x128xf32>
    %630 = arith.addf %629, %628 : vector<8x128xf32>
    %631 = arith.divf %629, %630 : vector<8x128xf32>
    %632 = arith.mulf %623, %602 : vector<8x128xf32>
    %633 = arith.mulf %617, %625 : vector<8x128xf32>
    %634 = arith.addf %632, %633 : vector<8x128xf32>
    %635 = math.tanh %634 : vector<8x128xf32>
    %636 = arith.mulf %631, %635 : vector<8x128xf32>
    %c7_281 = arith.constant 7 : index
    %c0_282 = arith.constant 0 : index
    %c0_283 = arith.constant 0 : index
    %637 = vector.load %arg12[%c7_281, %c0_282, %c0_283] : memref<8x8x512xf32, #tpu.memory_space<vmem>>, vector<1x8x512xf32>
    %638 = vector.shape_cast %637 : vector<1x8x512xf32> to vector<8x512xf32>
    %639 = arith.truncf %636 : vector<8x128xf32> to vector<8x128xbf16>
    %c1_284 = arith.constant 1 : index
    %c0_285 = arith.constant 0 : index
    %c0_286 = arith.constant 0 : index
    %640 = vector.load %arg7[%c1_284, %c0_285, %c0_286] : memref<2x128x512xbf16, #tpu.memory_space<vmem>>, vector<1x128x512xbf16>
    %641 = vector.shape_cast %640 : vector<1x128x512xbf16> to vector<128x512xbf16>
    %cst_287 = arith.constant dense<0.000000e+00> : vector<8x512xf32>
    %642 = tpu.matmul %639, %641, %cst_287 {dimension_numbers = #tpu.dot_dimension_numbers<[1], [0], [0], [1], [0, 0, 1, 1], [], []>} : vector<8x128xbf16>, vector<128x512xbf16>, vector<8x512xf32> -> vector<8x512xf32>
    %643 = arith.addf %638, %642 : vector<8x512xf32>
    %644 = vector.extract_strided_slice %643 {offsets = [0, 0], sizes = [8, 128], strides = [1, 1]} : vector<8x512xf32> to vector<8x128xf32>
    %645 = arith.negf %644 : vector<8x128xf32>
    %646 = math.exp %645 : vector<8x128xf32>
    %cst_288 = arith.constant 1.000000e+00 : f32
    %647 = vector.broadcast %cst_288 : f32 to vector<8x128xf32>
    %648 = arith.addf %647, %646 : vector<8x128xf32>
    %649 = arith.divf %647, %648 : vector<8x128xf32>
    %650 = vector.extract_strided_slice %643 {offsets = [0, 128], sizes = [8, 128], strides = [1, 1]} : vector<8x512xf32> to vector<8x128xf32>
    %651 = arith.negf %650 : vector<8x128xf32>
    %652 = math.exp %651 : vector<8x128xf32>
    %cst_289 = arith.constant 1.000000e+00 : f32
    %653 = vector.broadcast %cst_289 : f32 to vector<8x128xf32>
    %654 = arith.addf %653, %652 : vector<8x128xf32>
    %655 = arith.divf %653, %654 : vector<8x128xf32>
    %656 = vector.extract_strided_slice %643 {offsets = [0, 256], sizes = [8, 128], strides = [1, 1]} : vector<8x512xf32> to vector<8x128xf32>
    %657 = math.tanh %656 : vector<8x128xf32>
    %658 = vector.extract_strided_slice %643 {offsets = [0, 384], sizes = [8, 128], strides = [1, 1]} : vector<8x512xf32> to vector<8x128xf32>
    %659 = arith.negf %658 : vector<8x128xf32>
    %660 = math.exp %659 : vector<8x128xf32>
    %cst_290 = arith.constant 1.000000e+00 : f32
    %661 = vector.broadcast %cst_290 : f32 to vector<8x128xf32>
    %662 = arith.addf %661, %660 : vector<8x128xf32>
    %663 = arith.divf %661, %662 : vector<8x128xf32>
    %664 = arith.mulf %655, %634 : vector<8x128xf32>
    %665 = arith.mulf %649, %657 : vector<8x128xf32>
    %666 = arith.addf %664, %665 : vector<8x128xf32>
    %667 = math.tanh %666 : vector<8x128xf32>
    %668 = arith.mulf %663, %667 : vector<8x128xf32>
    %669 = arith.truncf %668 : vector<8x128xf32> to vector<8x128xbf16>
    %c0_291 = arith.constant 0 : index
    %c0_292 = arith.constant 0 : index
    %670 = vector.load %arg9[%c0_291, %c0_292] : memref<128x4xbf16, #tpu.memory_space<vmem>>, vector<128x4xbf16>
    %cst_293 = arith.constant dense<0.000000e+00> : vector<8x4xf32>
    %671 = tpu.matmul %669, %670, %cst_293 {dimension_numbers = #tpu.dot_dimension_numbers<[1], [0], [0], [1], [0, 0, 1, 1], [], []>} : vector<8x128xbf16>, vector<128x4xbf16>, vector<8x4xf32> -> vector<8x4xf32>
    %c0_294 = arith.constant 0 : index
    %c0_295 = arith.constant 0 : index
    %672 = vector.load %arg10[%c0_294, %c0_295] : memref<1x4xf32, #tpu.memory_space<vmem>>, vector<1x4xf32>
    %673 = vector.broadcast %672 : vector<1x4xf32> to vector<8x4xf32>
    %674 = arith.addf %671, %673 : vector<8x4xf32>
    %c0_296 = arith.constant 0 : index
    %c0_297 = arith.constant 0 : index
    %675 = vector.load %arg11[%c0_296, %c0_297] : memref<8x4xf32, #tpu.memory_space<vmem>>, vector<8x4xf32>
    tpu.vector_store %arg11[%c0_296, %c0_297], %674 {strides = array<i32>} : memref<8x4xf32, #tpu.memory_space<vmem>>, vector<8x4xf32>,
    return
  }
  func.func @transform_0(%arg0: i32) -> (i32, i32, i32) {
    %c0_i32 = arith.constant 0 : i32
    %c0_i32_0 = arith.constant 0 : i32
    %c0_i32_1 = arith.constant 0 : i32
    return %arg0, %c0_i32, %c0_i32_0 : i32, i32, i32
  }
  func.func @transform_1(%arg0: i32) -> (i32, i32, i32) {
    %c0_i32 = arith.constant 0 : i32
    %c0_i32_0 = arith.constant 0 : i32
    %c0_i32_1 = arith.constant 0 : i32
    %c0_i32_2 = arith.constant 0 : i32
    return %c0_i32, %c0_i32_0, %c0_i32_1 : i32, i32, i32
  }
  func.func @transform_2(%arg0: i32) -> (i32, i32, i32) {
    %c0_i32 = arith.constant 0 : i32
    %c0_i32_0 = arith.constant 0 : i32
    %c0_i32_1 = arith.constant 0 : i32
    %c0_i32_2 = arith.constant 0 : i32
    return %c0_i32, %c0_i32_0, %c0_i32_1 : i32, i32, i32
  }
  func.func @transform_3(%arg0: i32) -> (i32, i32) {
    %c0_i32 = arith.constant 0 : i32
    %c0_i32_0 = arith.constant 0 : i32
    %c0_i32_1 = arith.constant 0 : i32
    return %c0_i32, %c0_i32_0 : i32, i32
  }
  func.func @transform_4(%arg0: i32) -> (i32, i32) {
    %c0_i32 = arith.constant 0 : i32
    %c0_i32_0 = arith.constant 0 : i32
    %c0_i32_1 = arith.constant 0 : i32
    return %c0_i32, %c0_i32_0 : i32, i32
  }
  func.func @transform_5(%arg0: i32) -> (i32, i32, i32) {
    %c0_i32 = arith.constant 0 : i32
    %c0_i32_0 = arith.constant 0 : i32
    %c0_i32_1 = arith.constant 0 : i32
    %c0_i32_2 = arith.constant 0 : i32
    return %c0_i32, %c0_i32_0, %c0_i32_1 : i32, i32, i32
  }
  func.func @transform_6(%arg0: i32) -> (i32, i32, i32) {
    %c0_i32 = arith.constant 0 : i32
    %c0_i32_0 = arith.constant 0 : i32
    %c0_i32_1 = arith.constant 0 : i32
    %c0_i32_2 = arith.constant 0 : i32
    return %c0_i32, %c0_i32_0, %c0_i32_1 : i32, i32, i32
  }
  func.func @transform_7(%arg0: i32) -> (i32, i32, i32) {
    %c0_i32 = arith.constant 0 : i32
    %c0_i32_0 = arith.constant 0 : i32
    %c0_i32_1 = arith.constant 0 : i32
    %c0_i32_2 = arith.constant 0 : i32
    return %c0_i32, %c0_i32_0, %c0_i32_1 : i32, i32, i32
  }
  func.func @transform_8(%arg0: i32) -> (i32, i32) {
    %c0_i32 = arith.constant 0 : i32
    %c0_i32_0 = arith.constant 0 : i32
    %c0_i32_1 = arith.constant 0 : i32
    return %c0_i32, %c0_i32_0 : i32, i32
  }
  func.func @transform_9(%arg0: i32) -> (i32, i32) {
    %c0_i32 = arith.constant 0 : i32
    %c0_i32_0 = arith.constant 0 : i32
    %c0_i32_1 = arith.constant 0 : i32
    return %c0_i32, %c0_i32_0 : i32, i32
  }
  func.func @transform_10(%arg0: i32) -> (i32, i32) {
    %c0_i32 = arith.constant 0 : i32
    %c0_i32_0 = arith.constant 0 : i32
    return %arg0, %c0_i32 : i32, i32
  }
}

</mosaic_0001>

<llo_original>
// kernel: tpu_custom_call.1
$region0: #{tpu_custom_call.1}
  #allocation0 [shape = 'u32[]', space=smem, size = 0x4, offset = 0x4, fixed_abs, tag = 'smem constant byte address 0x4 - core index']
  #allocation1 [shape = 'u32[72,128]{1,0:T(1,128)}', space=vmem, size = 0x9000, scoped, tag = 'internal scratch']
  #allocation2 [shape = 'f32[8,8,512]{2,1,0:T(8,128)}', space=vmem, size = 0x20000, scoped, tag = 'scratch operand']
  #allocation3 [shape = 'f32[8,8,128]{2,1,0:T(8,128)}', space=vmem, size = 0x8000, scoped, tag = 'scratch operand']
  #allocation4 [shape = 'f32[8,8,16]{2,1,0:T(8,128)}', space=vmem, size = 0x8000, scoped, tag = 'scratch operand']
  %s0 = inlined_call_operand.hbm [shape: f32[16,8,16], index: 0, kind: input, shape index: {}]
  %s1 = inlined_call_operand.vmem [shape: bf16[3,16,16], index: 1, kind: input, shape index: {}]
  %s2 = inlined_call_operand.vmem [shape: f32[3,1,16], index: 2, kind: input, shape index: {}]
  %s3 = inlined_call_operand.vmem [shape: bf16[16,16], index: 3, kind: input, shape index: {}]
  %s4 = inlined_call_operand.vmem [shape: f32[1,16], index: 4, kind: input, shape index: {}]
  %s5 = inlined_call_operand.hbm [shape: bf16[2,128,512], index: 5, kind: input, shape index: {}]
  %s6 = inlined_call_operand.hbm [shape: bf16[2,128,512], index: 6, kind: input, shape index: {}]
  %s7 = inlined_call_operand.vmem [shape: f32[2,1,512], index: 7, kind: input, shape index: {}]
  %s8 = inlined_call_operand.vmem [shape: bf16[128,4], index: 8, kind: input, shape index: {}]
  %s9 = inlined_call_operand.vmem [shape: f32[1,4], index: 9, kind: input, shape index: {}]
  %s10 = inlined_call_operand.vmem [shape: f32[16,4], index: 10, kind: output, shape index: {}]
  %s11 = sld [smem:[#allocation0]]
  $region85: #{tpu_custom_call.1} parent=0
    _
  %s13 = ssub.s32 1, %s11
  %s14 = scalar_select 0, %s13, %s11
  $region1: #{tpu_custom_call.1} parent=0
    #allocation5 [shape = 'u8[65536]{0}', space=vmem, size = 0x10000, scoped, tag = 'input window, operand 0']
    #allocation6 [shape = 's32[2]{0}', space=sflag, size = 0x8, scoped, tag = 'scoped memory for tpu_custom_call.1']
    #allocation7 [shape = 'u8[262144]{0}', space=vmem, size = 0x40000, scoped, tag = 'input window, operand 5, single buffered']
    #allocation8 [shape = 's32[1]{0}', space=sflag, size = 0x4, scoped, tag = 'scoped memory for tpu_custom_call.1']
    #allocation9 [shape = 'u8[262144]{0}', space=vmem, size = 0x40000, scoped, tag = 'input window, operand 6, single buffered']
    %15 = vsyncpa [#allocation6], 0
    %s16 = scalar_lea.sflag [#allocation6], 1
    %17 = vsyncpa %s16, 0
    %18 = vsyncpa [#allocation8], 0
    loop: start=0, step=1, limit=4
    $region2: #{tpu_custom_call.1} parent=1 // loop_pre_header
      _
    $region3: #{tpu_custom_call.1} parent=1 // loop_header
      %s20 = sphi 0, %s24
      %p21 = scmp.ge.s32.totalorder %s20, 4
      %s30 = sphi 0, %s32
      %s33 = sphi 0, %s30
      %s34 = sphi 0, %s33
      %s50 = sphi 0, %s34
      %s54 = sphi 0, %s54
      %s56 = sphi 0, %s54
      %s57 = sphi 0, %s56
      %s71 = sphi 0, %s57
      %s75 = sphi 0, %s75
      %s77 = sphi 0, %s75
      %s78 = sphi 0, %s77
      %s92 = sphi 0, %s78
      %s96 = sphi 0, %s96
      %s98 = sphi 0, %s96
      %s99 = sphi 0, %s98
      %s113 = sphi 0, %s99
      %s117 = sphi 0, %s117
      %s119 = sphi 0, %s117
      %s120 = sphi 0, %s119
      %s134 = sphi 0, %s120
      %s138 = sphi 0, %s138
      %s140 = sphi 0, %s138
      %s141 = sphi 0, %s140
      %s155 = sphi 0, %s141
      %s159 = sphi 0, %s159
      %s161 = sphi 0, %s159
      %s162 = sphi 0, %s161
      %s176 = sphi 0, %s162
      %s180 = sphi 0, %s180
      %s182 = sphi 0, %s180
      %s183 = sphi 0, %s182
      %s197 = sphi 0, %s183
      %s201 = sphi 0, %s201
      %s203 = sphi 0, %s201
      %s204 = sphi 0, %s203
      %s218 = sphi 0, %s204
      %s222 = sphi 0, %s222
      %s224 = sphi 0, %s222
      %s225 = sphi 0, %s224
      %s239 = sphi 0, %s225
      %s245 = sphi 0, %s247
      %s248 = sphi 0, %s245
      %s249 = sphi 0, %s248
      %s265 = sphi 0, %s249
    $region4: #{tpu_custom_call.1} parent=1 // loop_header_branch
      %23 = sbr.rel (%p21) target = $region8
    $region5: #{tpu_custom_call.1} parent=1 // loop_body
      %s25 = ssub.s32 %s20, 1
      %s26 = ssub.s32 %s20, 2
      %s27 = sadd.s32 %s20, 1
      %s28 = ssub.s32 %s20, %s27
      %p29 = scmp.eq.s32.totalorder %s28, 0
      %s31 = sadd.s32 %s30, 1
      %s32 = scalar_select %p29, %s30, %s31
      %p35 = pneg %p29
      %p36 = scmp.eq.s32.totalorder %s20, 1
      %p37 = por %p35, %p36
      %p38 = scmp.ne.s32.totalorder %s30, %s33
      %p39 = scmp.eq.s32.totalorder %s20, 0
      %p40 = por %p38, %p39
      %p41 = scmp.ne.s32.totalorder %s30, %s33
      %p42 = scmp.eq.s32.totalorder %s25, 1
      %p43 = por %p41, %p42
      %p44 = scmp.ne.s32.totalorder %s33, %s34
      %p45 = scmp.eq.s32.totalorder %s25, 0
      %p46 = por %p44, %p45
      %p47 = scmp.ne.s32.totalorder %s33, %s34
      %p48 = scmp.eq.s32.totalorder %s26, 1
      %p49 = por %p47, %p48
      %p51 = scmp.ne.s32.totalorder %s34, %s50
      %p52 = scmp.eq.s32.totalorder %s26, 0
      %p53 = por %p51, %p52
      %s55 = sadd.s32 %s54, 1
      %p58 = scmp.eq.s32.totalorder %s20, 1
      %p59 = scmp.ne.s32.totalorder %s54, %s56
      %p60 = scmp.eq.s32.totalorder %s20, 0
      %p61 = por %p59, %p60
      %p62 = scmp.ne.s32.totalorder %s54, %s56
      %p63 = scmp.eq.s32.totalorder %s25, 1
      %p64 = por %p62, %p63
      %p65 = scmp.ne.s32.totalorder %s56, %s57
      %p66 = scmp.eq.s32.totalorder %s25, 0
      %p67 = por %p65, %p66
      %p68 = scmp.ne.s32.totalorder %s56, %s57
      %p69 = scmp.eq.s32.totalorder %s26, 1
      %p70 = por %p68, %p69
      %p72 = scmp.ne.s32.totalorder %s57, %s71
      %p73 = scmp.eq.s32.totalorder %s26, 0
      %p74 = por %p72, %p73
      %s76 = sadd.s32 %s75, 1
      %p79 = scmp.eq.s32.totalorder %s20, 1
      %p80 = scmp.ne.s32.totalorder %s75, %s77
      %p81 = scmp.eq.s32.totalorder %s20, 0
      %p82 = por %p80, %p81
      %p83 = scmp.ne.s32.totalorder %s75, %s77
      %p84 = scmp.eq.s32.totalorder %s25, 1
      %p85 = por %p83, %p84
      %p86 = scmp.ne.s32.totalorder %s77, %s78
      %p87 = scmp.eq.s32.totalorder %s25, 0
      %p88 = por %p86, %p87
      %p89 = scmp.ne.s32.totalorder %s77, %s78
      %p90 = scmp.eq.s32.totalorder %s26, 1
      %p91 = por %p89, %p90
      %p93 = scmp.ne.s32.totalorder %s78, %s92
      %p94 = scmp.eq.s32.totalorder %s26, 0
      %p95 = por %p93, %p94
      %s97 = sadd.s32 %s96, 1
      %p100 = scmp.eq.s32.totalorder %s20, 1
      %p101 = scmp.ne.s32.totalorder %s96, %s98
      %p102 = scmp.eq.s32.totalorder %s20, 0
      %p103 = por %p101, %p102
      %p104 = scmp.ne.s32.totalorder %s96, %s98
      %p105 = scmp.eq.s32.totalorder %s25, 1
      %p106 = por %p104, %p105
      %p107 = scmp.ne.s32.totalorder %s98, %s99
      %p108 = scmp.eq.s32.totalorder %s25, 0
      %p109 = por %p107, %p108
      %p110 = scmp.ne.s32.totalorder %s98, %s99
      %p111 = scmp.eq.s32.totalorder %s26, 1
      %p112 = por %p110, %p111
      %p114 = scmp.ne.s32.totalorder %s99, %s113
      %p115 = scmp.eq.s32.totalorder %s26, 0
      %p116 = por %p114, %p115
      %s118 = sadd.s32 %s117, 1
      %p121 = scmp.eq.s32.totalorder %s20, 1
      %p122 = scmp.ne.s32.totalorder %s117, %s119
      %p123 = scmp.eq.s32.totalorder %s20, 0
      %p124 = por %p122, %p123
      %p125 = scmp.ne.s32.totalorder %s117, %s119
      %p126 = scmp.eq.s32.totalorder %s25, 1
      %p127 = por %p125, %p126
      %p128 = scmp.ne.s32.totalorder %s119, %s120
      %p129 = scmp.eq.s32.totalorder %s25, 0
      %p130 = por %p128, %p129
      %p131 = scmp.ne.s32.totalorder %s119, %s120
      %p132 = scmp.eq.s32.totalorder %s26, 1
      %p133 = por %p131, %p132
      %p135 = scmp.ne.s32.totalorder %s120, %s134
      %p136 = scmp.eq.s32.totalorder %s26, 0
      %p137 = por %p135, %p136
      %s139 = sadd.s32 %s138, 1
      %p142 = scmp.eq.s32.totalorder %s20, 1
      %p143 = scmp.ne.s32.totalorder %s138, %s140
      %p144 = scmp.eq.s32.totalorder %s20, 0
      %p145 = por %p143, %p144
      %p146 = scmp.ne.s32.totalorder %s138, %s140
      %p147 = scmp.eq.s32.totalorder %s25, 1
      %p148 = por %p146, %p147
      %p149 = scmp.ne.s32.totalorder %s140, %s141
      %p150 = scmp.eq.s32.totalorder %s25, 0
      %p151 = por %p149, %p150
      %p152 = scmp.ne.s32.totalorder %s140, %s141
      %p153 = scmp.eq.s32.totalorder %s26, 1
      %p154 = por %p152, %p153
      %p156 = scmp.ne.s32.totalorder %s141, %s155
      %p157 = scmp.eq.s32.totalorder %s26, 0
      %p158 = por %p156, %p157
      %s160 = sadd.s32 %s159, 1
      %p163 = scmp.eq.s32.totalorder %s20, 1
      %p164 = scmp.ne.s32.totalorder %s159, %s161
      %p165 = scmp.eq.s32.totalorder %s20, 0
      %p166 = por %p164, %p165
      %p167 = scmp.ne.s32.totalorder %s159, %s161
      %p168 = scmp.eq.s32.totalorder %s25, 1
      %p169 = por %p167, %p168
      %p170 = scmp.ne.s32.totalorder %s161, %s162
      %p171 = scmp.eq.s32.totalorder %s25, 0
      %p172 = por %p170, %p171
      %p173 = scmp.ne.s32.totalorder %s161, %s162
      %p174 = scmp.eq.s32.totalorder %s26, 1
      %p175 = por %p173, %p174
      %p177 = scmp.ne.s32.totalorder %s162, %s176
      %p178 = scmp.eq.s32.totalorder %s26, 0
      %p179 = por %p177, %p178
      %s181 = sadd.s32 %s180, 1
      %p184 = scmp.eq.s32.totalorder %s20, 1
      %p185 = scmp.ne.s32.totalorder %s180, %s182
      %p186 = scmp.eq.s32.totalorder %s20, 0
      %p187 = por %p185, %p186
      %p188 = scmp.ne.s32.totalorder %s180, %s182
      %p189 = scmp.eq.s32.totalorder %s25, 1
      %p190 = por %p188, %p189
      %p191 = scmp.ne.s32.totalorder %s182, %s183
      %p192 = scmp.eq.s32.totalorder %s25, 0
      %p193 = por %p191, %p192
      %p194 = scmp.ne.s32.totalorder %s182, %s183
      %p195 = scmp.eq.s32.totalorder %s26, 1
      %p196 = por %p194, %p195
      %p198 = scmp.ne.s32.totalorder %s183, %s197
      %p199 = scmp.eq.s32.totalorder %s26, 0
      %p200 = por %p198, %p199
      %s202 = sadd.s32 %s201, 1
      %p205 = scmp.eq.s32.totalorder %s20, 1
      %p206 = scmp.ne.s32.totalorder %s201, %s203
      %p207 = scmp.eq.s32.totalorder %s20, 0
      %p208 = por %p206, %p207
      %p209 = scmp.ne.s32.totalorder %s201, %s203
      %p210 = scmp.eq.s32.totalorder %s25, 1
      %p211 = por %p209, %p210
      %p212 = scmp.ne.s32.totalorder %s203, %s204
      %p213 = scmp.eq.s32.totalorder %s25, 0
      %p214 = por %p212, %p213
      %p215 = scmp.ne.s32.totalorder %s203, %s204
      %p216 = scmp.eq.s32.totalorder %s26, 1
      %p217 = por %p215, %p216
      %p219 = scmp.ne.s32.totalorder %s204, %s218
      %p220 = scmp.eq.s32.totalorder %s26, 0
      %p221 = por %p219, %p220
      %s223 = sadd.s32 %s222, 1
      %p226 = scmp.eq.s32.totalorder %s20, 1
      %p227 = scmp.ne.s32.totalorder %s222, %s224
      %p228 = scmp.eq.s32.totalorder %s20, 0
      %p229 = por %p227, %p228
      %p230 = scmp.ne.s32.totalorder %s222, %s224
      %p231 = scmp.eq.s32.totalorder %s25, 1
      %p232 = por %p230, %p231
      %p233 = scmp.ne.s32.totalorder %s224, %s225
      %p234 = scmp.eq.s32.totalorder %s25, 0
      %p235 = por %p233, %p234
      %p236 = scmp.ne.s32.totalorder %s224, %s225
      %p237 = scmp.eq.s32.totalorder %s26, 1
      %p238 = por %p236, %p237
      %p240 = scmp.ne.s32.totalorder %s225, %s239
      %p241 = scmp.eq.s32.totalorder %s26, 0
      %p242 = por %p240, %p241
      %s243 = ssub.s32 %s20, %s27
      %p244 = scmp.eq.s32.totalorder %s243, 0
      %s246 = sadd.s32 %s245, 1
      %s247 = scalar_select %p244, %s245, %s246
      %p250 = pneg %p244
      %p251 = scmp.eq.s32.totalorder %s20, 1
      %p252 = por %p250, %p251
      %p253 = scmp.ne.s32.totalorder %s245, %s248
      %p254 = scmp.eq.s32.totalorder %s20, 0
      %p255 = por %p253, %p254
      %p256 = scmp.ne.s32.totalorder %s245, %s248
      %p257 = scmp.eq.s32.totalorder %s25, 1
      %p258 = por %p256, %p257
      %p259 = scmp.ne.s32.totalorder %s248, %s249
      %p260 = scmp.eq.s32.totalorder %s25, 0
      %p261 = por %p259, %p260
      %p262 = scmp.ne.s32.totalorder %s248, %s249
      %p263 = scmp.eq.s32.totalorder %s26, 1
      %p264 = por %p262, %p263
      %p266 = scmp.ne.s32.totalorder %s249, %s265
      %p267 = scmp.eq.s32.totalorder %s26, 0
      %p268 = por %p266, %p267
      %p269 = scmp.le.s32.totalorder 1, %s20
      %p270 = scmp.lt.s32.totalorder %s20, 3
      %p271 = pnand %p269, %p270
      %p272 = pneg %p271
      // Predicated region
      $region9: #{tpu_custom_call.1} parent=5 // pred_check
        _
      $region10: #{tpu_custom_call.1} parent=5 // pred_check_branch
        %274 = sbr.rel (%p271) target = $region12
      $region11: #{tpu_custom_call.1} parent=5 // pred_region
        %s275 = ssub.s32 %s20, 1
        // Predicated region
        $region13: #{tpu_custom_call.1} parent=11 // pred_check
          %p276 = pneg %p67
        $region14: #{tpu_custom_call.1} parent=11 // pred_check_branch
          %278 = sbr.rel (%p276) target = $region16
        $region15: #{tpu_custom_call.1} parent=11 // pred_region
          _
        $region16: #{tpu_custom_call.1} parent=11 // pred_fallthru
          _
        // Predicated region
        $region17: #{tpu_custom_call.1} parent=11 // pred_check
          %p279 = pneg %p88
        $region18: #{tpu_custom_call.1} parent=11 // pred_check_branch
          %281 = sbr.rel (%p279) target = $region20
        $region19: #{tpu_custom_call.1} parent=11 // pred_region
          _
        $region20: #{tpu_custom_call.1} parent=11 // pred_fallthru
          _
        // Predicated region
        $region21: #{tpu_custom_call.1} parent=11 // pred_check
          %p282 = pneg %p109
        $region22: #{tpu_custom_call.1} parent=11 // pred_check_branch
          %284 = sbr.rel (%p282) target = $region24
        $region23: #{tpu_custom_call.1} parent=11 // pred_region
          _
        $region24: #{tpu_custom_call.1} parent=11 // pred_fallthru
          _
        // Predicated region
        $region25: #{tpu_custom_call.1} parent=11 // pred_check
          %p285 = pneg %p130
        $region26: #{tpu_custom_call.1} parent=11 // pred_check_branch
          %287 = sbr.rel (%p285) target = $region28
        $region27: #{tpu_custom_call.1} parent=11 // pred_region
          _
        $region28: #{tpu_custom_call.1} parent=11 // pred_fallthru
          _
        // Predicated region
        $region29: #{tpu_custom_call.1} parent=11 // pred_check
          %p288 = pneg %p151
        $region30: #{tpu_custom_call.1} parent=11 // pred_check_branch
          %290 = sbr.rel (%p288) target = $region32
        $region31: #{tpu_custom_call.1} parent=11 // pred_region
          %292 = vsyncadd [#allocation8], 0
          %s293 = sshll.u32 %s5, 4
          %s294 = int_to_ptr.hbm [resolvable:$true] %s293
          %s295 = sshll.u32 [#allocation7], 4
          %s296 = int_to_ptr.vmem [resolvable:$true] %s295
          %301 = dma.hbm_to_vmem [thread:$0]  %s294, 8192, %s296, [#allocation8], 256, 256, 16
        $region32: #{tpu_custom_call.1} parent=11 // pred_fallthru
          _
        // Predicated region
        $region33: #{tpu_custom_call.1} parent=11 // pred_check
          %p302 = pneg %p172
        $region34: #{tpu_custom_call.1} parent=11 // pred_check_branch
          %304 = sbr.rel (%p302) target = $region36
        $region35: #{tpu_custom_call.1} parent=11 // pred_region
          %306 = vsyncadd [#allocation8], 0
          %s307 = sshll.u32 %s6, 4
          %s308 = int_to_ptr.hbm [resolvable:$true] %s307
          %s309 = sshll.u32 [#allocation9], 4
          %s310 = int_to_ptr.vmem [resolvable:$true] %s309
          %315 = dma.hbm_to_vmem [thread:$0]  %s308, 8192, %s310, [#allocation8], 256, 256, 16
        $region36: #{tpu_custom_call.1} parent=11 // pred_fallthru
          _
        // Predicated region
        $region37: #{tpu_custom_call.1} parent=11 // pred_check
          %p316 = pneg %p193
        $region38: #{tpu_custom_call.1} parent=11 // pred_check_branch
          %318 = sbr.rel (%p316) target = $region40
        $region39: #{tpu_custom_call.1} parent=11 // pred_region
          _
        $region40: #{tpu_custom_call.1} parent=11 // pred_fallthru
          _
        // Predicated region
        $region41: #{tpu_custom_call.1} parent=11 // pred_check
          %p319 = pneg %p214
        $region42: #{tpu_custom_call.1} parent=11 // pred_check_branch
          %321 = sbr.rel (%p319) target = $region44
        $region43: #{tpu_custom_call.1} parent=11 // pred_region
          _
        $region44: #{tpu_custom_call.1} parent=11 // pred_fallthru
          _
        // Predicated region
        $region45: #{tpu_custom_call.1} parent=11 // pred_check
          %p322 = pneg %p235
        $region46: #{tpu_custom_call.1} parent=11 // pred_check_branch
          %324 = sbr.rel (%p322) target = $region48
        $region47: #{tpu_custom_call.1} parent=11 // pred_region
          _
        $region48: #{tpu_custom_call.1} parent=11 // pred_fallthru
          _
      $region12: #{tpu_custom_call.1} parent=5 // pred_fallthru
        _
      %p325 = scmp.lt.s32.totalorder %s20, 2
      // Predicated region
      $region49: #{tpu_custom_call.1} parent=5 // pred_check
        %p326 = pneg %p325
      $region50: #{tpu_custom_call.1} parent=5 // pred_check_branch
        %328 = sbr.rel (%p326) target = $region52
      $region51: #{tpu_custom_call.1} parent=5 // pred_region
        // Predicated region
        $region53: #{tpu_custom_call.1} parent=51 // pred_check
          %p329 = pneg %p40
        $region54: #{tpu_custom_call.1} parent=51 // pred_check_branch
          %331 = sbr.rel (%p329) target = $region56
        $region55: #{tpu_custom_call.1} parent=51 // pred_region
          %s332 = sand.u32 %s30, 1
          %s333 = scalar_lea.sflag [#allocation6], %s332
          %s334 = sand.u32 %s30, 1
          %s335 = smul.addr %s334, 64
          %s336 = scalar_lea.vmem [#allocation5], %s335
          %s337 = smul.u32 8, %s20
          %339 = vsyncadd %s333, 0
          %s340 = smul.addr %s337, 8
          %s341 = scalar_lea.hbm %s0, %s340
          %s342 = sshll.u32 %s341, 4
          %s343 = int_to_ptr.hbm [resolvable:$true] %s342
          %s344 = sshll.u32 %s336, 4
          %s345 = int_to_ptr.vmem [resolvable:$true] %s344
          %350 = dma.hbm_to_vmem [thread:$0]  %s343, 1024, %s345, %s333, 128, 128, 8
        $region56: #{tpu_custom_call.1} parent=51 // pred_fallthru
          _
      $region52: #{tpu_custom_call.1} parent=5 // pred_fallthru
        _
      %p351 = scmp.le.s32.totalorder 1, %s20
      %p352 = scmp.lt.s32.totalorder %s20, 3
      %p353 = pnand %p351, %p352
      %p354 = pneg %p353
      // Predicated region
      $region57: #{tpu_custom_call.1} parent=5 // pred_check
        _
      $region58: #{tpu_custom_call.1} parent=5 // pred_check_branch
        %356 = sbr.rel (%p353) target = $region60
      $region59: #{tpu_custom_call.1} parent=5 // pred_region
        %s357 = ssub.s32 %s20, 1
        %s358 = sand.u32 %s33, 1
        %s359 = scalar_lea.sflag [#allocation6], %s358
        %s360 = sand.u32 %s33, 1
        %s361 = smul.addr %s360, 64
        %s362 = scalar_lea.vmem [#allocation5], %s361
        // Predicated region
        $region61: #{tpu_custom_call.1} parent=59 // pred_check
          %p363 = pneg %p46
        $region62: #{tpu_custom_call.1} parent=59 // pred_check_branch
          %365 = sbr.rel (%p363) target = $region64
        $region63: #{tpu_custom_call.1} parent=59 // pred_region
          %367 = dma.done %s359, 1024
        $region64: #{tpu_custom_call.1} parent=59 // pred_fallthru
          _
        // Predicated region
        $region65: #{tpu_custom_call.1} parent=59 // pred_check
          %p368 = pneg %p151
        $region66: #{tpu_custom_call.1} parent=59 // pred_check_branch
          %370 = sbr.rel (%p368) target = $region68
        $region67: #{tpu_custom_call.1} parent=59 // pred_region
          %372 = dma.done [#allocation8], 8192
        $region68: #{tpu_custom_call.1} parent=59 // pred_fallthru
          _
        // Predicated region
        $region69: #{tpu_custom_call.1} parent=59 // pred_check
          %p373 = pneg %p172
        $region70: #{tpu_custom_call.1} parent=59 // pred_check_branch
          %375 = sbr.rel (%p373) target = $region72
        $region71: #{tpu_custom_call.1} parent=59 // pred_region
          %377 = dma.done [#allocation8], 8192
        $region72: #{tpu_custom_call.1} parent=59 // pred_fallthru
          _
        %s378 = sand.u32 %s33, 1
        %s379 = scalar_lea.sflag [#allocation6], %s378
        %s380 = sand.u32 %s33, 1
        %s381 = smul.addr %s380, 64
        %s382 = scalar_lea.vmem [#allocation5], %s381
        %p383 = pneg %p46
        %p384 = pneg %p43
        %p385 = pneg %p67
        %p386 = pneg %p64
        %p387 = pneg %p88
        %p388 = pneg %p85
        %p389 = pneg %p109
        %p390 = pneg %p106
        %p391 = pneg %p130
        %p392 = pneg %p127
        %p393 = pneg %p151
        %p394 = pneg %p148
        %p395 = pneg %p172
        %p396 = pneg %p169
        %p397 = pneg %p193
        %p398 = pneg %p190
        %p399 = pneg %p214
        %p400 = pneg %p211
        %p401 = pneg %p235
        %p402 = pneg %p232
        %p403 = pneg %p261
        %p404 = pneg %p258
        %p405 = scmp.lt.s32.totalorder %s25, 1
        %s406 = scalar_select %p405, %s25, 1
        %s407 = smul.addr %s406, 8
        %s408 = scalar_lea.vmem %s10, %s407
        %s409 = smul.u32 8, %s25
        %p410 = scmp.lt.s32.totalorder %s25, 1
        %s411 = scalar_select %p410, %s25, 1
        %s412 = smul.addr %s411, 8
        %s413 = scalar_lea.vmem %s10, %s412
        %v415 = vld [vmem:[%s362] sm:$0xff]
        %v416 = vld [vmem:[%s362 + $0x8] sm:$0xff]
        %v417 = vld [vmem:[%s362 + $0x10] sm:$0xff]
        %v418 = vld [vmem:[%s362 + $0x18] sm:$0xff]
        %v419 = vld [vmem:[%s362 + $0x20] sm:$0xff]
        %v420 = vld [vmem:[%s362 + $0x28] sm:$0xff]
        %v421 = vld [vmem:[%s362 + $0x30] sm:$0xff]
        %v422 = vld [vmem:[%s362 + $0x38] sm:$0xff]
        %v423 = vpack.c.bf16 %v416, %v415
        %v424 = vpack.c.bf16 %v418, %v417
        %v425 = vpack.c.bf16 %v420, %v419
        %v426 = vpack.c.bf16 %v422, %v421
        %v427 = vld [vmem:[%s1] sm:$0xf]
        %v428 = vld [vmem:[%s1 + $0x4] sm:$0xf]
        %v429 = vld [vmem:[%s2] sm:$0x1]
        %v431 = vperm.slane %v429, 0
        %v435 = vunpack.c.l.b16 %v427
        %v436 = vunpack.c.l.b16 %v428
        %v437 = vpack.c.b16 %v436, %v435
        %vm439 = vcmask 130048
        %v441 = vsel %vm439, %v423, 0
        %v444 = vsel %vm439, %v424, 0
        %v447 = vsel %vm439, %v425, 0
        %v450 = vsel %vm439, %v426, 0
        %452 = vmatpush.bf16.msra.mxu0 0
        %453 = vmatpush.bf16.msra.mxu0 0
        %454 = vmatpush.bf16.msra.mxu0 0
        %455 = vmatpush.bf16.msra.mxu0 0
        %456 = vmatpush.bf16.msra.mxu0 0
        %457 = vmatpush.bf16.msra.mxu0 0
        %458 = vmatpush.bf16.msra.mxu0 0
        %459 = vmatpush.bf16.msra.mxu0 %v437
        %460 = vmatmul.bf16.gmra.mxu0 %v441
        %v461 = vpop.f32.mrf.mxu0
        %v462 = vadd.f32 %v431, %v461
        %v463 = vpop.f32.mrf.mxu0
        %v464 = vadd.f32 %v431, %v463
        %465 = vmatmul.bf16.gmra.mxu0 %v444
        %v466 = vpop.f32.mrf.mxu0
        %v467 = vadd.f32 %v431, %v466
        %v468 = vpop.f32.mrf.mxu0
        %v469 = vadd.f32 %v431, %v468
        %470 = vmatmul.bf16.gmra.mxu0 %v447
        %v471 = vpop.f32.mrf.mxu0
        %v472 = vadd.f32 %v431, %v471
        %v473 = vpop.f32.mrf.mxu0
        %v474 = vadd.f32 %v431, %v473
        %475 = vmatmul.bf16.gmra.mxu0 %v450
        %v476 = vpop.f32.mrf.mxu0
        %v477 = vadd.f32 %v431, %v476
        %v478 = vpop.f32.mrf.mxu0
        %v479 = vadd.f32 %v431, %v478
        %480 = vdwg.mxu0
        %s481 = scalar_lea.vmem %s1, 8
        %v482 = vld [vmem:[%s481] sm:$0xf]
        %v483 = vld [vmem:[%s481 + $0x4] sm:$0xf]
        %s484 = scalar_lea.vmem %s2, 1
        %v485 = vld [vmem:[%s484] sm:$0x1]
        %v487 = vperm.slane %v485, 0
        %v491 = vunpack.c.l.b16 %v482
        %v492 = vunpack.c.l.b16 %v483
        %v493 = vpack.c.b16 %v492, %v491
        %495 = vmatpush.bf16.msra.mxu0 0
        %496 = vmatpush.bf16.msra.mxu0 0
        %497 = vmatpush.bf16.msra.mxu0 0
        %498 = vmatpush.bf16.msra.mxu0 0
        %499 = vmatpush.bf16.msra.mxu0 0
        %500 = vmatpush.bf16.msra.mxu0 0
        %501 = vmatpush.bf16.msra.mxu0 0
        %502 = vmatpush.bf16.msra.mxu0 %v493
        %503 = vmatmul.bf16.gmra.mxu0 %v441
        %v504 = vpop.f32.mrf.mxu0
        %v505 = vadd.f32 %v487, %v504
        %v506 = vpop.f32.mrf.mxu0
        %v507 = vadd.f32 %v487, %v506
        %508 = vmatmul.bf16.gmra.mxu0 %v444
        %v509 = vpop.f32.mrf.mxu0
        %v510 = vadd.f32 %v487, %v509
        %v511 = vpop.f32.mrf.mxu0
        %v512 = vadd.f32 %v487, %v511
        %513 = vmatmul.bf16.gmra.mxu0 %v447
        %v514 = vpop.f32.mrf.mxu0
        %v515 = vadd.f32 %v487, %v514
        %v516 = vpop.f32.mrf.mxu0
        %v517 = vadd.f32 %v487, %v516
        %518 = vmatmul.bf16.gmra.mxu0 %v450
        %v519 = vpop.f32.mrf.mxu0
        %v520 = vadd.f32 %v487, %v519
        %v521 = vpop.f32.mrf.mxu0
        %v522 = vadd.f32 %v487, %v521
        %523 = vdwg.mxu0
        %s524 = scalar_lea.vmem %s1, 16
        %v525 = vld [vmem:[%s524] sm:$0xf]
        %v526 = vld [vmem:[%s524 + $0x4] sm:$0xf]
        %s527 = scalar_lea.vmem %s2, 2
        %v528 = vld [vmem:[%s527] sm:$0x1]
        %v530 = vperm.slane %v528, 0
        %v534 = vunpack.c.l.b16 %v525
        %v535 = vunpack.c.l.b16 %v526
        %v536 = vpack.c.b16 %v535, %v534
        %538 = vmatpush.bf16.msra.mxu0 0
        %539 = vmatpush.bf16.msra.mxu0 0
        %540 = vmatpush.bf16.msra.mxu0 0
        %541 = vmatpush.bf16.msra.mxu0 0
        %542 = vmatpush.bf16.msra.mxu0 0
        %543 = vmatpush.bf16.msra.mxu0 0
        %544 = vmatpush.bf16.msra.mxu0 0
        %545 = vmatpush.bf16.msra.mxu0 %v536
        %546 = vmatmul.bf16.gmra.mxu0 %v441
        %v547 = vpop.f32.mrf.mxu0
        %v548 = vadd.f32 %v530, %v547
        %v549 = vpop.f32.mrf.mxu0
        %v550 = vadd.f32 %v530, %v549
        %551 = vmatmul.bf16.gmra.mxu0 %v444
        %v552 = vpop.f32.mrf.mxu0
        %v553 = vadd.f32 %v530, %v552
        %v554 = vpop.f32.mrf.mxu0
        %v555 = vadd.f32 %v530, %v554
        %556 = vmatmul.bf16.gmra.mxu0 %v447
        %v557 = vpop.f32.mrf.mxu0
        %v558 = vadd.f32 %v530, %v557
        %v559 = vpop.f32.mrf.mxu0
        %v560 = vadd.f32 %v530, %v559
        %561 = vmatmul.bf16.gmra.mxu0 %v450
        %v562 = vpop.f32.mrf.mxu0
        %v563 = vadd.f32 %v530, %v562
        %v564 = vpop.f32.mrf.mxu0
        %v565 = vadd.f32 %v530, %v564
        %566 = vdwg.mxu0
        %v567 = vpack.c.bf16 %v462, %v462
        %v568 = vpack.c.bf16 %v464, %v464
        %v569 = vpack.c.bf16 %v467, %v467
        %v570 = vpack.c.bf16 %v469, %v469
        %v571 = vpack.c.bf16 %v472, %v472
        %v572 = vpack.c.bf16 %v474, %v474
        %v573 = vpack.c.bf16 %v477, %v477
        %v574 = vpack.c.bf16 %v479, %v479
        %v575 = vpack.c.bf16 %v505, %v505
        %v576 = vpack.c.bf16 %v507, %v507
        %v577 = vpack.c.bf16 %v510, %v510
        %v578 = vpack.c.bf16 %v512, %v512
        %v579 = vpack.c.bf16 %v515, %v515
        %v580 = vpack.c.bf16 %v517, %v517
        %v581 = vpack.c.bf16 %v520, %v520
        %v582 = vpack.c.bf16 %v522, %v522
        %v584 = vsel %vm439, %v567, 0
        %v587 = vsel %vm439, %v575, 0
        %589 = vmatpush.bf16.xpose.msra.mxu0 0
        %590 = vmatpush.bf16.xpose.msra.mxu0 0
        %591 = vmatpush.bf16.xpose.msra.mxu0 0
        %592 = vmatpush.bf16.xpose.msra.mxu0 0
        %593 = vmatpush.bf16.xpose.msra.mxu0 0
        %594 = vmatpush.bf16.xpose.msra.mxu0 0
        %595 = vmatpush.bf16.xpose.msra.mxu0 0
        %596 = vmatpush.bf16.xpose.msra.mxu0 %v587
        %597 = vmatmul.bf16.gmra.mxu0 %v584
        %v598 = vpop.f32.mrf.mxu0
        %v599 = vadd.f32 0.0, %v598
        %v600 = vpop.f32.mrf.mxu0
        %601 = vdwg.mxu0
        %v603 = vsel %vm439, %v568, 0
        %v606 = vsel %vm439, %v576, 0
        %608 = vmatpush.bf16.xpose.msra.mxu0 0
        %609 = vmatpush.bf16.xpose.msra.mxu0 0
        %610 = vmatpush.bf16.xpose.msra.mxu0 0
        %611 = vmatpush.bf16.xpose.msra.mxu0 0
        %612 = vmatpush.bf16.xpose.msra.mxu0 0
        %613 = vmatpush.bf16.xpose.msra.mxu0 0
        %614 = vmatpush.bf16.xpose.msra.mxu0 0
        %615 = vmatpush.bf16.xpose.msra.mxu0 %v606
        %616 = vmatmul.bf16.gmra.mxu0 %v603
        %v617 = vpop.f32.mrf.mxu0
        %v618 = vadd.f32 0.0, %v617
        %v619 = vpop.f32.mrf.mxu0
        %620 = vdwg.mxu0
        %v622 = vsel %vm439, %v569, 0
        %v625 = vsel %vm439, %v577, 0
        %627 = vmatpush.bf16.xpose.msra.mxu0 0
        %628 = vmatpush.bf16.xpose.msra.mxu0 0
        %629 = vmatpush.bf16.xpose.msra.mxu0 0
        %630 = vmatpush.bf16.xpose.msra.mxu0 0
        %631 = vmatpush.bf16.xpose.msra.mxu0 0
        %632 = vmatpush.bf16.xpose.msra.mxu0 0
        %633 = vmatpush.bf16.xpose.msra.mxu0 0
        %634 = vmatpush.bf16.xpose.msra.mxu0 %v625
        %635 = vmatmul.bf16.gmra.mxu0 %v622
        %v636 = vpop.f32.mrf.mxu0
        %v637 = vadd.f32 0.0, %v636
        %v638 = vpop.f32.mrf.mxu0
        %639 = vdwg.mxu0
        %v641 = vsel %vm439, %v570, 0
        %v644 = vsel %vm439, %v578, 0
        %646 = vmatpush.bf16.xpose.msra.mxu0 0
        %647 = vmatpush.bf16.xpose.msra.mxu0 0
        %648 = vmatpush.bf16.xpose.msra.mxu0 0
        %649 = vmatpush.bf16.xpose.msra.mxu0 0
        %650 = vmatpush.bf16.xpose.msra.mxu0 0
        %651 = vmatpush.bf16.xpose.msra.mxu0 0
        %652 = vmatpush.bf16.xpose.msra.mxu0 0
        %653 = vmatpush.bf16.xpose.msra.mxu0 %v644
        %654 = vmatmul.bf16.gmra.mxu0 %v641
        %v655 = vpop.f32.mrf.mxu0
        %v656 = vadd.f32 0.0, %v655
        %v657 = vpop.f32.mrf.mxu0
        %658 = vdwg.mxu0
        %v660 = vsel %vm439, %v571, 0
        %v663 = vsel %vm439, %v579, 0
        %665 = vmatpush.bf16.xpose.msra.mxu0 0
        %666 = vmatpush.bf16.xpose.msra.mxu0 0
        %667 = vmatpush.bf16.xpose.msra.mxu0 0
        %668 = vmatpush.bf16.xpose.msra.mxu0 0
        %669 = vmatpush.bf16.xpose.msra.mxu0 0
        %670 = vmatpush.bf16.xpose.msra.mxu0 0
        %671 = vmatpush.bf16.xpose.msra.mxu0 0
        %672 = vmatpush.bf16.xpose.msra.mxu0 %v663
        %673 = vmatmul.bf16.gmra.mxu0 %v660
        %v674 = vpop.f32.mrf.mxu0
        %v675 = vadd.f32 0.0, %v674
        %v676 = vpop.f32.mrf.mxu0
        %677 = vdwg.mxu0
        %v679 = vsel %vm439, %v572, 0
        %v682 = vsel %vm439, %v580, 0
        %684 = vmatpush.bf16.xpose.msra.mxu0 0
        %685 = vmatpush.bf16.xpose.msra.mxu0 0
        %686 = vmatpush.bf16.xpose.msra.mxu0 0
        %687 = vmatpush.bf16.xpose.msra.mxu0 0
        %688 = vmatpush.bf16.xpose.msra.mxu0 0
        %689 = vmatpush.bf16.xpose.msra.mxu0 0
        %690 = vmatpush.bf16.xpose.msra.mxu0 0
        %691 = vmatpush.bf16.xpose.msra.mxu0 %v682
        %692 = vmatmul.bf16.gmra.mxu0 %v679
        %v693 = vpop.f32.mrf.mxu0
        %v694 = vadd.f32 0.0, %v693
        %v695 = vpop.f32.mrf.mxu0
        %696 = vdwg.mxu0
        %v698 = vsel %vm439, %v573, 0
        %v701 = vsel %vm439, %v581, 0
        %703 = vmatpush.bf16.xpose.msra.mxu0 0
        %704 = vmatpush.bf16.xpose.msra.mxu0 0
        %705 = vmatpush.bf16.xpose.msra.mxu0 0
        %706 = vmatpush.bf16.xpose.msra.mxu0 0
        %707 = vmatpush.bf16.xpose.msra.mxu0 0
        %708 = vmatpush.bf16.xpose.msra.mxu0 0
        %709 = vmatpush.bf16.xpose.msra.mxu0 0
        %710 = vmatpush.bf16.xpose.msra.mxu0 %v701
        %711 = vmatmul.bf16.gmra.mxu0 %v698
        %v712 = vpop.f32.mrf.mxu0
        %v713 = vadd.f32 0.0, %v712
        %v714 = vpop.f32.mrf.mxu0
        %715 = vdwg.mxu0
        %v717 = vsel %vm439, %v574, 0
        %v720 = vsel %vm439, %v582, 0
        %722 = vmatpush.bf16.xpose.msra.mxu0 0
        %723 = vmatpush.bf16.xpose.msra.mxu0 0
        %724 = vmatpush.bf16.xpose.msra.mxu0 0
        %725 = vmatpush.bf16.xpose.msra.mxu0 0
        %726 = vmatpush.bf16.xpose.msra.mxu0 0
        %727 = vmatpush.bf16.xpose.msra.mxu0 0
        %728 = vmatpush.bf16.xpose.msra.mxu0 0
        %729 = vmatpush.bf16.xpose.msra.mxu0 %v720
        %730 = vmatmul.bf16.gmra.mxu0 %v717
        %v731 = vpop.f32.mrf.mxu0
        %v732 = vadd.f32 0.0, %v731
        %v733 = vpop.f32.mrf.mxu0
        %734 = vdwg.mxu0
        %v735 = vmul.f32 %v599, 0.25
        %v736 = vmul.f32 %v618, 0.25
        %v737 = vmul.f32 %v637, 0.25
        %v738 = vmul.f32 %v656, 0.25
        %v739 = vmul.f32 %v675, 0.25
        %v740 = vmul.f32 %v694, 0.25
        %v741 = vmul.f32 %v713, 0.25
        %v742 = vmul.f32 %v732, 0.25
        %vm743 = vcmask 64512
        %v744 = vsel %vm743, %v735, -inf
        %745 = vmax.xlane.f32.xlu0 %v744
        %v746 = vpop.xlane.xlu0 %745
        %v747 = vsel %vm743, %v736, -inf
        %748 = vmax.xlane.f32.xlu0 %v747
        %v749 = vpop.xlane.xlu0 %748
        %v750 = vsel %vm743, %v737, -inf
        %751 = vmax.xlane.f32.xlu0 %v750
        %v752 = vpop.xlane.xlu0 %751
        %v753 = vsel %vm743, %v738, -inf
        %754 = vmax.xlane.f32.xlu0 %v753
        %v755 = vpop.xlane.xlu0 %754
        %v756 = vsel %vm743, %v739, -inf
        %757 = vmax.xlane.f32.xlu0 %v756
        %v758 = vpop.xlane.xlu0 %757
        %v759 = vsel %vm743, %v740, -inf
        %760 = vmax.xlane.f32.xlu0 %v759
        %v761 = vpop.xlane.xlu0 %760
        %v762 = vsel %vm743, %v741, -inf
        %763 = vmax.xlane.f32.xlu0 %v762
        %v764 = vpop.xlane.xlu0 %763
        %v765 = vsel %vm743, %v742, -inf
        %766 = vmax.xlane.f32.xlu0 %v765
        %v767 = vpop.xlane.xlu0 %766
        %v768 = vsub.f32 %v735, %v746
        %v769 = vsub.f32 %v736, %v749
        %v770 = vsub.f32 %v737, %v752
        %v771 = vsub.f32 %v738, %v755
        %v772 = vsub.f32 %v739, %v758
        %v773 = vsub.f32 %v740, %v761
        %v774 = vsub.f32 %v741, %v764
        %v775 = vsub.f32 %v742, %v767
        %v776 = vmul.f32 %v768, 1.442695
        %v777 = vpow.pop %v776
        %v778 = vmul.f32 %v769, 1.442695
        %v779 = vpow.pop %v778
        %v780 = vmul.f32 %v770, 1.442695
        %v781 = vpow.pop %v780
        %v782 = vmul.f32 %v771, 1.442695
        %v783 = vpow.pop %v782
        %v784 = vmul.f32 %v772, 1.442695
        %v785 = vpow.pop %v784
        %v786 = vmul.f32 %v773, 1.442695
        %v787 = vpow.pop %v786
        %v788 = vmul.f32 %v774, 1.442695
        %v789 = vpow.pop %v788
        %v790 = vmul.f32 %v775, 1.442695
        %v791 = vpow.pop %v790
        %v792 = vsel %vm743, %v777, 0.0
        %793 = vadd.xlane.f32.xlu0 %v792
        %v794 = vpop.xlane.xlu0 %793
        %v795 = vsel %vm743, %v779, 0.0
        %796 = vadd.xlane.f32.xlu0 %v795
        %v797 = vpop.xlane.xlu0 %796
        %v798 = vsel %vm743, %v781, 0.0
        %799 = vadd.xlane.f32.xlu0 %v798
        %v800 = vpop.xlane.xlu0 %799
        %v801 = vsel %vm743, %v783, 0.0
        %802 = vadd.xlane.f32.xlu0 %v801
        %v803 = vpop.xlane.xlu0 %802
        %v804 = vsel %vm743, %v785, 0.0
        %805 = vadd.xlane.f32.xlu0 %v804
        %v806 = vpop.xlane.xlu0 %805
        %v807 = vsel %vm743, %v787, 0.0
        %808 = vadd.xlane.f32.xlu0 %v807
        %v809 = vpop.xlane.xlu0 %808
        %v810 = vsel %vm743, %v789, 0.0
        %811 = vadd.xlane.f32.xlu0 %v810
        %v812 = vpop.xlane.xlu0 %811
        %v813 = vsel %vm743, %v791, 0.0
        %814 = vadd.xlane.f32.xlu0 %v813
        %v815 = vpop.xlane.xlu0 %814
        %v816 = vrcp.pop %v794
        %v817 = vrcp.pop %v797
        %v818 = vrcp.pop %v800
        %v819 = vrcp.pop %v803
        %v820 = vrcp.pop %v806
        %v821 = vrcp.pop %v809
        %v822 = vrcp.pop %v812
        %v823 = vrcp.pop %v815
        %v824 = vmul.f32 %v777, %v816
        %v825 = vmul.f32 %v779, %v817
        %v826 = vmul.f32 %v781, %v818
        %v827 = vmul.f32 %v783, %v819
        %v828 = vmul.f32 %v785, %v820
        %v829 = vmul.f32 %v787, %v821
        %v830 = vmul.f32 %v789, %v822
        %v831 = vmul.f32 %v791, %v823
        %v832 = vpack.c.bf16 %v824, %v824
        %v833 = vpack.c.bf16 %v825, %v825
        %v834 = vpack.c.bf16 %v826, %v826
        %v835 = vpack.c.bf16 %v827, %v827
        %v836 = vpack.c.bf16 %v828, %v828
        %v837 = vpack.c.bf16 %v829, %v829
        %v838 = vpack.c.bf16 %v830, %v830
        %v839 = vpack.c.bf16 %v831, %v831
        %v840 = vpack.c.bf16 %v548, %v548
        %v841 = vpack.c.bf16 %v550, %v550
        %v842 = vpack.c.bf16 %v553, %v553
        %v843 = vpack.c.bf16 %v555, %v555
        %v844 = vpack.c.bf16 %v558, %v558
        %v845 = vpack.c.bf16 %v560, %v560
        %v846 = vpack.c.bf16 %v563, %v563
        %v847 = vpack.c.bf16 %v565, %v565
        %v849 = vsel %vm743, %v832, 0
        %vm851 = vcmask 1043456
        %v853 = vsel %vm851, %v840, 0
        %855 = vmatpush.bf16.msra.mxu0 0
        %856 = vmatpush.bf16.msra.mxu0 0
        %857 = vmatpush.bf16.msra.mxu0 0
        %858 = vmatpush.bf16.msra.mxu0 0
        %859 = vmatpush.bf16.msra.mxu0 0
        %860 = vmatpush.bf16.msra.mxu0 0
        %861 = vmatpush.bf16.msra.mxu0 0
        %862 = vmatpush.bf16.msra.mxu0 %v853
        %863 = vmatmul.bf16.gmra.mxu0 %v849
        %v864 = vpop.f32.mrf.mxu0
        %v865 = vadd.f32 %v415, %v864
        %v866 = vpop.f32.mrf.mxu0
        %867 = vdwg.mxu0
        %v869 = vsel %vm743, %v833, 0
        %v872 = vsel %vm851, %v841, 0
        %874 = vmatpush.bf16.msra.mxu0 0
        %875 = vmatpush.bf16.msra.mxu0 0
        %876 = vmatpush.bf16.msra.mxu0 0
        %877 = vmatpush.bf16.msra.mxu0 0
        %878 = vmatpush.bf16.msra.mxu0 0
        %879 = vmatpush.bf16.msra.mxu0 0
        %880 = vmatpush.bf16.msra.mxu0 0
        %881 = vmatpush.bf16.msra.mxu0 %v872
        %882 = vmatmul.bf16.gmra.mxu0 %v869
        %v883 = vpop.f32.mrf.mxu0
        %v884 = vadd.f32 %v416, %v883
        %v885 = vpop.f32.mrf.mxu0
        %886 = vdwg.mxu0
        %v888 = vsel %vm743, %v834, 0
        %v891 = vsel %vm851, %v842, 0
        %893 = vmatpush.bf16.msra.mxu0 0
        %894 = vmatpush.bf16.msra.mxu0 0
        %895 = vmatpush.bf16.msra.mxu0 0
        %896 = vmatpush.bf16.msra.mxu0 0
        %897 = vmatpush.bf16.msra.mxu0 0
        %898 = vmatpush.bf16.msra.mxu0 0
        %899 = vmatpush.bf16.msra.mxu0 0
        %900 = vmatpush.bf16.msra.mxu0 %v891
        %901 = vmatmul.bf16.gmra.mxu0 %v888
        %v902 = vpop.f32.mrf.mxu0
        %v903 = vadd.f32 %v417, %v902
        %v904 = vpop.f32.mrf.mxu0
        %905 = vdwg.mxu0
        %v907 = vsel %vm743, %v835, 0
        %v910 = vsel %vm851, %v843, 0
        %912 = vmatpush.bf16.msra.mxu0 0
        %913 = vmatpush.bf16.msra.mxu0 0
        %914 = vmatpush.bf16.msra.mxu0 0
        %915 = vmatpush.bf16.msra.mxu0 0
        %916 = vmatpush.bf16.msra.mxu0 0
        %917 = vmatpush.bf16.msra.mxu0 0
        %918 = vmatpush.bf16.msra.mxu0 0
        %919 = vmatpush.bf16.msra.mxu0 %v910
        %920 = vmatmul.bf16.gmra.mxu0 %v907
        %v921 = vpop.f32.mrf.mxu0
        %v922 = vadd.f32 %v418, %v921
        %v923 = vpop.f32.mrf.mxu0
        %924 = vdwg.mxu0
        %v926 = vsel %vm743, %v836, 0
        %v929 = vsel %vm851, %v844, 0
        %931 = vmatpush.bf16.msra.mxu0 0
        %932 = vmatpush.bf16.msra.mxu0 0
        %933 = vmatpush.bf16.msra.mxu0 0
        %934 = vmatpush.bf16.msra.mxu0 0
        %935 = vmatpush.bf16.msra.mxu0 0
        %936 = vmatpush.bf16.msra.mxu0 0
        %937 = vmatpush.bf16.msra.mxu0 0
        %938 = vmatpush.bf16.msra.mxu0 %v929
        %939 = vmatmul.bf16.gmra.mxu0 %v926
        %v940 = vpop.f32.mrf.mxu0
        %v941 = vadd.f32 %v419, %v940
        %v942 = vpop.f32.mrf.mxu0
        %943 = vdwg.mxu0
        %v945 = vsel %vm743, %v837, 0
        %v948 = vsel %vm851, %v845, 0
        %950 = vmatpush.bf16.msra.mxu0 0
        %951 = vmatpush.bf16.msra.mxu0 0
        %952 = vmatpush.bf16.msra.mxu0 0
        %953 = vmatpush.bf16.msra.mxu0 0
        %954 = vmatpush.bf16.msra.mxu0 0
        %955 = vmatpush.bf16.msra.mxu0 0
        %956 = vmatpush.bf16.msra.mxu0 0
        %957 = vmatpush.bf16.msra.mxu0 %v948
        %958 = vmatmul.bf16.gmra.mxu0 %v945
        %v959 = vpop.f32.mrf.mxu0
        %v960 = vadd.f32 %v420, %v959
        %v961 = vpop.f32.mrf.mxu0
        %962 = vdwg.mxu0
        %v964 = vsel %vm743, %v838, 0
        %v967 = vsel %vm851, %v846, 0
        %969 = vmatpush.bf16.msra.mxu0 0
        %970 = vmatpush.bf16.msra.mxu0 0
        %971 = vmatpush.bf16.msra.mxu0 0
        %972 = vmatpush.bf16.msra.mxu0 0
        %973 = vmatpush.bf16.msra.mxu0 0
        %974 = vmatpush.bf16.msra.mxu0 0
        %975 = vmatpush.bf16.msra.mxu0 0
        %976 = vmatpush.bf16.msra.mxu0 %v967
        %977 = vmatmul.bf16.gmra.mxu0 %v964
        %v978 = vpop.f32.mrf.mxu0
        %v979 = vadd.f32 %v421, %v978
        %v980 = vpop.f32.mrf.mxu0
        %981 = vdwg.mxu0
        %v983 = vsel %vm743, %v839, 0
        %v986 = vsel %vm851, %v847, 0
        %988 = vmatpush.bf16.msra.mxu0 0
        %989 = vmatpush.bf16.msra.mxu0 0
        %990 = vmatpush.bf16.msra.mxu0 0
        %991 = vmatpush.bf16.msra.mxu0 0
        %992 = vmatpush.bf16.msra.mxu0 0
        %993 = vmatpush.bf16.msra.mxu0 0
        %994 = vmatpush.bf16.msra.mxu0 0
        %995 = vmatpush.bf16.msra.mxu0 %v986
        %996 = vmatmul.bf16.gmra.mxu0 %v983
        %v997 = vpop.f32.mrf.mxu0
        %v998 = vadd.f32 %v422, %v997
        %v999 = vpop.f32.mrf.mxu0
        %1000 = vdwg.mxu0
        %v1001 = vpack.c.bf16 %v884, %v865
        %v1002 = vpack.c.bf16 %v922, %v903
        %v1003 = vpack.c.bf16 %v960, %v941
        %v1004 = vpack.c.bf16 %v998, %v979
        %v1005 = vld [vmem:[%s3] sm:$0xf]
        %v1006 = vld [vmem:[%s3 + $0x4] sm:$0xf]
        %v1007 = vld [vmem:[%s4] sm:$0x1]
        %v1009 = vperm.slane %v1007, 0
        %v1013 = vunpack.c.l.b16 %v1005
        %v1014 = vunpack.c.l.b16 %v1006
        %v1015 = vpack.c.b16 %v1014, %v1013
        %v1018 = vsel %vm439, %v1001, 0
        %v1021 = vsel %vm439, %v1002, 0
        %v1024 = vsel %vm439, %v1003, 0
        %v1027 = vsel %vm439, %v1004, 0
        %1029 = vmatpush.bf16.msra.mxu0 0
        %1030 = vmatpush.bf16.msra.mxu0 0
        %1031 = vmatpush.bf16.msra.mxu0 0
        %1032 = vmatpush.bf16.msra.mxu0 0
        %1033 = vmatpush.bf16.msra.mxu0 0
        %1034 = vmatpush.bf16.msra.mxu0 0
        %1035 = vmatpush.bf16.msra.mxu0 0
        %1036 = vmatpush.bf16.msra.mxu0 %v1015
        %1037 = vmatmul.bf16.gmra.mxu0 %v1018
        %v1038 = vpop.f32.mrf.mxu0
        %v1039 = vadd.f32 %v1009, %v1038
        %v1040 = vpop.f32.mrf.mxu0
        %v1041 = vadd.f32 %v1009, %v1040
        %1042 = vmatmul.bf16.gmra.mxu0 %v1021
        %v1043 = vpop.f32.mrf.mxu0
        %v1044 = vadd.f32 %v1009, %v1043
        %v1045 = vpop.f32.mrf.mxu0
        %v1046 = vadd.f32 %v1009, %v1045
        %1047 = vmatmul.bf16.gmra.mxu0 %v1024
        %v1048 = vpop.f32.mrf.mxu0
        %v1049 = vadd.f32 %v1009, %v1048
        %v1050 = vpop.f32.mrf.mxu0
        %v1051 = vadd.f32 %v1009, %v1050
        %1052 = vmatmul.bf16.gmra.mxu0 %v1027
        %v1053 = vpop.f32.mrf.mxu0
        %v1054 = vadd.f32 %v1009, %v1053
        %v1055 = vpop.f32.mrf.mxu0
        %v1056 = vadd.f32 %v1009, %v1055
        %1057 = vdwg.mxu0
        %v1058 = vadd.f32 %v1039, %v415
        %v1059 = vadd.f32 %v1041, %v416
        %v1060 = vadd.f32 %v1044, %v417
        %v1061 = vadd.f32 %v1046, %v418
        %v1062 = vadd.f32 %v1049, %v419
        %v1063 = vadd.f32 %v1051, %v420
        %v1064 = vadd.f32 %v1054, %v421
        %v1065 = vadd.f32 %v1056, %v422
        %1066 = vst.msk [vmem:[#allocation4] sm:$0xff] %vm439, %v1058
        %1067 = vst.msk [vmem:[#allocation4 + $0x8] sm:$0xff] %vm439, %v1059
        %1068 = vst.msk [vmem:[#allocation4 + $0x10] sm:$0xff] %vm439, %v1060
        %1069 = vst.msk [vmem:[#allocation4 + $0x18] sm:$0xff] %vm439, %v1061
        %1070 = vst.msk [vmem:[#allocation4 + $0x20] sm:$0xff] %vm439, %v1062
        %1071 = vst.msk [vmem:[#allocation4 + $0x28] sm:$0xff] %vm439, %v1063
        %1072 = vst.msk [vmem:[#allocation4 + $0x30] sm:$0xff] %vm439, %v1064
        %1073 = vst.msk [vmem:[#allocation4 + $0x38] sm:$0xff] %vm439, %v1065
        %v1074 = vld [vmem:[#allocation4] sm:$0x1]
        %v1075 = vld [vmem:[#allocation4 + $0x8] sm:$0x1]
        %v1076 = vld [vmem:[#allocation4 + $0x10] sm:$0x1]
        %v1077 = vld [vmem:[#allocation4 + $0x18] sm:$0x1]
        %v1078 = vld [vmem:[#allocation4 + $0x20] sm:$0x1]
        %v1079 = vld [vmem:[#allocation4 + $0x28] sm:$0x1]
        %v1080 = vld [vmem:[#allocation4 + $0x30] sm:$0x1]
        %v1081 = vld [vmem:[#allocation4 + $0x38] sm:$0x1]
        %v1090 = vrot.slane %v1075, 7
        %vm1091 = vcmask 1041409
        %v1092 = vsel %vm1091, %v1090, %v1074
        %v1093 = vrot.slane %v1076, 6
        %vm1094 = vcmask 1042434
        %v1095 = vsel %vm1094, %v1093, %v1092
        %v1096 = vrot.slane %v1077, 5
        %vm1097 = vcmask 1043459
        %v1098 = vsel %vm1097, %v1096, %v1095
        %v1099 = vrot.slane %v1078, 4
        %vm1100 = vcmask 1044484
        %v1101 = vsel %vm1100, %v1099, %v1098
        %v1102 = vrot.slane %v1079, 3
        %vm1103 = vcmask 1045509
        %v1104 = vsel %vm1103, %v1102, %v1101
        %v1105 = vrot.slane %v1080, 2
        %vm1106 = vcmask 1046534
        %v1107 = vsel %vm1106, %v1105, %v1104
        %v1108 = vrot.slane %v1081, 1
        %vm1109 = vcmask 1047559
        %v1110 = vsel %vm1109, %v1108, %v1107
        %v1112 = vsel %vm439, %v1110, 0.0
        %1113 = vst [vmem:[#allocation3] sm:$0xff] %v1112
        %v1114 = vld [vmem:[#allocation4 + $0x1] sm:$0x1]
        %v1115 = vld [vmem:[#allocation4 + $0x9] sm:$0x1]
        %v1116 = vld [vmem:[#allocation4 + $0x11] sm:$0x1]
        %v1117 = vld [vmem:[#allocation4 + $0x19] sm:$0x1]
        %v1118 = vld [vmem:[#allocation4 + $0x21] sm:$0x1]
        %v1119 = vld [vmem:[#allocation4 + $0x29] sm:$0x1]
        %v1120 = vld [vmem:[#allocation4 + $0x31] sm:$0x1]
        %v1121 = vld [vmem:[#allocation4 + $0x39] sm:$0x1]
        %v1130 = vrot.slane %v1115, 7
        %v1131 = vsel %vm1091, %v1130, %v1114
        %v1132 = vrot.slane %v1116, 6
        %v1133 = vsel %vm1094, %v1132, %v1131
        %v1134 = vrot.slane %v1117, 5
        %v1135 = vsel %vm1097, %v1134, %v1133
        %v1136 = vrot.slane %v1118, 4
        %v1137 = vsel %vm1100, %v1136, %v1135
        %v1138 = vrot.slane %v1119, 3
        %v1139 = vsel %vm1103, %v1138, %v1137
        %v1140 = vrot.slane %v1120, 2
        %v1141 = vsel %vm1106, %v1140, %v1139
        %v1142 = vrot.slane %v1121, 1
        %v1143 = vsel %vm1109, %v1142, %v1141
        %v1145 = vsel %vm439, %v1143, 0.0
        %s1146 = scalar_lea.vmem [#allocation3], 8
        %1147 = vst [vmem:[%s1146] sm:$0xff] %v1145
        %v1148 = vld [vmem:[#allocation4 + $0x2] sm:$0x1]
        %v1149 = vld [vmem:[#allocation4 + $0xa] sm:$0x1]
        %v1150 = vld [vmem:[#allocation4 + $0x12] sm:$0x1]
        %v1151 = vld [vmem:[#allocation4 + $0x1a] sm:$0x1]
        %v1152 = vld [vmem:[#allocation4 + $0x22] sm:$0x1]
        %v1153 = vld [vmem:[#allocation4 + $0x2a] sm:$0x1]
        %v1154 = vld [vmem:[#allocation4 + $0x32] sm:$0x1]
        %v1155 = vld [vmem:[#allocation4 + $0x3a] sm:$0x1]
        %v1164 = vrot.slane %v1149, 7
        %v1165 = vsel %vm1091, %v1164, %v1148
        %v1166 = vrot.slane %v1150, 6
        %v1167 = vsel %vm1094, %v1166, %v1165
        %v1168 = vrot.slane %v1151, 5
        %v1169 = vsel %vm1097, %v1168, %v1167
        %v1170 = vrot.slane %v1152, 4
        %v1171 = vsel %vm1100, %v1170, %v1169
        %v1172 = vrot.slane %v1153, 3
        %v1173 = vsel %vm1103, %v1172, %v1171
        %v1174 = vrot.slane %v1154, 2
        %v1175 = vsel %vm1106, %v1174, %v1173
        %v1176 = vrot.slane %v1155, 1
        %v1177 = vsel %vm1109, %v1176, %v1175
        %v1179 = vsel %vm439, %v1177, 0.0
        %s1180 = scalar_lea.vmem [#allocation3], 16
        %1181 = vst [vmem:[%s1180] sm:$0xff] %v1179
        %v1182 = vld [vmem:[#allocation4 + $0x3] sm:$0x1]
        %v1183 = vld [vmem:[#allocation4 + $0xb] sm:$0x1]
        %v1184 = vld [vmem:[#allocation4 + $0x13] sm:$0x1]
        %v1185 = vld [vmem:[#allocation4 + $0x1b] sm:$0x1]
        %v1186 = vld [vmem:[#allocation4 + $0x23] sm:$0x1]
        %v1187 = vld [vmem:[#allocation4 + $0x2b] sm:$0x1]
        %v1188 = vld [vmem:[#allocation4 + $0x33] sm:$0x1]
        %v1189 = vld [vmem:[#allocation4 + $0x3b] sm:$0x1]
        %v1198 = vrot.slane %v1183, 7
        %v1199 = vsel %vm1091, %v1198, %v1182
        %v1200 = vrot.slane %v1184, 6
        %v1201 = vsel %vm1094, %v1200, %v1199
        %v1202 = vrot.slane %v1185, 5
        %v1203 = vsel %vm1097, %v1202, %v1201
        %v1204 = vrot.slane %v1186, 4
        %v1205 = vsel %vm1100, %v1204, %v1203
        %v1206 = vrot.slane %v1187, 3
        %v1207 = vsel %vm1103, %v1206, %v1205
        %v1208 = vrot.slane %v1188, 2
        %v1209 = vsel %vm1106, %v1208, %v1207
        %v1210 = vrot.slane %v1189, 1
        %v1211 = vsel %vm1109, %v1210, %v1209
        %v1213 = vsel %vm439, %v1211, 0.0
        %s1214 = scalar_lea.vmem [#allocation3], 24
        %1215 = vst [vmem:[%s1214] sm:$0xff] %v1213
        %v1216 = vld [vmem:[#allocation4 + $0x4] sm:$0x1]
        %v1217 = vld [vmem:[#allocation4 + $0xc] sm:$0x1]
        %v1218 = vld [vmem:[#allocation4 + $0x14] sm:$0x1]
        %v1219 = vld [vmem:[#allocation4 + $0x1c] sm:$0x1]
        %v1220 = vld [vmem:[#allocation4 + $0x24] sm:$0x1]
        %v1221 = vld [vmem:[#allocation4 + $0x2c] sm:$0x1]
        %v1222 = vld [vmem:[#allocation4 + $0x34] sm:$0x1]
        %v1223 = vld [vmem:[#allocation4 + $0x3c] sm:$0x1]
        %v1232 = vrot.slane %v1217, 7
        %v1233 = vsel %vm1091, %v1232, %v1216
        %v1234 = vrot.slane %v1218, 6
        %v1235 = vsel %vm1094, %v1234, %v1233
        %v1236 = vrot.slane %v1219, 5
        %v1237 = vsel %vm1097, %v1236, %v1235
        %v1238 = vrot.slane %v1220, 4
        %v1239 = vsel %vm1100, %v1238, %v1237
        %v1240 = vrot.slane %v1221, 3
        %v1241 = vsel %vm1103, %v1240, %v1239
        %v1242 = vrot.slane %v1222, 2
        %v1243 = vsel %vm1106, %v1242, %v1241
        %v1244 = vrot.slane %v1223, 1
        %v1245 = vsel %vm1109, %v1244, %v1243
        %v1247 = vsel %vm439, %v1245, 0.0
        %s1248 = scalar_lea.vmem [#allocation3], 32
        %1249 = vst [vmem:[%s1248] sm:$0xff] %v1247
        %v1250 = vld [vmem:[#allocation4 + $0x5] sm:$0x1]
        %v1251 = vld [vmem:[#allocation4 + $0xd] sm:$0x1]
        %v1252 = vld [vmem:[#allocation4 + $0x15] sm:$0x1]
        %v1253 = vld [vmem:[#allocation4 + $0x1d] sm:$0x1]
        %v1254 = vld [vmem:[#allocation4 + $0x25] sm:$0x1]
        %v1255 = vld [vmem:[#allocation4 + $0x2d] sm:$0x1]
        %v1256 = vld [vmem:[#allocation4 + $0x35] sm:$0x1]
        %v1257 = vld [vmem:[#allocation4 + $0x3d] sm:$0x1]
        %v1266 = vrot.slane %v1251, 7
        %v1267 = vsel %vm1091, %v1266, %v1250
        %v1268 = vrot.slane %v1252, 6
        %v1269 = vsel %vm1094, %v1268, %v1267
        %v1270 = vrot.slane %v1253, 5
        %v1271 = vsel %vm1097, %v1270, %v1269
        %v1272 = vrot.slane %v1254, 4
        %v1273 = vsel %vm1100, %v1272, %v1271
        %v1274 = vrot.slane %v1255, 3
        %v1275 = vsel %vm1103, %v1274, %v1273
        %v1276 = vrot.slane %v1256, 2
        %v1277 = vsel %vm1106, %v1276, %v1275
        %v1278 = vrot.slane %v1257, 1
        %v1279 = vsel %vm1109, %v1278, %v1277
        %v1281 = vsel %vm439, %v1279, 0.0
        %s1282 = scalar_lea.vmem [#allocation3], 40
        %1283 = vst [vmem:[%s1282] sm:$0xff] %v1281
        %v1284 = vld [vmem:[#allocation4 + $0x6] sm:$0x1]
        %v1285 = vld [vmem:[#allocation4 + $0xe] sm:$0x1]
        %v1286 = vld [vmem:[#allocation4 + $0x16] sm:$0x1]
        %v1287 = vld [vmem:[#allocation4 + $0x1e] sm:$0x1]
        %v1288 = vld [vmem:[#allocation4 + $0x26] sm:$0x1]
        %v1289 = vld [vmem:[#allocation4 + $0x2e] sm:$0x1]
        %v1290 = vld [vmem:[#allocation4 + $0x36] sm:$0x1]
        %v1291 = vld [vmem:[#allocation4 + $0x3e] sm:$0x1]
        %v1300 = vrot.slane %v1285, 7
        %v1301 = vsel %vm1091, %v1300, %v1284
        %v1302 = vrot.slane %v1286, 6
        %v1303 = vsel %vm1094, %v1302, %v1301
        %v1304 = vrot.slane %v1287, 5
        %v1305 = vsel %vm1097, %v1304, %v1303
        %v1306 = vrot.slane %v1288, 4
        %v1307 = vsel %vm1100, %v1306, %v1305
        %v1308 = vrot.slane %v1289, 3
        %v1309 = vsel %vm1103, %v1308, %v1307
        %v1310 = vrot.slane %v1290, 2
        %v1311 = vsel %vm1106, %v1310, %v1309
        %v1312 = vrot.slane %v1291, 1
        %v1313 = vsel %vm1109, %v1312, %v1311
        %v1315 = vsel %vm439, %v1313, 0.0
        %s1316 = scalar_lea.vmem [#allocation3], 48
        %1317 = vst [vmem:[%s1316] sm:$0xff] %v1315
        %v1318 = vld [vmem:[#allocation4 + $0x7] sm:$0x1]
        %v1319 = vld [vmem:[#allocation4 + $0xf] sm:$0x1]
        %v1320 = vld [vmem:[#allocation4 + $0x17] sm:$0x1]
        %v1321 = vld [vmem:[#allocation4 + $0x1f] sm:$0x1]
        %v1322 = vld [vmem:[#allocation4 + $0x27] sm:$0x1]
        %v1323 = vld [vmem:[#allocation4 + $0x2f] sm:$0x1]
        %v1324 = vld [vmem:[#allocation4 + $0x37] sm:$0x1]
        %v1325 = vld [vmem:[#allocation4 + $0x3f] sm:$0x1]
        %v1334 = vrot.slane %v1319, 7
        %v1335 = vsel %vm1091, %v1334, %v1318
        %v1336 = vrot.slane %v1320, 6
        %v1337 = vsel %vm1094, %v1336, %v1335
        %v1338 = vrot.slane %v1321, 5
        %v1339 = vsel %vm1097, %v1338, %v1337
        %v1340 = vrot.slane %v1322, 4
        %v1341 = vsel %vm1100, %v1340, %v1339
        %v1342 = vrot.slane %v1323, 3
        %v1343 = vsel %vm1103, %v1342, %v1341
        %v1344 = vrot.slane %v1324, 2
        %v1345 = vsel %vm1106, %v1344, %v1343
        %v1346 = vrot.slane %v1325, 1
        %v1347 = vsel %vm1109, %v1346, %v1345
        %v1349 = vsel %vm439, %v1347, 0.0
        %s1350 = scalar_lea.vmem [#allocation3], 56
        %1351 = vst [vmem:[%s1350] sm:$0xff] %v1349
        %v1352 = vld [vmem:[#allocation3] sm:$0xff]
        %v1353 = vld [vmem:[#allocation3 + $0x8] sm:$0xff]
        %v1354 = vld [vmem:[#allocation3 + $0x10] sm:$0xff]
        %v1355 = vld [vmem:[#allocation3 + $0x18] sm:$0xff]
        %v1356 = vld [vmem:[#allocation3 + $0x20] sm:$0xff]
        %v1357 = vld [vmem:[#allocation3 + $0x28] sm:$0xff]
        %v1358 = vld [vmem:[#allocation3 + $0x30] sm:$0xff]
        %v1359 = vld [vmem:[#allocation3 + $0x38] sm:$0xff]
        %v1360 = vpack.c.bf16 %v1353, %v1352
        %v1361 = vpack.c.bf16 %v1355, %v1354
        %v1362 = vpack.c.bf16 %v1357, %v1356
        %v1363 = vpack.c.bf16 %v1359, %v1358
        %v1364 = vld [vmem:[#allocation7] sm:$0xff]
        %v1365 = vld [vmem:[#allocation7 + $0x8] sm:$0xff]
        %v1366 = vld [vmem:[#allocation7 + $0x10] sm:$0xff]
        %v1367 = vld [vmem:[#allocation7 + $0x18] sm:$0xff]
        %v1368 = vld [vmem:[#allocation7 + $0x20] sm:$0xff]
        %v1369 = vld [vmem:[#allocation7 + $0x28] sm:$0xff]
        %v1370 = vld [vmem:[#allocation7 + $0x30] sm:$0xff]
        %v1371 = vld [vmem:[#allocation7 + $0x38] sm:$0xff]
        %v1372 = vld [vmem:[#allocation7 + $0x40] sm:$0xff]
        %v1373 = vld [vmem:[#allocation7 + $0x48] sm:$0xff]
        %v1374 = vld [vmem:[#allocation7 + $0x50] sm:$0xff]
        %v1375 = vld [vmem:[#allocation7 + $0x58] sm:$0xff]
        %v1376 = vld [vmem:[#allocation7 + $0x60] sm:$0xff]
        %v1377 = vld [vmem:[#allocation7 + $0x68] sm:$0xff]
        %v1378 = vld [vmem:[#allocation7 + $0x70] sm:$0xff]
        %v1379 = vld [vmem:[#allocation7 + $0x78] sm:$0xff]
        %v1380 = vld [vmem:[#allocation7 + $0x80] sm:$0xff]
        %v1381 = vld [vmem:[#allocation7 + $0x88] sm:$0xff]
        %v1382 = vld [vmem:[#allocation7 + $0x90] sm:$0xff]
        %v1383 = vld [vmem:[#allocation7 + $0x98] sm:$0xff]
        %v1384 = vld [vmem:[#allocation7 + $0xa0] sm:$0xff]
        %v1385 = vld [vmem:[#allocation7 + $0xa8] sm:$0xff]
        %v1386 = vld [vmem:[#allocation7 + $0xb0] sm:$0xff]
        %v1387 = vld [vmem:[#allocation7 + $0xb8] sm:$0xff]
        %v1388 = vld [vmem:[#allocation7 + $0xc0] sm:$0xff]
        %v1389 = vld [vmem:[#allocation7 + $0xc8] sm:$0xff]
        %v1390 = vld [vmem:[#allocation7 + $0xd0] sm:$0xff]
        %v1391 = vld [vmem:[#allocation7 + $0xd8] sm:$0xff]
        %v1392 = vld [vmem:[#allocation7 + $0xe0] sm:$0xff]
        %v1393 = vld [vmem:[#allocation7 + $0xe8] sm:$0xff]
        %v1394 = vld [vmem:[#allocation7 + $0xf0] sm:$0xff]
        %v1395 = vld [vmem:[#allocation7 + $0xf8] sm:$0xff]
        %v1396 = vld [vmem:[%s7] sm:$0xf]
        %v1398 = vperm.slane %v1396, 0
        %v1399 = vperm.slane %v1396, 1
        %v1400 = vperm.slane %v1396, 2
        %v1401 = vperm.slane %v1396, 3
        %v1438 = vunpack.c.l.b16 %v1364
        %v1439 = vunpack.c.h.b16 %v1364
        %v1440 = vunpack.c.l.b16 %v1365
        %v1441 = vunpack.c.h.b16 %v1365
        %v1442 = vunpack.c.l.b16 %v1366
        %v1443 = vunpack.c.h.b16 %v1366
        %v1444 = vunpack.c.l.b16 %v1367
        %v1445 = vunpack.c.h.b16 %v1367
        %v1446 = vunpack.c.l.b16 %v1368
        %v1447 = vunpack.c.h.b16 %v1368
        %v1448 = vunpack.c.l.b16 %v1369
        %v1449 = vunpack.c.h.b16 %v1369
        %v1450 = vunpack.c.l.b16 %v1370
        %v1451 = vunpack.c.h.b16 %v1370
        %v1452 = vunpack.c.l.b16 %v1371
        %v1453 = vunpack.c.h.b16 %v1371
        %v1454 = vunpack.c.l.b16 %v1372
        %v1455 = vunpack.c.h.b16 %v1372
        %v1456 = vunpack.c.l.b16 %v1373
        %v1457 = vunpack.c.h.b16 %v1373
        %v1458 = vunpack.c.l.b16 %v1374
        %v1459 = vunpack.c.h.b16 %v1374
        %v1460 = vunpack.c.l.b16 %v1375
        %v1461 = vunpack.c.h.b16 %v1375
        %v1462 = vunpack.c.l.b16 %v1376
        %v1463 = vunpack.c.h.b16 %v1376
        %v1464 = vunpack.c.l.b16 %v1377
        %v1465 = vunpack.c.h.b16 %v1377
        %v1466 = vunpack.c.l.b16 %v1378
        %v1467 = vunpack.c.h.b16 %v1378
        %v1468 = vunpack.c.l.b16 %v1379
        %v1469 = vunpack.c.h.b16 %v1379
        %v1470 = vunpack.c.l.b16 %v1380
        %v1471 = vunpack.c.h.b16 %v1380
        %v1472 = vunpack.c.l.b16 %v1381
        %v1473 = vunpack.c.h.b16 %v1381
        %v1474 = vunpack.c.l.b16 %v1382
        %v1475 = vunpack.c.h.b16 %v1382
        %v1476 = vunpack.c.l.b16 %v1383
        %v1477 = vunpack.c.h.b16 %v1383
        %v1478 = vunpack.c.l.b16 %v1384
        %v1479 = vunpack.c.h.b16 %v1384
        %v1480 = vunpack.c.l.b16 %v1385
        %v1481 = vunpack.c.h.b16 %v1385
        %v1482 = vunpack.c.l.b16 %v1386
        %v1483 = vunpack.c.h.b16 %v1386
        %v1484 = vunpack.c.l.b16 %v1387
        %v1485 = vunpack.c.h.b16 %v1387
        %v1486 = vunpack.c.l.b16 %v1388
        %v1487 = vunpack.c.h.b16 %v1388
        %v1488 = vunpack.c.l.b16 %v1389
        %v1489 = vunpack.c.h.b16 %v1389
        %v1490 = vunpack.c.l.b16 %v1390
        %v1491 = vunpack.c.h.b16 %v1390
        %v1492 = vunpack.c.l.b16 %v1391
        %v1493 = vunpack.c.h.b16 %v1391
        %v1494 = vunpack.c.l.b16 %v1392
        %v1495 = vunpack.c.h.b16 %v1392
        %v1496 = vunpack.c.l.b16 %v1393
        %v1497 = vunpack.c.h.b16 %v1393
        %v1498 = vunpack.c.l.b16 %v1394
        %v1499 = vunpack.c.h.b16 %v1394
        %v1500 = vunpack.c.l.b16 %v1395
        %v1501 = vunpack.c.h.b16 %v1395
        %v1502 = vpack.c.b16 %v1442, %v1438
        %v1503 = vpack.c.b16 %v1443, %v1439
        %v1504 = vpack.c.b16 %v1444, %v1440
        %v1505 = vpack.c.b16 %v1445, %v1441
        %v1506 = vpack.c.b16 %v1450, %v1446
        %v1507 = vpack.c.b16 %v1451, %v1447
        %v1508 = vpack.c.b16 %v1452, %v1448
        %v1509 = vpack.c.b16 %v1453, %v1449
        %v1510 = vpack.c.b16 %v1458, %v1454
        %v1511 = vpack.c.b16 %v1459, %v1455
        %v1512 = vpack.c.b16 %v1460, %v1456
        %v1513 = vpack.c.b16 %v1461, %v1457
        %v1514 = vpack.c.b16 %v1466, %v1462
        %v1515 = vpack.c.b16 %v1467, %v1463
        %v1516 = vpack.c.b16 %v1468, %v1464
        %v1517 = vpack.c.b16 %v1469, %v1465
        %v1518 = vpack.c.b16 %v1474, %v1470
        %v1519 = vpack.c.b16 %v1475, %v1471
        %v1520 = vpack.c.b16 %v1476, %v1472
        %v1521 = vpack.c.b16 %v1477, %v1473
        %v1522 = vpack.c.b16 %v1482, %v1478
        %v1523 = vpack.c.b16 %v1483, %v1479
        %v1524 = vpack.c.b16 %v1484, %v1480
        %v1525 = vpack.c.b16 %v1485, %v1481
        %v1526 = vpack.c.b16 %v1490, %v1486
        %v1527 = vpack.c.b16 %v1491, %v1487
        %v1528 = vpack.c.b16 %v1492, %v1488
        %v1529 = vpack.c.b16 %v1493, %v1489
        %v1530 = vpack.c.b16 %v1498, %v1494
        %v1531 = vpack.c.b16 %v1499, %v1495
        %v1532 = vpack.c.b16 %v1500, %v1496
        %v1533 = vpack.c.b16 %v1501, %v1497
        %1566 = vmatpush.bf16.msra.mxu0 %v1530
        %1567 = vmatpush.bf16.msra.mxu0 %v1526
        %1568 = vmatpush.bf16.msra.mxu0 %v1522
        %1569 = vmatpush.bf16.msra.mxu0 %v1518
        %1570 = vmatpush.bf16.msra.mxu0 %v1514
        %1571 = vmatpush.bf16.msra.mxu0 %v1510
        %1572 = vmatpush.bf16.msra.mxu0 %v1506
        %1573 = vmatpush.bf16.msra.mxu0 %v1502
        %1574 = vmatmul.bf16.gmra.mxu0 %v1360
        %v1575 = vpop.f32.mrf.mxu0
        %v1576 = vadd.f32 %v1398, %v1575
        %v1577 = vpop.f32.mrf.mxu0
        %v1578 = vadd.f32 %v1398, %v1577
        %1579 = vmatmul.bf16.gmra.mxu0 %v1361
        %v1580 = vpop.f32.mrf.mxu0
        %v1581 = vadd.f32 %v1398, %v1580
        %v1582 = vpop.f32.mrf.mxu0
        %v1583 = vadd.f32 %v1398, %v1582
        %1584 = vmatmul.bf16.gmra.mxu0 %v1362
        %v1585 = vpop.f32.mrf.mxu0
        %v1586 = vadd.f32 %v1398, %v1585
        %v1587 = vpop.f32.mrf.mxu0
        %v1588 = vadd.f32 %v1398, %v1587
        %1589 = vmatmul.bf16.gmra.mxu0 %v1363
        %v1590 = vpop.f32.mrf.mxu0
        %v1591 = vadd.f32 %v1398, %v1590
        %v1592 = vpop.f32.mrf.mxu0
        %v1593 = vadd.f32 %v1398, %v1592
        %1594 = vdwg.mxu0
        %1595 = vmatpush.bf16.msra.mxu0 %v1531
        %1596 = vmatpush.bf16.msra.mxu0 %v1527
        %1597 = vmatpush.bf16.msra.mxu0 %v1523
        %1598 = vmatpush.bf16.msra.mxu0 %v1519
        %1599 = vmatpush.bf16.msra.mxu0 %v1515
        %1600 = vmatpush.bf16.msra.mxu0 %v1511
        %1601 = vmatpush.bf16.msra.mxu0 %v1507
        %1602 = vmatpush.bf16.msra.mxu0 %v1503
        %1603 = vmatmul.bf16.gmra.mxu0 %v1360
        %v1604 = vpop.f32.mrf.mxu0
        %v1605 = vadd.f32 %v1399, %v1604
        %v1606 = vpop.f32.mrf.mxu0
        %v1607 = vadd.f32 %v1399, %v1606
        %1608 = vmatmul.bf16.gmra.mxu0 %v1361
        %v1609 = vpop.f32.mrf.mxu0
        %v1610 = vadd.f32 %v1399, %v1609
        %v1611 = vpop.f32.mrf.mxu0
        %v1612 = vadd.f32 %v1399, %v1611
        %1613 = vmatmul.bf16.gmra.mxu0 %v1362
        %v1614 = vpop.f32.mrf.mxu0
        %v1615 = vadd.f32 %v1399, %v1614
        %v1616 = vpop.f32.mrf.mxu0
        %v1617 = vadd.f32 %v1399, %v1616
        %1618 = vmatmul.bf16.gmra.mxu0 %v1363
        %v1619 = vpop.f32.mrf.mxu0
        %v1620 = vadd.f32 %v1399, %v1619
        %v1621 = vpop.f32.mrf.mxu0
        %v1622 = vadd.f32 %v1399, %v1621
        %1623 = vdwg.mxu0
        %1624 = vmatpush.bf16.msra.mxu0 %v1532
        %1625 = vmatpush.bf16.msra.mxu0 %v1528
        %1626 = vmatpush.bf16.msra.mxu0 %v1524
        %1627 = vmatpush.bf16.msra.mxu0 %v1520
        %1628 = vmatpush.bf16.msra.mxu0 %v1516
        %1629 = vmatpush.bf16.msra.mxu0 %v1512
        %1630 = vmatpush.bf16.msra.mxu0 %v1508
        %1631 = vmatpush.bf16.msra.mxu0 %v1504
        %1632 = vmatmul.bf16.gmra.mxu0 %v1360
        %v1633 = vpop.f32.mrf.mxu0
        %v1634 = vadd.f32 %v1400, %v1633
        %v1635 = vpop.f32.mrf.mxu0
        %v1636 = vadd.f32 %v1400, %v1635
        %1637 = vmatmul.bf16.gmra.mxu0 %v1361
        %v1638 = vpop.f32.mrf.mxu0
        %v1639 = vadd.f32 %v1400, %v1638
        %v1640 = vpop.f32.mrf.mxu0
        %v1641 = vadd.f32 %v1400, %v1640
        %1642 = vmatmul.bf16.gmra.mxu0 %v1362
        %v1643 = vpop.f32.mrf.mxu0
        %v1644 = vadd.f32 %v1400, %v1643
        %v1645 = vpop.f32.mrf.mxu0
        %v1646 = vadd.f32 %v1400, %v1645
        %1647 = vmatmul.bf16.gmra.mxu0 %v1363
        %v1648 = vpop.f32.mrf.mxu0
        %v1649 = vadd.f32 %v1400, %v1648
        %v1650 = vpop.f32.mrf.mxu0
        %v1651 = vadd.f32 %v1400, %v1650
        %1652 = vdwg.mxu0
        %1653 = vmatpush.bf16.msra.mxu0 %v1533
        %1654 = vmatpush.bf16.msra.mxu0 %v1529
        %1655 = vmatpush.bf16.msra.mxu0 %v1525
        %1656 = vmatpush.bf16.msra.mxu0 %v1521
        %1657 = vmatpush.bf16.msra.mxu0 %v1517
        %1658 = vmatpush.bf16.msra.mxu0 %v1513
        %1659 = vmatpush.bf16.msra.mxu0 %v1509
        %1660 = vmatpush.bf16.msra.mxu0 %v1505
        %1661 = vmatmul.bf16.gmra.mxu0 %v1360
        %v1662 = vpop.f32.mrf.mxu0
        %v1663 = vadd.f32 %v1401, %v1662
        %v1664 = vpop.f32.mrf.mxu0
        %v1665 = vadd.f32 %v1401, %v1664
        %1666 = vmatmul.bf16.gmra.mxu0 %v1361
        %v1667 = vpop.f32.mrf.mxu0
        %v1668 = vadd.f32 %v1401, %v1667
        %v1669 = vpop.f32.mrf.mxu0
        %v1670 = vadd.f32 %v1401, %v1669
        %1671 = vmatmul.bf16.gmra.mxu0 %v1362
        %v1672 = vpop.f32.mrf.mxu0
        %v1673 = vadd.f32 %v1401, %v1672
        %v1674 = vpop.f32.mrf.mxu0
        %v1675 = vadd.f32 %v1401, %v1674
        %1676 = vmatmul.bf16.gmra.mxu0 %v1363
        %v1677 = vpop.f32.mrf.mxu0
        %v1678 = vadd.f32 %v1401, %v1677
        %v1679 = vpop.f32.mrf.mxu0
        %v1680 = vadd.f32 %v1401, %v1679
        %1681 = vdwg.mxu0
        %1682 = vst [vmem:[#allocation2] sm:$0xff] %v1576
        %1683 = vst [vmem:[#allocation2 + $0x8] sm:$0xff] %v1605
        %1684 = vst [vmem:[#allocation2 + $0x10] sm:$0xff] %v1634
        %1685 = vst [vmem:[#allocation2 + $0x18] sm:$0xff] %v1663
        %1686 = vst [vmem:[#allocation2 + $0x20] sm:$0xff] %v1578
        %1687 = vst [vmem:[#allocation2 + $0x28] sm:$0xff] %v1607
        %1688 = vst [vmem:[#allocation2 + $0x30] sm:$0xff] %v1636
        %1689 = vst [vmem:[#allocation2 + $0x38] sm:$0xff] %v1665
        %1690 = vst [vmem:[#allocation2 + $0x40] sm:$0xff] %v1581
        %1691 = vst [vmem:[#allocation2 + $0x48] sm:$0xff] %v1610
        %1692 = vst [vmem:[#allocation2 + $0x50] sm:$0xff] %v1639
        %1693 = vst [vmem:[#allocation2 + $0x58] sm:$0xff] %v1668
        %1694 = vst [vmem:[#allocation2 + $0x60] sm:$0xff] %v1583
        %1695 = vst [vmem:[#allocation2 + $0x68] sm:$0xff] %v1612
        %1696 = vst [vmem:[#allocation2 + $0x70] sm:$0xff] %v1641
        %1697 = vst [vmem:[#allocation2 + $0x78] sm:$0xff] %v1670
        %1698 = vst [vmem:[#allocation2 + $0x80] sm:$0xff] %v1586
        %1699 = vst [vmem:[#allocation2 + $0x88] sm:$0xff] %v1615
        %1700 = vst [vmem:[#allocation2 + $0x90] sm:$0xff] %v1644
        %1701 = vst [vmem:[#allocation2 + $0x98] sm:$0xff] %v1673
        %1702 = vst [vmem:[#allocation2 + $0xa0] sm:$0xff] %v1588
        %1703 = vst [vmem:[#allocation2 + $0xa8] sm:$0xff] %v1617
        %1704 = vst [vmem:[#allocation2 + $0xb0] sm:$0xff] %v1646
        %1705 = vst [vmem:[#allocation2 + $0xb8] sm:$0xff] %v1675
        %1706 = vst [vmem:[#allocation2 + $0xc0] sm:$0xff] %v1591
        %1707 = vst [vmem:[#allocation2 + $0xc8] sm:$0xff] %v1620
        %1708 = vst [vmem:[#allocation2 + $0xd0] sm:$0xff] %v1649
        %1709 = vst [vmem:[#allocation2 + $0xd8] sm:$0xff] %v1678
        %1710 = vst [vmem:[#allocation2 + $0xe0] sm:$0xff] %v1593
        %1711 = vst [vmem:[#allocation2 + $0xe8] sm:$0xff] %v1622
        %1712 = vst [vmem:[#allocation2 + $0xf0] sm:$0xff] %v1651
        %1713 = vst [vmem:[#allocation2 + $0xf8] sm:$0xff] %v1680
        %v1714 = vld [vmem:[#allocation2] sm:$0xff]
        %v1715 = vld [vmem:[#allocation2 + $0x8] sm:$0xff]
        %v1716 = vld [vmem:[#allocation2 + $0x10] sm:$0xff]
        %v1717 = vld [vmem:[#allocation2 + $0x18] sm:$0xff]
        %v1718 = vld [vmem:[#allocation9] sm:$0xff]
        %v1719 = vld [vmem:[#allocation9 + $0x8] sm:$0xff]
        %v1720 = vld [vmem:[#allocation9 + $0x10] sm:$0xff]
        %v1721 = vld [vmem:[#allocation9 + $0x18] sm:$0xff]
        %v1722 = vld [vmem:[#allocation9 + $0x20] sm:$0xff]
        %v1723 = vld [vmem:[#allocation9 + $0x28] sm:$0xff]
        %v1724 = vld [vmem:[#allocation9 + $0x30] sm:$0xff]
        %v1725 = vld [vmem:[#allocation9 + $0x38] sm:$0xff]
        %v1726 = vld [vmem:[#allocation9 + $0x40] sm:$0xff]
        %v1727 = vld [vmem:[#allocation9 + $0x48] sm:$0xff]
        %v1728 = vld [vmem:[#allocation9 + $0x50] sm:$0xff]
        %v1729 = vld [vmem:[#allocation9 + $0x58] sm:$0xff]
        %v1730 = vld [vmem:[#allocation9 + $0x60] sm:$0xff]
        %v1731 = vld [vmem:[#allocation9 + $0x68] sm:$0xff]
        %v1732 = vld [vmem:[#allocation9 + $0x70] sm:$0xff]
        %v1733 = vld [vmem:[#allocation9 + $0x78] sm:$0xff]
        %v1734 = vld [vmem:[#allocation9 + $0x80] sm:$0xff]
        %v1735 = vld [vmem:[#allocation9 + $0x88] sm:$0xff]
        %v1736 = vld [vmem:[#allocation9 + $0x90] sm:$0xff]
        %v1737 = vld [vmem:[#allocation9 + $0x98] sm:$0xff]
        %v1738 = vld [vmem:[#allocation9 + $0xa0] sm:$0xff]
        %v1739 = vld [vmem:[#allocation9 + $0xa8] sm:$0xff]
        %v1740 = vld [vmem:[#allocation9 + $0xb0] sm:$0xff]
        %v1741 = vld [vmem:[#allocation9 + $0xb8] sm:$0xff]
        %v1742 = vld [vmem:[#allocation9 + $0xc0] sm:$0xff]
        %v1743 = vld [vmem:[#allocation9 + $0xc8] sm:$0xff]
        %v1744 = vld [vmem:[#allocation9 + $0xd0] sm:$0xff]
        %v1745 = vld [vmem:[#allocation9 + $0xd8] sm:$0xff]
        %v1746 = vld [vmem:[#allocation9 + $0xe0] sm:$0xff]
        %v1747 = vld [vmem:[#allocation9 + $0xe8] sm:$0xff]
        %v1748 = vld [vmem:[#allocation9 + $0xf0] sm:$0xff]
        %v1749 = vld [vmem:[#allocation9 + $0xf8] sm:$0xff]
        %v1782 = vunpack.c.l.b16 %v1718
        %v1783 = vunpack.c.h.b16 %v1718
        %v1784 = vunpack.c.l.b16 %v1719
        %v1785 = vunpack.c.h.b16 %v1719
        %v1786 = vunpack.c.l.b16 %v1720
        %v1787 = vunpack.c.h.b16 %v1720
        %v1788 = vunpack.c.l.b16 %v1721
        %v1789 = vunpack.c.h.b16 %v1721
        %v1790 = vunpack.c.l.b16 %v1722
        %v1791 = vunpack.c.h.b16 %v1722
        %v1792 = vunpack.c.l.b16 %v1723
        %v1793 = vunpack.c.h.b16 %v1723
        %v1794 = vunpack.c.l.b16 %v1724
        %v1795 = vunpack.c.h.b16 %v1724
        %v1796 = vunpack.c.l.b16 %v1725
        %v1797 = vunpack.c.h.b16 %v1725
        %v1798 = vunpack.c.l.b16 %v1726
        %v1799 = vunpack.c.h.b16 %v1726
        %v1800 = vunpack.c.l.b16 %v1727
        %v1801 = vunpack.c.h.b16 %v1727
        %v1802 = vunpack.c.l.b16 %v1728
        %v1803 = vunpack.c.h.b16 %v1728
        %v1804 = vunpack.c.l.b16 %v1729
        %v1805 = vunpack.c.h.b16 %v1729
        %v1806 = vunpack.c.l.b16 %v1730
        %v1807 = vunpack.c.h.b16 %v1730
        %v1808 = vunpack.c.l.b16 %v1731
        %v1809 = vunpack.c.h.b16 %v1731
        %v1810 = vunpack.c.l.b16 %v1732
        %v1811 = vunpack.c.h.b16 %v1732
        %v1812 = vunpack.c.l.b16 %v1733
        %v1813 = vunpack.c.h.b16 %v1733
        %v1814 = vunpack.c.l.b16 %v1734
        %v1815 = vunpack.c.h.b16 %v1734
        %v1816 = vunpack.c.l.b16 %v1735
        %v1817 = vunpack.c.h.b16 %v1735
        %v1818 = vunpack.c.l.b16 %v1736
        %v1819 = vunpack.c.h.b16 %v1736
        %v1820 = vunpack.c.l.b16 %v1737
        %v1821 = vunpack.c.h.b16 %v1737
        %v1822 = vunpack.c.l.b16 %v1738
        %v1823 = vunpack.c.h.b16 %v1738
        %v1824 = vunpack.c.l.b16 %v1739
        %v1825 = vunpack.c.h.b16 %v1739
        %v1826 = vunpack.c.l.b16 %v1740
        %v1827 = vunpack.c.h.b16 %v1740
        %v1828 = vunpack.c.l.b16 %v1741
        %v1829 = vunpack.c.h.b16 %v1741
        %v1830 = vunpack.c.l.b16 %v1742
        %v1831 = vunpack.c.h.b16 %v1742
        %v1832 = vunpack.c.l.b16 %v1743
        %v1833 = vunpack.c.h.b16 %v1743
        %v1834 = vunpack.c.l.b16 %v1744
        %v1835 = vunpack.c.h.b16 %v1744
        %v1836 = vunpack.c.l.b16 %v1745
        %v1837 = vunpack.c.h.b16 %v1745
        %v1838 = vunpack.c.l.b16 %v1746
        %v1839 = vunpack.c.h.b16 %v1746
        %v1840 = vunpack.c.l.b16 %v1747
        %v1841 = vunpack.c.h.b16 %v1747
        %v1842 = vunpack.c.l.b16 %v1748
        %v1843 = vunpack.c.h.b16 %v1748
        %v1844 = vunpack.c.l.b16 %v1749
        %v1845 = vunpack.c.h.b16 %v1749
        %v1846 = vpack.c.b16 %v1786, %v1782
        %v1847 = vpack.c.b16 %v1787, %v1783
        %v1848 = vpack.c.b16 %v1788, %v1784
        %v1849 = vpack.c.b16 %v1789, %v1785
        %v1850 = vpack.c.b16 %v1794, %v1790
        %v1851 = vpack.c.b16 %v1795, %v1791
        %v1852 = vpack.c.b16 %v1796, %v1792
        %v1853 = vpack.c.b16 %v1797, %v1793
        %v1854 = vpack.c.b16 %v1802, %v1798
        %v1855 = vpack.c.b16 %v1803, %v1799
        %v1856 = vpack.c.b16 %v1804, %v1800
        %v1857 = vpack.c.b16 %v1805, %v1801
        %v1858 = vpack.c.b16 %v1810, %v1806
        %v1859 = vpack.c.b16 %v1811, %v1807
        %v1860 = vpack.c.b16 %v1812, %v1808
        %v1861 = vpack.c.b16 %v1813, %v1809
        %v1862 = vpack.c.b16 %v1818, %v1814
        %v1863 = vpack.c.b16 %v1819, %v1815
        %v1864 = vpack.c.b16 %v1820, %v1816
        %v1865 = vpack.c.b16 %v1821, %v1817
        %v1866 = vpack.c.b16 %v1826, %v1822
        %v1867 = vpack.c.b16 %v1827, %v1823
        %v1868 = vpack.c.b16 %v1828, %v1824
        %v1869 = vpack.c.b16 %v1829, %v1825
        %v1870 = vpack.c.b16 %v1834, %v1830
        %v1871 = vpack.c.b16 %v1835, %v1831
        %v1872 = vpack.c.b16 %v1836, %v1832
        %v1873 = vpack.c.b16 %v1837, %v1833
        %v1874 = vpack.c.b16 %v1842, %v1838
        %v1875 = vpack.c.b16 %v1843, %v1839
        %v1876 = vpack.c.b16 %v1844, %v1840
        %v1877 = vpack.c.b16 %v1845, %v1841
        %1910 = vmatpush.bf16.msra.mxu0 %v1874
        %1911 = vmatpush.bf16.msra.mxu0 %v1870
        %1912 = vmatpush.bf16.msra.mxu0 %v1866
        %1913 = vmatpush.bf16.msra.mxu0 %v1862
        %1914 = vmatpush.bf16.msra.mxu0 %v1858
        %1915 = vmatpush.bf16.msra.mxu0 %v1854
        %1916 = vmatpush.bf16.msra.mxu0 %v1850
        %1917 = vmatpush.bf16.msra.mxu0 %v1846
        %1918 = vmatmul.bf16.gmra.mxu0 0
        %v1919 = vpop.f32.mrf.mxu0
        %v1920 = vadd.f32 0.0, %v1919
        %v1921 = vpop.f32.mrf.mxu0
        %1922 = vdwg.mxu0
        %1923 = vmatpush.bf16.msra.mxu0 %v1875
        %1924 = vmatpush.bf16.msra.mxu0 %v1871
        %1925 = vmatpush.bf16.msra.mxu0 %v1867
        %1926 = vmatpush.bf16.msra.mxu0 %v1863
        %1927 = vmatpush.bf16.msra.mxu0 %v1859
        %1928 = vmatpush.bf16.msra.mxu0 %v1855
        %1929 = vmatpush.bf16.msra.mxu0 %v1851
        %1930 = vmatpush.bf16.msra.mxu0 %v1847
        %1931 = vmatmul.bf16.gmra.mxu0 0
        %v1932 = vpop.f32.mrf.mxu0
        %v1933 = vadd.f32 0.0, %v1932
        %v1934 = vpop.f32.mrf.mxu0
        %1935 = vdwg.mxu0
        %1936 = vmatpush.bf16.msra.mxu0 %v1876
        %1937 = vmatpush.bf16.msra.mxu0 %v1872
        %1938 = vmatpush.bf16.msra.mxu0 %v1868
        %1939 = vmatpush.bf16.msra.mxu0 %v1864
        %1940 = vmatpush.bf16.msra.mxu0 %v1860
        %1941 = vmatpush.bf16.msra.mxu0 %v1856
        %1942 = vmatpush.bf16.msra.mxu0 %v1852
        %1943 = vmatpush.bf16.msra.mxu0 %v1848
        %1944 = vmatmul.bf16.gmra.mxu0 0
        %v1945 = vpop.f32.mrf.mxu0
        %v1946 = vadd.f32 0.0, %v1945
        %v1947 = vpop.f32.mrf.mxu0
        %1948 = vdwg.mxu0
        %1949 = vmatpush.bf16.msra.mxu0 %v1877
        %1950 = vmatpush.bf16.msra.mxu0 %v1873
        %1951 = vmatpush.bf16.msra.mxu0 %v1869
        %1952 = vmatpush.bf16.msra.mxu0 %v1865
        %1953 = vmatpush.bf16.msra.mxu0 %v1861
        %1954 = vmatpush.bf16.msra.mxu0 %v1857
        %1955 = vmatpush.bf16.msra.mxu0 %v1853
        %1956 = vmatpush.bf16.msra.mxu0 %v1849
        %1957 = vmatmul.bf16.gmra.mxu0 0
        %v1958 = vpop.f32.mrf.mxu0
        %v1959 = vadd.f32 0.0, %v1958
        %v1960 = vpop.f32.mrf.mxu0
        %1961 = vdwg.mxu0
        %v1962 = vadd.f32 %v1714, %v1920
        %v1963 = vadd.f32 %v1715, %v1933
        %v1964 = vadd.f32 %v1716, %v1946
        %v1965 = vadd.f32 %v1717, %v1959
        %v1966 = vxor.u32 %v1962, 2147483648
        %v1967 = vmul.f32 %v1966, 1.442695
        %v1968 = vpow.pop %v1967
        %v1969 = vadd.f32 %v1968, 1.0
        %v1970 = vrcp.pop %v1969
        %v1971 = vmul.f32 %v1969, %v1970
        %v1972 = vsub.f32 1.0, %v1971
        %v1973 = vmul.f32 %v1970, %v1972
        %v1974 = vadd.f32 %v1970, %v1973
        %vm1975 = vweird.f32 %v1969
        %vm1976 = vweird.f32 %v1970
        %vm1977 = vmor %vm1975, %vm1976
        %v1978 = vsel %vm1977, %v1970, %v1974
        %v1979 = vand.u32 2147483647, %v1969
        %vm1980 = vcmp.eq.f32.partialorder %v1979, 8.507059e+37
        %v1981 = vand.u32 %v1969, 2147483648
        %v1982 = vor.u32 1.1754944e-38, %v1981
        %v1983 = vsel %vm1980, %v1982, %v1978
        %v1984 = vmul.f32 1.0, %v1983
        %v1985 = vxor.u32 %v1963, 2147483648
        %v1986 = vmul.f32 %v1985, 1.442695
        %v1987 = vpow.pop %v1986
        %v1988 = vadd.f32 %v1987, 1.0
        %v1989 = vrcp.pop %v1988
        %v1990 = vmul.f32 %v1988, %v1989
        %v1991 = vsub.f32 1.0, %v1990
        %v1992 = vmul.f32 %v1989, %v1991
        %v1993 = vadd.f32 %v1989, %v1992
        %vm1994 = vweird.f32 %v1988
        %vm1995 = vweird.f32 %v1989
        %vm1996 = vmor %vm1994, %vm1995
        %v1997 = vsel %vm1996, %v1989, %v1993
        %v1998 = vand.u32 2147483647, %v1988
        %vm1999 = vcmp.eq.f32.partialorder %v1998, 8.507059e+37
        %v2000 = vand.u32 %v1988, 2147483648
        %v2001 = vor.u32 1.1754944e-38, %v2000
        %v2002 = vsel %vm1999, %v2001, %v1997
        %v2003 = vmul.f32 1.0, %v2002
        %v2004 = vtanh.pop %v1964
        %v2005 = vxor.u32 %v1965, 2147483648
        %v2006 = vmul.f32 %v2005, 1.442695
        %v2007 = vpow.pop %v2006
        %v2008 = vadd.f32 %v2007, 1.0
        %v2009 = vrcp.pop %v2008
        %v2010 = vmul.f32 %v2008, %v2009
        %v2011 = vsub.f32 1.0, %v2010
        %v2012 = vmul.f32 %v2009, %v2011
        %v2013 = vadd.f32 %v2009, %v2012
        %vm2014 = vweird.f32 %v2008
        %vm2015 = vweird.f32 %v2009
        %vm2016 = vmor %vm2014, %vm2015
        %v2017 = vsel %vm2016, %v2009, %v2013
        %v2018 = vand.u32 2147483647, %v2008
        %vm2019 = vcmp.eq.f32.partialorder %v2018, 8.507059e+37
        %v2020 = vand.u32 %v2008, 2147483648
        %v2021 = vor.u32 1.1754944e-38, %v2020
        %v2022 = vsel %vm2019, %v2021, %v2017
        %v2023 = vmul.f32 1.0, %v2022
        %v2024 = vmul.f32 %v2003, 0.0
        %v2025 = vmul.f32 %v1984, %v2004
        %v2026 = vadd.f32 %v2024, %v2025
        %v2027 = vtanh.pop %v2026
        %v2028 = vmul.f32 %v2023, %v2027
        %2029 = vst [vmem:[#allocation3] sm:$0xff] %v2028
        %s2030 = scalar_lea.vmem [#allocation2], 32
        %v2031 = vld [vmem:[%s2030] sm:$0xff]
        %v2032 = vld [vmem:[%s2030 + $0x8] sm:$0xff]
        %v2033 = vld [vmem:[%s2030 + $0x10] sm:$0xff]
        %v2034 = vld [vmem:[%s2030 + $0x18] sm:$0xff]
        %v2035 = vpack.c.bf16 %v2028, %v2028
        %v2036 = vld [vmem:[#allocation9] sm:$0xff]
        %v2037 = vld [vmem:[#allocation9 + $0x8] sm:$0xff]
        %v2038 = vld [vmem:[#allocation9 + $0x10] sm:$0xff]
        %v2039 = vld [vmem:[#allocation9 + $0x18] sm:$0xff]
        %v2040 = vld [vmem:[#allocation9 + $0x20] sm:$0xff]
        %v2041 = vld [vmem:[#allocation9 + $0x28] sm:$0xff]
        %v2042 = vld [vmem:[#allocation9 + $0x30] sm:$0xff]
        %v2043 = vld [vmem:[#allocation9 + $0x38] sm:$0xff]
        %v2044 = vld [vmem:[#allocation9 + $0x40] sm:$0xff]
        %v2045 = vld [vmem:[#allocation9 + $0x48] sm:$0xff]
        %v2046 = vld [vmem:[#allocation9 + $0x50] sm:$0xff]
        %v2047 = vld [vmem:[#allocation9 + $0x58] sm:$0xff]
        %v2048 = vld [vmem:[#allocation9 + $0x60] sm:$0xff]
        %v2049 = vld [vmem:[#allocation9 + $0x68] sm:$0xff]
        %v2050 = vld [vmem:[#allocation9 + $0x70] sm:$0xff]
        %v2051 = vld [vmem:[#allocation9 + $0x78] sm:$0xff]
        %v2052 = vld [vmem:[#allocation9 + $0x80] sm:$0xff]
        %v2053 = vld [vmem:[#allocation9 + $0x88] sm:$0xff]
        %v2054 = vld [vmem:[#allocation9 + $0x90] sm:$0xff]
        %v2055 = vld [vmem:[#allocation9 + $0x98] sm:$0xff]
        %v2056 = vld [vmem:[#allocation9 + $0xa0] sm:$0xff]
        %v2057 = vld [vmem:[#allocation9 + $0xa8] sm:$0xff]
        %v2058 = vld [vmem:[#allocation9 + $0xb0] sm:$0xff]
        %v2059 = vld [vmem:[#allocation9 + $0xb8] sm:$0xff]
        %v2060 = vld [vmem:[#allocation9 + $0xc0] sm:$0xff]
        %v2061 = vld [vmem:[#allocation9 + $0xc8] sm:$0xff]
        %v2062 = vld [vmem:[#allocation9 + $0xd0] sm:$0xff]
        %v2063 = vld [vmem:[#allocation9 + $0xd8] sm:$0xff]
        %v2064 = vld [vmem:[#allocation9 + $0xe0] sm:$0xff]
        %v2065 = vld [vmem:[#allocation9 + $0xe8] sm:$0xff]
        %v2066 = vld [vmem:[#allocation9 + $0xf0] sm:$0xff]
        %v2067 = vld [vmem:[#allocation9 + $0xf8] sm:$0xff]
        %v2100 = vunpack.c.l.b16 %v2036
        %v2101 = vunpack.c.h.b16 %v2036
        %v2102 = vunpack.c.l.b16 %v2037
        %v2103 = vunpack.c.h.b16 %v2037
        %v2104 = vunpack.c.l.b16 %v2038
        %v2105 = vunpack.c.h.b16 %v2038
        %v2106 = vunpack.c.l.b16 %v2039
        %v2107 = vunpack.c.h.b16 %v2039
        %v2108 = vunpack.c.l.b16 %v2040
        %v2109 = vunpack.c.h.b16 %v2040
        %v2110 = vunpack.c.l.b16 %v2041
        %v2111 = vunpack.c.h.b16 %v2041
        %v2112 = vunpack.c.l.b16 %v2042
        %v2113 = vunpack.c.h.b16 %v2042
        %v2114 = vunpack.c.l.b16 %v2043
        %v2115 = vunpack.c.h.b16 %v2043
        %v2116 = vunpack.c.l.b16 %v2044
        %v2117 = vunpack.c.h.b16 %v2044
        %v2118 = vunpack.c.l.b16 %v2045
        %v2119 = vunpack.c.h.b16 %v2045
        %v2120 = vunpack.c.l.b16 %v2046
        %v2121 = vunpack.c.h.b16 %v2046
        %v2122 = vunpack.c.l.b16 %v2047
        %v2123 = vunpack.c.h.b16 %v2047
        %v2124 = vunpack.c.l.b16 %v2048
        %v2125 = vunpack.c.h.b16 %v2048
        %v2126 = vunpack.c.l.b16 %v2049
        %v2127 = vunpack.c.h.b16 %v2049
        %v2128 = vunpack.c.l.b16 %v2050
        %v2129 = vunpack.c.h.b16 %v2050
        %v2130 = vunpack.c.l.b16 %v2051
        %v2131 = vunpack.c.h.b16 %v2051
        %v2132 = vunpack.c.l.b16 %v2052
        %v2133 = vunpack.c.h.b16 %v2052
        %v2134 = vunpack.c.l.b16 %v2053
        %v2135 = vunpack.c.h.b16 %v2053
        %v2136 = vunpack.c.l.b16 %v2054
        %v2137 = vunpack.c.h.b16 %v2054
        %v2138 = vunpack.c.l.b16 %v2055
        %v2139 = vunpack.c.h.b16 %v2055
        %v2140 = vunpack.c.l.b16 %v2056
        %v2141 = vunpack.c.h.b16 %v2056
        %v2142 = vunpack.c.l.b16 %v2057
        %v2143 = vunpack.c.h.b16 %v2057
        %v2144 = vunpack.c.l.b16 %v2058
        %v2145 = vunpack.c.h.b16 %v2058
        %v2146 = vunpack.c.l.b16 %v2059
        %v2147 = vunpack.c.h.b16 %v2059
        %v2148 = vunpack.c.l.b16 %v2060
        %v2149 = vunpack.c.h.b16 %v2060
        %v2150 = vunpack.c.l.b16 %v2061
        %v2151 = vunpack.c.h.b16 %v2061
        %v2152 = vunpack.c.l.b16 %v2062
        %v2153 = vunpack.c.h.b16 %v2062
        %v2154 = vunpack.c.l.b16 %v2063
        %v2155 = vunpack.c.h.b16 %v2063
        %v2156 = vunpack.c.l.b16 %v2064
        %v2157 = vunpack.c.h.b16 %v2064
        %v2158 = vunpack.c.l.b16 %v2065
        %v2159 = vunpack.c.h.b16 %v2065
        %v2160 = vunpack.c.l.b16 %v2066
        %v2161 = vunpack.c.h.b16 %v2066
        %v2162 = vunpack.c.l.b16 %v2067
        %v2163 = vunpack.c.h.b16 %v2067
        %v2164 = vpack.c.b16 %v2104, %v2100
        %v2165 = vpack.c.b16 %v2105, %v2101
        %v2166 = vpack.c.b16 %v2106, %v2102
        %v2167 = vpack.c.b16 %v2107, %v2103
        %v2168 = vpack.c.b16 %v2112, %v2108
        %v2169 = vpack.c.b16 %v2113, %v2109
        %v2170 = vpack.c.b16 %v2114, %v2110
        %v2171 = vpack.c.b16 %v2115, %v2111
        %v2172 = vpack.c.b16 %v2120, %v2116
        %v2173 = vpack.c.b16 %v2121, %v2117
        %v2174 = vpack.c.b16 %v2122, %v2118
        %v2175 = vpack.c.b16 %v2123, %v2119
        %v2176 = vpack.c.b16 %v2128, %v2124
        %v2177 = vpack.c.b16 %v2129, %v2125
        %v2178 = vpack.c.b16 %v2130, %v2126
        %v2179 = vpack.c.b16 %v2131, %v2127
        %v2180 = vpack.c.b16 %v2136, %v2132
        %v2181 = vpack.c.b16 %v2137, %v2133
        %v2182 = vpack.c.b16 %v2138, %v2134
        %v2183 = vpack.c.b16 %v2139, %v2135
        %v2184 = vpack.c.b16 %v2144, %v2140
        %v2185 = vpack.c.b16 %v2145, %v2141
        %v2186 = vpack.c.b16 %v2146, %v2142
        %v2187 = vpack.c.b16 %v2147, %v2143
        %v2188 = vpack.c.b16 %v2152, %v2148
        %v2189 = vpack.c.b16 %v2153, %v2149
        %v2190 = vpack.c.b16 %v2154, %v2150
        %v2191 = vpack.c.b16 %v2155, %v2151
        %v2192 = vpack.c.b16 %v2160, %v2156
        %v2193 = vpack.c.b16 %v2161, %v2157
        %v2194 = vpack.c.b16 %v2162, %v2158
        %v2195 = vpack.c.b16 %v2163, %v2159
        %2228 = vmatpush.bf16.msra.mxu0 %v2192
        %2229 = vmatpush.bf16.msra.mxu0 %v2188
        %2230 = vmatpush.bf16.msra.mxu0 %v2184
        %2231 = vmatpush.bf16.msra.mxu0 %v2180
        %2232 = vmatpush.bf16.msra.mxu0 %v2176
        %2233 = vmatpush.bf16.msra.mxu0 %v2172
        %2234 = vmatpush.bf16.msra.mxu0 %v2168
        %2235 = vmatpush.bf16.msra.mxu0 %v2164
        %2236 = vmatmul.bf16.gmra.mxu0 %v2035
        %v2237 = vpop.f32.mrf.mxu0
        %v2238 = vadd.f32 0.0, %v2237
        %v2239 = vpop.f32.mrf.mxu0
        %2240 = vdwg.mxu0
        %2241 = vmatpush.bf16.msra.mxu0 %v2193
        %2242 = vmatpush.bf16.msra.mxu0 %v2189
        %2243 = vmatpush.bf16.msra.mxu0 %v2185
        %2244 = vmatpush.bf16.msra.mxu0 %v2181
        %2245 = vmatpush.bf16.msra.mxu0 %v2177
        %2246 = vmatpush.bf16.msra.mxu0 %v2173
        %2247 = vmatpush.bf16.msra.mxu0 %v2169
        %2248 = vmatpush.bf16.msra.mxu0 %v2165
        %2249 = vmatmul.bf16.gmra.mxu0 %v2035
        %v2250 = vpop.f32.mrf.mxu0
        %v2251 = vadd.f32 0.0, %v2250
        %v2252 = vpop.f32.mrf.mxu0
        %2253 = vdwg.mxu0
        %2254 = vmatpush.bf16.msra.mxu0 %v2194
        %2255 = vmatpush.bf16.msra.mxu0 %v2190
        %2256 = vmatpush.bf16.msra.mxu0 %v2186
        %2257 = vmatpush.bf16.msra.mxu0 %v2182
        %2258 = vmatpush.bf16.msra.mxu0 %v2178
        %2259 = vmatpush.bf16.msra.mxu0 %v2174
        %2260 = vmatpush.bf16.msra.mxu0 %v2170
        %2261 = vmatpush.bf16.msra.mxu0 %v2166
        %2262 = vmatmul.bf16.gmra.mxu0 %v2035
        %v2263 = vpop.f32.mrf.mxu0
        %v2264 = vadd.f32 0.0, %v2263
        %v2265 = vpop.f32.mrf.mxu0
        %2266 = vdwg.mxu0
        %2267 = vmatpush.bf16.msra.mxu0 %v2195
        %2268 = vmatpush.bf16.msra.mxu0 %v2191
        %2269 = vmatpush.bf16.msra.mxu0 %v2187
        %2270 = vmatpush.bf16.msra.mxu0 %v2183
        %2271 = vmatpush.bf16.msra.mxu0 %v2179
        %2272 = vmatpush.bf16.msra.mxu0 %v2175
        %2273 = vmatpush.bf16.msra.mxu0 %v2171
        %2274 = vmatpush.bf16.msra.mxu0 %v2167
        %2275 = vmatmul.bf16.gmra.mxu0 %v2035
        %v2276 = vpop.f32.mrf.mxu0
        %v2277 = vadd.f32 0.0, %v2276
        %v2278 = vpop.f32.mrf.mxu0
        %2279 = vdwg.mxu0
        %v2280 = vadd.f32 %v2031, %v2238
        %v2281 = vadd.f32 %v2032, %v2251
        %v2282 = vadd.f32 %v2033, %v2264
        %v2283 = vadd.f32 %v2034, %v2277
        %v2284 = vxor.u32 %v2280, 2147483648
        %v2285 = vmul.f32 %v2284, 1.442695
        %v2286 = vpow.pop %v2285
        %v2287 = vadd.f32 %v2286, 1.0
        %v2288 = vrcp.pop %v2287
        %v2289 = vmul.f32 %v2287, %v2288
        %v2290 = vsub.f32 1.0, %v2289
        %v2291 = vmul.f32 %v2288, %v2290
        %v2292 = vadd.f32 %v2288, %v2291
        %vm2293 = vweird.f32 %v2287
        %vm2294 = vweird.f32 %v2288
        %vm2295 = vmor %vm2293, %vm2294
        %v2296 = vsel %vm2295, %v2288, %v2292
        %v2297 = vand.u32 2147483647, %v2287
        %vm2298 = vcmp.eq.f32.partialorder %v2297, 8.507059e+37
        %v2299 = vand.u32 %v2287, 2147483648
        %v2300 = vor.u32 1.1754944e-38, %v2299
        %v2301 = vsel %vm2298, %v2300, %v2296
        %v2302 = vmul.f32 1.0, %v2301
        %v2303 = vxor.u32 %v2281, 2147483648
        %v2304 = vmul.f32 %v2303, 1.442695
        %v2305 = vpow.pop %v2304
        %v2306 = vadd.f32 %v2305, 1.0
        %v2307 = vrcp.pop %v2306
        %v2308 = vmul.f32 %v2306, %v2307
        %v2309 = vsub.f32 1.0, %v2308
        %v2310 = vmul.f32 %v2307, %v2309
        %v2311 = vadd.f32 %v2307, %v2310
        %vm2312 = vweird.f32 %v2306
        %vm2313 = vweird.f32 %v2307
        %vm2314 = vmor %vm2312, %vm2313
        %v2315 = vsel %vm2314, %v2307, %v2311
        %v2316 = vand.u32 2147483647, %v2306
        %vm2317 = vcmp.eq.f32.partialorder %v2316, 8.507059e+37
        %v2318 = vand.u32 %v2306, 2147483648
        %v2319 = vor.u32 1.1754944e-38, %v2318
        %v2320 = vsel %vm2317, %v2319, %v2315
        %v2321 = vmul.f32 1.0, %v2320
        %v2322 = vtanh.pop %v2282
        %v2323 = vxor.u32 %v2283, 2147483648
        %v2324 = vmul.f32 %v2323, 1.442695
        %v2325 = vpow.pop %v2324
        %v2326 = vadd.f32 %v2325, 1.0
        %v2327 = vrcp.pop %v2326
        %v2328 = vmul.f32 %v2326, %v2327
        %v2329 = vsub.f32 1.0, %v2328
        %v2330 = vmul.f32 %v2327, %v2329
        %v2331 = vadd.f32 %v2327, %v2330
        %vm2332 = vweird.f32 %v2326
        %vm2333 = vweird.f32 %v2327
        %vm2334 = vmor %vm2332, %vm2333
        %v2335 = vsel %vm2334, %v2327, %v2331
        %v2336 = vand.u32 2147483647, %v2326
        %vm2337 = vcmp.eq.f32.partialorder %v2336, 8.507059e+37
        %v2338 = vand.u32 %v2326, 2147483648
        %v2339 = vor.u32 1.1754944e-38, %v2338
        %v2340 = vsel %vm2337, %v2339, %v2335
        %v2341 = vmul.f32 1.0, %v2340
        %v2342 = vmul.f32 %v2321, %v2026
        %v2343 = vmul.f32 %v2302, %v2322
        %v2344 = vadd.f32 %v2342, %v2343
        %v2345 = vtanh.pop %v2344
        %v2346 = vmul.f32 %v2341, %v2345
        %2347 = vst [vmem:[%s1146] sm:$0xff] %v2346
        %s2348 = scalar_lea.vmem [#allocation2], 64
        %v2349 = vld [vmem:[%s2348] sm:$0xff]
        %v2350 = vld [vmem:[%s2348 + $0x8] sm:$0xff]
        %v2351 = vld [vmem:[%s2348 + $0x10] sm:$0xff]
        %v2352 = vld [vmem:[%s2348 + $0x18] sm:$0xff]
        %v2353 = vpack.c.bf16 %v2346, %v2346
        %v2354 = vld [vmem:[#allocation9] sm:$0xff]
        %v2355 = vld [vmem:[#allocation9 + $0x8] sm:$0xff]
        %v2356 = vld [vmem:[#allocation9 + $0x10] sm:$0xff]
        %v2357 = vld [vmem:[#allocation9 + $0x18] sm:$0xff]
        %v2358 = vld [vmem:[#allocation9 + $0x20] sm:$0xff]
        %v2359 = vld [vmem:[#allocation9 + $0x28] sm:$0xff]
        %v2360 = vld [vmem:[#allocation9 + $0x30] sm:$0xff]
        %v2361 = vld [vmem:[#allocation9 + $0x38] sm:$0xff]
        %v2362 = vld [vmem:[#allocation9 + $0x40] sm:$0xff]
        %v2363 = vld [vmem:[#allocation9 + $0x48] sm:$0xff]
        %v2364 = vld [vmem:[#allocation9 + $0x50] sm:$0xff]
        %v2365 = vld [vmem:[#allocation9 + $0x58] sm:$0xff]
        %v2366 = vld [vmem:[#allocation9 + $0x60] sm:$0xff]
        %v2367 = vld [vmem:[#allocation9 + $0x68] sm:$0xff]
        %v2368 = vld [vmem:[#allocation9 + $0x70] sm:$0xff]
        %v2369 = vld [vmem:[#allocation9 + $0x78] sm:$0xff]
        %v2370 = vld [vmem:[#allocation9 + $0x80] sm:$0xff]
        %v2371 = vld [vmem:[#allocation9 + $0x88] sm:$0xff]
        %v2372 = vld [vmem:[#allocation9 + $0x90] sm:$0xff]
        %v2373 = vld [vmem:[#allocation9 + $0x98] sm:$0xff]
        %v2374 = vld [vmem:[#allocation9 + $0xa0] sm:$0xff]
        %v2375 = vld [vmem:[#allocation9 + $0xa8] sm:$0xff]
        %v2376 = vld [vmem:[#allocation9 + $0xb0] sm:$0xff]
        %v2377 = vld [vmem:[#allocation9 + $0xb8] sm:$0xff]
        %v2378 = vld [vmem:[#allocation9 + $0xc0] sm:$0xff]
        %v2379 = vld [vmem:[#allocation9 + $0xc8] sm:$0xff]
        %v2380 = vld [vmem:[#allocation9 + $0xd0] sm:$0xff]
        %v2381 = vld [vmem:[#allocation9 + $0xd8] sm:$0xff]
        %v2382 = vld [vmem:[#allocation9 + $0xe0] sm:$0xff]
        %v2383 = vld [vmem:[#allocation9 + $0xe8] sm:$0xff]
        %v2384 = vld [vmem:[#allocation9 + $0xf0] sm:$0xff]
        %v2385 = vld [vmem:[#allocation9 + $0xf8] sm:$0xff]
        %v2418 = vunpack.c.l.b16 %v2354
        %v2419 = vunpack.c.h.b16 %v2354
        %v2420 = vunpack.c.l.b16 %v2355
        %v2421 = vunpack.c.h.b16 %v2355
        %v2422 = vunpack.c.l.b16 %v2356
        %v2423 = vunpack.c.h.b16 %v2356
        %v2424 = vunpack.c.l.b16 %v2357
        %v2425 = vunpack.c.h.b16 %v2357
        %v2426 = vunpack.c.l.b16 %v2358
        %v2427 = vunpack.c.h.b16 %v2358
        %v2428 = vunpack.c.l.b16 %v2359
        %v2429 = vunpack.c.h.b16 %v2359
        %v2430 = vunpack.c.l.b16 %v2360
        %v2431 = vunpack.c.h.b16 %v2360
        %v2432 = vunpack.c.l.b16 %v2361
        %v2433 = vunpack.c.h.b16 %v2361
        %v2434 = vunpack.c.l.b16 %v2362
        %v2435 = vunpack.c.h.b16 %v2362
        %v2436 = vunpack.c.l.b16 %v2363
        %v2437 = vunpack.c.h.b16 %v2363
        %v2438 = vunpack.c.l.b16 %v2364
        %v2439 = vunpack.c.h.b16 %v2364
        %v2440 = vunpack.c.l.b16 %v2365
        %v2441 = vunpack.c.h.b16 %v2365
        %v2442 = vunpack.c.l.b16 %v2366
        %v2443 = vunpack.c.h.b16 %v2366
        %v2444 = vunpack.c.l.b16 %v2367
        %v2445 = vunpack.c.h.b16 %v2367
        %v2446 = vunpack.c.l.b16 %v2368
        %v2447 = vunpack.c.h.b16 %v2368
        %v2448 = vunpack.c.l.b16 %v2369
        %v2449 = vunpack.c.h.b16 %v2369
        %v2450 = vunpack.c.l.b16 %v2370
        %v2451 = vunpack.c.h.b16 %v2370
        %v2452 = vunpack.c.l.b16 %v2371
        %v2453 = vunpack.c.h.b16 %v2371
        %v2454 = vunpack.c.l.b16 %v2372
        %v2455 = vunpack.c.h.b16 %v2372
        %v2456 = vunpack.c.l.b16 %v2373
        %v2457 = vunpack.c.h.b16 %v2373
        %v2458 = vunpack.c.l.b16 %v2374
        %v2459 = vunpack.c.h.b16 %v2374
        %v2460 = vunpack.c.l.b16 %v2375
        %v2461 = vunpack.c.h.b16 %v2375
        %v2462 = vunpack.c.l.b16 %v2376
        %v2463 = vunpack.c.h.b16 %v2376
        %v2464 = vunpack.c.l.b16 %v2377
        %v2465 = vunpack.c.h.b16 %v2377
        %v2466 = vunpack.c.l.b16 %v2378
        %v2467 = vunpack.c.h.b16 %v2378
        %v2468 = vunpack.c.l.b16 %v2379
        %v2469 = vunpack.c.h.b16 %v2379
        %v2470 = vunpack.c.l.b16 %v2380
        %v2471 = vunpack.c.h.b16 %v2380
        %v2472 = vunpack.c.l.b16 %v2381
        %v2473 = vunpack.c.h.b16 %v2381
        %v2474 = vunpack.c.l.b16 %v2382
        %v2475 = vunpack.c.h.b16 %v2382
        %v2476 = vunpack.c.l.b16 %v2383
        %v2477 = vunpack.c.h.b16 %v2383
        %v2478 = vunpack.c.l.b16 %v2384
        %v2479 = vunpack.c.h.b16 %v2384
        %v2480 = vunpack.c.l.b16 %v2385
        %v2481 = vunpack.c.h.b16 %v2385
        %v2482 = vpack.c.b16 %v2422, %v2418
        %v2483 = vpack.c.b16 %v2423, %v2419
        %v2484 = vpack.c.b16 %v2424, %v2420
        %v2485 = vpack.c.b16 %v2425, %v2421
        %v2486 = vpack.c.b16 %v2430, %v2426
        %v2487 = vpack.c.b16 %v2431, %v2427
        %v2488 = vpack.c.b16 %v2432, %v2428
        %v2489 = vpack.c.b16 %v2433, %v2429
        %v2490 = vpack.c.b16 %v2438, %v2434
        %v2491 = vpack.c.b16 %v2439, %v2435
        %v2492 = vpack.c.b16 %v2440, %v2436
        %v2493 = vpack.c.b16 %v2441, %v2437
        %v2494 = vpack.c.b16 %v2446, %v2442
        %v2495 = vpack.c.b16 %v2447, %v2443
        %v2496 = vpack.c.b16 %v2448, %v2444
        %v2497 = vpack.c.b16 %v2449, %v2445
        %v2498 = vpack.c.b16 %v2454, %v2450
        %v2499 = vpack.c.b16 %v2455, %v2451
        %v2500 = vpack.c.b16 %v2456, %v2452
        %v2501 = vpack.c.b16 %v2457, %v2453
        %v2502 = vpack.c.b16 %v2462, %v2458
        %v2503 = vpack.c.b16 %v2463, %v2459
        %v2504 = vpack.c.b16 %v2464, %v2460
        %v2505 = vpack.c.b16 %v2465, %v2461
        %v2506 = vpack.c.b16 %v2470, %v2466
        %v2507 = vpack.c.b16 %v2471, %v2467
        %v2508 = vpack.c.b16 %v2472, %v2468
        %v2509 = vpack.c.b16 %v2473, %v2469
        %v2510 = vpack.c.b16 %v2478, %v2474
        %v2511 = vpack.c.b16 %v2479, %v2475
        %v2512 = vpack.c.b16 %v2480, %v2476
        %v2513 = vpack.c.b16 %v2481, %v2477
        %2546 = vmatpush.bf16.msra.mxu0 %v2510
        %2547 = vmatpush.bf16.msra.mxu0 %v2506
        %2548 = vmatpush.bf16.msra.mxu0 %v2502
        %2549 = vmatpush.bf16.msra.mxu0 %v2498
        %2550 = vmatpush.bf16.msra.mxu0 %v2494
        %2551 = vmatpush.bf16.msra.mxu0 %v2490
        %2552 = vmatpush.bf16.msra.mxu0 %v2486
        %2553 = vmatpush.bf16.msra.mxu0 %v2482
        %2554 = vmatmul.bf16.gmra.mxu0 %v2353
        %v2555 = vpop.f32.mrf.mxu0
        %v2556 = vadd.f32 0.0, %v2555
        %v2557 = vpop.f32.mrf.mxu0
        %2558 = vdwg.mxu0
        %2559 = vmatpush.bf16.msra.mxu0 %v2511
        %2560 = vmatpush.bf16.msra.mxu0 %v2507
        %2561 = vmatpush.bf16.msra.mxu0 %v2503
        %2562 = vmatpush.bf16.msra.mxu0 %v2499
        %2563 = vmatpush.bf16.msra.mxu0 %v2495
        %2564 = vmatpush.bf16.msra.mxu0 %v2491
        %2565 = vmatpush.bf16.msra.mxu0 %v2487
        %2566 = vmatpush.bf16.msra.mxu0 %v2483
        %2567 = vmatmul.bf16.gmra.mxu0 %v2353
        %v2568 = vpop.f32.mrf.mxu0
        %v2569 = vadd.f32 0.0, %v2568
        %v2570 = vpop.f32.mrf.mxu0
        %2571 = vdwg.mxu0
        %2572 = vmatpush.bf16.msra.mxu0 %v2512
        %2573 = vmatpush.bf16.msra.mxu0 %v2508
        %2574 = vmatpush.bf16.msra.mxu0 %v2504
        %2575 = vmatpush.bf16.msra.mxu0 %v2500
        %2576 = vmatpush.bf16.msra.mxu0 %v2496
        %2577 = vmatpush.bf16.msra.mxu0 %v2492
        %2578 = vmatpush.bf16.msra.mxu0 %v2488
        %2579 = vmatpush.bf16.msra.mxu0 %v2484
        %2580 = vmatmul.bf16.gmra.mxu0 %v2353
        %v2581 = vpop.f32.mrf.mxu0
        %v2582 = vadd.f32 0.0, %v2581
        %v2583 = vpop.f32.mrf.mxu0
        %2584 = vdwg.mxu0
        %2585 = vmatpush.bf16.msra.mxu0 %v2513
        %2586 = vmatpush.bf16.msra.mxu0 %v2509
        %2587 = vmatpush.bf16.msra.mxu0 %v2505
        %2588 = vmatpush.bf16.msra.mxu0 %v2501
        %2589 = vmatpush.bf16.msra.mxu0 %v2497
        %2590 = vmatpush.bf16.msra.mxu0 %v2493
        %2591 = vmatpush.bf16.msra.mxu0 %v2489
        %2592 = vmatpush.bf16.msra.mxu0 %v2485
        %2593 = vmatmul.bf16.gmra.mxu0 %v2353
        %v2594 = vpop.f32.mrf.mxu0
        %v2595 = vadd.f32 0.0, %v2594
        %v2596 = vpop.f32.mrf.mxu0
        %2597 = vdwg.mxu0
        %v2598 = vadd.f32 %v2349, %v2556
        %v2599 = vadd.f32 %v2350, %v2569
        %v2600 = vadd.f32 %v2351, %v2582
        %v2601 = vadd.f32 %v2352, %v2595
        %v2602 = vxor.u32 %v2598, 2147483648
        %v2603 = vmul.f32 %v2602, 1.442695
        %v2604 = vpow.pop %v2603
        %v2605 = vadd.f32 %v2604, 1.0
        %v2606 = vrcp.pop %v2605
        %v2607 = vmul.f32 %v2605, %v2606
        %v2608 = vsub.f32 1.0, %v2607
        %v2609 = vmul.f32 %v2606, %v2608
        %v2610 = vadd.f32 %v2606, %v2609
        %vm2611 = vweird.f32 %v2605
        %vm2612 = vweird.f32 %v2606
        %vm2613 = vmor %vm2611, %vm2612
        %v2614 = vsel %vm2613, %v2606, %v2610
        %v2615 = vand.u32 2147483647, %v2605
        %vm2616 = vcmp.eq.f32.partialorder %v2615, 8.507059e+37
        %v2617 = vand.u32 %v2605, 2147483648
        %v2618 = vor.u32 1.1754944e-38, %v2617
        %v2619 = vsel %vm2616, %v2618, %v2614
        %v2620 = vmul.f32 1.0, %v2619
        %v2621 = vxor.u32 %v2599, 2147483648
        %v2622 = vmul.f32 %v2621, 1.442695
        %v2623 = vpow.pop %v2622
        %v2624 = vadd.f32 %v2623, 1.0
        %v2625 = vrcp.pop %v2624
        %v2626 = vmul.f32 %v2624, %v2625
        %v2627 = vsub.f32 1.0, %v2626
        %v2628 = vmul.f32 %v2625, %v2627
        %v2629 = vadd.f32 %v2625, %v2628
        %vm2630 = vweird.f32 %v2624
        %vm2631 = vweird.f32 %v2625
        %vm2632 = vmor %vm2630, %vm2631
        %v2633 = vsel %vm2632, %v2625, %v2629
        %v2634 = vand.u32 2147483647, %v2624
        %vm2635 = vcmp.eq.f32.partialorder %v2634, 8.507059e+37
        %v2636 = vand.u32 %v2624, 2147483648
        %v2637 = vor.u32 1.1754944e-38, %v2636
        %v2638 = vsel %vm2635, %v2637, %v2633
        %v2639 = vmul.f32 1.0, %v2638
        %v2640 = vtanh.pop %v2600
        %v2641 = vxor.u32 %v2601, 2147483648
        %v2642 = vmul.f32 %v2641, 1.442695
        %v2643 = vpow.pop %v2642
        %v2644 = vadd.f32 %v2643, 1.0
        %v2645 = vrcp.pop %v2644
        %v2646 = vmul.f32 %v2644, %v2645
        %v2647 = vsub.f32 1.0, %v2646
        %v2648 = vmul.f32 %v2645, %v2647
        %v2649 = vadd.f32 %v2645, %v2648
        %vm2650 = vweird.f32 %v2644
        %vm2651 = vweird.f32 %v2645
        %vm2652 = vmor %vm2650, %vm2651
        %v2653 = vsel %vm2652, %v2645, %v2649
        %v2654 = vand.u32 2147483647, %v2644
        %vm2655 = vcmp.eq.f32.partialorder %v2654, 8.507059e+37
        %v2656 = vand.u32 %v2644, 2147483648
        %v2657 = vor.u32 1.1754944e-38, %v2656
        %v2658 = vsel %vm2655, %v2657, %v2653
        %v2659 = vmul.f32 1.0, %v2658
        %v2660 = vmul.f32 %v2639, %v2344
        %v2661 = vmul.f32 %v2620, %v2640
        %v2662 = vadd.f32 %v2660, %v2661
        %v2663 = vtanh.pop %v2662
        %v2664 = vmul.f32 %v2659, %v2663
        %2665 = vst [vmem:[%s1180] sm:$0xff] %v2664
        %s2666 = scalar_lea.vmem [#allocation2], 96
        %v2667 = vld [vmem:[%s2666] sm:$0xff]
        %v2668 = vld [vmem:[%s2666 + $0x8] sm:$0xff]
        %v2669 = vld [vmem:[%s2666 + $0x10] sm:$0xff]
        %v2670 = vld [vmem:[%s2666 + $0x18] sm:$0xff]
        %v2671 = vpack.c.bf16 %v2664, %v2664
        %v2672 = vld [vmem:[#allocation9] sm:$0xff]
        %v2673 = vld [vmem:[#allocation9 + $0x8] sm:$0xff]
        %v2674 = vld [vmem:[#allocation9 + $0x10] sm:$0xff]
        %v2675 = vld [vmem:[#allocation9 + $0x18] sm:$0xff]
        %v2676 = vld [vmem:[#allocation9 + $0x20] sm:$0xff]
        %v2677 = vld [vmem:[#allocation9 + $0x28] sm:$0xff]
        %v2678 = vld [vmem:[#allocation9 + $0x30] sm:$0xff]
        %v2679 = vld [vmem:[#allocation9 + $0x38] sm:$0xff]
        %v2680 = vld [vmem:[#allocation9 + $0x40] sm:$0xff]
        %v2681 = vld [vmem:[#allocation9 + $0x48] sm:$0xff]
        %v2682 = vld [vmem:[#allocation9 + $0x50] sm:$0xff]
        %v2683 = vld [vmem:[#allocation9 + $0x58] sm:$0xff]
        %v2684 = vld [vmem:[#allocation9 + $0x60] sm:$0xff]
        %v2685 = vld [vmem:[#allocation9 + $0x68] sm:$0xff]
        %v2686 = vld [vmem:[#allocation9 + $0x70] sm:$0xff]
        %v2687 = vld [vmem:[#allocation9 + $0x78] sm:$0xff]
        %v2688 = vld [vmem:[#allocation9 + $0x80] sm:$0xff]
        %v2689 = vld [vmem:[#allocation9 + $0x88] sm:$0xff]
        %v2690 = vld [vmem:[#allocation9 + $0x90] sm:$0xff]
        %v2691 = vld [vmem:[#allocation9 + $0x98] sm:$0xff]
        %v2692 = vld [vmem:[#allocation9 + $0xa0] sm:$0xff]
        %v2693 = vld [vmem:[#allocation9 + $0xa8] sm:$0xff]
        %v2694 = vld [vmem:[#allocation9 + $0xb0] sm:$0xff]
        %v2695 = vld [vmem:[#allocation9 + $0xb8] sm:$0xff]
        %v2696 = vld [vmem:[#allocation9 + $0xc0] sm:$0xff]
        %v2697 = vld [vmem:[#allocation9 + $0xc8] sm:$0xff]
        %v2698 = vld [vmem:[#allocation9 + $0xd0] sm:$0xff]
        %v2699 = vld [vmem:[#allocation9 + $0xd8] sm:$0xff]
        %v2700 = vld [vmem:[#allocation9 + $0xe0] sm:$0xff]
        %v2701 = vld [vmem:[#allocation9 + $0xe8] sm:$0xff]
        %v2702 = vld [vmem:[#allocation9 + $0xf0] sm:$0xff]
        %v2703 = vld [vmem:[#allocation9 + $0xf8] sm:$0xff]
        %v2736 = vunpack.c.l.b16 %v2672
        %v2737 = vunpack.c.h.b16 %v2672
        %v2738 = vunpack.c.l.b16 %v2673
        %v2739 = vunpack.c.h.b16 %v2673
        %v2740 = vunpack.c.l.b16 %v2674
        %v2741 = vunpack.c.h.b16 %v2674
        %v2742 = vunpack.c.l.b16 %v2675
        %v2743 = vunpack.c.h.b16 %v2675
        %v2744 = vunpack.c.l.b16 %v2676
        %v2745 = vunpack.c.h.b16 %v2676
        %v2746 = vunpack.c.l.b16 %v2677
        %v2747 = vunpack.c.h.b16 %v2677
        %v2748 = vunpack.c.l.b16 %v2678
        %v2749 = vunpack.c.h.b16 %v2678
        %v2750 = vunpack.c.l.b16 %v2679
        %v2751 = vunpack.c.h.b16 %v2679
        %v2752 = vunpack.c.l.b16 %v2680
        %v2753 = vunpack.c.h.b16 %v2680
        %v2754 = vunpack.c.l.b16 %v2681
        %v2755 = vunpack.c.h.b16 %v2681
        %v2756 = vunpack.c.l.b16 %v2682
        %v2757 = vunpack.c.h.b16 %v2682
        %v2758 = vunpack.c.l.b16 %v2683
        %v2759 = vunpack.c.h.b16 %v2683
        %v2760 = vunpack.c.l.b16 %v2684
        %v2761 = vunpack.c.h.b16 %v2684
        %v2762 = vunpack.c.l.b16 %v2685
        %v2763 = vunpack.c.h.b16 %v2685
        %v2764 = vunpack.c.l.b16 %v2686
        %v2765 = vunpack.c.h.b16 %v2686
        %v2766 = vunpack.c.l.b16 %v2687
        %v2767 = vunpack.c.h.b16 %v2687
        %v2768 = vunpack.c.l.b16 %v2688
        %v2769 = vunpack.c.h.b16 %v2688
        %v2770 = vunpack.c.l.b16 %v2689
        %v2771 = vunpack.c.h.b16 %v2689
        %v2772 = vunpack.c.l.b16 %v2690
        %v2773 = vunpack.c.h.b16 %v2690
        %v2774 = vunpack.c.l.b16 %v2691
        %v2775 = vunpack.c.h.b16 %v2691
        %v2776 = vunpack.c.l.b16 %v2692
        %v2777 = vunpack.c.h.b16 %v2692
        %v2778 = vunpack.c.l.b16 %v2693
        %v2779 = vunpack.c.h.b16 %v2693
        %v2780 = vunpack.c.l.b16 %v2694
        %v2781 = vunpack.c.h.b16 %v2694
        %v2782 = vunpack.c.l.b16 %v2695
        %v2783 = vunpack.c.h.b16 %v2695
        %v2784 = vunpack.c.l.b16 %v2696
        %v2785 = vunpack.c.h.b16 %v2696
        %v2786 = vunpack.c.l.b16 %v2697
        %v2787 = vunpack.c.h.b16 %v2697
        %v2788 = vunpack.c.l.b16 %v2698
        %v2789 = vunpack.c.h.b16 %v2698
        %v2790 = vunpack.c.l.b16 %v2699
        %v2791 = vunpack.c.h.b16 %v2699
        %v2792 = vunpack.c.l.b16 %v2700
        %v2793 = vunpack.c.h.b16 %v2700
        %v2794 = vunpack.c.l.b16 %v2701
        %v2795 = vunpack.c.h.b16 %v2701
        %v2796 = vunpack.c.l.b16 %v2702
        %v2797 = vunpack.c.h.b16 %v2702
        %v2798 = vunpack.c.l.b16 %v2703
        %v2799 = vunpack.c.h.b16 %v2703
        %v2800 = vpack.c.b16 %v2740, %v2736
        %v2801 = vpack.c.b16 %v2741, %v2737
        %v2802 = vpack.c.b16 %v2742, %v2738
        %v2803 = vpack.c.b16 %v2743, %v2739
        %v2804 = vpack.c.b16 %v2748, %v2744
        %v2805 = vpack.c.b16 %v2749, %v2745
        %v2806 = vpack.c.b16 %v2750, %v2746
        %v2807 = vpack.c.b16 %v2751, %v2747
        %v2808 = vpack.c.b16 %v2756, %v2752
        %v2809 = vpack.c.b16 %v2757, %v2753
        %v2810 = vpack.c.b16 %v2758, %v2754
        %v2811 = vpack.c.b16 %v2759, %v2755
        %v2812 = vpack.c.b16 %v2764, %v2760
        %v2813 = vpack.c.b16 %v2765, %v2761
        %v2814 = vpack.c.b16 %v2766, %v2762
        %v2815 = vpack.c.b16 %v2767, %v2763
        %v2816 = vpack.c.b16 %v2772, %v2768
        %v2817 = vpack.c.b16 %v2773, %v2769
        %v2818 = vpack.c.b16 %v2774, %v2770
        %v2819 = vpack.c.b16 %v2775, %v2771
        %v2820 = vpack.c.b16 %v2780, %v2776
        %v2821 = vpack.c.b16 %v2781, %v2777
        %v2822 = vpack.c.b16 %v2782, %v2778
        %v2823 = vpack.c.b16 %v2783, %v2779
        %v2824 = vpack.c.b16 %v2788, %v2784
        %v2825 = vpack.c.b16 %v2789, %v2785
        %v2826 = vpack.c.b16 %v2790, %v2786
        %v2827 = vpack.c.b16 %v2791, %v2787
        %v2828 = vpack.c.b16 %v2796, %v2792
        %v2829 = vpack.c.b16 %v2797, %v2793
        %v2830 = vpack.c.b16 %v2798, %v2794
        %v2831 = vpack.c.b16 %v2799, %v2795
        %2864 = vmatpush.bf16.msra.mxu0 %v2828
        %2865 = vmatpush.bf16.msra.mxu0 %v2824
        %2866 = vmatpush.bf16.msra.mxu0 %v2820
        %2867 = vmatpush.bf16.msra.mxu0 %v2816
        %2868 = vmatpush.bf16.msra.mxu0 %v2812
        %2869 = vmatpush.bf16.msra.mxu0 %v2808
        %2870 = vmatpush.bf16.msra.mxu0 %v2804
        %2871 = vmatpush.bf16.msra.mxu0 %v2800
        %2872 = vmatmul.bf16.gmra.mxu0 %v2671
        %v2873 = vpop.f32.mrf.mxu0
        %v2874 = vadd.f32 0.0, %v2873
        %v2875 = vpop.f32.mrf.mxu0
        %2876 = vdwg.mxu0
        %2877 = vmatpush.bf16.msra.mxu0 %v2829
        %2878 = vmatpush.bf16.msra.mxu0 %v2825
        %2879 = vmatpush.bf16.msra.mxu0 %v2821
        %2880 = vmatpush.bf16.msra.mxu0 %v2817
        %2881 = vmatpush.bf16.msra.mxu0 %v2813
        %2882 = vmatpush.bf16.msra.mxu0 %v2809
        %2883 = vmatpush.bf16.msra.mxu0 %v2805
        %2884 = vmatpush.bf16.msra.mxu0 %v2801
        %2885 = vmatmul.bf16.gmra.mxu0 %v2671
        %v2886 = vpop.f32.mrf.mxu0
        %v2887 = vadd.f32 0.0, %v2886
        %v2888 = vpop.f32.mrf.mxu0
        %2889 = vdwg.mxu0
        %2890 = vmatpush.bf16.msra.mxu0 %v2830
        %2891 = vmatpush.bf16.msra.mxu0 %v2826
        %2892 = vmatpush.bf16.msra.mxu0 %v2822
        %2893 = vmatpush.bf16.msra.mxu0 %v2818
        %2894 = vmatpush.bf16.msra.mxu0 %v2814
        %2895 = vmatpush.bf16.msra.mxu0 %v2810
        %2896 = vmatpush.bf16.msra.mxu0 %v2806
        %2897 = vmatpush.bf16.msra.mxu0 %v2802
        %2898 = vmatmul.bf16.gmra.mxu0 %v2671
        %v2899 = vpop.f32.mrf.mxu0
        %v2900 = vadd.f32 0.0, %v2899
        %v2901 = vpop.f32.mrf.mxu0
        %2902 = vdwg.mxu0
        %2903 = vmatpush.bf16.msra.mxu0 %v2831
        %2904 = vmatpush.bf16.msra.mxu0 %v2827
        %2905 = vmatpush.bf16.msra.mxu0 %v2823
        %2906 = vmatpush.bf16.msra.mxu0 %v2819
        %2907 = vmatpush.bf16.msra.mxu0 %v2815
        %2908 = vmatpush.bf16.msra.mxu0 %v2811
        %2909 = vmatpush.bf16.msra.mxu0 %v2807
        %2910 = vmatpush.bf16.msra.mxu0 %v2803
        %2911 = vmatmul.bf16.gmra.mxu0 %v2671
        %v2912 = vpop.f32.mrf.mxu0
        %v2913 = vadd.f32 0.0, %v2912
        %v2914 = vpop.f32.mrf.mxu0
        %2915 = vdwg.mxu0
        %v2916 = vadd.f32 %v2667, %v2874
        %v2917 = vadd.f32 %v2668, %v2887
        %v2918 = vadd.f32 %v2669, %v2900
        %v2919 = vadd.f32 %v2670, %v2913
        %v2920 = vxor.u32 %v2916, 2147483648
        %v2921 = vmul.f32 %v2920, 1.442695
        %v2922 = vpow.pop %v2921
        %v2923 = vadd.f32 %v2922, 1.0
        %v2924 = vrcp.pop %v2923
        %v2925 = vmul.f32 %v2923, %v2924
        %v2926 = vsub.f32 1.0, %v2925
        %v2927 = vmul.f32 %v2924, %v2926
        %v2928 = vadd.f32 %v2924, %v2927
        %vm2929 = vweird.f32 %v2923
        %vm2930 = vweird.f32 %v2924
        %vm2931 = vmor %vm2929, %vm2930
        %v2932 = vsel %vm2931, %v2924, %v2928
        %v2933 = vand.u32 2147483647, %v2923
        %vm2934 = vcmp.eq.f32.partialorder %v2933, 8.507059e+37
        %v2935 = vand.u32 %v2923, 2147483648
        %v2936 = vor.u32 1.1754944e-38, %v2935
        %v2937 = vsel %vm2934, %v2936, %v2932
        %v2938 = vmul.f32 1.0, %v2937
        %v2939 = vxor.u32 %v2917, 2147483648
        %v2940 = vmul.f32 %v2939, 1.442695
        %v2941 = vpow.pop %v2940
        %v2942 = vadd.f32 %v2941, 1.0
        %v2943 = vrcp.pop %v2942
        %v2944 = vmul.f32 %v2942, %v2943
        %v2945 = vsub.f32 1.0, %v2944
        %v2946 = vmul.f32 %v2943, %v2945
        %v2947 = vadd.f32 %v2943, %v2946
        %vm2948 = vweird.f32 %v2942
        %vm2949 = vweird.f32 %v2943
        %vm2950 = vmor %vm2948, %vm2949
        %v2951 = vsel %vm2950, %v2943, %v2947
        %v2952 = vand.u32 2147483647, %v2942
        %vm2953 = vcmp.eq.f32.partialorder %v2952, 8.507059e+37
        %v2954 = vand.u32 %v2942, 2147483648
        %v2955 = vor.u32 1.1754944e-38, %v2954
        %v2956 = vsel %vm2953, %v2955, %v2951
        %v2957 = vmul.f32 1.0, %v2956
        %v2958 = vtanh.pop %v2918
        %v2959 = vxor.u32 %v2919, 2147483648
        %v2960 = vmul.f32 %v2959, 1.442695
        %v2961 = vpow.pop %v2960
        %v2962 = vadd.f32 %v2961, 1.0
        %v2963 = vrcp.pop %v2962
        %v2964 = vmul.f32 %v2962, %v2963
        %v2965 = vsub.f32 1.0, %v2964
        %v2966 = vmul.f32 %v2963, %v2965
        %v2967 = vadd.f32 %v2963, %v2966
        %vm2968 = vweird.f32 %v2962
        %vm2969 = vweird.f32 %v2963
        %vm2970 = vmor %vm2968, %vm2969
        %v2971 = vsel %vm2970, %v2963, %v2967
        %v2972 = vand.u32 2147483647, %v2962
        %vm2973 = vcmp.eq.f32.partialorder %v2972, 8.507059e+37
        %v2974 = vand.u32 %v2962, 2147483648
        %v2975 = vor.u32 1.1754944e-38, %v2974
        %v2976 = vsel %vm2973, %v2975, %v2971
        %v2977 = vmul.f32 1.0, %v2976
        %v2978 = vmul.f32 %v2957, %v2662
        %v2979 = vmul.f32 %v2938, %v2958
        %v2980 = vadd.f32 %v2978, %v2979
        %v2981 = vtanh.pop %v2980
        %v2982 = vmul.f32 %v2977, %v2981
        %2983 = vst [vmem:[%s1214] sm:$0xff] %v2982
        %s2984 = scalar_lea.vmem [#allocation2], 128
        %v2985 = vld [vmem:[%s2984] sm:$0xff]
        %v2986 = vld [vmem:[%s2984 + $0x8] sm:$0xff]
        %v2987 = vld [vmem:[%s2984 + $0x10] sm:$0xff]
        %v2988 = vld [vmem:[%s2984 + $0x18] sm:$0xff]
        %v2989 = vpack.c.bf16 %v2982, %v2982
        %v2990 = vld [vmem:[#allocation9] sm:$0xff]
        %v2991 = vld [vmem:[#allocation9 + $0x8] sm:$0xff]
        %v2992 = vld [vmem:[#allocation9 + $0x10] sm:$0xff]
        %v2993 = vld [vmem:[#allocation9 + $0x18] sm:$0xff]
        %v2994 = vld [vmem:[#allocation9 + $0x20] sm:$0xff]
        %v2995 = vld [vmem:[#allocation9 + $0x28] sm:$0xff]
        %v2996 = vld [vmem:[#allocation9 + $0x30] sm:$0xff]
        %v2997 = vld [vmem:[#allocation9 + $0x38] sm:$0xff]
        %v2998 = vld [vmem:[#allocation9 + $0x40] sm:$0xff]
        %v2999 = vld [vmem:[#allocation9 + $0x48] sm:$0xff]
        %v3000 = vld [vmem:[#allocation9 + $0x50] sm:$0xff]
        %v3001 = vld [vmem:[#allocation9 + $0x58] sm:$0xff]
        %v3002 = vld [vmem:[#allocation9 + $0x60] sm:$0xff]
        %v3003 = vld [vmem:[#allocation9 + $0x68] sm:$0xff]
        %v3004 = vld [vmem:[#allocation9 + $0x70] sm:$0xff]
        %v3005 = vld [vmem:[#allocation9 + $0x78] sm:$0xff]
        %v3006 = vld [vmem:[#allocation9 + $0x80] sm:$0xff]
        %v3007 = vld [vmem:[#allocation9 + $0x88] sm:$0xff]
        %v3008 = vld [vmem:[#allocation9 + $0x90] sm:$0xff]
        %v3009 = vld [vmem:[#allocation9 + $0x98] sm:$0xff]
        %v3010 = vld [vmem:[#allocation9 + $0xa0] sm:$0xff]
        %v3011 = vld [vmem:[#allocation9 + $0xa8] sm:$0xff]
        %v3012 = vld [vmem:[#allocation9 + $0xb0] sm:$0xff]
        %v3013 = vld [vmem:[#allocation9 + $0xb8] sm:$0xff]
        %v3014 = vld [vmem:[#allocation9 + $0xc0] sm:$0xff]
        %v3015 = vld [vmem:[#allocation9 + $0xc8] sm:$0xff]
        %v3016 = vld [vmem:[#allocation9 + $0xd0] sm:$0xff]
        %v3017 = vld [vmem:[#allocation9 + $0xd8] sm:$0xff]
        %v3018 = vld [vmem:[#allocation9 + $0xe0] sm:$0xff]
        %v3019 = vld [vmem:[#allocation9 + $0xe8] sm:$0xff]
        %v3020 = vld [vmem:[#allocation9 + $0xf0] sm:$0xff]
        %v3021 = vld [vmem:[#allocation9 + $0xf8] sm:$0xff]
        %v3054 = vunpack.c.l.b16 %v2990
        %v3055 = vunpack.c.h.b16 %v2990
        %v3056 = vunpack.c.l.b16 %v2991
        %v3057 = vunpack.c.h.b16 %v2991
        %v3058 = vunpack.c.l.b16 %v2992
        %v3059 = vunpack.c.h.b16 %v2992
        %v3060 = vunpack.c.l.b16 %v2993
        %v3061 = vunpack.c.h.b16 %v2993
        %v3062 = vunpack.c.l.b16 %v2994
        %v3063 = vunpack.c.h.b16 %v2994
        %v3064 = vunpack.c.l.b16 %v2995
        %v3065 = vunpack.c.h.b16 %v2995
        %v3066 = vunpack.c.l.b16 %v2996
        %v3067 = vunpack.c.h.b16 %v2996
        %v3068 = vunpack.c.l.b16 %v2997
        %v3069 = vunpack.c.h.b16 %v2997
        %v3070 = vunpack.c.l.b16 %v2998
        %v3071 = vunpack.c.h.b16 %v2998
        %v3072 = vunpack.c.l.b16 %v2999
        %v3073 = vunpack.c.h.b16 %v2999
        %v3074 = vunpack.c.l.b16 %v3000
        %v3075 = vunpack.c.h.b16 %v3000
        %v3076 = vunpack.c.l.b16 %v3001
        %v3077 = vunpack.c.h.b16 %v3001
        %v3078 = vunpack.c.l.b16 %v3002
        %v3079 = vunpack.c.h.b16 %v3002
        %v3080 = vunpack.c.l.b16 %v3003
        %v3081 = vunpack.c.h.b16 %v3003
        %v3082 = vunpack.c.l.b16 %v3004
        %v3083 = vunpack.c.h.b16 %v3004
        %v3084 = vunpack.c.l.b16 %v3005
        %v3085 = vunpack.c.h.b16 %v3005
        %v3086 = vunpack.c.l.b16 %v3006
        %v3087 = vunpack.c.h.b16 %v3006
        %v3088 = vunpack.c.l.b16 %v3007
        %v3089 = vunpack.c.h.b16 %v3007
        %v3090 = vunpack.c.l.b16 %v3008
        %v3091 = vunpack.c.h.b16 %v3008
        %v3092 = vunpack.c.l.b16 %v3009
        %v3093 = vunpack.c.h.b16 %v3009
        %v3094 = vunpack.c.l.b16 %v3010
        %v3095 = vunpack.c.h.b16 %v3010
        %v3096 = vunpack.c.l.b16 %v3011
        %v3097 = vunpack.c.h.b16 %v3011
        %v3098 = vunpack.c.l.b16 %v3012
        %v3099 = vunpack.c.h.b16 %v3012
        %v3100 = vunpack.c.l.b16 %v3013
        %v3101 = vunpack.c.h.b16 %v3013
        %v3102 = vunpack.c.l.b16 %v3014
        %v3103 = vunpack.c.h.b16 %v3014
        %v3104 = vunpack.c.l.b16 %v3015
        %v3105 = vunpack.c.h.b16 %v3015
        %v3106 = vunpack.c.l.b16 %v3016
        %v3107 = vunpack.c.h.b16 %v3016
        %v3108 = vunpack.c.l.b16 %v3017
        %v3109 = vunpack.c.h.b16 %v3017
        %v3110 = vunpack.c.l.b16 %v3018
        %v3111 = vunpack.c.h.b16 %v3018
        %v3112 = vunpack.c.l.b16 %v3019
        %v3113 = vunpack.c.h.b16 %v3019
        %v3114 = vunpack.c.l.b16 %v3020
        %v3115 = vunpack.c.h.b16 %v3020
        %v3116 = vunpack.c.l.b16 %v3021
        %v3117 = vunpack.c.h.b16 %v3021
        %v3118 = vpack.c.b16 %v3058, %v3054
        %v3119 = vpack.c.b16 %v3059, %v3055
        %v3120 = vpack.c.b16 %v3060, %v3056
        %v3121 = vpack.c.b16 %v3061, %v3057
        %v3122 = vpack.c.b16 %v3066, %v3062
        %v3123 = vpack.c.b16 %v3067, %v3063
        %v3124 = vpack.c.b16 %v3068, %v3064
        %v3125 = vpack.c.b16 %v3069, %v3065
        %v3126 = vpack.c.b16 %v3074, %v3070
        %v3127 = vpack.c.b16 %v3075, %v3071
        %v3128 = vpack.c.b16 %v3076, %v3072
        %v3129 = vpack.c.b16 %v3077, %v3073
        %v3130 = vpack.c.b16 %v3082, %v3078
        %v3131 = vpack.c.b16 %v3083, %v3079
        %v3132 = vpack.c.b16 %v3084, %v3080
        %v3133 = vpack.c.b16 %v3085, %v3081
        %v3134 = vpack.c.b16 %v3090, %v3086
        %v3135 = vpack.c.b16 %v3091, %v3087
        %v3136 = vpack.c.b16 %v3092, %v3088
        %v3137 = vpack.c.b16 %v3093, %v3089
        %v3138 = vpack.c.b16 %v3098, %v3094
        %v3139 = vpack.c.b16 %v3099, %v3095
        %v3140 = vpack.c.b16 %v3100, %v3096
        %v3141 = vpack.c.b16 %v3101, %v3097
        %v3142 = vpack.c.b16 %v3106, %v3102
        %v3143 = vpack.c.b16 %v3107, %v3103
        %v3144 = vpack.c.b16 %v3108, %v3104
        %v3145 = vpack.c.b16 %v3109, %v3105
        %v3146 = vpack.c.b16 %v3114, %v3110
        %v3147 = vpack.c.b16 %v3115, %v3111
        %v3148 = vpack.c.b16 %v3116, %v3112
        %v3149 = vpack.c.b16 %v3117, %v3113
        %3182 = vmatpush.bf16.msra.mxu0 %v3146
        %3183 = vmatpush.bf16.msra.mxu0 %v3142
        %3184 = vmatpush.bf16.msra.mxu0 %v3138
        %3185 = vmatpush.bf16.msra.mxu0 %v3134
        %3186 = vmatpush.bf16.msra.mxu0 %v3130
        %3187 = vmatpush.bf16.msra.mxu0 %v3126
        %3188 = vmatpush.bf16.msra.mxu0 %v3122
        %3189 = vmatpush.bf16.msra.mxu0 %v3118
        %3190 = vmatmul.bf16.gmra.mxu0 %v2989
        %v3191 = vpop.f32.mrf.mxu0
        %v3192 = vadd.f32 0.0, %v3191
        %v3193 = vpop.f32.mrf.mxu0
        %3194 = vdwg.mxu0
        %3195 = vmatpush.bf16.msra.mxu0 %v3147
        %3196 = vmatpush.bf16.msra.mxu0 %v3143
        %3197 = vmatpush.bf16.msra.mxu0 %v3139
        %3198 = vmatpush.bf16.msra.mxu0 %v3135
        %3199 = vmatpush.bf16.msra.mxu0 %v3131
        %3200 = vmatpush.bf16.msra.mxu0 %v3127
        %3201 = vmatpush.bf16.msra.mxu0 %v3123
        %3202 = vmatpush.bf16.msra.mxu0 %v3119
        %3203 = vmatmul.bf16.gmra.mxu0 %v2989
        %v3204 = vpop.f32.mrf.mxu0
        %v3205 = vadd.f32 0.0, %v3204
        %v3206 = vpop.f32.mrf.mxu0
        %3207 = vdwg.mxu0
        %3208 = vmatpush.bf16.msra.mxu0 %v3148
        %3209 = vmatpush.bf16.msra.mxu0 %v3144
        %3210 = vmatpush.bf16.msra.mxu0 %v3140
        %3211 = vmatpush.bf16.msra.mxu0 %v3136
        %3212 = vmatpush.bf16.msra.mxu0 %v3132
        %3213 = vmatpush.bf16.msra.mxu0 %v3128
        %3214 = vmatpush.bf16.msra.mxu0 %v3124
        %3215 = vmatpush.bf16.msra.mxu0 %v3120
        %3216 = vmatmul.bf16.gmra.mxu0 %v2989
        %v3217 = vpop.f32.mrf.mxu0
        %v3218 = vadd.f32 0.0, %v3217
        %v3219 = vpop.f32.mrf.mxu0
        %3220 = vdwg.mxu0
        %3221 = vmatpush.bf16.msra.mxu0 %v3149
        %3222 = vmatpush.bf16.msra.mxu0 %v3145
        %3223 = vmatpush.bf16.msra.mxu0 %v3141
        %3224 = vmatpush.bf16.msra.mxu0 %v3137
        %3225 = vmatpush.bf16.msra.mxu0 %v3133
        %3226 = vmatpush.bf16.msra.mxu0 %v3129
        %3227 = vmatpush.bf16.msra.mxu0 %v3125
        %3228 = vmatpush.bf16.msra.mxu0 %v3121
        %3229 = vmatmul.bf16.gmra.mxu0 %v2989
        %v3230 = vpop.f32.mrf.mxu0
        %v3231 = vadd.f32 0.0, %v3230
        %v3232 = vpop.f32.mrf.mxu0
        %3233 = vdwg.mxu0
        %v3234 = vadd.f32 %v2985, %v3192
        %v3235 = vadd.f32 %v2986, %v3205
        %v3236 = vadd.f32 %v2987, %v3218
        %v3237 = vadd.f32 %v2988, %v3231
        %v3238 = vxor.u32 %v3234, 2147483648
        %v3239 = vmul.f32 %v3238, 1.442695
        %v3240 = vpow.pop %v3239
        %v3241 = vadd.f32 %v3240, 1.0
        %v3242 = vrcp.pop %v3241
        %v3243 = vmul.f32 %v3241, %v3242
        %v3244 = vsub.f32 1.0, %v3243
        %v3245 = vmul.f32 %v3242, %v3244
        %v3246 = vadd.f32 %v3242, %v3245
        %vm3247 = vweird.f32 %v3241
        %vm3248 = vweird.f32 %v3242
        %vm3249 = vmor %vm3247, %vm3248
        %v3250 = vsel %vm3249, %v3242, %v3246
        %v3251 = vand.u32 2147483647, %v3241
        %vm3252 = vcmp.eq.f32.partialorder %v3251, 8.507059e+37
        %v3253 = vand.u32 %v3241, 2147483648
        %v3254 = vor.u32 1.1754944e-38, %v3253
        %v3255 = vsel %vm3252, %v3254, %v3250
        %v3256 = vmul.f32 1.0, %v3255
        %v3257 = vxor.u32 %v3235, 2147483648
        %v3258 = vmul.f32 %v3257, 1.442695
        %v3259 = vpow.pop %v3258
        %v3260 = vadd.f32 %v3259, 1.0
        %v3261 = vrcp.pop %v3260
        %v3262 = vmul.f32 %v3260, %v3261
        %v3263 = vsub.f32 1.0, %v3262
        %v3264 = vmul.f32 %v3261, %v3263
        %v3265 = vadd.f32 %v3261, %v3264
        %vm3266 = vweird.f32 %v3260
        %vm3267 = vweird.f32 %v3261
        %vm3268 = vmor %vm3266, %vm3267
        %v3269 = vsel %vm3268, %v3261, %v3265
        %v3270 = vand.u32 2147483647, %v3260
        %vm3271 = vcmp.eq.f32.partialorder %v3270, 8.507059e+37
        %v3272 = vand.u32 %v3260, 2147483648
        %v3273 = vor.u32 1.1754944e-38, %v3272
        %v3274 = vsel %vm3271, %v3273, %v3269
        %v3275 = vmul.f32 1.0, %v3274
        %v3276 = vtanh.pop %v3236
        %v3277 = vxor.u32 %v3237, 2147483648
        %v3278 = vmul.f32 %v3277, 1.442695
        %v3279 = vpow.pop %v3278
        %v3280 = vadd.f32 %v3279, 1.0
        %v3281 = vrcp.pop %v3280
        %v3282 = vmul.f32 %v3280, %v3281
        %v3283 = vsub.f32 1.0, %v3282
        %v3284 = vmul.f32 %v3281, %v3283
        %v3285 = vadd.f32 %v3281, %v3284
        %vm3286 = vweird.f32 %v3280
        %vm3287 = vweird.f32 %v3281
        %vm3288 = vmor %vm3286, %vm3287
        %v3289 = vsel %vm3288, %v3281, %v3285
        %v3290 = vand.u32 2147483647, %v3280
        %vm3291 = vcmp.eq.f32.partialorder %v3290, 8.507059e+37
        %v3292 = vand.u32 %v3280, 2147483648
        %v3293 = vor.u32 1.1754944e-38, %v3292
        %v3294 = vsel %vm3291, %v3293, %v3289
        %v3295 = vmul.f32 1.0, %v3294
        %v3296 = vmul.f32 %v3275, %v2980
        %v3297 = vmul.f32 %v3256, %v3276
        %v3298 = vadd.f32 %v3296, %v3297
        %v3299 = vtanh.pop %v3298
        %v3300 = vmul.f32 %v3295, %v3299
        %3301 = vst [vmem:[%s1248] sm:$0xff] %v3300
        %s3302 = scalar_lea.vmem [#allocation2], 160
        %v3303 = vld [vmem:[%s3302] sm:$0xff]
        %v3304 = vld [vmem:[%s3302 + $0x8] sm:$0xff]
        %v3305 = vld [vmem:[%s3302 + $0x10] sm:$0xff]
        %v3306 = vld [vmem:[%s3302 + $0x18] sm:$0xff]
        %v3307 = vpack.c.bf16 %v3300, %v3300
        %v3308 = vld [vmem:[#allocation9] sm:$0xff]
        %v3309 = vld [vmem:[#allocation9 + $0x8] sm:$0xff]
        %v3310 = vld [vmem:[#allocation9 + $0x10] sm:$0xff]
        %v3311 = vld [vmem:[#allocation9 + $0x18] sm:$0xff]
        %v3312 = vld [vmem:[#allocation9 + $0x20] sm:$0xff]
        %v3313 = vld [vmem:[#allocation9 + $0x28] sm:$0xff]
        %v3314 = vld [vmem:[#allocation9 + $0x30] sm:$0xff]
        %v3315 = vld [vmem:[#allocation9 + $0x38] sm:$0xff]
        %v3316 = vld [vmem:[#allocation9 + $0x40] sm:$0xff]
        %v3317 = vld [vmem:[#allocation9 + $0x48] sm:$0xff]
        %v3318 = vld [vmem:[#allocation9 + $0x50] sm:$0xff]
        %v3319 = vld [vmem:[#allocation9 + $0x58] sm:$0xff]
        %v3320 = vld [vmem:[#allocation9 + $0x60] sm:$0xff]
        %v3321 = vld [vmem:[#allocation9 + $0x68] sm:$0xff]
        %v3322 = vld [vmem:[#allocation9 + $0x70] sm:$0xff]
        %v3323 = vld [vmem:[#allocation9 + $0x78] sm:$0xff]
        %v3324 = vld [vmem:[#allocation9 + $0x80] sm:$0xff]
        %v3325 = vld [vmem:[#allocation9 + $0x88] sm:$0xff]
        %v3326 = vld [vmem:[#allocation9 + $0x90] sm:$0xff]
        %v3327 = vld [vmem:[#allocation9 + $0x98] sm:$0xff]
        %v3328 = vld [vmem:[#allocation9 + $0xa0] sm:$0xff]
        %v3329 = vld [vmem:[#allocation9 + $0xa8] sm:$0xff]
        %v3330 = vld [vmem:[#allocation9 + $0xb0] sm:$0xff]
        %v3331 = vld [vmem:[#allocation9 + $0xb8] sm:$0xff]
        %v3332 = vld [vmem:[#allocation9 + $0xc0] sm:$0xff]
        %v3333 = vld [vmem:[#allocation9 + $0xc8] sm:$0xff]
        %v3334 = vld [vmem:[#allocation9 + $0xd0] sm:$0xff]
        %v3335 = vld [vmem:[#allocation9 + $0xd8] sm:$0xff]
        %v3336 = vld [vmem:[#allocation9 + $0xe0] sm:$0xff]
        %v3337 = vld [vmem:[#allocation9 + $0xe8] sm:$0xff]
        %v3338 = vld [vmem:[#allocation9 + $0xf0] sm:$0xff]
        %v3339 = vld [vmem:[#allocation9 + $0xf8] sm:$0xff]
        %v3372 = vunpack.c.l.b16 %v3308
        %v3373 = vunpack.c.h.b16 %v3308
        %v3374 = vunpack.c.l.b16 %v3309
        %v3375 = vunpack.c.h.b16 %v3309
        %v3376 = vunpack.c.l.b16 %v3310
        %v3377 = vunpack.c.h.b16 %v3310
        %v3378 = vunpack.c.l.b16 %v3311
        %v3379 = vunpack.c.h.b16 %v3311
        %v3380 = vunpack.c.l.b16 %v3312
        %v3381 = vunpack.c.h.b16 %v3312
        %v3382 = vunpack.c.l.b16 %v3313
        %v3383 = vunpack.c.h.b16 %v3313
        %v3384 = vunpack.c.l.b16 %v3314
        %v3385 = vunpack.c.h.b16 %v3314
        %v3386 = vunpack.c.l.b16 %v3315
        %v3387 = vunpack.c.h.b16 %v3315
        %v3388 = vunpack.c.l.b16 %v3316
        %v3389 = vunpack.c.h.b16 %v3316
        %v3390 = vunpack.c.l.b16 %v3317
        %v3391 = vunpack.c.h.b16 %v3317
        %v3392 = vunpack.c.l.b16 %v3318
        %v3393 = vunpack.c.h.b16 %v3318
        %v3394 = vunpack.c.l.b16 %v3319
        %v3395 = vunpack.c.h.b16 %v3319
        %v3396 = vunpack.c.l.b16 %v3320
        %v3397 = vunpack.c.h.b16 %v3320
        %v3398 = vunpack.c.l.b16 %v3321
        %v3399 = vunpack.c.h.b16 %v3321
        %v3400 = vunpack.c.l.b16 %v3322
        %v3401 = vunpack.c.h.b16 %v3322
        %v3402 = vunpack.c.l.b16 %v3323
        %v3403 = vunpack.c.h.b16 %v3323
        %v3404 = vunpack.c.l.b16 %v3324
        %v3405 = vunpack.c.h.b16 %v3324
        %v3406 = vunpack.c.l.b16 %v3325
        %v3407 = vunpack.c.h.b16 %v3325
        %v3408 = vunpack.c.l.b16 %v3326
        %v3409 = vunpack.c.h.b16 %v3326
        %v3410 = vunpack.c.l.b16 %v3327
        %v3411 = vunpack.c.h.b16 %v3327
        %v3412 = vunpack.c.l.b16 %v3328
        %v3413 = vunpack.c.h.b16 %v3328
        %v3414 = vunpack.c.l.b16 %v3329
        %v3415 = vunpack.c.h.b16 %v3329
        %v3416 = vunpack.c.l.b16 %v3330
        %v3417 = vunpack.c.h.b16 %v3330
        %v3418 = vunpack.c.l.b16 %v3331
        %v3419 = vunpack.c.h.b16 %v3331
        %v3420 = vunpack.c.l.b16 %v3332
        %v3421 = vunpack.c.h.b16 %v3332
        %v3422 = vunpack.c.l.b16 %v3333
        %v3423 = vunpack.c.h.b16 %v3333
        %v3424 = vunpack.c.l.b16 %v3334
        %v3425 = vunpack.c.h.b16 %v3334
        %v3426 = vunpack.c.l.b16 %v3335
        %v3427 = vunpack.c.h.b16 %v3335
        %v3428 = vunpack.c.l.b16 %v3336
        %v3429 = vunpack.c.h.b16 %v3336
        %v3430 = vunpack.c.l.b16 %v3337
        %v3431 = vunpack.c.h.b16 %v3337
        %v3432 = vunpack.c.l.b16 %v3338
        %v3433 = vunpack.c.h.b16 %v3338
        %v3434 = vunpack.c.l.b16 %v3339
        %v3435 = vunpack.c.h.b16 %v3339
        %v3436 = vpack.c.b16 %v3376, %v3372
        %v3437 = vpack.c.b16 %v3377, %v3373
        %v3438 = vpack.c.b16 %v3378, %v3374
        %v3439 = vpack.c.b16 %v3379, %v3375
        %v3440 = vpack.c.b16 %v3384, %v3380
        %v3441 = vpack.c.b16 %v3385, %v3381
        %v3442 = vpack.c.b16 %v3386, %v3382
        %v3443 = vpack.c.b16 %v3387, %v3383
        %v3444 = vpack.c.b16 %v3392, %v3388
        %v3445 = vpack.c.b16 %v3393, %v3389
        %v3446 = vpack.c.b16 %v3394, %v3390
        %v3447 = vpack.c.b16 %v3395, %v3391
        %v3448 = vpack.c.b16 %v3400, %v3396
        %v3449 = vpack.c.b16 %v3401, %v3397
        %v3450 = vpack.c.b16 %v3402, %v3398
        %v3451 = vpack.c.b16 %v3403, %v3399
        %v3452 = vpack.c.b16 %v3408, %v3404
        %v3453 = vpack.c.b16 %v3409, %v3405
        %v3454 = vpack.c.b16 %v3410, %v3406
        %v3455 = vpack.c.b16 %v3411, %v3407
        %v3456 = vpack.c.b16 %v3416, %v3412
        %v3457 = vpack.c.b16 %v3417, %v3413
        %v3458 = vpack.c.b16 %v3418, %v3414
        %v3459 = vpack.c.b16 %v3419, %v3415
        %v3460 = vpack.c.b16 %v3424, %v3420
        %v3461 = vpack.c.b16 %v3425, %v3421
        %v3462 = vpack.c.b16 %v3426, %v3422
        %v3463 = vpack.c.b16 %v3427, %v3423
        %v3464 = vpack.c.b16 %v3432, %v3428
        %v3465 = vpack.c.b16 %v3433, %v3429
        %v3466 = vpack.c.b16 %v3434, %v3430
        %v3467 = vpack.c.b16 %v3435, %v3431
        %3500 = vmatpush.bf16.msra.mxu0 %v3464
        %3501 = vmatpush.bf16.msra.mxu0 %v3460
        %3502 = vmatpush.bf16.msra.mxu0 %v3456
        %3503 = vmatpush.bf16.msra.mxu0 %v3452
        %3504 = vmatpush.bf16.msra.mxu0 %v3448
        %3505 = vmatpush.bf16.msra.mxu0 %v3444
        %3506 = vmatpush.bf16.msra.mxu0 %v3440
        %3507 = vmatpush.bf16.msra.mxu0 %v3436
        %3508 = vmatmul.bf16.gmra.mxu0 %v3307
        %v3509 = vpop.f32.mrf.mxu0
        %v3510 = vadd.f32 0.0, %v3509
        %v3511 = vpop.f32.mrf.mxu0
        %3512 = vdwg.mxu0
        %3513 = vmatpush.bf16.msra.mxu0 %v3465
        %3514 = vmatpush.bf16.msra.mxu0 %v3461
        %3515 = vmatpush.bf16.msra.mxu0 %v3457
        %3516 = vmatpush.bf16.msra.mxu0 %v3453
        %3517 = vmatpush.bf16.msra.mxu0 %v3449
        %3518 = vmatpush.bf16.msra.mxu0 %v3445
        %3519 = vmatpush.bf16.msra.mxu0 %v3441
        %3520 = vmatpush.bf16.msra.mxu0 %v3437
        %3521 = vmatmul.bf16.gmra.mxu0 %v3307
        %v3522 = vpop.f32.mrf.mxu0
        %v3523 = vadd.f32 0.0, %v3522
        %v3524 = vpop.f32.mrf.mxu0
        %3525 = vdwg.mxu0
        %3526 = vmatpush.bf16.msra.mxu0 %v3466
        %3527 = vmatpush.bf16.msra.mxu0 %v3462
        %3528 = vmatpush.bf16.msra.mxu0 %v3458
        %3529 = vmatpush.bf16.msra.mxu0 %v3454
        %3530 = vmatpush.bf16.msra.mxu0 %v3450
        %3531 = vmatpush.bf16.msra.mxu0 %v3446
        %3532 = vmatpush.bf16.msra.mxu0 %v3442
        %3533 = vmatpush.bf16.msra.mxu0 %v3438
        %3534 = vmatmul.bf16.gmra.mxu0 %v3307
        %v3535 = vpop.f32.mrf.mxu0
        %v3536 = vadd.f32 0.0, %v3535
        %v3537 = vpop.f32.mrf.mxu0
        %3538 = vdwg.mxu0
        %3539 = vmatpush.bf16.msra.mxu0 %v3467
        %3540 = vmatpush.bf16.msra.mxu0 %v3463
        %3541 = vmatpush.bf16.msra.mxu0 %v3459
        %3542 = vmatpush.bf16.msra.mxu0 %v3455
        %3543 = vmatpush.bf16.msra.mxu0 %v3451
        %3544 = vmatpush.bf16.msra.mxu0 %v3447
        %3545 = vmatpush.bf16.msra.mxu0 %v3443
        %3546 = vmatpush.bf16.msra.mxu0 %v3439
        %3547 = vmatmul.bf16.gmra.mxu0 %v3307
        %v3548 = vpop.f32.mrf.mxu0
        %v3549 = vadd.f32 0.0, %v3548
        %v3550 = vpop.f32.mrf.mxu0
        %3551 = vdwg.mxu0
        %v3552 = vadd.f32 %v3303, %v3510
        %v3553 = vadd.f32 %v3304, %v3523
        %v3554 = vadd.f32 %v3305, %v3536
        %v3555 = vadd.f32 %v3306, %v3549
        %v3556 = vxor.u32 %v3552, 2147483648
        %v3557 = vmul.f32 %v3556, 1.442695
        %v3558 = vpow.pop %v3557
        %v3559 = vadd.f32 %v3558, 1.0
        %v3560 = vrcp.pop %v3559
        %v3561 = vmul.f32 %v3559, %v3560
        %v3562 = vsub.f32 1.0, %v3561
        %v3563 = vmul.f32 %v3560, %v3562
        %v3564 = vadd.f32 %v3560, %v3563
        %vm3565 = vweird.f32 %v3559
        %vm3566 = vweird.f32 %v3560
        %vm3567 = vmor %vm3565, %vm3566
        %v3568 = vsel %vm3567, %v3560, %v3564
        %v3569 = vand.u32 2147483647, %v3559
        %vm3570 = vcmp.eq.f32.partialorder %v3569, 8.507059e+37
        %v3571 = vand.u32 %v3559, 2147483648
        %v3572 = vor.u32 1.1754944e-38, %v3571
        %v3573 = vsel %vm3570, %v3572, %v3568
        %v3574 = vmul.f32 1.0, %v3573
        %v3575 = vxor.u32 %v3553, 2147483648
        %v3576 = vmul.f32 %v3575, 1.442695
        %v3577 = vpow.pop %v3576
        %v3578 = vadd.f32 %v3577, 1.0
        %v3579 = vrcp.pop %v3578
        %v3580 = vmul.f32 %v3578, %v3579
        %v3581 = vsub.f32 1.0, %v3580
        %v3582 = vmul.f32 %v3579, %v3581
        %v3583 = vadd.f32 %v3579, %v3582
        %vm3584 = vweird.f32 %v3578
        %vm3585 = vweird.f32 %v3579
        %vm3586 = vmor %vm3584, %vm3585
        %v3587 = vsel %vm3586, %v3579, %v3583
        %v3588 = vand.u32 2147483647, %v3578
        %vm3589 = vcmp.eq.f32.partialorder %v3588, 8.507059e+37
        %v3590 = vand.u32 %v3578, 2147483648
        %v3591 = vor.u32 1.1754944e-38, %v3590
        %v3592 = vsel %vm3589, %v3591, %v3587
        %v3593 = vmul.f32 1.0, %v3592
        %v3594 = vtanh.pop %v3554
        %v3595 = vxor.u32 %v3555, 2147483648
        %v3596 = vmul.f32 %v3595, 1.442695
        %v3597 = vpow.pop %v3596
        %v3598 = vadd.f32 %v3597, 1.0
        %v3599 = vrcp.pop %v3598
        %v3600 = vmul.f32 %v3598, %v3599
        %v3601 = vsub.f32 1.0, %v3600
        %v3602 = vmul.f32 %v3599, %v3601
        %v3603 = vadd.f32 %v3599, %v3602
        %vm3604 = vweird.f32 %v3598
        %vm3605 = vweird.f32 %v3599
        %vm3606 = vmor %vm3604, %vm3605
        %v3607 = vsel %vm3606, %v3599, %v3603
        %v3608 = vand.u32 2147483647, %v3598
        %vm3609 = vcmp.eq.f32.partialorder %v3608, 8.507059e+37
        %v3610 = vand.u32 %v3598, 2147483648
        %v3611 = vor.u32 1.1754944e-38, %v3610
        %v3612 = vsel %vm3609, %v3611, %v3607
        %v3613 = vmul.f32 1.0, %v3612
        %v3614 = vmul.f32 %v3593, %v3298
        %v3615 = vmul.f32 %v3574, %v3594
        %v3616 = vadd.f32 %v3614, %v3615
        %v3617 = vtanh.pop %v3616
        %v3618 = vmul.f32 %v3613, %v3617
        %3619 = vst [vmem:[%s1282] sm:$0xff] %v3618
        %s3620 = scalar_lea.vmem [#allocation2], 192
        %v3621 = vld [vmem:[%s3620] sm:$0xff]
        %v3622 = vld [vmem:[%s3620 + $0x8] sm:$0xff]
        %v3623 = vld [vmem:[%s3620 + $0x10] sm:$0xff]
        %v3624 = vld [vmem:[%s3620 + $0x18] sm:$0xff]
        %v3625 = vpack.c.bf16 %v3618, %v3618
        %v3626 = vld [vmem:[#allocation9] sm:$0xff]
        %v3627 = vld [vmem:[#allocation9 + $0x8] sm:$0xff]
        %v3628 = vld [vmem:[#allocation9 + $0x10] sm:$0xff]
        %v3629 = vld [vmem:[#allocation9 + $0x18] sm:$0xff]
        %v3630 = vld [vmem:[#allocation9 + $0x20] sm:$0xff]
        %v3631 = vld [vmem:[#allocation9 + $0x28] sm:$0xff]
        %v3632 = vld [vmem:[#allocation9 + $0x30] sm:$0xff]
        %v3633 = vld [vmem:[#allocation9 + $0x38] sm:$0xff]
        %v3634 = vld [vmem:[#allocation9 + $0x40] sm:$0xff]
        %v3635 = vld [vmem:[#allocation9 + $0x48] sm:$0xff]
        %v3636 = vld [vmem:[#allocation9 + $0x50] sm:$0xff]
        %v3637 = vld [vmem:[#allocation9 + $0x58] sm:$0xff]
        %v3638 = vld [vmem:[#allocation9 + $0x60] sm:$0xff]
        %v3639 = vld [vmem:[#allocation9 + $0x68] sm:$0xff]
        %v3640 = vld [vmem:[#allocation9 + $0x70] sm:$0xff]
        %v3641 = vld [vmem:[#allocation9 + $0x78] sm:$0xff]
        %v3642 = vld [vmem:[#allocation9 + $0x80] sm:$0xff]
        %v3643 = vld [vmem:[#allocation9 + $0x88] sm:$0xff]
        %v3644 = vld [vmem:[#allocation9 + $0x90] sm:$0xff]
        %v3645 = vld [vmem:[#allocation9 + $0x98] sm:$0xff]
        %v3646 = vld [vmem:[#allocation9 + $0xa0] sm:$0xff]
        %v3647 = vld [vmem:[#allocation9 + $0xa8] sm:$0xff]
        %v3648 = vld [vmem:[#allocation9 + $0xb0] sm:$0xff]
        %v3649 = vld [vmem:[#allocation9 + $0xb8] sm:$0xff]
        %v3650 = vld [vmem:[#allocation9 + $0xc0] sm:$0xff]
        %v3651 = vld [vmem:[#allocation9 + $0xc8] sm:$0xff]
        %v3652 = vld [vmem:[#allocation9 + $0xd0] sm:$0xff]
        %v3653 = vld [vmem:[#allocation9 + $0xd8] sm:$0xff]
        %v3654 = vld [vmem:[#allocation9 + $0xe0] sm:$0xff]
        %v3655 = vld [vmem:[#allocation9 + $0xe8] sm:$0xff]
        %v3656 = vld [vmem:[#allocation9 + $0xf0] sm:$0xff]
        %v3657 = vld [vmem:[#allocation9 + $0xf8] sm:$0xff]
        %v3690 = vunpack.c.l.b16 %v3626
        %v3691 = vunpack.c.h.b16 %v3626
        %v3692 = vunpack.c.l.b16 %v3627
        %v3693 = vunpack.c.h.b16 %v3627
        %v3694 = vunpack.c.l.b16 %v3628
        %v3695 = vunpack.c.h.b16 %v3628
        %v3696 = vunpack.c.l.b16 %v3629
        %v3697 = vunpack.c.h.b16 %v3629
        %v3698 = vunpack.c.l.b16 %v3630
        %v3699 = vunpack.c.h.b16 %v3630
        %v3700 = vunpack.c.l.b16 %v3631
        %v3701 = vunpack.c.h.b16 %v3631
        %v3702 = vunpack.c.l.b16 %v3632
        %v3703 = vunpack.c.h.b16 %v3632
        %v3704 = vunpack.c.l.b16 %v3633
        %v3705 = vunpack.c.h.b16 %v3633
        %v3706 = vunpack.c.l.b16 %v3634
        %v3707 = vunpack.c.h.b16 %v3634
        %v3708 = vunpack.c.l.b16 %v3635
        %v3709 = vunpack.c.h.b16 %v3635
        %v3710 = vunpack.c.l.b16 %v3636
        %v3711 = vunpack.c.h.b16 %v3636
        %v3712 = vunpack.c.l.b16 %v3637
        %v3713 = vunpack.c.h.b16 %v3637
        %v3714 = vunpack.c.l.b16 %v3638
        %v3715 = vunpack.c.h.b16 %v3638
        %v3716 = vunpack.c.l.b16 %v3639
        %v3717 = vunpack.c.h.b16 %v3639
        %v3718 = vunpack.c.l.b16 %v3640
        %v3719 = vunpack.c.h.b16 %v3640
        %v3720 = vunpack.c.l.b16 %v3641
        %v3721 = vunpack.c.h.b16 %v3641
        %v3722 = vunpack.c.l.b16 %v3642
        %v3723 = vunpack.c.h.b16 %v3642
        %v3724 = vunpack.c.l.b16 %v3643
        %v3725 = vunpack.c.h.b16 %v3643
        %v3726 = vunpack.c.l.b16 %v3644
        %v3727 = vunpack.c.h.b16 %v3644
        %v3728 = vunpack.c.l.b16 %v3645
        %v3729 = vunpack.c.h.b16 %v3645
        %v3730 = vunpack.c.l.b16 %v3646
        %v3731 = vunpack.c.h.b16 %v3646
        %v3732 = vunpack.c.l.b16 %v3647
        %v3733 = vunpack.c.h.b16 %v3647
        %v3734 = vunpack.c.l.b16 %v3648
        %v3735 = vunpack.c.h.b16 %v3648
        %v3736 = vunpack.c.l.b16 %v3649
        %v3737 = vunpack.c.h.b16 %v3649
        %v3738 = vunpack.c.l.b16 %v3650
        %v3739 = vunpack.c.h.b16 %v3650
        %v3740 = vunpack.c.l.b16 %v3651
        %v3741 = vunpack.c.h.b16 %v3651
        %v3742 = vunpack.c.l.b16 %v3652
        %v3743 = vunpack.c.h.b16 %v3652
        %v3744 = vunpack.c.l.b16 %v3653
        %v3745 = vunpack.c.h.b16 %v3653
        %v3746 = vunpack.c.l.b16 %v3654
        %v3747 = vunpack.c.h.b16 %v3654
        %v3748 = vunpack.c.l.b16 %v3655
        %v3749 = vunpack.c.h.b16 %v3655
        %v3750 = vunpack.c.l.b16 %v3656
        %v3751 = vunpack.c.h.b16 %v3656
        %v3752 = vunpack.c.l.b16 %v3657
        %v3753 = vunpack.c.h.b16 %v3657
        %v3754 = vpack.c.b16 %v3694, %v3690
        %v3755 = vpack.c.b16 %v3695, %v3691
        %v3756 = vpack.c.b16 %v3696, %v3692
        %v3757 = vpack.c.b16 %v3697, %v3693
        %v3758 = vpack.c.b16 %v3702, %v3698
        %v3759 = vpack.c.b16 %v3703, %v3699
        %v3760 = vpack.c.b16 %v3704, %v3700
        %v3761 = vpack.c.b16 %v3705, %v3701
        %v3762 = vpack.c.b16 %v3710, %v3706
        %v3763 = vpack.c.b16 %v3711, %v3707
        %v3764 = vpack.c.b16 %v3712, %v3708
        %v3765 = vpack.c.b16 %v3713, %v3709
        %v3766 = vpack.c.b16 %v3718, %v3714
        %v3767 = vpack.c.b16 %v3719, %v3715
        %v3768 = vpack.c.b16 %v3720, %v3716
        %v3769 = vpack.c.b16 %v3721, %v3717
        %v3770 = vpack.c.b16 %v3726, %v3722
        %v3771 = vpack.c.b16 %v3727, %v3723
        %v3772 = vpack.c.b16 %v3728, %v3724
        %v3773 = vpack.c.b16 %v3729, %v3725
        %v3774 = vpack.c.b16 %v3734, %v3730
        %v3775 = vpack.c.b16 %v3735, %v3731
        %v3776 = vpack.c.b16 %v3736, %v3732
        %v3777 = vpack.c.b16 %v3737, %v3733
        %v3778 = vpack.c.b16 %v3742, %v3738
        %v3779 = vpack.c.b16 %v3743, %v3739
        %v3780 = vpack.c.b16 %v3744, %v3740
        %v3781 = vpack.c.b16 %v3745, %v3741
        %v3782 = vpack.c.b16 %v3750, %v3746
        %v3783 = vpack.c.b16 %v3751, %v3747
        %v3784 = vpack.c.b16 %v3752, %v3748
        %v3785 = vpack.c.b16 %v3753, %v3749
        %3818 = vmatpush.bf16.msra.mxu0 %v3782
        %3819 = vmatpush.bf16.msra.mxu0 %v3778
        %3820 = vmatpush.bf16.msra.mxu0 %v3774
        %3821 = vmatpush.bf16.msra.mxu0 %v3770
        %3822 = vmatpush.bf16.msra.mxu0 %v3766
        %3823 = vmatpush.bf16.msra.mxu0 %v3762
        %3824 = vmatpush.bf16.msra.mxu0 %v3758
        %3825 = vmatpush.bf16.msra.mxu0 %v3754
        %3826 = vmatmul.bf16.gmra.mxu0 %v3625
        %v3827 = vpop.f32.mrf.mxu0
        %v3828 = vadd.f32 0.0, %v3827
        %v3829 = vpop.f32.mrf.mxu0
        %3830 = vdwg.mxu0
        %3831 = vmatpush.bf16.msra.mxu0 %v3783
        %3832 = vmatpush.bf16.msra.mxu0 %v3779
        %3833 = vmatpush.bf16.msra.mxu0 %v3775
        %3834 = vmatpush.bf16.msra.mxu0 %v3771
        %3835 = vmatpush.bf16.msra.mxu0 %v3767
        %3836 = vmatpush.bf16.msra.mxu0 %v3763
        %3837 = vmatpush.bf16.msra.mxu0 %v3759
        %3838 = vmatpush.bf16.msra.mxu0 %v3755
        %3839 = vmatmul.bf16.gmra.mxu0 %v3625
        %v3840 = vpop.f32.mrf.mxu0
        %v3841 = vadd.f32 0.0, %v3840
        %v3842 = vpop.f32.mrf.mxu0
        %3843 = vdwg.mxu0
        %3844 = vmatpush.bf16.msra.mxu0 %v3784
        %3845 = vmatpush.bf16.msra.mxu0 %v3780
        %3846 = vmatpush.bf16.msra.mxu0 %v3776
        %3847 = vmatpush.bf16.msra.mxu0 %v3772
        %3848 = vmatpush.bf16.msra.mxu0 %v3768
        %3849 = vmatpush.bf16.msra.mxu0 %v3764
        %3850 = vmatpush.bf16.msra.mxu0 %v3760
        %3851 = vmatpush.bf16.msra.mxu0 %v3756
        %3852 = vmatmul.bf16.gmra.mxu0 %v3625
        %v3853 = vpop.f32.mrf.mxu0
        %v3854 = vadd.f32 0.0, %v3853
        %v3855 = vpop.f32.mrf.mxu0
        %3856 = vdwg.mxu0
        %3857 = vmatpush.bf16.msra.mxu0 %v3785
        %3858 = vmatpush.bf16.msra.mxu0 %v3781
        %3859 = vmatpush.bf16.msra.mxu0 %v3777
        %3860 = vmatpush.bf16.msra.mxu0 %v3773
        %3861 = vmatpush.bf16.msra.mxu0 %v3769
        %3862 = vmatpush.bf16.msra.mxu0 %v3765
        %3863 = vmatpush.bf16.msra.mxu0 %v3761
        %3864 = vmatpush.bf16.msra.mxu0 %v3757
        %3865 = vmatmul.bf16.gmra.mxu0 %v3625
        %v3866 = vpop.f32.mrf.mxu0
        %v3867 = vadd.f32 0.0, %v3866
        %v3868 = vpop.f32.mrf.mxu0
        %3869 = vdwg.mxu0
        %v3870 = vadd.f32 %v3621, %v3828
        %v3871 = vadd.f32 %v3622, %v3841
        %v3872 = vadd.f32 %v3623, %v3854
        %v3873 = vadd.f32 %v3624, %v3867
        %v3874 = vxor.u32 %v3870, 2147483648
        %v3875 = vmul.f32 %v3874, 1.442695
        %v3876 = vpow.pop %v3875
        %v3877 = vadd.f32 %v3876, 1.0
        %v3878 = vrcp.pop %v3877
        %v3879 = vmul.f32 %v3877, %v3878
        %v3880 = vsub.f32 1.0, %v3879
        %v3881 = vmul.f32 %v3878, %v3880
        %v3882 = vadd.f32 %v3878, %v3881
        %vm3883 = vweird.f32 %v3877
        %vm3884 = vweird.f32 %v3878
        %vm3885 = vmor %vm3883, %vm3884
        %v3886 = vsel %vm3885, %v3878, %v3882
        %v3887 = vand.u32 2147483647, %v3877
        %vm3888 = vcmp.eq.f32.partialorder %v3887, 8.507059e+37
        %v3889 = vand.u32 %v3877, 2147483648
        %v3890 = vor.u32 1.1754944e-38, %v3889
        %v3891 = vsel %vm3888, %v3890, %v3886
        %v3892 = vmul.f32 1.0, %v3891
        %v3893 = vxor.u32 %v3871, 2147483648
        %v3894 = vmul.f32 %v3893, 1.442695
        %v3895 = vpow.pop %v3894
        %v3896 = vadd.f32 %v3895, 1.0
        %v3897 = vrcp.pop %v3896
        %v3898 = vmul.f32 %v3896, %v3897
        %v3899 = vsub.f32 1.0, %v3898
        %v3900 = vmul.f32 %v3897, %v3899
        %v3901 = vadd.f32 %v3897, %v3900
        %vm3902 = vweird.f32 %v3896
        %vm3903 = vweird.f32 %v3897
        %vm3904 = vmor %vm3902, %vm3903
        %v3905 = vsel %vm3904, %v3897, %v3901
        %v3906 = vand.u32 2147483647, %v3896
        %vm3907 = vcmp.eq.f32.partialorder %v3906, 8.507059e+37
        %v3908 = vand.u32 %v3896, 2147483648
        %v3909 = vor.u32 1.1754944e-38, %v3908
        %v3910 = vsel %vm3907, %v3909, %v3905
        %v3911 = vmul.f32 1.0, %v3910
        %v3912 = vtanh.pop %v3872
        %v3913 = vxor.u32 %v3873, 2147483648
        %v3914 = vmul.f32 %v3913, 1.442695
        %v3915 = vpow.pop %v3914
        %v3916 = vadd.f32 %v3915, 1.0
        %v3917 = vrcp.pop %v3916
        %v3918 = vmul.f32 %v3916, %v3917
        %v3919 = vsub.f32 1.0, %v3918
        %v3920 = vmul.f32 %v3917, %v3919
        %v3921 = vadd.f32 %v3917, %v3920
        %vm3922 = vweird.f32 %v3916
        %vm3923 = vweird.f32 %v3917
        %vm3924 = vmor %vm3922, %vm3923
        %v3925 = vsel %vm3924, %v3917, %v3921
        %v3926 = vand.u32 2147483647, %v3916
        %vm3927 = vcmp.eq.f32.partialorder %v3926, 8.507059e+37
        %v3928 = vand.u32 %v3916, 2147483648
        %v3929 = vor.u32 1.1754944e-38, %v3928
        %v3930 = vsel %vm3927, %v3929, %v3925
        %v3931 = vmul.f32 1.0, %v3930
        %v3932 = vmul.f32 %v3911, %v3616
        %v3933 = vmul.f32 %v3892, %v3912
        %v3934 = vadd.f32 %v3932, %v3933
        %v3935 = vtanh.pop %v3934
        %v3936 = vmul.f32 %v3931, %v3935
        %3937 = vst [vmem:[%s1316] sm:$0xff] %v3936
        %s3938 = scalar_lea.vmem [#allocation2], 224
        %v3939 = vld [vmem:[%s3938] sm:$0xff]
        %v3940 = vld [vmem:[%s3938 + $0x8] sm:$0xff]
        %v3941 = vld [vmem:[%s3938 + $0x10] sm:$0xff]
        %v3942 = vld [vmem:[%s3938 + $0x18] sm:$0xff]
        %v3943 = vpack.c.bf16 %v3936, %v3936
        %v3944 = vld [vmem:[#allocation9] sm:$0xff]
        %v3945 = vld [vmem:[#allocation9 + $0x8] sm:$0xff]
        %v3946 = vld [vmem:[#allocation9 + $0x10] sm:$0xff]
        %v3947 = vld [vmem:[#allocation9 + $0x18] sm:$0xff]
        %v3948 = vld [vmem:[#allocation9 + $0x20] sm:$0xff]
        %v3949 = vld [vmem:[#allocation9 + $0x28] sm:$0xff]
        %v3950 = vld [vmem:[#allocation9 + $0x30] sm:$0xff]
        %v3951 = vld [vmem:[#allocation9 + $0x38] sm:$0xff]
        %v3952 = vld [vmem:[#allocation9 + $0x40] sm:$0xff]
        %v3953 = vld [vmem:[#allocation9 + $0x48] sm:$0xff]
        %v3954 = vld [vmem:[#allocation9 + $0x50] sm:$0xff]
        %v3955 = vld [vmem:[#allocation9 + $0x58] sm:$0xff]
        %v3956 = vld [vmem:[#allocation9 + $0x60] sm:$0xff]
        %v3957 = vld [vmem:[#allocation9 + $0x68] sm:$0xff]
        %v3958 = vld [vmem:[#allocation9 + $0x70] sm:$0xff]
        %v3959 = vld [vmem:[#allocation9 + $0x78] sm:$0xff]
        %v3960 = vld [vmem:[#allocation9 + $0x80] sm:$0xff]
        %v3961 = vld [vmem:[#allocation9 + $0x88] sm:$0xff]
        %v3962 = vld [vmem:[#allocation9 + $0x90] sm:$0xff]
        %v3963 = vld [vmem:[#allocation9 + $0x98] sm:$0xff]
        %v3964 = vld [vmem:[#allocation9 + $0xa0] sm:$0xff]
        %v3965 = vld [vmem:[#allocation9 + $0xa8] sm:$0xff]
        %v3966 = vld [vmem:[#allocation9 + $0xb0] sm:$0xff]
        %v3967 = vld [vmem:[#allocation9 + $0xb8] sm:$0xff]
        %v3968 = vld [vmem:[#allocation9 + $0xc0] sm:$0xff]
        %v3969 = vld [vmem:[#allocation9 + $0xc8] sm:$0xff]
        %v3970 = vld [vmem:[#allocation9 + $0xd0] sm:$0xff]
        %v3971 = vld [vmem:[#allocation9 + $0xd8] sm:$0xff]
        %v3972 = vld [vmem:[#allocation9 + $0xe0] sm:$0xff]
        %v3973 = vld [vmem:[#allocation9 + $0xe8] sm:$0xff]
        %v3974 = vld [vmem:[#allocation9 + $0xf0] sm:$0xff]
        %v3975 = vld [vmem:[#allocation9 + $0xf8] sm:$0xff]
        %v4008 = vunpack.c.l.b16 %v3944
        %v4009 = vunpack.c.h.b16 %v3944
        %v4010 = vunpack.c.l.b16 %v3945
        %v4011 = vunpack.c.h.b16 %v3945
        %v4012 = vunpack.c.l.b16 %v3946
        %v4013 = vunpack.c.h.b16 %v3946
        %v4014 = vunpack.c.l.b16 %v3947
        %v4015 = vunpack.c.h.b16 %v3947
        %v4016 = vunpack.c.l.b16 %v3948
        %v4017 = vunpack.c.h.b16 %v3948
        %v4018 = vunpack.c.l.b16 %v3949
        %v4019 = vunpack.c.h.b16 %v3949
        %v4020 = vunpack.c.l.b16 %v3950
        %v4021 = vunpack.c.h.b16 %v3950
        %v4022 = vunpack.c.l.b16 %v3951
        %v4023 = vunpack.c.h.b16 %v3951
        %v4024 = vunpack.c.l.b16 %v3952
        %v4025 = vunpack.c.h.b16 %v3952
        %v4026 = vunpack.c.l.b16 %v3953
        %v4027 = vunpack.c.h.b16 %v3953
        %v4028 = vunpack.c.l.b16 %v3954
        %v4029 = vunpack.c.h.b16 %v3954
        %v4030 = vunpack.c.l.b16 %v3955
        %v4031 = vunpack.c.h.b16 %v3955
        %v4032 = vunpack.c.l.b16 %v3956
        %v4033 = vunpack.c.h.b16 %v3956
        %v4034 = vunpack.c.l.b16 %v3957
        %v4035 = vunpack.c.h.b16 %v3957
        %v4036 = vunpack.c.l.b16 %v3958
        %v4037 = vunpack.c.h.b16 %v3958
        %v4038 = vunpack.c.l.b16 %v3959
        %v4039 = vunpack.c.h.b16 %v3959
        %v4040 = vunpack.c.l.b16 %v3960
        %v4041 = vunpack.c.h.b16 %v3960
        %v4042 = vunpack.c.l.b16 %v3961
        %v4043 = vunpack.c.h.b16 %v3961
        %v4044 = vunpack.c.l.b16 %v3962
        %v4045 = vunpack.c.h.b16 %v3962
        %v4046 = vunpack.c.l.b16 %v3963
        %v4047 = vunpack.c.h.b16 %v3963
        %v4048 = vunpack.c.l.b16 %v3964
        %v4049 = vunpack.c.h.b16 %v3964
        %v4050 = vunpack.c.l.b16 %v3965
        %v4051 = vunpack.c.h.b16 %v3965
        %v4052 = vunpack.c.l.b16 %v3966
        %v4053 = vunpack.c.h.b16 %v3966
        %v4054 = vunpack.c.l.b16 %v3967
        %v4055 = vunpack.c.h.b16 %v3967
        %v4056 = vunpack.c.l.b16 %v3968
        %v4057 = vunpack.c.h.b16 %v3968
        %v4058 = vunpack.c.l.b16 %v3969
        %v4059 = vunpack.c.h.b16 %v3969
        %v4060 = vunpack.c.l.b16 %v3970
        %v4061 = vunpack.c.h.b16 %v3970
        %v4062 = vunpack.c.l.b16 %v3971
        %v4063 = vunpack.c.h.b16 %v3971
        %v4064 = vunpack.c.l.b16 %v3972
        %v4065 = vunpack.c.h.b16 %v3972
        %v4066 = vunpack.c.l.b16 %v3973
        %v4067 = vunpack.c.h.b16 %v3973
        %v4068 = vunpack.c.l.b16 %v3974
        %v4069 = vunpack.c.h.b16 %v3974
        %v4070 = vunpack.c.l.b16 %v3975
        %v4071 = vunpack.c.h.b16 %v3975
        %v4072 = vpack.c.b16 %v4012, %v4008
        %v4073 = vpack.c.b16 %v4013, %v4009
        %v4074 = vpack.c.b16 %v4014, %v4010
        %v4075 = vpack.c.b16 %v4015, %v4011
        %v4076 = vpack.c.b16 %v4020, %v4016
        %v4077 = vpack.c.b16 %v4021, %v4017
        %v4078 = vpack.c.b16 %v4022, %v4018
        %v4079 = vpack.c.b16 %v4023, %v4019
        %v4080 = vpack.c.b16 %v4028, %v4024
        %v4081 = vpack.c.b16 %v4029, %v4025
        %v4082 = vpack.c.b16 %v4030, %v4026
        %v4083 = vpack.c.b16 %v4031, %v4027
        %v4084 = vpack.c.b16 %v4036, %v4032
        %v4085 = vpack.c.b16 %v4037, %v4033
        %v4086 = vpack.c.b16 %v4038, %v4034
        %v4087 = vpack.c.b16 %v4039, %v4035
        %v4088 = vpack.c.b16 %v4044, %v4040
        %v4089 = vpack.c.b16 %v4045, %v4041
        %v4090 = vpack.c.b16 %v4046, %v4042
        %v4091 = vpack.c.b16 %v4047, %v4043
        %v4092 = vpack.c.b16 %v4052, %v4048
        %v4093 = vpack.c.b16 %v4053, %v4049
        %v4094 = vpack.c.b16 %v4054, %v4050
        %v4095 = vpack.c.b16 %v4055, %v4051
        %v4096 = vpack.c.b16 %v4060, %v4056
        %v4097 = vpack.c.b16 %v4061, %v4057
        %v4098 = vpack.c.b16 %v4062, %v4058
        %v4099 = vpack.c.b16 %v4063, %v4059
        %v4100 = vpack.c.b16 %v4068, %v4064
        %v4101 = vpack.c.b16 %v4069, %v4065
        %v4102 = vpack.c.b16 %v4070, %v4066
        %v4103 = vpack.c.b16 %v4071, %v4067
        %4136 = vmatpush.bf16.msra.mxu0 %v4100
        %4137 = vmatpush.bf16.msra.mxu0 %v4096
        %4138 = vmatpush.bf16.msra.mxu0 %v4092
        %4139 = vmatpush.bf16.msra.mxu0 %v4088
        %4140 = vmatpush.bf16.msra.mxu0 %v4084
        %4141 = vmatpush.bf16.msra.mxu0 %v4080
        %4142 = vmatpush.bf16.msra.mxu0 %v4076
        %4143 = vmatpush.bf16.msra.mxu0 %v4072
        %4144 = vmatmul.bf16.gmra.mxu0 %v3943
        %v4145 = vpop.f32.mrf.mxu0
        %v4146 = vadd.f32 0.0, %v4145
        %v4147 = vpop.f32.mrf.mxu0
        %4148 = vdwg.mxu0
        %4149 = vmatpush.bf16.msra.mxu0 %v4101
        %4150 = vmatpush.bf16.msra.mxu0 %v4097
        %4151 = vmatpush.bf16.msra.mxu0 %v4093
        %4152 = vmatpush.bf16.msra.mxu0 %v4089
        %4153 = vmatpush.bf16.msra.mxu0 %v4085
        %4154 = vmatpush.bf16.msra.mxu0 %v4081
        %4155 = vmatpush.bf16.msra.mxu0 %v4077
        %4156 = vmatpush.bf16.msra.mxu0 %v4073
        %4157 = vmatmul.bf16.gmra.mxu0 %v3943
        %v4158 = vpop.f32.mrf.mxu0
        %v4159 = vadd.f32 0.0, %v4158
        %v4160 = vpop.f32.mrf.mxu0
        %4161 = vdwg.mxu0
        %4162 = vmatpush.bf16.msra.mxu0 %v4102
        %4163 = vmatpush.bf16.msra.mxu0 %v4098
        %4164 = vmatpush.bf16.msra.mxu0 %v4094
        %4165 = vmatpush.bf16.msra.mxu0 %v4090
        %4166 = vmatpush.bf16.msra.mxu0 %v4086
        %4167 = vmatpush.bf16.msra.mxu0 %v4082
        %4168 = vmatpush.bf16.msra.mxu0 %v4078
        %4169 = vmatpush.bf16.msra.mxu0 %v4074
        %4170 = vmatmul.bf16.gmra.mxu0 %v3943
        %v4171 = vpop.f32.mrf.mxu0
        %v4172 = vadd.f32 0.0, %v4171
        %v4173 = vpop.f32.mrf.mxu0
        %4174 = vdwg.mxu0
        %4175 = vmatpush.bf16.msra.mxu0 %v4103
        %4176 = vmatpush.bf16.msra.mxu0 %v4099
        %4177 = vmatpush.bf16.msra.mxu0 %v4095
        %4178 = vmatpush.bf16.msra.mxu0 %v4091
        %4179 = vmatpush.bf16.msra.mxu0 %v4087
        %4180 = vmatpush.bf16.msra.mxu0 %v4083
        %4181 = vmatpush.bf16.msra.mxu0 %v4079
        %4182 = vmatpush.bf16.msra.mxu0 %v4075
        %4183 = vmatmul.bf16.gmra.mxu0 %v3943
        %v4184 = vpop.f32.mrf.mxu0
        %v4185 = vadd.f32 0.0, %v4184
        %v4186 = vpop.f32.mrf.mxu0
        %4187 = vdwg.mxu0
        %v4188 = vadd.f32 %v3939, %v4146
        %v4189 = vadd.f32 %v3940, %v4159
        %v4190 = vadd.f32 %v3941, %v4172
        %v4191 = vadd.f32 %v3942, %v4185
        %v4192 = vxor.u32 %v4188, 2147483648
        %v4193 = vmul.f32 %v4192, 1.442695
        %v4194 = vpow.pop %v4193
        %v4195 = vadd.f32 %v4194, 1.0
        %v4196 = vrcp.pop %v4195
        %v4197 = vmul.f32 %v4195, %v4196
        %v4198 = vsub.f32 1.0, %v4197
        %v4199 = vmul.f32 %v4196, %v4198
        %v4200 = vadd.f32 %v4196, %v4199
        %vm4201 = vweird.f32 %v4195
        %vm4202 = vweird.f32 %v4196
        %vm4203 = vmor %vm4201, %vm4202
        %v4204 = vsel %vm4203, %v4196, %v4200
        %v4205 = vand.u32 2147483647, %v4195
        %vm4206 = vcmp.eq.f32.partialorder %v4205, 8.507059e+37
        %v4207 = vand.u32 %v4195, 2147483648
        %v4208 = vor.u32 1.1754944e-38, %v4207
        %v4209 = vsel %vm4206, %v4208, %v4204
        %v4210 = vmul.f32 1.0, %v4209
        %v4211 = vxor.u32 %v4189, 2147483648
        %v4212 = vmul.f32 %v4211, 1.442695
        %v4213 = vpow.pop %v4212
        %v4214 = vadd.f32 %v4213, 1.0
        %v4215 = vrcp.pop %v4214
        %v4216 = vmul.f32 %v4214, %v4215
        %v4217 = vsub.f32 1.0, %v4216
        %v4218 = vmul.f32 %v4215, %v4217
        %v4219 = vadd.f32 %v4215, %v4218
        %vm4220 = vweird.f32 %v4214
        %vm4221 = vweird.f32 %v4215
        %vm4222 = vmor %vm4220, %vm4221
        %v4223 = vsel %vm4222, %v4215, %v4219
        %v4224 = vand.u32 2147483647, %v4214
        %vm4225 = vcmp.eq.f32.partialorder %v4224, 8.507059e+37
        %v4226 = vand.u32 %v4214, 2147483648
        %v4227 = vor.u32 1.1754944e-38, %v4226
        %v4228 = vsel %vm4225, %v4227, %v4223
        %v4229 = vmul.f32 1.0, %v4228
        %v4230 = vtanh.pop %v4190
        %v4231 = vxor.u32 %v4191, 2147483648
        %v4232 = vmul.f32 %v4231, 1.442695
        %v4233 = vpow.pop %v4232
        %v4234 = vadd.f32 %v4233, 1.0
        %v4235 = vrcp.pop %v4234
        %v4236 = vmul.f32 %v4234, %v4235
        %v4237 = vsub.f32 1.0, %v4236
        %v4238 = vmul.f32 %v4235, %v4237
        %v4239 = vadd.f32 %v4235, %v4238
        %vm4240 = vweird.f32 %v4234
        %vm4241 = vweird.f32 %v4235
        %vm4242 = vmor %vm4240, %vm4241
        %v4243 = vsel %vm4242, %v4235, %v4239
        %v4244 = vand.u32 2147483647, %v4234
        %vm4245 = vcmp.eq.f32.partialorder %v4244, 8.507059e+37
        %v4246 = vand.u32 %v4234, 2147483648
        %v4247 = vor.u32 1.1754944e-38, %v4246
        %v4248 = vsel %vm4245, %v4247, %v4243
        %v4249 = vmul.f32 1.0, %v4248
        %v4250 = vmul.f32 %v4229, %v3934
        %v4251 = vmul.f32 %v4210, %v4230
        %v4252 = vadd.f32 %v4250, %v4251
        %v4253 = vtanh.pop %v4252
        %v4254 = vmul.f32 %v4249, %v4253
        %4255 = vst [vmem:[%s1350] sm:$0xff] %v4254
        %v4256 = vld [vmem:[#allocation3] sm:$0xff]
        %v4257 = vld [vmem:[#allocation3 + $0x8] sm:$0xff]
        %v4258 = vld [vmem:[#allocation3 + $0x10] sm:$0xff]
        %v4259 = vld [vmem:[#allocation3 + $0x18] sm:$0xff]
        %v4260 = vld [vmem:[#allocation3 + $0x20] sm:$0xff]
        %v4261 = vld [vmem:[#allocation3 + $0x28] sm:$0xff]
        %v4262 = vld [vmem:[#allocation3 + $0x30] sm:$0xff]
        %v4263 = vld [vmem:[#allocation3 + $0x38] sm:$0xff]
        %v4264 = vpack.c.bf16 %v4257, %v4256
        %v4265 = vpack.c.bf16 %v4259, %v4258
        %v4266 = vpack.c.bf16 %v4261, %v4260
        %v4267 = vpack.c.bf16 %v4263, %v4262
        %s4268 = scalar_lea.vmem [#allocation7], 256
        %v4269 = vld [vmem:[%s4268] sm:$0xff]
        %v4270 = vld [vmem:[%s4268 + $0x8] sm:$0xff]
        %v4271 = vld [vmem:[%s4268 + $0x10] sm:$0xff]
        %v4272 = vld [vmem:[%s4268 + $0x18] sm:$0xff]
        %v4273 = vld [vmem:[%s4268 + $0x20] sm:$0xff]
        %v4274 = vld [vmem:[%s4268 + $0x28] sm:$0xff]
        %v4275 = vld [vmem:[%s4268 + $0x30] sm:$0xff]
        %v4276 = vld [vmem:[%s4268 + $0x38] sm:$0xff]
        %v4277 = vld [vmem:[%s4268 + $0x40] sm:$0xff]
        %v4278 = vld [vmem:[%s4268 + $0x48] sm:$0xff]
        %v4279 = vld [vmem:[%s4268 + $0x50] sm:$0xff]
        %v4280 = vld [vmem:[%s4268 + $0x58] sm:$0xff]
        %v4281 = vld [vmem:[%s4268 + $0x60] sm:$0xff]
        %v4282 = vld [vmem:[%s4268 + $0x68] sm:$0xff]
        %v4283 = vld [vmem:[%s4268 + $0x70] sm:$0xff]
        %v4284 = vld [vmem:[%s4268 + $0x78] sm:$0xff]
        %v4285 = vld [vmem:[%s4268 + $0x80] sm:$0xff]
        %v4286 = vld [vmem:[%s4268 + $0x88] sm:$0xff]
        %v4287 = vld [vmem:[%s4268 + $0x90] sm:$0xff]
        %v4288 = vld [vmem:[%s4268 + $0x98] sm:$0xff]
        %v4289 = vld [vmem:[%s4268 + $0xa0] sm:$0xff]
        %v4290 = vld [vmem:[%s4268 + $0xa8] sm:$0xff]
        %v4291 = vld [vmem:[%s4268 + $0xb0] sm:$0xff]
        %v4292 = vld [vmem:[%s4268 + $0xb8] sm:$0xff]
        %v4293 = vld [vmem:[%s4268 + $0xc0] sm:$0xff]
        %v4294 = vld [vmem:[%s4268 + $0xc8] sm:$0xff]
        %v4295 = vld [vmem:[%s4268 + $0xd0] sm:$0xff]
        %v4296 = vld [vmem:[%s4268 + $0xd8] sm:$0xff]
        %v4297 = vld [vmem:[%s4268 + $0xe0] sm:$0xff]
        %v4298 = vld [vmem:[%s4268 + $0xe8] sm:$0xff]
        %v4299 = vld [vmem:[%s4268 + $0xf0] sm:$0xff]
        %v4300 = vld [vmem:[%s4268 + $0xf8] sm:$0xff]
        %s4301 = scalar_lea.vmem %s7, 4
        %v4302 = vld [vmem:[%s4301] sm:$0xf]
        %v4304 = vperm.slane %v4302, 0
        %v4305 = vperm.slane %v4302, 1
        %v4306 = vperm.slane %v4302, 2
        %v4307 = vperm.slane %v4302, 3
        %v4344 = vunpack.c.l.b16 %v4269
        %v4345 = vunpack.c.h.b16 %v4269
        %v4346 = vunpack.c.l.b16 %v4270
        %v4347 = vunpack.c.h.b16 %v4270
        %v4348 = vunpack.c.l.b16 %v4271
        %v4349 = vunpack.c.h.b16 %v4271
        %v4350 = vunpack.c.l.b16 %v4272
        %v4351 = vunpack.c.h.b16 %v4272
        %v4352 = vunpack.c.l.b16 %v4273
        %v4353 = vunpack.c.h.b16 %v4273
        %v4354 = vunpack.c.l.b16 %v4274
        %v4355 = vunpack.c.h.b16 %v4274
        %v4356 = vunpack.c.l.b16 %v4275
        %v4357 = vunpack.c.h.b16 %v4275
        %v4358 = vunpack.c.l.b16 %v4276
        %v4359 = vunpack.c.h.b16 %v4276
        %v4360 = vunpack.c.l.b16 %v4277
        %v4361 = vunpack.c.h.b16 %v4277
        %v4362 = vunpack.c.l.b16 %v4278
        %v4363 = vunpack.c.h.b16 %v4278
        %v4364 = vunpack.c.l.b16 %v4279
        %v4365 = vunpack.c.h.b16 %v4279
        %v4366 = vunpack.c.l.b16 %v4280
        %v4367 = vunpack.c.h.b16 %v4280
        %v4368 = vunpack.c.l.b16 %v4281
        %v4369 = vunpack.c.h.b16 %v4281
        %v4370 = vunpack.c.l.b16 %v4282
        %v4371 = vunpack.c.h.b16 %v4282
        %v4372 = vunpack.c.l.b16 %v4283
        %v4373 = vunpack.c.h.b16 %v4283
        %v4374 = vunpack.c.l.b16 %v4284
        %v4375 = vunpack.c.h.b16 %v4284
        %v4376 = vunpack.c.l.b16 %v4285
        %v4377 = vunpack.c.h.b16 %v4285
        %v4378 = vunpack.c.l.b16 %v4286
        %v4379 = vunpack.c.h.b16 %v4286
        %v4380 = vunpack.c.l.b16 %v4287
        %v4381 = vunpack.c.h.b16 %v4287
        %v4382 = vunpack.c.l.b16 %v4288
        %v4383 = vunpack.c.h.b16 %v4288
        %v4384 = vunpack.c.l.b16 %v4289
        %v4385 = vunpack.c.h.b16 %v4289
        %v4386 = vunpack.c.l.b16 %v4290
        %v4387 = vunpack.c.h.b16 %v4290
        %v4388 = vunpack.c.l.b16 %v4291
        %v4389 = vunpack.c.h.b16 %v4291
        %v4390 = vunpack.c.l.b16 %v4292
        %v4391 = vunpack.c.h.b16 %v4292
        %v4392 = vunpack.c.l.b16 %v4293
        %v4393 = vunpack.c.h.b16 %v4293
        %v4394 = vunpack.c.l.b16 %v4294
        %v4395 = vunpack.c.h.b16 %v4294
        %v4396 = vunpack.c.l.b16 %v4295
        %v4397 = vunpack.c.h.b16 %v4295
        %v4398 = vunpack.c.l.b16 %v4296
        %v4399 = vunpack.c.h.b16 %v4296
        %v4400 = vunpack.c.l.b16 %v4297
        %v4401 = vunpack.c.h.b16 %v4297
        %v4402 = vunpack.c.l.b16 %v4298
        %v4403 = vunpack.c.h.b16 %v4298
        %v4404 = vunpack.c.l.b16 %v4299
        %v4405 = vunpack.c.h.b16 %v4299
        %v4406 = vunpack.c.l.b16 %v4300
        %v4407 = vunpack.c.h.b16 %v4300
        %v4408 = vpack.c.b16 %v4348, %v4344
        %v4409 = vpack.c.b16 %v4349, %v4345
        %v4410 = vpack.c.b16 %v4350, %v4346
        %v4411 = vpack.c.b16 %v4351, %v4347
        %v4412 = vpack.c.b16 %v4356, %v4352
        %v4413 = vpack.c.b16 %v4357, %v4353
        %v4414 = vpack.c.b16 %v4358, %v4354
        %v4415 = vpack.c.b16 %v4359, %v4355
        %v4416 = vpack.c.b16 %v4364, %v4360
        %v4417 = vpack.c.b16 %v4365, %v4361
        %v4418 = vpack.c.b16 %v4366, %v4362
        %v4419 = vpack.c.b16 %v4367, %v4363
        %v4420 = vpack.c.b16 %v4372, %v4368
        %v4421 = vpack.c.b16 %v4373, %v4369
        %v4422 = vpack.c.b16 %v4374, %v4370
        %v4423 = vpack.c.b16 %v4375, %v4371
        %v4424 = vpack.c.b16 %v4380, %v4376
        %v4425 = vpack.c.b16 %v4381, %v4377
        %v4426 = vpack.c.b16 %v4382, %v4378
        %v4427 = vpack.c.b16 %v4383, %v4379
        %v4428 = vpack.c.b16 %v4388, %v4384
        %v4429 = vpack.c.b16 %v4389, %v4385
        %v4430 = vpack.c.b16 %v4390, %v4386
        %v4431 = vpack.c.b16 %v4391, %v4387
        %v4432 = vpack.c.b16 %v4396, %v4392
        %v4433 = vpack.c.b16 %v4397, %v4393
        %v4434 = vpack.c.b16 %v4398, %v4394
        %v4435 = vpack.c.b16 %v4399, %v4395
        %v4436 = vpack.c.b16 %v4404, %v4400
        %v4437 = vpack.c.b16 %v4405, %v4401
        %v4438 = vpack.c.b16 %v4406, %v4402
        %v4439 = vpack.c.b16 %v4407, %v4403
        %4472 = vmatpush.bf16.msra.mxu0 %v4436
        %4473 = vmatpush.bf16.msra.mxu0 %v4432
        %4474 = vmatpush.bf16.msra.mxu0 %v4428
        %4475 = vmatpush.bf16.msra.mxu0 %v4424
        %4476 = vmatpush.bf16.msra.mxu0 %v4420
        %4477 = vmatpush.bf16.msra.mxu0 %v4416
        %4478 = vmatpush.bf16.msra.mxu0 %v4412
        %4479 = vmatpush.bf16.msra.mxu0 %v4408
        %4480 = vmatmul.bf16.gmra.mxu0 %v4264
        %v4481 = vpop.f32.mrf.mxu0
        %v4482 = vadd.f32 %v4304, %v4481
        %v4483 = vpop.f32.mrf.mxu0
        %v4484 = vadd.f32 %v4304, %v4483
        %4485 = vmatmul.bf16.gmra.mxu0 %v4265
        %v4486 = vpop.f32.mrf.mxu0
        %v4487 = vadd.f32 %v4304, %v4486
        %v4488 = vpop.f32.mrf.mxu0
        %v4489 = vadd.f32 %v4304, %v4488
        %4490 = vmatmul.bf16.gmra.mxu0 %v4266
        %v4491 = vpop.f32.mrf.mxu0
        %v4492 = vadd.f32 %v4304, %v4491
        %v4493 = vpop.f32.mrf.mxu0
        %v4494 = vadd.f32 %v4304, %v4493
        %4495 = vmatmul.bf16.gmra.mxu0 %v4267
        %v4496 = vpop.f32.mrf.mxu0
        %v4497 = vadd.f32 %v4304, %v4496
        %v4498 = vpop.f32.mrf.mxu0
        %v4499 = vadd.f32 %v4304, %v4498
        %4500 = vdwg.mxu0
        %4501 = vmatpush.bf16.msra.mxu0 %v4437
        %4502 = vmatpush.bf16.msra.mxu0 %v4433
        %4503 = vmatpush.bf16.msra.mxu0 %v4429
        %4504 = vmatpush.bf16.msra.mxu0 %v4425
        %4505 = vmatpush.bf16.msra.mxu0 %v4421
        %4506 = vmatpush.bf16.msra.mxu0 %v4417
        %4507 = vmatpush.bf16.msra.mxu0 %v4413
        %4508 = vmatpush.bf16.msra.mxu0 %v4409
        %4509 = vmatmul.bf16.gmra.mxu0 %v4264
        %v4510 = vpop.f32.mrf.mxu0
        %v4511 = vadd.f32 %v4305, %v4510
        %v4512 = vpop.f32.mrf.mxu0
        %v4513 = vadd.f32 %v4305, %v4512
        %4514 = vmatmul.bf16.gmra.mxu0 %v4265
        %v4515 = vpop.f32.mrf.mxu0
        %v4516 = vadd.f32 %v4305, %v4515
        %v4517 = vpop.f32.mrf.mxu0
        %v4518 = vadd.f32 %v4305, %v4517
        %4519 = vmatmul.bf16.gmra.mxu0 %v4266
        %v4520 = vpop.f32.mrf.mxu0
        %v4521 = vadd.f32 %v4305, %v4520
        %v4522 = vpop.f32.mrf.mxu0
        %v4523 = vadd.f32 %v4305, %v4522
        %4524 = vmatmul.bf16.gmra.mxu0 %v4267
        %v4525 = vpop.f32.mrf.mxu0
        %v4526 = vadd.f32 %v4305, %v4525
        %v4527 = vpop.f32.mrf.mxu0
        %v4528 = vadd.f32 %v4305, %v4527
        %4529 = vdwg.mxu0
        %4530 = vmatpush.bf16.msra.mxu0 %v4438
        %4531 = vmatpush.bf16.msra.mxu0 %v4434
        %4532 = vmatpush.bf16.msra.mxu0 %v4430
        %4533 = vmatpush.bf16.msra.mxu0 %v4426
        %4534 = vmatpush.bf16.msra.mxu0 %v4422
        %4535 = vmatpush.bf16.msra.mxu0 %v4418
        %4536 = vmatpush.bf16.msra.mxu0 %v4414
        %4537 = vmatpush.bf16.msra.mxu0 %v4410
        %4538 = vmatmul.bf16.gmra.mxu0 %v4264
        %v4539 = vpop.f32.mrf.mxu0
        %v4540 = vadd.f32 %v4306, %v4539
        %v4541 = vpop.f32.mrf.mxu0
        %v4542 = vadd.f32 %v4306, %v4541
        %4543 = vmatmul.bf16.gmra.mxu0 %v4265
        %v4544 = vpop.f32.mrf.mxu0
        %v4545 = vadd.f32 %v4306, %v4544
        %v4546 = vpop.f32.mrf.mxu0
        %v4547 = vadd.f32 %v4306, %v4546
        %4548 = vmatmul.bf16.gmra.mxu0 %v4266
        %v4549 = vpop.f32.mrf.mxu0
        %v4550 = vadd.f32 %v4306, %v4549
        %v4551 = vpop.f32.mrf.mxu0
        %v4552 = vadd.f32 %v4306, %v4551
        %4553 = vmatmul.bf16.gmra.mxu0 %v4267
        %v4554 = vpop.f32.mrf.mxu0
        %v4555 = vadd.f32 %v4306, %v4554
        %v4556 = vpop.f32.mrf.mxu0
        %v4557 = vadd.f32 %v4306, %v4556
        %4558 = vdwg.mxu0
        %4559 = vmatpush.bf16.msra.mxu0 %v4439
        %4560 = vmatpush.bf16.msra.mxu0 %v4435
        %4561 = vmatpush.bf16.msra.mxu0 %v4431
        %4562 = vmatpush.bf16.msra.mxu0 %v4427
        %4563 = vmatpush.bf16.msra.mxu0 %v4423
        %4564 = vmatpush.bf16.msra.mxu0 %v4419
        %4565 = vmatpush.bf16.msra.mxu0 %v4415
        %4566 = vmatpush.bf16.msra.mxu0 %v4411
        %4567 = vmatmul.bf16.gmra.mxu0 %v4264
        %v4568 = vpop.f32.mrf.mxu0
        %v4569 = vadd.f32 %v4307, %v4568
        %v4570 = vpop.f32.mrf.mxu0
        %v4571 = vadd.f32 %v4307, %v4570
        %4572 = vmatmul.bf16.gmra.mxu0 %v4265
        %v4573 = vpop.f32.mrf.mxu0
        %v4574 = vadd.f32 %v4307, %v4573
        %v4575 = vpop.f32.mrf.mxu0
        %v4576 = vadd.f32 %v4307, %v4575
        %4577 = vmatmul.bf16.gmra.mxu0 %v4266
        %v4578 = vpop.f32.mrf.mxu0
        %v4579 = vadd.f32 %v4307, %v4578
        %v4580 = vpop.f32.mrf.mxu0
        %v4581 = vadd.f32 %v4307, %v4580
        %4582 = vmatmul.bf16.gmra.mxu0 %v4267
        %v4583 = vpop.f32.mrf.mxu0
        %v4584 = vadd.f32 %v4307, %v4583
        %v4585 = vpop.f32.mrf.mxu0
        %v4586 = vadd.f32 %v4307, %v4585
        %4587 = vdwg.mxu0
        %4588 = vst [vmem:[#allocation2] sm:$0xff] %v4482
        %4589 = vst [vmem:[#allocation2 + $0x8] sm:$0xff] %v4511
        %4590 = vst [vmem:[#allocation2 + $0x10] sm:$0xff] %v4540
        %4591 = vst [vmem:[#allocation2 + $0x18] sm:$0xff] %v4569
        %4592 = vst [vmem:[#allocation2 + $0x20] sm:$0xff] %v4484
        %4593 = vst [vmem:[#allocation2 + $0x28] sm:$0xff] %v4513
        %4594 = vst [vmem:[#allocation2 + $0x30] sm:$0xff] %v4542
        %4595 = vst [vmem:[#allocation2 + $0x38] sm:$0xff] %v4571
        %4596 = vst [vmem:[#allocation2 + $0x40] sm:$0xff] %v4487
        %4597 = vst [vmem:[#allocation2 + $0x48] sm:$0xff] %v4516
        %4598 = vst [vmem:[#allocation2 + $0x50] sm:$0xff] %v4545
        %4599 = vst [vmem:[#allocation2 + $0x58] sm:$0xff] %v4574
        %4600 = vst [vmem:[#allocation2 + $0x60] sm:$0xff] %v4489
        %4601 = vst [vmem:[#allocation2 + $0x68] sm:$0xff] %v4518
        %4602 = vst [vmem:[#allocation2 + $0x70] sm:$0xff] %v4547
        %4603 = vst [vmem:[#allocation2 + $0x78] sm:$0xff] %v4576
        %4604 = vst [vmem:[#allocation2 + $0x80] sm:$0xff] %v4492
        %4605 = vst [vmem:[#allocation2 + $0x88] sm:$0xff] %v4521
        %4606 = vst [vmem:[#allocation2 + $0x90] sm:$0xff] %v4550
        %4607 = vst [vmem:[#allocation2 + $0x98] sm:$0xff] %v4579
        %4608 = vst [vmem:[#allocation2 + $0xa0] sm:$0xff] %v4494
        %4609 = vst [vmem:[#allocation2 + $0xa8] sm:$0xff] %v4523
        %4610 = vst [vmem:[#allocation2 + $0xb0] sm:$0xff] %v4552
        %4611 = vst [vmem:[#allocation2 + $0xb8] sm:$0xff] %v4581
        %4612 = vst [vmem:[#allocation2 + $0xc0] sm:$0xff] %v4497
        %4613 = vst [vmem:[#allocation2 + $0xc8] sm:$0xff] %v4526
        %4614 = vst [vmem:[#allocation2 + $0xd0] sm:$0xff] %v4555
        %4615 = vst [vmem:[#allocation2 + $0xd8] sm:$0xff] %v4584
        %4616 = vst [vmem:[#allocation2 + $0xe0] sm:$0xff] %v4499
        %4617 = vst [vmem:[#allocation2 + $0xe8] sm:$0xff] %v4528
        %4618 = vst [vmem:[#allocation2 + $0xf0] sm:$0xff] %v4557
        %4619 = vst [vmem:[#allocation2 + $0xf8] sm:$0xff] %v4586
        %v4620 = vld [vmem:[#allocation2] sm:$0xff]
        %v4621 = vld [vmem:[#allocation2 + $0x8] sm:$0xff]
        %v4622 = vld [vmem:[#allocation2 + $0x10] sm:$0xff]
        %v4623 = vld [vmem:[#allocation2 + $0x18] sm:$0xff]
        %s4624 = scalar_lea.vmem [#allocation9], 256
        %v4625 = vld [vmem:[%s4624] sm:$0xff]
        %v4626 = vld [vmem:[%s4624 + $0x8] sm:$0xff]
        %v4627 = vld [vmem:[%s4624 + $0x10] sm:$0xff]
        %v4628 = vld [vmem:[%s4624 + $0x18] sm:$0xff]
        %v4629 = vld [vmem:[%s4624 + $0x20] sm:$0xff]
        %v4630 = vld [vmem:[%s4624 + $0x28] sm:$0xff]
        %v4631 = vld [vmem:[%s4624 + $0x30] sm:$0xff]
        %v4632 = vld [vmem:[%s4624 + $0x38] sm:$0xff]
        %v4633 = vld [vmem:[%s4624 + $0x40] sm:$0xff]
        %v4634 = vld [vmem:[%s4624 + $0x48] sm:$0xff]
        %v4635 = vld [vmem:[%s4624 + $0x50] sm:$0xff]
        %v4636 = vld [vmem:[%s4624 + $0x58] sm:$0xff]
        %v4637 = vld [vmem:[%s4624 + $0x60] sm:$0xff]
        %v4638 = vld [vmem:[%s4624 + $0x68] sm:$0xff]
        %v4639 = vld [vmem:[%s4624 + $0x70] sm:$0xff]
        %v4640 = vld [vmem:[%s4624 + $0x78] sm:$0xff]
        %v4641 = vld [vmem:[%s4624 + $0x80] sm:$0xff]
        %v4642 = vld [vmem:[%s4624 + $0x88] sm:$0xff]
        %v4643 = vld [vmem:[%s4624 + $0x90] sm:$0xff]
        %v4644 = vld [vmem:[%s4624 + $0x98] sm:$0xff]
        %v4645 = vld [vmem:[%s4624 + $0xa0] sm:$0xff]
        %v4646 = vld [vmem:[%s4624 + $0xa8] sm:$0xff]
        %v4647 = vld [vmem:[%s4624 + $0xb0] sm:$0xff]
        %v4648 = vld [vmem:[%s4624 + $0xb8] sm:$0xff]
        %v4649 = vld [vmem:[%s4624 + $0xc0] sm:$0xff]
        %v4650 = vld [vmem:[%s4624 + $0xc8] sm:$0xff]
        %v4651 = vld [vmem:[%s4624 + $0xd0] sm:$0xff]
        %v4652 = vld [vmem:[%s4624 + $0xd8] sm:$0xff]
        %v4653 = vld [vmem:[%s4624 + $0xe0] sm:$0xff]
        %v4654 = vld [vmem:[%s4624 + $0xe8] sm:$0xff]
        %v4655 = vld [vmem:[%s4624 + $0xf0] sm:$0xff]
        %v4656 = vld [vmem:[%s4624 + $0xf8] sm:$0xff]
        %v4689 = vunpack.c.l.b16 %v4625
        %v4690 = vunpack.c.h.b16 %v4625
        %v4691 = vunpack.c.l.b16 %v4626
        %v4692 = vunpack.c.h.b16 %v4626
        %v4693 = vunpack.c.l.b16 %v4627
        %v4694 = vunpack.c.h.b16 %v4627
        %v4695 = vunpack.c.l.b16 %v4628
        %v4696 = vunpack.c.h.b16 %v4628
        %v4697 = vunpack.c.l.b16 %v4629
        %v4698 = vunpack.c.h.b16 %v4629
        %v4699 = vunpack.c.l.b16 %v4630
        %v4700 = vunpack.c.h.b16 %v4630
        %v4701 = vunpack.c.l.b16 %v4631
        %v4702 = vunpack.c.h.b16 %v4631
        %v4703 = vunpack.c.l.b16 %v4632
        %v4704 = vunpack.c.h.b16 %v4632
        %v4705 = vunpack.c.l.b16 %v4633
        %v4706 = vunpack.c.h.b16 %v4633
        %v4707 = vunpack.c.l.b16 %v4634
        %v4708 = vunpack.c.h.b16 %v4634
        %v4709 = vunpack.c.l.b16 %v4635
        %v4710 = vunpack.c.h.b16 %v4635
        %v4711 = vunpack.c.l.b16 %v4636
        %v4712 = vunpack.c.h.b16 %v4636
        %v4713 = vunpack.c.l.b16 %v4637
        %v4714 = vunpack.c.h.b16 %v4637
        %v4715 = vunpack.c.l.b16 %v4638
        %v4716 = vunpack.c.h.b16 %v4638
        %v4717 = vunpack.c.l.b16 %v4639
        %v4718 = vunpack.c.h.b16 %v4639
        %v4719 = vunpack.c.l.b16 %v4640
        %v4720 = vunpack.c.h.b16 %v4640
        %v4721 = vunpack.c.l.b16 %v4641
        %v4722 = vunpack.c.h.b16 %v4641
        %v4723 = vunpack.c.l.b16 %v4642
        %v4724 = vunpack.c.h.b16 %v4642
        %v4725 = vunpack.c.l.b16 %v4643
        %v4726 = vunpack.c.h.b16 %v4643
        %v4727 = vunpack.c.l.b16 %v4644
        %v4728 = vunpack.c.h.b16 %v4644
        %v4729 = vunpack.c.l.b16 %v4645
        %v4730 = vunpack.c.h.b16 %v4645
        %v4731 = vunpack.c.l.b16 %v4646
        %v4732 = vunpack.c.h.b16 %v4646
        %v4733 = vunpack.c.l.b16 %v4647
        %v4734 = vunpack.c.h.b16 %v4647
        %v4735 = vunpack.c.l.b16 %v4648
        %v4736 = vunpack.c.h.b16 %v4648
        %v4737 = vunpack.c.l.b16 %v4649
        %v4738 = vunpack.c.h.b16 %v4649
        %v4739 = vunpack.c.l.b16 %v4650
        %v4740 = vunpack.c.h.b16 %v4650
        %v4741 = vunpack.c.l.b16 %v4651
        %v4742 = vunpack.c.h.b16 %v4651
        %v4743 = vunpack.c.l.b16 %v4652
        %v4744 = vunpack.c.h.b16 %v4652
        %v4745 = vunpack.c.l.b16 %v4653
        %v4746 = vunpack.c.h.b16 %v4653
        %v4747 = vunpack.c.l.b16 %v4654
        %v4748 = vunpack.c.h.b16 %v4654
        %v4749 = vunpack.c.l.b16 %v4655
        %v4750 = vunpack.c.h.b16 %v4655
        %v4751 = vunpack.c.l.b16 %v4656
        %v4752 = vunpack.c.h.b16 %v4656
        %v4753 = vpack.c.b16 %v4693, %v4689
        %v4754 = vpack.c.b16 %v4694, %v4690
        %v4755 = vpack.c.b16 %v4695, %v4691
        %v4756 = vpack.c.b16 %v4696, %v4692
        %v4757 = vpack.c.b16 %v4701, %v4697
        %v4758 = vpack.c.b16 %v4702, %v4698
        %v4759 = vpack.c.b16 %v4703, %v4699
        %v4760 = vpack.c.b16 %v4704, %v4700
        %v4761 = vpack.c.b16 %v4709, %v4705
        %v4762 = vpack.c.b16 %v4710, %v4706
        %v4763 = vpack.c.b16 %v4711, %v4707
        %v4764 = vpack.c.b16 %v4712, %v4708
        %v4765 = vpack.c.b16 %v4717, %v4713
        %v4766 = vpack.c.b16 %v4718, %v4714
        %v4767 = vpack.c.b16 %v4719, %v4715
        %v4768 = vpack.c.b16 %v4720, %v4716
        %v4769 = vpack.c.b16 %v4725, %v4721
        %v4770 = vpack.c.b16 %v4726, %v4722
        %v4771 = vpack.c.b16 %v4727, %v4723
        %v4772 = vpack.c.b16 %v4728, %v4724
        %v4773 = vpack.c.b16 %v4733, %v4729
        %v4774 = vpack.c.b16 %v4734, %v4730
        %v4775 = vpack.c.b16 %v4735, %v4731
        %v4776 = vpack.c.b16 %v4736, %v4732
        %v4777 = vpack.c.b16 %v4741, %v4737
        %v4778 = vpack.c.b16 %v4742, %v4738
        %v4779 = vpack.c.b16 %v4743, %v4739
        %v4780 = vpack.c.b16 %v4744, %v4740
        %v4781 = vpack.c.b16 %v4749, %v4745
        %v4782 = vpack.c.b16 %v4750, %v4746
        %v4783 = vpack.c.b16 %v4751, %v4747
        %v4784 = vpack.c.b16 %v4752, %v4748
        %4817 = vmatpush.bf16.msra.mxu0 %v4781
        %4818 = vmatpush.bf16.msra.mxu0 %v4777
        %4819 = vmatpush.bf16.msra.mxu0 %v4773
        %4820 = vmatpush.bf16.msra.mxu0 %v4769
        %4821 = vmatpush.bf16.msra.mxu0 %v4765
        %4822 = vmatpush.bf16.msra.mxu0 %v4761
        %4823 = vmatpush.bf16.msra.mxu0 %v4757
        %4824 = vmatpush.bf16.msra.mxu0 %v4753
        %4825 = vmatmul.bf16.gmra.mxu0 0
        %v4826 = vpop.f32.mrf.mxu0
        %v4827 = vadd.f32 0.0, %v4826
        %v4828 = vpop.f32.mrf.mxu0
        %4829 = vdwg.mxu0
        %4830 = vmatpush.bf16.msra.mxu0 %v4782
        %4831 = vmatpush.bf16.msra.mxu0 %v4778
        %4832 = vmatpush.bf16.msra.mxu0 %v4774
        %4833 = vmatpush.bf16.msra.mxu0 %v4770
        %4834 = vmatpush.bf16.msra.mxu0 %v4766
        %4835 = vmatpush.bf16.msra.mxu0 %v4762
        %4836 = vmatpush.bf16.msra.mxu0 %v4758
        %4837 = vmatpush.bf16.msra.mxu0 %v4754
        %4838 = vmatmul.bf16.gmra.mxu0 0
        %v4839 = vpop.f32.mrf.mxu0
        %v4840 = vadd.f32 0.0, %v4839
        %v4841 = vpop.f32.mrf.mxu0
        %4842 = vdwg.mxu0
        %4843 = vmatpush.bf16.msra.mxu0 %v4783
        %4844 = vmatpush.bf16.msra.mxu0 %v4779
        %4845 = vmatpush.bf16.msra.mxu0 %v4775
        %4846 = vmatpush.bf16.msra.mxu0 %v4771
        %4847 = vmatpush.bf16.msra.mxu0 %v4767
        %4848 = vmatpush.bf16.msra.mxu0 %v4763
        %4849 = vmatpush.bf16.msra.mxu0 %v4759
        %4850 = vmatpush.bf16.msra.mxu0 %v4755
        %4851 = vmatmul.bf16.gmra.mxu0 0
        %v4852 = vpop.f32.mrf.mxu0
        %v4853 = vadd.f32 0.0, %v4852
        %v4854 = vpop.f32.mrf.mxu0
        %4855 = vdwg.mxu0
        %4856 = vmatpush.bf16.msra.mxu0 %v4784
        %4857 = vmatpush.bf16.msra.mxu0 %v4780
        %4858 = vmatpush.bf16.msra.mxu0 %v4776
        %4859 = vmatpush.bf16.msra.mxu0 %v4772
        %4860 = vmatpush.bf16.msra.mxu0 %v4768
        %4861 = vmatpush.bf16.msra.mxu0 %v4764
        %4862 = vmatpush.bf16.msra.mxu0 %v4760
        %4863 = vmatpush.bf16.msra.mxu0 %v4756
        %4864 = vmatmul.bf16.gmra.mxu0 0
        %v4865 = vpop.f32.mrf.mxu0
        %v4866 = vadd.f32 0.0, %v4865
        %v4867 = vpop.f32.mrf.mxu0
        %4868 = vdwg.mxu0
        %v4869 = vadd.f32 %v4620, %v4827
        %v4870 = vadd.f32 %v4621, %v4840
        %v4871 = vadd.f32 %v4622, %v4853
        %v4872 = vadd.f32 %v4623, %v4866
        %v4873 = vxor.u32 %v4869, 2147483648
        %v4874 = vmul.f32 %v4873, 1.442695
        %v4875 = vpow.pop %v4874
        %v4876 = vadd.f32 %v4875, 1.0
        %v4877 = vrcp.pop %v4876
        %v4878 = vmul.f32 %v4876, %v4877
        %v4879 = vsub.f32 1.0, %v4878
        %v4880 = vmul.f32 %v4877, %v4879
        %v4881 = vadd.f32 %v4877, %v4880
        %vm4882 = vweird.f32 %v4876
        %vm4883 = vweird.f32 %v4877
        %vm4884 = vmor %vm4882, %vm4883
        %v4885 = vsel %vm4884, %v4877, %v4881
        %v4886 = vand.u32 2147483647, %v4876
        %vm4887 = vcmp.eq.f32.partialorder %v4886, 8.507059e+37
        %v4888 = vand.u32 %v4876, 2147483648
        %v4889 = vor.u32 1.1754944e-38, %v4888
        %v4890 = vsel %vm4887, %v4889, %v4885
        %v4891 = vmul.f32 1.0, %v4890
        %v4892 = vxor.u32 %v4870, 2147483648
        %v4893 = vmul.f32 %v4892, 1.442695
        %v4894 = vpow.pop %v4893
        %v4895 = vadd.f32 %v4894, 1.0
        %v4896 = vrcp.pop %v4895
        %v4897 = vmul.f32 %v4895, %v4896
        %v4898 = vsub.f32 1.0, %v4897
        %v4899 = vmul.f32 %v4896, %v4898
        %v4900 = vadd.f32 %v4896, %v4899
        %vm4901 = vweird.f32 %v4895
        %vm4902 = vweird.f32 %v4896
        %vm4903 = vmor %vm4901, %vm4902
        %v4904 = vsel %vm4903, %v4896, %v4900
        %v4905 = vand.u32 2147483647, %v4895
        %vm4906 = vcmp.eq.f32.partialorder %v4905, 8.507059e+37
        %v4907 = vand.u32 %v4895, 2147483648
        %v4908 = vor.u32 1.1754944e-38, %v4907
        %v4909 = vsel %vm4906, %v4908, %v4904
        %v4910 = vmul.f32 1.0, %v4909
        %v4911 = vtanh.pop %v4871
        %v4912 = vxor.u32 %v4872, 2147483648
        %v4913 = vmul.f32 %v4912, 1.442695
        %v4914 = vpow.pop %v4913
        %v4915 = vadd.f32 %v4914, 1.0
        %v4916 = vrcp.pop %v4915
        %v4917 = vmul.f32 %v4915, %v4916
        %v4918 = vsub.f32 1.0, %v4917
        %v4919 = vmul.f32 %v4916, %v4918
        %v4920 = vadd.f32 %v4916, %v4919
        %vm4921 = vweird.f32 %v4915
        %vm4922 = vweird.f32 %v4916
        %vm4923 = vmor %vm4921, %vm4922
        %v4924 = vsel %vm4923, %v4916, %v4920
        %v4925 = vand.u32 2147483647, %v4915
        %vm4926 = vcmp.eq.f32.partialorder %v4925, 8.507059e+37
        %v4927 = vand.u32 %v4915, 2147483648
        %v4928 = vor.u32 1.1754944e-38, %v4927
        %v4929 = vsel %vm4926, %v4928, %v4924
        %v4930 = vmul.f32 1.0, %v4929
        %v4931 = vmul.f32 %v4910, 0.0
        %v4932 = vmul.f32 %v4891, %v4911
        %v4933 = vadd.f32 %v4931, %v4932
        %v4934 = vtanh.pop %v4933
        %v4935 = vmul.f32 %v4930, %v4934
        %v4936 = vld [vmem:[%s2030] sm:$0xff]
        %v4937 = vld [vmem:[%s2030 + $0x8] sm:$0xff]
        %v4938 = vld [vmem:[%s2030 + $0x10] sm:$0xff]
        %v4939 = vld [vmem:[%s2030 + $0x18] sm:$0xff]
        %v4940 = vpack.c.bf16 %v4935, %v4935
        %4941 = vmatpush.bf16.msra.mxu0 %v4781
        %4942 = vmatpush.bf16.msra.mxu0 %v4777
        %4943 = vmatpush.bf16.msra.mxu0 %v4773
        %4944 = vmatpush.bf16.msra.mxu0 %v4769
        %4945 = vmatpush.bf16.msra.mxu0 %v4765
        %4946 = vmatpush.bf16.msra.mxu0 %v4761
        %4947 = vmatpush.bf16.msra.mxu0 %v4757
        %4948 = vmatpush.bf16.msra.mxu0 %v4753
        %4949 = vmatmul.bf16.gmra.mxu0 %v4940
        %v4950 = vpop.f32.mrf.mxu0
        %v4951 = vadd.f32 0.0, %v4950
        %v4952 = vpop.f32.mrf.mxu0
        %4953 = vdwg.mxu0
        %4954 = vmatpush.bf16.msra.mxu0 %v4782
        %4955 = vmatpush.bf16.msra.mxu0 %v4778
        %4956 = vmatpush.bf16.msra.mxu0 %v4774
        %4957 = vmatpush.bf16.msra.mxu0 %v4770
        %4958 = vmatpush.bf16.msra.mxu0 %v4766
        %4959 = vmatpush.bf16.msra.mxu0 %v4762
        %4960 = vmatpush.bf16.msra.mxu0 %v4758
        %4961 = vmatpush.bf16.msra.mxu0 %v4754
        %4962 = vmatmul.bf16.gmra.mxu0 %v4940
        %v4963 = vpop.f32.mrf.mxu0
        %v4964 = vadd.f32 0.0, %v4963
        %v4965 = vpop.f32.mrf.mxu0
        %4966 = vdwg.mxu0
        %4967 = vmatpush.bf16.msra.mxu0 %v4783
        %4968 = vmatpush.bf16.msra.mxu0 %v4779
        %4969 = vmatpush.bf16.msra.mxu0 %v4775
        %4970 = vmatpush.bf16.msra.mxu0 %v4771
        %4971 = vmatpush.bf16.msra.mxu0 %v4767
        %4972 = vmatpush.bf16.msra.mxu0 %v4763
        %4973 = vmatpush.bf16.msra.mxu0 %v4759
        %4974 = vmatpush.bf16.msra.mxu0 %v4755
        %4975 = vmatmul.bf16.gmra.mxu0 %v4940
        %v4976 = vpop.f32.mrf.mxu0
        %v4977 = vadd.f32 0.0, %v4976
        %v4978 = vpop.f32.mrf.mxu0
        %4979 = vdwg.mxu0
        %4980 = vmatpush.bf16.msra.mxu0 %v4784
        %4981 = vmatpush.bf16.msra.mxu0 %v4780
        %4982 = vmatpush.bf16.msra.mxu0 %v4776
        %4983 = vmatpush.bf16.msra.mxu0 %v4772
        %4984 = vmatpush.bf16.msra.mxu0 %v4768
        %4985 = vmatpush.bf16.msra.mxu0 %v4764
        %4986 = vmatpush.bf16.msra.mxu0 %v4760
        %4987 = vmatpush.bf16.msra.mxu0 %v4756
        %4988 = vmatmul.bf16.gmra.mxu0 %v4940
        %v4989 = vpop.f32.mrf.mxu0
        %v4990 = vadd.f32 0.0, %v4989
        %v4991 = vpop.f32.mrf.mxu0
        %4992 = vdwg.mxu0
        %v4993 = vadd.f32 %v4936, %v4951
        %v4994 = vadd.f32 %v4937, %v4964
        %v4995 = vadd.f32 %v4938, %v4977
        %v4996 = vadd.f32 %v4939, %v4990
        %v4997 = vxor.u32 %v4993, 2147483648
        %v4998 = vmul.f32 %v4997, 1.442695
        %v4999 = vpow.pop %v4998
        %v5000 = vadd.f32 %v4999, 1.0
        %v5001 = vrcp.pop %v5000
        %v5002 = vmul.f32 %v5000, %v5001
        %v5003 = vsub.f32 1.0, %v5002
        %v5004 = vmul.f32 %v5001, %v5003
        %v5005 = vadd.f32 %v5001, %v5004
        %vm5006 = vweird.f32 %v5000
        %vm5007 = vweird.f32 %v5001
        %vm5008 = vmor %vm5006, %vm5007
        %v5009 = vsel %vm5008, %v5001, %v5005
        %v5010 = vand.u32 2147483647, %v5000
        %vm5011 = vcmp.eq.f32.partialorder %v5010, 8.507059e+37
        %v5012 = vand.u32 %v5000, 2147483648
        %v5013 = vor.u32 1.1754944e-38, %v5012
        %v5014 = vsel %vm5011, %v5013, %v5009
        %v5015 = vmul.f32 1.0, %v5014
        %v5016 = vxor.u32 %v4994, 2147483648
        %v5017 = vmul.f32 %v5016, 1.442695
        %v5018 = vpow.pop %v5017
        %v5019 = vadd.f32 %v5018, 1.0
        %v5020 = vrcp.pop %v5019
        %v5021 = vmul.f32 %v5019, %v5020
        %v5022 = vsub.f32 1.0, %v5021
        %v5023 = vmul.f32 %v5020, %v5022
        %v5024 = vadd.f32 %v5020, %v5023
        %vm5025 = vweird.f32 %v5019
        %vm5026 = vweird.f32 %v5020
        %vm5027 = vmor %vm5025, %vm5026
        %v5028 = vsel %vm5027, %v5020, %v5024
        %v5029 = vand.u32 2147483647, %v5019
        %vm5030 = vcmp.eq.f32.partialorder %v5029, 8.507059e+37
        %v5031 = vand.u32 %v5019, 2147483648
        %v5032 = vor.u32 1.1754944e-38, %v5031
        %v5033 = vsel %vm5030, %v5032, %v5028
        %v5034 = vmul.f32 1.0, %v5033
        %v5035 = vtanh.pop %v4995
        %v5036 = vxor.u32 %v4996, 2147483648
        %v5037 = vmul.f32 %v5036, 1.442695
        %v5038 = vpow.pop %v5037
        %v5039 = vadd.f32 %v5038, 1.0
        %v5040 = vrcp.pop %v5039
        %v5041 = vmul.f32 %v5039, %v5040
        %v5042 = vsub.f32 1.0, %v5041
        %v5043 = vmul.f32 %v5040, %v5042
        %v5044 = vadd.f32 %v5040, %v5043
        %vm5045 = vweird.f32 %v5039
        %vm5046 = vweird.f32 %v5040
        %vm5047 = vmor %vm5045, %vm5046
        %v5048 = vsel %vm5047, %v5040, %v5044
        %v5049 = vand.u32 2147483647, %v5039
        %vm5050 = vcmp.eq.f32.partialorder %v5049, 8.507059e+37
        %v5051 = vand.u32 %v5039, 2147483648
        %v5052 = vor.u32 1.1754944e-38, %v5051
        %v5053 = vsel %vm5050, %v5052, %v5048
        %v5054 = vmul.f32 1.0, %v5053
        %v5055 = vmul.f32 %v5034, %v4933
        %v5056 = vmul.f32 %v5015, %v5035
        %v5057 = vadd.f32 %v5055, %v5056
        %v5058 = vtanh.pop %v5057
        %v5059 = vmul.f32 %v5054, %v5058
        %v5060 = vld [vmem:[%s2348] sm:$0xff]
        %v5061 = vld [vmem:[%s2348 + $0x8] sm:$0xff]
        %v5062 = vld [vmem:[%s2348 + $0x10] sm:$0xff]
        %v5063 = vld [vmem:[%s2348 + $0x18] sm:$0xff]
        %v5064 = vpack.c.bf16 %v5059, %v5059
        %5065 = vmatpush.bf16.msra.mxu0 %v4781
        %5066 = vmatpush.bf16.msra.mxu0 %v4777
        %5067 = vmatpush.bf16.msra.mxu0 %v4773
        %5068 = vmatpush.bf16.msra.mxu0 %v4769
        %5069 = vmatpush.bf16.msra.mxu0 %v4765
        %5070 = vmatpush.bf16.msra.mxu0 %v4761
        %5071 = vmatpush.bf16.msra.mxu0 %v4757
        %5072 = vmatpush.bf16.msra.mxu0 %v4753
        %5073 = vmatmul.bf16.gmra.mxu0 %v5064
        %v5074 = vpop.f32.mrf.mxu0
        %v5075 = vadd.f32 0.0, %v5074
        %v5076 = vpop.f32.mrf.mxu0
        %5077 = vdwg.mxu0
        %5078 = vmatpush.bf16.msra.mxu0 %v4782
        %5079 = vmatpush.bf16.msra.mxu0 %v4778
        %5080 = vmatpush.bf16.msra.mxu0 %v4774
        %5081 = vmatpush.bf16.msra.mxu0 %v4770
        %5082 = vmatpush.bf16.msra.mxu0 %v4766
        %5083 = vmatpush.bf16.msra.mxu0 %v4762
        %5084 = vmatpush.bf16.msra.mxu0 %v4758
        %5085 = vmatpush.bf16.msra.mxu0 %v4754
        %5086 = vmatmul.bf16.gmra.mxu0 %v5064
        %v5087 = vpop.f32.mrf.mxu0
        %v5088 = vadd.f32 0.0, %v5087
        %v5089 = vpop.f32.mrf.mxu0
        %5090 = vdwg.mxu0
        %5091 = vmatpush.bf16.msra.mxu0 %v4783
        %5092 = vmatpush.bf16.msra.mxu0 %v4779
        %5093 = vmatpush.bf16.msra.mxu0 %v4775
        %5094 = vmatpush.bf16.msra.mxu0 %v4771
        %5095 = vmatpush.bf16.msra.mxu0 %v4767
        %5096 = vmatpush.bf16.msra.mxu0 %v4763
        %5097 = vmatpush.bf16.msra.mxu0 %v4759
        %5098 = vmatpush.bf16.msra.mxu0 %v4755
        %5099 = vmatmul.bf16.gmra.mxu0 %v5064
        %v5100 = vpop.f32.mrf.mxu0
        %v5101 = vadd.f32 0.0, %v5100
        %v5102 = vpop.f32.mrf.mxu0
        %5103 = vdwg.mxu0
        %5104 = vmatpush.bf16.msra.mxu0 %v4784
        %5105 = vmatpush.bf16.msra.mxu0 %v4780
        %5106 = vmatpush.bf16.msra.mxu0 %v4776
        %5107 = vmatpush.bf16.msra.mxu0 %v4772
        %5108 = vmatpush.bf16.msra.mxu0 %v4768
        %5109 = vmatpush.bf16.msra.mxu0 %v4764
        %5110 = vmatpush.bf16.msra.mxu0 %v4760
        %5111 = vmatpush.bf16.msra.mxu0 %v4756
        %5112 = vmatmul.bf16.gmra.mxu0 %v5064
        %v5113 = vpop.f32.mrf.mxu0
        %v5114 = vadd.f32 0.0, %v5113
        %v5115 = vpop.f32.mrf.mxu0
        %5116 = vdwg.mxu0
        %v5117 = vadd.f32 %v5060, %v5075
        %v5118 = vadd.f32 %v5061, %v5088
        %v5119 = vadd.f32 %v5062, %v5101
        %v5120 = vadd.f32 %v5063, %v5114
        %v5121 = vxor.u32 %v5117, 2147483648
        %v5122 = vmul.f32 %v5121, 1.442695
        %v5123 = vpow.pop %v5122
        %v5124 = vadd.f32 %v5123, 1.0
        %v5125 = vrcp.pop %v5124
        %v5126 = vmul.f32 %v5124, %v5125
        %v5127 = vsub.f32 1.0, %v5126
        %v5128 = vmul.f32 %v5125, %v5127
        %v5129 = vadd.f32 %v5125, %v5128
        %vm5130 = vweird.f32 %v5124
        %vm5131 = vweird.f32 %v5125
        %vm5132 = vmor %vm5130, %vm5131
        %v5133 = vsel %vm5132, %v5125, %v5129
        %v5134 = vand.u32 2147483647, %v5124
        %vm5135 = vcmp.eq.f32.partialorder %v5134, 8.507059e+37
        %v5136 = vand.u32 %v5124, 2147483648
        %v5137 = vor.u32 1.1754944e-38, %v5136
        %v5138 = vsel %vm5135, %v5137, %v5133
        %v5139 = vmul.f32 1.0, %v5138
        %v5140 = vxor.u32 %v5118, 2147483648
        %v5141 = vmul.f32 %v5140, 1.442695
        %v5142 = vpow.pop %v5141
        %v5143 = vadd.f32 %v5142, 1.0
        %v5144 = vrcp.pop %v5143
        %v5145 = vmul.f32 %v5143, %v5144
        %v5146 = vsub.f32 1.0, %v5145
        %v5147 = vmul.f32 %v5144, %v5146
        %v5148 = vadd.f32 %v5144, %v5147
        %vm5149 = vweird.f32 %v5143
        %vm5150 = vweird.f32 %v5144
        %vm5151 = vmor %vm5149, %vm5150
        %v5152 = vsel %vm5151, %v5144, %v5148
        %v5153 = vand.u32 2147483647, %v5143
        %vm5154 = vcmp.eq.f32.partialorder %v5153, 8.507059e+37
        %v5155 = vand.u32 %v5143, 2147483648
        %v5156 = vor.u32 1.1754944e-38, %v5155
        %v5157 = vsel %vm5154, %v5156, %v5152
        %v5158 = vmul.f32 1.0, %v5157
        %v5159 = vtanh.pop %v5119
        %v5160 = vxor.u32 %v5120, 2147483648
        %v5161 = vmul.f32 %v5160, 1.442695
        %v5162 = vpow.pop %v5161
        %v5163 = vadd.f32 %v5162, 1.0
        %v5164 = vrcp.pop %v5163
        %v5165 = vmul.f32 %v5163, %v5164
        %v5166 = vsub.f32 1.0, %v5165
        %v5167 = vmul.f32 %v5164, %v5166
        %v5168 = vadd.f32 %v5164, %v5167
        %vm5169 = vweird.f32 %v5163
        %vm5170 = vweird.f32 %v5164
        %vm5171 = vmor %vm5169, %vm5170
        %v5172 = vsel %vm5171, %v5164, %v5168
        %v5173 = vand.u32 2147483647, %v5163
        %vm5174 = vcmp.eq.f32.partialorder %v5173, 8.507059e+37
        %v5175 = vand.u32 %v5163, 2147483648
        %v5176 = vor.u32 1.1754944e-38, %v5175
        %v5177 = vsel %vm5174, %v5176, %v5172
        %v5178 = vmul.f32 1.0, %v5177
        %v5179 = vmul.f32 %v5158, %v5057
        %v5180 = vmul.f32 %v5139, %v5159
        %v5181 = vadd.f32 %v5179, %v5180
        %v5182 = vtanh.pop %v5181
        %v5183 = vmul.f32 %v5178, %v5182
        %v5184 = vld [vmem:[%s2666] sm:$0xff]
        %v5185 = vld [vmem:[%s2666 + $0x8] sm:$0xff]
        %v5186 = vld [vmem:[%s2666 + $0x10] sm:$0xff]
        %v5187 = vld [vmem:[%s2666 + $0x18] sm:$0xff]
        %v5188 = vpack.c.bf16 %v5183, %v5183
        %5189 = vmatpush.bf16.msra.mxu0 %v4781
        %5190 = vmatpush.bf16.msra.mxu0 %v4777
        %5191 = vmatpush.bf16.msra.mxu0 %v4773
        %5192 = vmatpush.bf16.msra.mxu0 %v4769
        %5193 = vmatpush.bf16.msra.mxu0 %v4765
        %5194 = vmatpush.bf16.msra.mxu0 %v4761
        %5195 = vmatpush.bf16.msra.mxu0 %v4757
        %5196 = vmatpush.bf16.msra.mxu0 %v4753
        %5197 = vmatmul.bf16.gmra.mxu0 %v5188
        %v5198 = vpop.f32.mrf.mxu0
        %v5199 = vadd.f32 0.0, %v5198
        %v5200 = vpop.f32.mrf.mxu0
        %5201 = vdwg.mxu0
        %5202 = vmatpush.bf16.msra.mxu0 %v4782
        %5203 = vmatpush.bf16.msra.mxu0 %v4778
        %5204 = vmatpush.bf16.msra.mxu0 %v4774
        %5205 = vmatpush.bf16.msra.mxu0 %v4770
        %5206 = vmatpush.bf16.msra.mxu0 %v4766
        %5207 = vmatpush.bf16.msra.mxu0 %v4762
        %5208 = vmatpush.bf16.msra.mxu0 %v4758
        %5209 = vmatpush.bf16.msra.mxu0 %v4754
        %5210 = vmatmul.bf16.gmra.mxu0 %v5188
        %v5211 = vpop.f32.mrf.mxu0
        %v5212 = vadd.f32 0.0, %v5211
        %v5213 = vpop.f32.mrf.mxu0
        %5214 = vdwg.mxu0
        %5215 = vmatpush.bf16.msra.mxu0 %v4783
        %5216 = vmatpush.bf16.msra.mxu0 %v4779
        %5217 = vmatpush.bf16.msra.mxu0 %v4775
        %5218 = vmatpush.bf16.msra.mxu0 %v4771
        %5219 = vmatpush.bf16.msra.mxu0 %v4767
        %5220 = vmatpush.bf16.msra.mxu0 %v4763
        %5221 = vmatpush.bf16.msra.mxu0 %v4759
        %5222 = vmatpush.bf16.msra.mxu0 %v4755
        %5223 = vmatmul.bf16.gmra.mxu0 %v5188
        %v5224 = vpop.f32.mrf.mxu0
        %v5225 = vadd.f32 0.0, %v5224
        %v5226 = vpop.f32.mrf.mxu0
        %5227 = vdwg.mxu0
        %5228 = vmatpush.bf16.msra.mxu0 %v4784
        %5229 = vmatpush.bf16.msra.mxu0 %v4780
        %5230 = vmatpush.bf16.msra.mxu0 %v4776
        %5231 = vmatpush.bf16.msra.mxu0 %v4772
        %5232 = vmatpush.bf16.msra.mxu0 %v4768
        %5233 = vmatpush.bf16.msra.mxu0 %v4764
        %5234 = vmatpush.bf16.msra.mxu0 %v4760
        %5235 = vmatpush.bf16.msra.mxu0 %v4756
        %5236 = vmatmul.bf16.gmra.mxu0 %v5188
        %v5237 = vpop.f32.mrf.mxu0
        %v5238 = vadd.f32 0.0, %v5237
        %v5239 = vpop.f32.mrf.mxu0
        %5240 = vdwg.mxu0
        %v5241 = vadd.f32 %v5184, %v5199
        %v5242 = vadd.f32 %v5185, %v5212
        %v5243 = vadd.f32 %v5186, %v5225
        %v5244 = vadd.f32 %v5187, %v5238
        %v5245 = vxor.u32 %v5241, 2147483648
        %v5246 = vmul.f32 %v5245, 1.442695
        %v5247 = vpow.pop %v5246
        %v5248 = vadd.f32 %v5247, 1.0
        %v5249 = vrcp.pop %v5248
        %v5250 = vmul.f32 %v5248, %v5249
        %v5251 = vsub.f32 1.0, %v5250
        %v5252 = vmul.f32 %v5249, %v5251
        %v5253 = vadd.f32 %v5249, %v5252
        %vm5254 = vweird.f32 %v5248
        %vm5255 = vweird.f32 %v5249
        %vm5256 = vmor %vm5254, %vm5255
        %v5257 = vsel %vm5256, %v5249, %v5253
        %v5258 = vand.u32 2147483647, %v5248
        %vm5259 = vcmp.eq.f32.partialorder %v5258, 8.507059e+37
        %v5260 = vand.u32 %v5248, 2147483648
        %v5261 = vor.u32 1.1754944e-38, %v5260
        %v5262 = vsel %vm5259, %v5261, %v5257
        %v5263 = vmul.f32 1.0, %v5262
        %v5264 = vxor.u32 %v5242, 2147483648
        %v5265 = vmul.f32 %v5264, 1.442695
        %v5266 = vpow.pop %v5265
        %v5267 = vadd.f32 %v5266, 1.0
        %v5268 = vrcp.pop %v5267
        %v5269 = vmul.f32 %v5267, %v5268
        %v5270 = vsub.f32 1.0, %v5269
        %v5271 = vmul.f32 %v5268, %v5270
        %v5272 = vadd.f32 %v5268, %v5271
        %vm5273 = vweird.f32 %v5267
        %vm5274 = vweird.f32 %v5268
        %vm5275 = vmor %vm5273, %vm5274
        %v5276 = vsel %vm5275, %v5268, %v5272
        %v5277 = vand.u32 2147483647, %v5267
        %vm5278 = vcmp.eq.f32.partialorder %v5277, 8.507059e+37
        %v5279 = vand.u32 %v5267, 2147483648
        %v5280 = vor.u32 1.1754944e-38, %v5279
        %v5281 = vsel %vm5278, %v5280, %v5276
        %v5282 = vmul.f32 1.0, %v5281
        %v5283 = vtanh.pop %v5243
        %v5284 = vxor.u32 %v5244, 2147483648
        %v5285 = vmul.f32 %v5284, 1.442695
        %v5286 = vpow.pop %v5285
        %v5287 = vadd.f32 %v5286, 1.0
        %v5288 = vrcp.pop %v5287
        %v5289 = vmul.f32 %v5287, %v5288
        %v5290 = vsub.f32 1.0, %v5289
        %v5291 = vmul.f32 %v5288, %v5290
        %v5292 = vadd.f32 %v5288, %v5291
        %vm5293 = vweird.f32 %v5287
        %vm5294 = vweird.f32 %v5288
        %vm5295 = vmor %vm5293, %vm5294
        %v5296 = vsel %vm5295, %v5288, %v5292
        %v5297 = vand.u32 2147483647, %v5287
        %vm5298 = vcmp.eq.f32.partialorder %v5297, 8.507059e+37
        %v5299 = vand.u32 %v5287, 2147483648
        %v5300 = vor.u32 1.1754944e-38, %v5299
        %v5301 = vsel %vm5298, %v5300, %v5296
        %v5302 = vmul.f32 1.0, %v5301
        %v5303 = vmul.f32 %v5282, %v5181
        %v5304 = vmul.f32 %v5263, %v5283
        %v5305 = vadd.f32 %v5303, %v5304
        %v5306 = vtanh.pop %v5305
        %v5307 = vmul.f32 %v5302, %v5306
        %v5308 = vld [vmem:[%s2984] sm:$0xff]
        %v5309 = vld [vmem:[%s2984 + $0x8] sm:$0xff]
        %v5310 = vld [vmem:[%s2984 + $0x10] sm:$0xff]
        %v5311 = vld [vmem:[%s2984 + $0x18] sm:$0xff]
        %v5312 = vpack.c.bf16 %v5307, %v5307
        %5313 = vmatpush.bf16.msra.mxu0 %v4781
        %5314 = vmatpush.bf16.msra.mxu0 %v4777
        %5315 = vmatpush.bf16.msra.mxu0 %v4773
        %5316 = vmatpush.bf16.msra.mxu0 %v4769
        %5317 = vmatpush.bf16.msra.mxu0 %v4765
        %5318 = vmatpush.bf16.msra.mxu0 %v4761
        %5319 = vmatpush.bf16.msra.mxu0 %v4757
        %5320 = vmatpush.bf16.msra.mxu0 %v4753
        %5321 = vmatmul.bf16.gmra.mxu0 %v5312
        %v5322 = vpop.f32.mrf.mxu0
        %v5323 = vadd.f32 0.0, %v5322
        %v5324 = vpop.f32.mrf.mxu0
        %5325 = vdwg.mxu0
        %5326 = vmatpush.bf16.msra.mxu0 %v4782
        %5327 = vmatpush.bf16.msra.mxu0 %v4778
        %5328 = vmatpush.bf16.msra.mxu0 %v4774
        %5329 = vmatpush.bf16.msra.mxu0 %v4770
        %5330 = vmatpush.bf16.msra.mxu0 %v4766
        %5331 = vmatpush.bf16.msra.mxu0 %v4762
        %5332 = vmatpush.bf16.msra.mxu0 %v4758
        %5333 = vmatpush.bf16.msra.mxu0 %v4754
        %5334 = vmatmul.bf16.gmra.mxu0 %v5312
        %v5335 = vpop.f32.mrf.mxu0
        %v5336 = vadd.f32 0.0, %v5335
        %v5337 = vpop.f32.mrf.mxu0
        %5338 = vdwg.mxu0
        %5339 = vmatpush.bf16.msra.mxu0 %v4783
        %5340 = vmatpush.bf16.msra.mxu0 %v4779
        %5341 = vmatpush.bf16.msra.mxu0 %v4775
        %5342 = vmatpush.bf16.msra.mxu0 %v4771
        %5343 = vmatpush.bf16.msra.mxu0 %v4767
        %5344 = vmatpush.bf16.msra.mxu0 %v4763
        %5345 = vmatpush.bf16.msra.mxu0 %v4759
        %5346 = vmatpush.bf16.msra.mxu0 %v4755
        %5347 = vmatmul.bf16.gmra.mxu0 %v5312
        %v5348 = vpop.f32.mrf.mxu0
        %v5349 = vadd.f32 0.0, %v5348
        %v5350 = vpop.f32.mrf.mxu0
        %5351 = vdwg.mxu0
        %5352 = vmatpush.bf16.msra.mxu0 %v4784
        %5353 = vmatpush.bf16.msra.mxu0 %v4780
        %5354 = vmatpush.bf16.msra.mxu0 %v4776
        %5355 = vmatpush.bf16.msra.mxu0 %v4772
        %5356 = vmatpush.bf16.msra.mxu0 %v4768
        %5357 = vmatpush.bf16.msra.mxu0 %v4764
        %5358 = vmatpush.bf16.msra.mxu0 %v4760
        %5359 = vmatpush.bf16.msra.mxu0 %v4756
        %5360 = vmatmul.bf16.gmra.mxu0 %v5312
        %v5361 = vpop.f32.mrf.mxu0
        %v5362 = vadd.f32 0.0, %v5361
        %v5363 = vpop.f32.mrf.mxu0
        %5364 = vdwg.mxu0
        %v5365 = vadd.f32 %v5308, %v5323
        %v5366 = vadd.f32 %v5309, %v5336
        %v5367 = vadd.f32 %v5310, %v5349
        %v5368 = vadd.f32 %v5311, %v5362
        %v5369 = vxor.u32 %v5365, 2147483648
        %v5370 = vmul.f32 %v5369, 1.442695
        %v5371 = vpow.pop %v5370
        %v5372 = vadd.f32 %v5371, 1.0
        %v5373 = vrcp.pop %v5372
        %v5374 = vmul.f32 %v5372, %v5373
        %v5375 = vsub.f32 1.0, %v5374
        %v5376 = vmul.f32 %v5373, %v5375
        %v5377 = vadd.f32 %v5373, %v5376
        %vm5378 = vweird.f32 %v5372
        %vm5379 = vweird.f32 %v5373
        %vm5380 = vmor %vm5378, %vm5379
        %v5381 = vsel %vm5380, %v5373, %v5377
        %v5382 = vand.u32 2147483647, %v5372
        %vm5383 = vcmp.eq.f32.partialorder %v5382, 8.507059e+37
        %v5384 = vand.u32 %v5372, 2147483648
        %v5385 = vor.u32 1.1754944e-38, %v5384
        %v5386 = vsel %vm5383, %v5385, %v5381
        %v5387 = vmul.f32 1.0, %v5386
        %v5388 = vxor.u32 %v5366, 2147483648
        %v5389 = vmul.f32 %v5388, 1.442695
        %v5390 = vpow.pop %v5389
        %v5391 = vadd.f32 %v5390, 1.0
        %v5392 = vrcp.pop %v5391
        %v5393 = vmul.f32 %v5391, %v5392
        %v5394 = vsub.f32 1.0, %v5393
        %v5395 = vmul.f32 %v5392, %v5394
        %v5396 = vadd.f32 %v5392, %v5395
        %vm5397 = vweird.f32 %v5391
        %vm5398 = vweird.f32 %v5392
        %vm5399 = vmor %vm5397, %vm5398
        %v5400 = vsel %vm5399, %v5392, %v5396
        %v5401 = vand.u32 2147483647, %v5391
        %vm5402 = vcmp.eq.f32.partialorder %v5401, 8.507059e+37
        %v5403 = vand.u32 %v5391, 2147483648
        %v5404 = vor.u32 1.1754944e-38, %v5403
        %v5405 = vsel %vm5402, %v5404, %v5400
        %v5406 = vmul.f32 1.0, %v5405
        %v5407 = vtanh.pop %v5367
        %v5408 = vxor.u32 %v5368, 2147483648
        %v5409 = vmul.f32 %v5408, 1.442695
        %v5410 = vpow.pop %v5409
        %v5411 = vadd.f32 %v5410, 1.0
        %v5412 = vrcp.pop %v5411
        %v5413 = vmul.f32 %v5411, %v5412
        %v5414 = vsub.f32 1.0, %v5413
        %v5415 = vmul.f32 %v5412, %v5414
        %v5416 = vadd.f32 %v5412, %v5415
        %vm5417 = vweird.f32 %v5411
        %vm5418 = vweird.f32 %v5412
        %vm5419 = vmor %vm5417, %vm5418
        %v5420 = vsel %vm5419, %v5412, %v5416
        %v5421 = vand.u32 2147483647, %v5411
        %vm5422 = vcmp.eq.f32.partialorder %v5421, 8.507059e+37
        %v5423 = vand.u32 %v5411, 2147483648
        %v5424 = vor.u32 1.1754944e-38, %v5423
        %v5425 = vsel %vm5422, %v5424, %v5420
        %v5426 = vmul.f32 1.0, %v5425
        %v5427 = vmul.f32 %v5406, %v5305
        %v5428 = vmul.f32 %v5387, %v5407
        %v5429 = vadd.f32 %v5427, %v5428
        %v5430 = vtanh.pop %v5429
        %v5431 = vmul.f32 %v5426, %v5430
        %v5432 = vld [vmem:[%s3302] sm:$0xff]
        %v5433 = vld [vmem:[%s3302 + $0x8] sm:$0xff]
        %v5434 = vld [vmem:[%s3302 + $0x10] sm:$0xff]
        %v5435 = vld [vmem:[%s3302 + $0x18] sm:$0xff]
        %v5436 = vpack.c.bf16 %v5431, %v5431
        %5437 = vmatpush.bf16.msra.mxu0 %v4781
        %5438 = vmatpush.bf16.msra.mxu0 %v4777
        %5439 = vmatpush.bf16.msra.mxu0 %v4773
        %5440 = vmatpush.bf16.msra.mxu0 %v4769
        %5441 = vmatpush.bf16.msra.mxu0 %v4765
        %5442 = vmatpush.bf16.msra.mxu0 %v4761
        %5443 = vmatpush.bf16.msra.mxu0 %v4757
        %5444 = vmatpush.bf16.msra.mxu0 %v4753
        %5445 = vmatmul.bf16.gmra.mxu0 %v5436
        %v5446 = vpop.f32.mrf.mxu0
        %v5447 = vadd.f32 0.0, %v5446
        %v5448 = vpop.f32.mrf.mxu0
        %5449 = vdwg.mxu0
        %5450 = vmatpush.bf16.msra.mxu0 %v4782
        %5451 = vmatpush.bf16.msra.mxu0 %v4778
        %5452 = vmatpush.bf16.msra.mxu0 %v4774
        %5453 = vmatpush.bf16.msra.mxu0 %v4770
        %5454 = vmatpush.bf16.msra.mxu0 %v4766
        %5455 = vmatpush.bf16.msra.mxu0 %v4762
        %5456 = vmatpush.bf16.msra.mxu0 %v4758
        %5457 = vmatpush.bf16.msra.mxu0 %v4754
        %5458 = vmatmul.bf16.gmra.mxu0 %v5436
        %v5459 = vpop.f32.mrf.mxu0
        %v5460 = vadd.f32 0.0, %v5459
        %v5461 = vpop.f32.mrf.mxu0
        %5462 = vdwg.mxu0
        %5463 = vmatpush.bf16.msra.mxu0 %v4783
        %5464 = vmatpush.bf16.msra.mxu0 %v4779
        %5465 = vmatpush.bf16.msra.mxu0 %v4775
        %5466 = vmatpush.bf16.msra.mxu0 %v4771
        %5467 = vmatpush.bf16.msra.mxu0 %v4767
        %5468 = vmatpush.bf16.msra.mxu0 %v4763
        %5469 = vmatpush.bf16.msra.mxu0 %v4759
        %5470 = vmatpush.bf16.msra.mxu0 %v4755
        %5471 = vmatmul.bf16.gmra.mxu0 %v5436
        %v5472 = vpop.f32.mrf.mxu0
        %v5473 = vadd.f32 0.0, %v5472
        %v5474 = vpop.f32.mrf.mxu0
        %5475 = vdwg.mxu0
        %5476 = vmatpush.bf16.msra.mxu0 %v4784
        %5477 = vmatpush.bf16.msra.mxu0 %v4780
        %5478 = vmatpush.bf16.msra.mxu0 %v4776
        %5479 = vmatpush.bf16.msra.mxu0 %v4772
        %5480 = vmatpush.bf16.msra.mxu0 %v4768
        %5481 = vmatpush.bf16.msra.mxu0 %v4764
        %5482 = vmatpush.bf16.msra.mxu0 %v4760
        %5483 = vmatpush.bf16.msra.mxu0 %v4756
        %5484 = vmatmul.bf16.gmra.mxu0 %v5436
        %v5485 = vpop.f32.mrf.mxu0
        %v5486 = vadd.f32 0.0, %v5485
        %v5487 = vpop.f32.mrf.mxu0
        %5488 = vdwg.mxu0
        %v5489 = vadd.f32 %v5432, %v5447
        %v5490 = vadd.f32 %v5433, %v5460
        %v5491 = vadd.f32 %v5434, %v5473
        %v5492 = vadd.f32 %v5435, %v5486
        %v5493 = vxor.u32 %v5489, 2147483648
        %v5494 = vmul.f32 %v5493, 1.442695
        %v5495 = vpow.pop %v5494
        %v5496 = vadd.f32 %v5495, 1.0
        %v5497 = vrcp.pop %v5496
        %v5498 = vmul.f32 %v5496, %v5497
        %v5499 = vsub.f32 1.0, %v5498
        %v5500 = vmul.f32 %v5497, %v5499
        %v5501 = vadd.f32 %v5497, %v5500
        %vm5502 = vweird.f32 %v5496
        %vm5503 = vweird.f32 %v5497
        %vm5504 = vmor %vm5502, %vm5503
        %v5505 = vsel %vm5504, %v5497, %v5501
        %v5506 = vand.u32 2147483647, %v5496
        %vm5507 = vcmp.eq.f32.partialorder %v5506, 8.507059e+37
        %v5508 = vand.u32 %v5496, 2147483648
        %v5509 = vor.u32 1.1754944e-38, %v5508
        %v5510 = vsel %vm5507, %v5509, %v5505
        %v5511 = vmul.f32 1.0, %v5510
        %v5512 = vxor.u32 %v5490, 2147483648
        %v5513 = vmul.f32 %v5512, 1.442695
        %v5514 = vpow.pop %v5513
        %v5515 = vadd.f32 %v5514, 1.0
        %v5516 = vrcp.pop %v5515
        %v5517 = vmul.f32 %v5515, %v5516
        %v5518 = vsub.f32 1.0, %v5517
        %v5519 = vmul.f32 %v5516, %v5518
        %v5520 = vadd.f32 %v5516, %v5519
        %vm5521 = vweird.f32 %v5515
        %vm5522 = vweird.f32 %v5516
        %vm5523 = vmor %vm5521, %vm5522
        %v5524 = vsel %vm5523, %v5516, %v5520
        %v5525 = vand.u32 2147483647, %v5515
        %vm5526 = vcmp.eq.f32.partialorder %v5525, 8.507059e+37
        %v5527 = vand.u32 %v5515, 2147483648
        %v5528 = vor.u32 1.1754944e-38, %v5527
        %v5529 = vsel %vm5526, %v5528, %v5524
        %v5530 = vmul.f32 1.0, %v5529
        %v5531 = vtanh.pop %v5491
        %v5532 = vxor.u32 %v5492, 2147483648
        %v5533 = vmul.f32 %v5532, 1.442695
        %v5534 = vpow.pop %v5533
        %v5535 = vadd.f32 %v5534, 1.0
        %v5536 = vrcp.pop %v5535
        %v5537 = vmul.f32 %v5535, %v5536
        %v5538 = vsub.f32 1.0, %v5537
        %v5539 = vmul.f32 %v5536, %v5538
        %v5540 = vadd.f32 %v5536, %v5539
        %vm5541 = vweird.f32 %v5535
        %vm5542 = vweird.f32 %v5536
        %vm5543 = vmor %vm5541, %vm5542
        %v5544 = vsel %vm5543, %v5536, %v5540
        %v5545 = vand.u32 2147483647, %v5535
        %vm5546 = vcmp.eq.f32.partialorder %v5545, 8.507059e+37
        %v5547 = vand.u32 %v5535, 2147483648
        %v5548 = vor.u32 1.1754944e-38, %v5547
        %v5549 = vsel %vm5546, %v5548, %v5544
        %v5550 = vmul.f32 1.0, %v5549
        %v5551 = vmul.f32 %v5530, %v5429
        %v5552 = vmul.f32 %v5511, %v5531
        %v5553 = vadd.f32 %v5551, %v5552
        %v5554 = vtanh.pop %v5553
        %v5555 = vmul.f32 %v5550, %v5554
        %v5556 = vld [vmem:[%s3620] sm:$0xff]
        %v5557 = vld [vmem:[%s3620 + $0x8] sm:$0xff]
        %v5558 = vld [vmem:[%s3620 + $0x10] sm:$0xff]
        %v5559 = vld [vmem:[%s3620 + $0x18] sm:$0xff]
        %v5560 = vpack.c.bf16 %v5555, %v5555
        %5561 = vmatpush.bf16.msra.mxu0 %v4781
        %5562 = vmatpush.bf16.msra.mxu0 %v4777
        %5563 = vmatpush.bf16.msra.mxu0 %v4773
        %5564 = vmatpush.bf16.msra.mxu0 %v4769
        %5565 = vmatpush.bf16.msra.mxu0 %v4765
        %5566 = vmatpush.bf16.msra.mxu0 %v4761
        %5567 = vmatpush.bf16.msra.mxu0 %v4757
        %5568 = vmatpush.bf16.msra.mxu0 %v4753
        %5569 = vmatmul.bf16.gmra.mxu0 %v5560
        %v5570 = vpop.f32.mrf.mxu0
        %v5571 = vadd.f32 0.0, %v5570
        %v5572 = vpop.f32.mrf.mxu0
        %5573 = vdwg.mxu0
        %5574 = vmatpush.bf16.msra.mxu0 %v4782
        %5575 = vmatpush.bf16.msra.mxu0 %v4778
        %5576 = vmatpush.bf16.msra.mxu0 %v4774
        %5577 = vmatpush.bf16.msra.mxu0 %v4770
        %5578 = vmatpush.bf16.msra.mxu0 %v4766
        %5579 = vmatpush.bf16.msra.mxu0 %v4762
        %5580 = vmatpush.bf16.msra.mxu0 %v4758
        %5581 = vmatpush.bf16.msra.mxu0 %v4754
        %5582 = vmatmul.bf16.gmra.mxu0 %v5560
        %v5583 = vpop.f32.mrf.mxu0
        %v5584 = vadd.f32 0.0, %v5583
        %v5585 = vpop.f32.mrf.mxu0
        %5586 = vdwg.mxu0
        %5587 = vmatpush.bf16.msra.mxu0 %v4783
        %5588 = vmatpush.bf16.msra.mxu0 %v4779
        %5589 = vmatpush.bf16.msra.mxu0 %v4775
        %5590 = vmatpush.bf16.msra.mxu0 %v4771
        %5591 = vmatpush.bf16.msra.mxu0 %v4767
        %5592 = vmatpush.bf16.msra.mxu0 %v4763
        %5593 = vmatpush.bf16.msra.mxu0 %v4759
        %5594 = vmatpush.bf16.msra.mxu0 %v4755
        %5595 = vmatmul.bf16.gmra.mxu0 %v5560
        %v5596 = vpop.f32.mrf.mxu0
        %v5597 = vadd.f32 0.0, %v5596
        %v5598 = vpop.f32.mrf.mxu0
        %5599 = vdwg.mxu0
        %5600 = vmatpush.bf16.msra.mxu0 %v4784
        %5601 = vmatpush.bf16.msra.mxu0 %v4780
        %5602 = vmatpush.bf16.msra.mxu0 %v4776
        %5603 = vmatpush.bf16.msra.mxu0 %v4772
        %5604 = vmatpush.bf16.msra.mxu0 %v4768
        %5605 = vmatpush.bf16.msra.mxu0 %v4764
        %5606 = vmatpush.bf16.msra.mxu0 %v4760
        %5607 = vmatpush.bf16.msra.mxu0 %v4756
        %5608 = vmatmul.bf16.gmra.mxu0 %v5560
        %v5609 = vpop.f32.mrf.mxu0
        %v5610 = vadd.f32 0.0, %v5609
        %v5611 = vpop.f32.mrf.mxu0
        %5612 = vdwg.mxu0
        %v5613 = vadd.f32 %v5556, %v5571
        %v5614 = vadd.f32 %v5557, %v5584
        %v5615 = vadd.f32 %v5558, %v5597
        %v5616 = vadd.f32 %v5559, %v5610
        %v5617 = vxor.u32 %v5613, 2147483648
        %v5618 = vmul.f32 %v5617, 1.442695
        %v5619 = vpow.pop %v5618
        %v5620 = vadd.f32 %v5619, 1.0
        %v5621 = vrcp.pop %v5620
        %v5622 = vmul.f32 %v5620, %v5621
        %v5623 = vsub.f32 1.0, %v5622
        %v5624 = vmul.f32 %v5621, %v5623
        %v5625 = vadd.f32 %v5621, %v5624
        %vm5626 = vweird.f32 %v5620
        %vm5627 = vweird.f32 %v5621
        %vm5628 = vmor %vm5626, %vm5627
        %v5629 = vsel %vm5628, %v5621, %v5625
        %v5630 = vand.u32 2147483647, %v5620
        %vm5631 = vcmp.eq.f32.partialorder %v5630, 8.507059e+37
        %v5632 = vand.u32 %v5620, 2147483648
        %v5633 = vor.u32 1.1754944e-38, %v5632
        %v5634 = vsel %vm5631, %v5633, %v5629
        %v5635 = vmul.f32 1.0, %v5634
        %v5636 = vxor.u32 %v5614, 2147483648
        %v5637 = vmul.f32 %v5636, 1.442695
        %v5638 = vpow.pop %v5637
        %v5639 = vadd.f32 %v5638, 1.0
        %v5640 = vrcp.pop %v5639
        %v5641 = vmul.f32 %v5639, %v5640
        %v5642 = vsub.f32 1.0, %v5641
        %v5643 = vmul.f32 %v5640, %v5642
        %v5644 = vadd.f32 %v5640, %v5643
        %vm5645 = vweird.f32 %v5639
        %vm5646 = vweird.f32 %v5640
        %vm5647 = vmor %vm5645, %vm5646
        %v5648 = vsel %vm5647, %v5640, %v5644
        %v5649 = vand.u32 2147483647, %v5639
        %vm5650 = vcmp.eq.f32.partialorder %v5649, 8.507059e+37
        %v5651 = vand.u32 %v5639, 2147483648
        %v5652 = vor.u32 1.1754944e-38, %v5651
        %v5653 = vsel %vm5650, %v5652, %v5648
        %v5654 = vmul.f32 1.0, %v5653
        %v5655 = vtanh.pop %v5615
        %v5656 = vxor.u32 %v5616, 2147483648
        %v5657 = vmul.f32 %v5656, 1.442695
        %v5658 = vpow.pop %v5657
        %v5659 = vadd.f32 %v5658, 1.0
        %v5660 = vrcp.pop %v5659
        %v5661 = vmul.f32 %v5659, %v5660
        %v5662 = vsub.f32 1.0, %v5661
        %v5663 = vmul.f32 %v5660, %v5662
        %v5664 = vadd.f32 %v5660, %v5663
        %vm5665 = vweird.f32 %v5659
        %vm5666 = vweird.f32 %v5660
        %vm5667 = vmor %vm5665, %vm5666
        %v5668 = vsel %vm5667, %v5660, %v5664
        %v5669 = vand.u32 2147483647, %v5659
        %vm5670 = vcmp.eq.f32.partialorder %v5669, 8.507059e+37
        %v5671 = vand.u32 %v5659, 2147483648
        %v5672 = vor.u32 1.1754944e-38, %v5671
        %v5673 = vsel %vm5670, %v5672, %v5668
        %v5674 = vmul.f32 1.0, %v5673
        %v5675 = vmul.f32 %v5654, %v5553
        %v5676 = vmul.f32 %v5635, %v5655
        %v5677 = vadd.f32 %v5675, %v5676
        %v5678 = vtanh.pop %v5677
        %v5679 = vmul.f32 %v5674, %v5678
        %v5680 = vld [vmem:[%s3938] sm:$0xff]
        %v5681 = vld [vmem:[%s3938 + $0x8] sm:$0xff]
        %v5682 = vld [vmem:[%s3938 + $0x10] sm:$0xff]
        %v5683 = vld [vmem:[%s3938 + $0x18] sm:$0xff]
        %v5684 = vpack.c.bf16 %v5679, %v5679
        %5685 = vmatpush.bf16.msra.mxu0 %v4781
        %5686 = vmatpush.bf16.msra.mxu0 %v4777
        %5687 = vmatpush.bf16.msra.mxu0 %v4773
        %5688 = vmatpush.bf16.msra.mxu0 %v4769
        %5689 = vmatpush.bf16.msra.mxu0 %v4765
        %5690 = vmatpush.bf16.msra.mxu0 %v4761
        %5691 = vmatpush.bf16.msra.mxu0 %v4757
        %5692 = vmatpush.bf16.msra.mxu0 %v4753
        %5693 = vmatmul.bf16.gmra.mxu0 %v5684
        %v5694 = vpop.f32.mrf.mxu0
        %v5695 = vadd.f32 0.0, %v5694
        %v5696 = vpop.f32.mrf.mxu0
        %5697 = vdwg.mxu0
        %5698 = vmatpush.bf16.msra.mxu0 %v4782
        %5699 = vmatpush.bf16.msra.mxu0 %v4778
        %5700 = vmatpush.bf16.msra.mxu0 %v4774
        %5701 = vmatpush.bf16.msra.mxu0 %v4770
        %5702 = vmatpush.bf16.msra.mxu0 %v4766
        %5703 = vmatpush.bf16.msra.mxu0 %v4762
        %5704 = vmatpush.bf16.msra.mxu0 %v4758
        %5705 = vmatpush.bf16.msra.mxu0 %v4754
        %5706 = vmatmul.bf16.gmra.mxu0 %v5684
        %v5707 = vpop.f32.mrf.mxu0
        %v5708 = vadd.f32 0.0, %v5707
        %v5709 = vpop.f32.mrf.mxu0
        %5710 = vdwg.mxu0
        %5711 = vmatpush.bf16.msra.mxu0 %v4783
        %5712 = vmatpush.bf16.msra.mxu0 %v4779
        %5713 = vmatpush.bf16.msra.mxu0 %v4775
        %5714 = vmatpush.bf16.msra.mxu0 %v4771
        %5715 = vmatpush.bf16.msra.mxu0 %v4767
        %5716 = vmatpush.bf16.msra.mxu0 %v4763
        %5717 = vmatpush.bf16.msra.mxu0 %v4759
        %5718 = vmatpush.bf16.msra.mxu0 %v4755
        %5719 = vmatmul.bf16.gmra.mxu0 %v5684
        %v5720 = vpop.f32.mrf.mxu0
        %v5721 = vadd.f32 0.0, %v5720
        %v5722 = vpop.f32.mrf.mxu0
        %5723 = vdwg.mxu0
        %5724 = vmatpush.bf16.msra.mxu0 %v4784
        %5725 = vmatpush.bf16.msra.mxu0 %v4780
        %5726 = vmatpush.bf16.msra.mxu0 %v4776
        %5727 = vmatpush.bf16.msra.mxu0 %v4772
        %5728 = vmatpush.bf16.msra.mxu0 %v4768
        %5729 = vmatpush.bf16.msra.mxu0 %v4764
        %5730 = vmatpush.bf16.msra.mxu0 %v4760
        %5731 = vmatpush.bf16.msra.mxu0 %v4756
        %5732 = vmatmul.bf16.gmra.mxu0 %v5684
        %v5733 = vpop.f32.mrf.mxu0
        %v5734 = vadd.f32 0.0, %v5733
        %v5735 = vpop.f32.mrf.mxu0
        %5736 = vdwg.mxu0
        %v5737 = vadd.f32 %v5680, %v5695
        %v5738 = vadd.f32 %v5681, %v5708
        %v5739 = vadd.f32 %v5682, %v5721
        %v5740 = vadd.f32 %v5683, %v5734
        %v5741 = vxor.u32 %v5737, 2147483648
        %v5742 = vmul.f32 %v5741, 1.442695
        %v5743 = vpow.pop %v5742
        %v5744 = vadd.f32 %v5743, 1.0
        %v5745 = vrcp.pop %v5744
        %v5746 = vmul.f32 %v5744, %v5745
        %v5747 = vsub.f32 1.0, %v5746
        %v5748 = vmul.f32 %v5745, %v5747
        %v5749 = vadd.f32 %v5745, %v5748
        %vm5750 = vweird.f32 %v5744
        %vm5751 = vweird.f32 %v5745
        %vm5752 = vmor %vm5750, %vm5751
        %v5753 = vsel %vm5752, %v5745, %v5749
        %v5754 = vand.u32 2147483647, %v5744
        %vm5755 = vcmp.eq.f32.partialorder %v5754, 8.507059e+37
        %v5756 = vand.u32 %v5744, 2147483648
        %v5757 = vor.u32 1.1754944e-38, %v5756
        %v5758 = vsel %vm5755, %v5757, %v5753
        %v5759 = vmul.f32 1.0, %v5758
        %v5760 = vxor.u32 %v5738, 2147483648
        %v5761 = vmul.f32 %v5760, 1.442695
        %v5762 = vpow.pop %v5761
        %v5763 = vadd.f32 %v5762, 1.0
        %v5764 = vrcp.pop %v5763
        %v5765 = vmul.f32 %v5763, %v5764
        %v5766 = vsub.f32 1.0, %v5765
        %v5767 = vmul.f32 %v5764, %v5766
        %v5768 = vadd.f32 %v5764, %v5767
        %vm5769 = vweird.f32 %v5763
        %vm5770 = vweird.f32 %v5764
        %vm5771 = vmor %vm5769, %vm5770
        %v5772 = vsel %vm5771, %v5764, %v5768
        %v5773 = vand.u32 2147483647, %v5763
        %vm5774 = vcmp.eq.f32.partialorder %v5773, 8.507059e+37
        %v5775 = vand.u32 %v5763, 2147483648
        %v5776 = vor.u32 1.1754944e-38, %v5775
        %v5777 = vsel %vm5774, %v5776, %v5772
        %v5778 = vmul.f32 1.0, %v5777
        %v5779 = vtanh.pop %v5739
        %v5780 = vxor.u32 %v5740, 2147483648
        %v5781 = vmul.f32 %v5780, 1.442695
        %v5782 = vpow.pop %v5781
        %v5783 = vadd.f32 %v5782, 1.0
        %v5784 = vrcp.pop %v5783
        %v5785 = vmul.f32 %v5783, %v5784
        %v5786 = vsub.f32 1.0, %v5785
        %v5787 = vmul.f32 %v5784, %v5786
        %v5788 = vadd.f32 %v5784, %v5787
        %vm5789 = vweird.f32 %v5783
        %vm5790 = vweird.f32 %v5784
        %vm5791 = vmor %vm5789, %vm5790
        %v5792 = vsel %vm5791, %v5784, %v5788
        %v5793 = vand.u32 2147483647, %v5783
        %vm5794 = vcmp.eq.f32.partialorder %v5793, 8.507059e+37
        %v5795 = vand.u32 %v5783, 2147483648
        %v5796 = vor.u32 1.1754944e-38, %v5795
        %v5797 = vsel %vm5794, %v5796, %v5792
        %v5798 = vmul.f32 1.0, %v5797
        %v5799 = vmul.f32 %v5778, %v5677
        %v5800 = vmul.f32 %v5759, %v5779
        %v5801 = vadd.f32 %v5799, %v5800
        %v5802 = vtanh.pop %v5801
        %v5803 = vmul.f32 %v5798, %v5802
        %v5804 = vpack.c.bf16 %v5803, %v5803
        %v5805 = vld [vmem:[%s8] sm:$0xf]
        %v5806 = vld [vmem:[%s8 + $0x4] sm:$0xf]
        %v5807 = vld [vmem:[%s8 + $0x8] sm:$0xf]
        %v5808 = vld [vmem:[%s8 + $0xc] sm:$0xf]
        %v5809 = vld [vmem:[%s8 + $0x10] sm:$0xf]
        %v5810 = vld [vmem:[%s8 + $0x14] sm:$0xf]
        %v5811 = vld [vmem:[%s8 + $0x18] sm:$0xf]
        %v5812 = vld [vmem:[%s8 + $0x1c] sm:$0xf]
        %v5813 = vld [vmem:[%s8 + $0x20] sm:$0xf]
        %v5814 = vld [vmem:[%s8 + $0x24] sm:$0xf]
        %v5815 = vld [vmem:[%s8 + $0x28] sm:$0xf]
        %v5816 = vld [vmem:[%s8 + $0x2c] sm:$0xf]
        %v5817 = vld [vmem:[%s8 + $0x30] sm:$0xf]
        %v5818 = vld [vmem:[%s8 + $0x34] sm:$0xf]
        %v5819 = vld [vmem:[%s8 + $0x38] sm:$0xf]
        %v5820 = vld [vmem:[%s8 + $0x3c] sm:$0xf]
        %v5821 = vld [vmem:[%s9] sm:$0x1]
        %v5823 = vperm.slane %v5821, 0
        %v5841 = vunpack.c.l.b16 %v5805
        %v5842 = vunpack.c.l.b16 %v5806
        %v5843 = vunpack.c.l.b16 %v5807
        %v5844 = vunpack.c.l.b16 %v5808
        %v5845 = vunpack.c.l.b16 %v5809
        %v5846 = vunpack.c.l.b16 %v5810
        %v5847 = vunpack.c.l.b16 %v5811
        %v5848 = vunpack.c.l.b16 %v5812
        %v5849 = vunpack.c.l.b16 %v5813
        %v5850 = vunpack.c.l.b16 %v5814
        %v5851 = vunpack.c.l.b16 %v5815
        %v5852 = vunpack.c.l.b16 %v5816
        %v5853 = vunpack.c.l.b16 %v5817
        %v5854 = vunpack.c.l.b16 %v5818
        %v5855 = vunpack.c.l.b16 %v5819
        %v5856 = vunpack.c.l.b16 %v5820
        %v5857 = vpack.c.b16 %v5842, %v5841
        %v5858 = vpack.c.b16 %v5844, %v5843
        %v5859 = vpack.c.b16 %v5846, %v5845
        %v5860 = vpack.c.b16 %v5848, %v5847
        %v5861 = vpack.c.b16 %v5850, %v5849
        %v5862 = vpack.c.b16 %v5852, %v5851
        %v5863 = vpack.c.b16 %v5854, %v5853
        %v5864 = vpack.c.b16 %v5856, %v5855
        %5873 = vmatpush.bf16.msra.mxu0 %v5864
        %5874 = vmatpush.bf16.msra.mxu0 %v5863
        %5875 = vmatpush.bf16.msra.mxu0 %v5862
        %5876 = vmatpush.bf16.msra.mxu0 %v5861
        %5877 = vmatpush.bf16.msra.mxu0 %v5860
        %5878 = vmatpush.bf16.msra.mxu0 %v5859
        %5879 = vmatpush.bf16.msra.mxu0 %v5858
        %5880 = vmatpush.bf16.msra.mxu0 %v5857
        %5881 = vmatmul.bf16.gmra.mxu0 %v5804
        %v5882 = vpop.f32.mrf.mxu0
        %v5883 = vadd.f32 %v5823, %v5882
        %v5884 = vpop.f32.mrf.mxu0
        %5885 = vdwg.mxu0
        %vm5886 = vcmask 31744
        %5887 = vst.msk [vmem:[%s413] sm:$0xff] %vm5886, %v5883
        %p5888 = scmp.lt.s32.totalorder %s25, 1
        %s5889 = scalar_select %p5888, %s25, 1
        %s5890 = smul.addr %s5889, 8
        %s5891 = scalar_lea.vmem %s10, %s5890
        // Predicated region
        $region73: #{tpu_custom_call.1} parent=59 // pred_check
          %p5892 = pneg %p258
        $region74: #{tpu_custom_call.1} parent=59 // pred_check_branch
          %5894 = sbr.rel (%p5892) target = $region76
        $region75: #{tpu_custom_call.1} parent=59 // pred_region
          _
        $region76: #{tpu_custom_call.1} parent=59 // pred_fallthru
          _
      $region60: #{tpu_custom_call.1} parent=5 // pred_fallthru
        _
      %p5895 = scmp.le.s32.totalorder 2, %s20
      // Predicated region
      $region77: #{tpu_custom_call.1} parent=5 // pred_check
        %p5896 = pneg %p5895
      $region78: #{tpu_custom_call.1} parent=5 // pred_check_branch
        %5898 = sbr.rel (%p5896) target = $region80
      $region79: #{tpu_custom_call.1} parent=5 // pred_region
        %s5899 = ssub.s32 %s20, 2
        // Predicated region
        $region81: #{tpu_custom_call.1} parent=79 // pred_check
          %p5900 = pneg %p264
        $region82: #{tpu_custom_call.1} parent=79 // pred_check_branch
          %5902 = sbr.rel (%p5900) target = $region84
        $region83: #{tpu_custom_call.1} parent=79 // pred_region
          %p5903 = scmp.lt.s32.totalorder %s26, 1
          %s5904 = scalar_select %p5903, %s26, 1
          %s5905 = smul.addr %s5904, 8
          %s5906 = scalar_lea.vmem %s10, %s5905
        $region84: #{tpu_custom_call.1} parent=79 // pred_fallthru
          _
      $region80: #{tpu_custom_call.1} parent=5 // pred_fallthru
        _
    $region6: #{tpu_custom_call.1} parent=1 // loop_footer
      %s24 = sadd.s32 1, %s20
    $region7: #{tpu_custom_call.1} parent=1 // loop_footer_branch
      %19 = sbr.rel target = $region3
    $region8: #{tpu_custom_call.1} parent=1 // loop_exit
      _
    %5907 = vsyncpa [#allocation6], 1
    %s5908 = scalar_lea.sflag [#allocation6], 1
    %5909 = vsyncpa %s5908, 1
    %5910 = vsyncpa [#allocation8], 1

</llo_original>
